<compile_context>
chip_gen: v7x
topology: tpu7x:2x2x1
jax: 0.10.0
libtpu: 0.0.40
codegen_flags: <defaults>
</compile_context>

<pallas_src>
import jax
import jax.numpy as jnp
from jax import lax
from jax.experimental import pallas as pl
from jax.experimental.pallas import tpu as pltpu

N_HIDDEN = 128
# MXU operand dtype (f32 accumulation everywhere).  jnp.float32 => exact f32 parity.
MXU_DTYPE = jnp.bfloat16

EMB_ORDER = ("drug", "protein", "disease", "mf", "bp", "cc", "pathway")
GCN_KEYS = ("MF_sim", "BP_sim", "CC_sim", "MF2P", "BP2P", "CC2P", "Path2P")
SAGE_ORDER = ("d-t-dr", "d-m-dr", "d-p", "dr-t-d", "dr-m-d", "p-d", "DDI", "PPI")
# SAGE pool matmuls are N-packed by *source* node type:
#   group 0: src=disease (rel 0,1,2) ; group 1: src=drug (rel 3,4,6) ; group 2: src=protein (rel 5,7)
POOL_GROUP = {0: (0, 0), 1: (0, 1), 2: (0, 2),
              3: (1, 0), 4: (1, 1), 6: (1, 2),
              5: (2, 0), 7: (2, 1)}

# Row layout of the packed bias / BN / output-vector array (width = 7*128 = 896).
ROW_EMB_B = 0                              # [0:896]  7 embedding biases (block-concat)
ROW_GCN_B = 1                              # rows 1..7   GraphConv biases      [0:128]
ROW_SG_BPOOL = 8                           # rows 8..10  N-packed pool biases  [0:384]
ROW_SG_B = 11                              # rows 11..18 SAGE shared biases    [0:128]
ROW_B1, ROW_G1, ROW_BE1 = 19, 20, 21       # head layer 1 bias / gamma / beta  [0:256]
ROW_B2, ROW_G2, ROW_BE2 = 22, 23, 24       # head layer 2                      [0:128]
ROW_B3, ROW_G3, ROW_BE3 = 25, 26, 27       # head layer 3                      [0:64]
ROW_WOUT, ROW_BOUT = 28, 29                # output weight row [0:64] / bias [0:1]
N_BIAS_ROWS = 30
BIAS_WIDTH = 7 * N_HIDDEN


# ----------------------------- the fused mega-kernel -------------------------------


def _my_net_kernel(
    # SMEM gather indices [B] int32
    x_dr_ref, x_p_ref,
    # VMEM (all packed)
    x_emb_ref,        # [N_pad, K_emb]     packed node features (block column layout)
    w_emb_ref,        # [K_emb, 896]       block-diagonal embedding weights
    gcn_adj_ref,      # [7, N_pad, N_pad]  GraphConv adjacencies (dst, src)
    sage_adj_ref,     # [8, N_pad, N_pad]  SAGE adjacencies (dst, src)
    gcn_w_ref,        # [7, 128, 128]
    sg_wpool_ref,     # [3, 128, 384]      N-packed pool weights (by src type)
    sg_wsn_ref,       # [8, 256, 128]      merged [W_self; W_neigh]
    w1_ref, w2_ref, w3_ref,                # MLP head weights
    bias_ref,         # [30, 896]          all biases / BN affine / output vector
    # output
    o_ref,            # [B, 1] f32
    # VMEM scratch used for the SMEM-indexed row gather
    dr_cat_ref,       # [N_pad, 384] f32
    p_cat_ref,        # [N_pad, 512] f32
):
    f32 = jnp.float32
    H = N_HIDDEN

    def bvec(row, width):                       # [1, width] slice of the bias pack
        return bias_ref[row:row + 1, 0:width]

    def mxu(a, b):                              # bf16 MXU inputs, f32 accumulation
        return jnp.dot(a.astype(MXU_DTYPE), b.astype(MXU_DTYPE),
                       preferred_element_type=f32)

    def relu(x):
        return jnp.maximum(x, 0.0)

    # ---- all 7 embedding Linears (+ReLU) as ONE block-diagonal MXU matmul ----
    emb_all = relu(mxu(x_emb_ref[...], w_emb_ref[...]) + bvec(ROW_EMB_B, 7 * H))
    h_dr_f = emb_all[:, 0 * H:1 * H]
    h_p_s = emb_all[:, 1 * H:2 * H]
    h_d = emb_all[:, 2 * H:3 * H]
    h_mf = emb_all[:, 3 * H:4 * H]
    h_bp = emb_all[:, 4 * H:5 * H]
    h_cc = emb_all[:, 5 * H:6 * H]
    h_pa = emb_all[:, 6 * H:7 * H]

    # ---- DGL GraphConv(norm='none', activation=relu): relu(A @ (X @ W) + b) ----
    def gcn(k, x):
        xw = mxu(x, gcn_w_ref[k])
        return relu(mxu(gcn_adj_ref[k], xw) + bvec(ROW_GCN_B + k, H))

    # GO_sim_embedding (GCN + residual), GO_to_P + Pathway_to_P (sum-aggregated HGCN)
    mf_feat = gcn(0, h_mf) + h_mf
    bp_feat = gcn(1, h_bp) + h_bp
    cc_feat = gcn(2, h_cc) + h_cc
    h_p_go_path = gcn(3, mf_feat) + gcn(4, bp_feat) + gcn(5, cc_feat) + gcn(6, h_pa)

    # ---- All_Graph_Net: shared HGCN of 8 SAGEConv('pool', relu), applied twice ----
    # TODO(synk): one shared bias per SAGE relation (DGL default); if the reference
    # SAGEConv carries separate fc_self / fc_neigh biases this under-counts one bias.
    def hgcn(h_dr, h_p, h_dis, need_d):
        src_by_group = (h_dis, h_dr, h_p)
        # N-packed pool matmuls: one [Ns,128]x[128,384] per source node type
        pools = [relu(mxu(src_by_group[g], sg_wpool_ref[g])
                      + bvec(ROW_SG_BPOOL + g, 3 * H)) for g in range(3)]

        def sage(k, x_dst):
            g, slot = POOL_GROUP[k]
            pool = pools[g][:, slot * H:(slot + 1) * H]           # [Ns, 128]
            mask = sage_adj_ref[k][:, :, None] > 0                # [Nd, Ns, 1]
            neigh = jnp.max(jnp.where(mask, pool[None, :, :], -jnp.inf), axis=1)
            neigh = jnp.maximum(neigh, 0.0)   # zero-in-degree rows -> 0 (allow_zero_in_degree)
            xcat = jnp.concatenate([x_dst, neigh], axis=1)        # [Nd, 256]
            return relu(mxu(xcat, sg_wsn_ref[k]) + bvec(ROW_SG_B + k, H))

        out_dr = sage(0, h_dr) + sage(1, h_dr) + sage(6, h_dr)
        out_p = sage(2, h_p) + sage(7, h_p)
        out_d = (sage(3, h_dis) + sage(4, h_dis) + sage(5, h_dis)) if need_d else None
        return out_dr, out_p, out_d

    h_dr1, h_p1, h_d1 = hgcn(h_dr_f, h_p_s, h_d, need_d=True)
    h_dr2, h_p2, _ = hgcn(h_dr1, h_p1, h_d1, need_d=False)   # round-2 disease feats unused

    # ---- (drug, protein) pair gather: SMEM indices + dynamic row slices (no one-hot) ----
    dr_cat_ref[...] = jnp.concatenate([h_dr_f, h_dr1, h_dr2], axis=1)            # [N, 384]
    p_cat_ref[...] = jnp.concatenate([h_p_s, h_p1, h_p2, h_p_go_path], axis=1)   # [N, 512]
    bsz = o_ref.shape[0]
    dr_rows = [dr_cat_ref[pl.ds(x_dr_ref[b], 1), :] for b in range(bsz)]
    p_rows = [p_cat_ref[pl.ds(x_p_ref[b], 1), :] for b in range(bsz)]
    h = jnp.concatenate([jnp.concatenate(dr_rows, axis=0),
                         jnp.concatenate(p_rows, axis=0)], axis=1)               # [B, 896]

    # ---- MLP head: (Linear -> BatchNorm1d(batch stats, eps=1e-5) -> ReLU) x 3 ----
    # TODO(synk): BatchNorm uses training-mode batch statistics (fresh module, default
    # affine params); plug running mean/var here for strict eval-mode parity.
    def lin_bn_relu(x, w_ref, rb, rg, rbe, n):
        y = mxu(x, w_ref[...]) + bvec(rb, n)
        mu = jnp.mean(y, axis=0, keepdims=True)
        var = jnp.mean(y * y, axis=0, keepdims=True) - mu * mu    # one-pass batch stats
        yn = (y - mu) * lax.rsqrt(var + 1e-5)
        return relu(yn * bvec(rg, n) + bvec(rbe, n))

    h = lin_bn_relu(h, w1_ref, ROW_B1, ROW_G1, ROW_BE1, 2 * H)
    h = lin_bn_relu(h, w2_ref, ROW_B2, ROW_G2, ROW_BE2, H)
    h = lin_bn_relu(h, w3_ref, ROW_B3, ROW_G3, ROW_BE3, 64)

    # final [64 -> 1] Linear as VPU multiply + lane reduce (no N=1 MXU matmul), + sigmoid
    logit = jnp.sum(h * bvec(ROW_WOUT, 64), axis=-1, keepdims=True) + bvec(ROW_BOUT, 1)
    o_ref[...] = jax.nn.sigmoid(logit)


# ----------------------------- one-time host-side packing --------------------------


def _dense(key, n_in, n_out):
    kw, kb = jax.random.split(key)
    s = 1.0 / float(n_in) ** 0.5
    w = jax.random.uniform(kw, (n_in, n_out), jnp.float32, -s, s)
    b = jax.random.uniform(kb, (1, n_out), jnp.float32, -s, s)
    return w, b


def _round_up(x, m):
    return -(-x // m) * m


def emb_layout(in_dims):
    offs = [0]
    for d in in_dims:
        offs.append(offs[-1] + d)
    return offs, _round_up(max(offs[-1], 1), 128)


def make_packed_params(key, in_dims):
    """in_dims: raw per-type input feature dims in EMB_ORDER order."""
    f32 = jnp.float32
    H = N_HIDDEN
    ks = iter(jax.random.split(key, 64))

    # 7 embedding Linears -> one block-diagonal [K_emb, 896] weight + packed bias row
    offs, k_pad = emb_layout(in_dims)
    w_emb = jnp.zeros((k_pad, 7 * H), f32)
    b_emb = jnp.zeros((1, 7 * H), f32)
    for i, d in enumerate(in_dims):
        w, b = _dense(next(ks), d, H)
        w_emb = w_emb.at[offs[i]:offs[i] + d, i * H:(i + 1) * H].set(w)
        b_emb = b_emb.at[:, i * H:(i + 1) * H].set(b)

    # 7 GraphConv relations
    gcn_w, gcn_b = [], []
    for _ in GCN_KEYS:
        w, b = _dense(next(ks), H, H)
        gcn_w.append(w)
        gcn_b.append(b)
    gcn_w = jnp.stack(gcn_w)                                      # [7,128,128]

    # 8 SAGEConv('pool') relations
    wpool, bpool, wsn, bsn = [], [], [], []
    for _ in SAGE_ORDER:
        k1, k2, k3, k4 = jax.random.split(next(ks), 4)
        w_p, b_p = _dense(k1, H, H)
        w_self, _ = _dense(k2, H, H)
        w_neigh, _ = _dense(k3, H, H)
        _, b = _dense(k4, H, H)
        wpool.append(w_p)
        bpool.append(b_p)
        wsn.append(jnp.concatenate([w_self, w_neigh], axis=0))    # merged [256,128]
        bsn.append(b)
    sg_wsn = jnp.stack(wsn)                                       # [8,256,128]

    # N-pack pool weights by source node type (3 pool matmuls per round instead of 8)
    sg_wpool = jnp.zeros((3, H, 3 * H), f32)
    sg_bpool = jnp.zeros((3, 1, 3 * H), f32)
    for k, (g, slot) in POOL_GROUP.items():
        sg_wpool = sg_wpool.at[g, :, slot * H:(slot + 1) * H].set(wpool[k])
        sg_bpool = sg_bpool.at[g, :, slot * H:(slot + 1) * H].set(bpool[k])

    # MLP head
    w1, b1 = _dense(next(ks), 7 * H, 2 * H)
    w2, b2 = _dense(next(ks), 2 * H, H)
    w3, b3 = _dense(next(ks), H, 64)
    wo, bo = _dense(next(ks), 64, 1)

    # every small [1, N] vector into one [30, 896] array (operand-count reduction)
    bias_pack = jnp.zeros((N_BIAS_ROWS, BIAS_WIDTH), f32)

    def put(bp, row, vec):
        return bp.at[row:row + 1, :vec.shape[1]].set(vec)

    bias_pack = put(bias_pack, ROW_EMB_B, b_emb)
    for k in range(7):
        bias_pack = put(bias_pack, ROW_GCN_B + k, gcn_b[k])
    for g in range(3):
        bias_pack = put(bias_pack, ROW_SG_BPOOL + g, sg_bpool[g])
    for k in range(8):
        bias_pack = put(bias_pack, ROW_SG_B + k, bsn[k])
    bias_pack = put(bias_pack, ROW_B1, b1)
    bias_pack = put(bias_pack, ROW_G1, jnp.ones((1, 2 * H), f32))
    bias_pack = put(bias_pack, ROW_BE1, jnp.zeros((1, 2 * H), f32))
    bias_pack = put(bias_pack, ROW_B2, b2)
    bias_pack = put(bias_pack, ROW_G2, jnp.ones((1, H), f32))
    bias_pack = put(bias_pack, ROW_BE2, jnp.zeros((1, H), f32))
    bias_pack = put(bias_pack, ROW_B3, b3)
    bias_pack = put(bias_pack, ROW_G3, jnp.ones((1, 64), f32))
    bias_pack = put(bias_pack, ROW_BE3, jnp.zeros((1, 64), f32))
    bias_pack = put(bias_pack, ROW_WOUT, wo.T)                    # [1, 64]
    bias_pack = put(bias_pack, ROW_BOUT, bo)                      # [1, 1]

    return {
        "w_emb": w_emb.astype(MXU_DTYPE),
        "gcn_w": gcn_w.astype(MXU_DTYPE),
        "sg_wpool": sg_wpool.astype(MXU_DTYPE),
        "sg_wsn": sg_wsn.astype(MXU_DTYPE),
        "w1": w1.astype(MXU_DTYPE),
        "w2": w2.astype(MXU_DTYPE),
        "w3": w3.astype(MXU_DTYPE),
        "bias_pack": bias_pack,                                   # f32 (post-accum adds)
    }


def pack_node_features(feats, in_dims, n_pad):
    """feats: per-type [n_i, d_i] arrays in EMB_ORDER order (one-time prep)."""
    offs, k_pad = emb_layout(in_dims)
    x = jnp.zeros((n_pad, k_pad), jnp.float32)
    for i, f in enumerate(feats):
        x = x.at[:f.shape[0], offs[i]:offs[i] + f.shape[1]].set(f)
    return x.astype(MXU_DTYPE)


def pack_graphs(G, n_pad):
    """Dense 0/1 adjacencies [dst, src], zero-padded to [n_pad, n_pad] and stacked."""
    def pad(a):
        return jnp.zeros((n_pad, n_pad), jnp.float32).at[:a.shape[0], :a.shape[1]].set(a)
    gcn_adj = jnp.stack([pad(G[r]) for r in GCN_KEYS]).astype(MXU_DTYPE)
    sage_adj = jnp.stack([pad(G[r]) for r in SAGE_ORDER]).astype(MXU_DTYPE)
    return gcn_adj, sage_adj


# ----------------------------- forward pass ----------------------------------------


@jax.jit
def my_net_forward(packed, x_emb, gcn_adj, sage_adj, x_dr, x_p):
    """x_dr / x_p: int32 [B] row indices into the drug / protein feature tables."""
    B = x_dr.shape[0]
    n_pad = x_emb.shape[0]
    k_emb = x_emb.shape[1]
    H = N_HIDDEN

    args = (x_dr, x_p, x_emb, packed["w_emb"], gcn_adj, sage_adj,
            packed["gcn_w"], packed["sg_wpool"], packed["sg_wsn"],
            packed["w1"], packed["w2"], packed["w3"], packed["bias_pack"])

    vmem = pl.BlockSpec(memory_space=pltpu.MemorySpace.VMEM)
    smem = pl.BlockSpec(memory_space=pltpu.MemorySpace.SMEM)

    flops = 2 * (n_pad * k_emb * 7 * H
                 + 7 * (n_pad * H * H + n_pad * n_pad * H)        # GraphConv XW + A(XW)
                 + 2 * 3 * n_pad * H * 3 * H                      # N-packed SAGE pools
                 + 13 * n_pad * 2 * H * H                         # SAGE self/neigh
                 + B * (7 * H * 2 * H + 2 * H * H + H * 64))      # MLP head
    bytes_accessed = sum(int(a.size) * a.dtype.itemsize for a in args) + B * 4

    return pl.pallas_call(
        _my_net_kernel,
        out_shape=jax.ShapeDtypeStruct((B, 1), jnp.float32),
        in_specs=[smem, smem] + [vmem] * (len(args) - 2),
        out_specs=vmem,
        scratch_shapes=[pltpu.VMEM((n_pad, 3 * H), jnp.float32),
                        pltpu.VMEM((n_pad, 4 * H), jnp.float32)],
        cost_estimate=pl.CostEstimate(flops=int(flops), transcendentals=int(4 * B),
                                      bytes_accessed=int(bytes_accessed)),
    )(*args)


# ----------------------------- driver -----------------------------------------------

if __name__ == "__main__":
    dims = dict(
        n_drugs=8, n_proteins=8, n_diseases=8, n_mf=8, n_bp=8, n_cc=8, n_pathways=8,
        n_finger_feature=32, n_seq_feature=32, n_diseases_feature=16,
    )
    B = 8
    in_dims = [dims["n_finger_feature"], dims["n_seq_feature"], dims["n_diseases_feature"],
               dims["n_mf"], dims["n_bp"], dims["n_cc"], dims["n_pathways"]]
    node_counts = [dims["n_drugs"], dims["n_proteins"], dims["n_diseases"],
                   dims["n_mf"], dims["n_bp"], dims["n_cc"], dims["n_pathways"]]
    n_pad = _round_up(max(node_counts), 8)

    key = jax.random.PRNGKey(0)
    kp, kx, kg = jax.random.split(key, 3)
    packed = make_packed_params(kp, in_dims)

    kk = iter(jax.random.split(kx, 16))
    x_dr = jax.random.randint(next(kk), (B,), 0, dims["n_drugs"], dtype=jnp.int32)
    x_p = jax.random.randint(next(kk), (B,), 0, dims["n_proteins"], dtype=jnp.int32)
    finger_feats = jax.random.normal(next(kk), (dims["n_drugs"], dims["n_finger_feature"]), jnp.float32)
    seq_feats = jax.random.normal(next(kk), (dims["n_proteins"], dims["n_seq_feature"]), jnp.float32)
    disease_feat = jax.random.normal(next(kk), (dims["n_diseases"], dims["n_diseases_feature"]), jnp.float32)
    MF_feat = jnp.eye(dims["n_mf"], dtype=jnp.float32)     # identity features, as in the script
    BP_feat = jnp.eye(dims["n_bp"], dtype=jnp.float32)
    CC_feat = jnp.eye(dims["n_cc"], dtype=jnp.float32)
    Pathway_feat = jnp.eye(dims["n_pathways"], dtype=jnp.float32)

    def adj(k, nd, ns):
        return jax.random.bernoulli(k, 0.5, (nd, ns)).astype(jnp.float32)

    gk = iter(jax.random.split(kg, 16))
    G = {
        "MF_sim": adj(next(gk), dims["n_mf"], dims["n_mf"]),
        "BP_sim": adj(next(gk), dims["n_bp"], dims["n_bp"]),
        "CC_sim": adj(next(gk), dims["n_cc"], dims["n_cc"]),
        "MF2P": adj(next(gk), dims["n_proteins"], dims["n_mf"]),
        "BP2P": adj(next(gk), dims["n_proteins"], dims["n_bp"]),
        "CC2P": adj(next(gk), dims["n_proteins"], dims["n_cc"]),
        "Path2P": adj(next(gk), dims["n_proteins"], dims["n_pathways"]),
        "d-t-dr": adj(next(gk), dims["n_drugs"], dims["n_diseases"]),
        "d-m-dr": adj(next(gk), dims["n_drugs"], dims["n_diseases"]),
        "d-p": adj(next(gk), dims["n_proteins"], dims["n_diseases"]),
        "dr-t-d": adj(next(gk), dims["n_diseases"], dims["n_drugs"]),
        "dr-m-d": adj(next(gk), dims["n_diseases"], dims["n_drugs"]),
        "p-d": adj(next(gk), dims["n_diseases"], dims["n_proteins"]),
        "DDI": adj(next(gk), dims["n_drugs"], dims["n_drugs"]),
        "PPI": adj(next(gk), dims["n_proteins"], dims["n_proteins"]),
    }

    # one-time graph / feature packing (hoisted out of the per-call forward path)
    x_emb = pack_node_features(
        [finger_feats, seq_feats, disease_feat, MF_feat, BP_feat, CC_feat, Pathway_feat],
        in_dims, n_pad)
    gcn_adj, sage_adj = pack_graphs(G, n_pad)

    out = my_net_forward(packed, x_emb, gcn_adj, sage_adj, x_dr, x_p)
    out = jax.block_until_ready(out)
    assert out.shape == (B, 1)
    assert bool(jnp.all((out >= 0.0) & (out <= 1.0)))
    print("KERNEL_OK")
</pallas_src>

<mosaic_0001>
module attributes {stable_mosaic.version = 11 : i64} {
  func.func @_my_net_kernel(%arg0: memref<8xi32, #tpu.memory_space<smem>>, %arg1: memref<8xi32, #tpu.memory_space<smem>>, %arg2: memref<8x128xbf16, #tpu.memory_space<vmem>>, %arg3: memref<128x896xbf16, #tpu.memory_space<vmem>>, %arg4: memref<7x8x8xbf16, #tpu.memory_space<vmem>>, %arg5: memref<8x8x8xbf16, #tpu.memory_space<vmem>>, %arg6: memref<7x128x128xbf16, #tpu.memory_space<vmem>>, %arg7: memref<3x128x384xbf16, #tpu.memory_space<vmem>>, %arg8: memref<8x256x128xbf16, #tpu.memory_space<vmem>>, %arg9: memref<896x256xbf16, #tpu.memory_space<vmem>>, %arg10: memref<256x128xbf16, #tpu.memory_space<vmem>>, %arg11: memref<128x64xbf16, #tpu.memory_space<vmem>>, %arg12: memref<30x896xf32, #tpu.memory_space<vmem>>, %arg13: memref<8x1xf32, #tpu.memory_space<vmem>>, %arg14: memref<8x384xf32, #tpu.memory_space<vmem>>, %arg15: memref<8x512xf32, #tpu.memory_space<vmem>>) attributes {dimension_semantics = [], scalar_prefetch = 0 : i64, scratch_operands = 2 : i64, tpu.core_type = #tpu.core_type<tc>} {
    %c0 = arith.constant 0 : index
    %c0_0 = arith.constant 0 : index
    %0 = vector.load %arg2[%c0, %c0_0] : memref<8x128xbf16, #tpu.memory_space<vmem>>, vector<8x128xbf16>
    %c0_1 = arith.constant 0 : index
    %c0_2 = arith.constant 0 : index
    %1 = vector.load %arg3[%c0_1, %c0_2] : memref<128x896xbf16, #tpu.memory_space<vmem>>, vector<128x896xbf16>
    %cst = arith.constant dense<0.000000e+00> : vector<8x896xf32>
    %2 = tpu.matmul %0, %1, %cst {dimension_numbers = #tpu.dot_dimension_numbers<[1], [0], [0], [1], [0, 0, 1, 1], [], []>} : vector<8x128xbf16>, vector<128x896xbf16>, vector<8x896xf32> -> vector<8x896xf32>
    %c0_3 = arith.constant 0 : index
    %c0_4 = arith.constant 0 : index
    %3 = vector.load %arg12[%c0_3, %c0_4] : memref<30x896xf32, #tpu.memory_space<vmem>>, vector<1x896xf32>
    %4 = vector.broadcast %3 : vector<1x896xf32> to vector<8x896xf32>
    %5 = arith.addf %2, %4 : vector<8x896xf32>
    %cst_5 = arith.constant 0.000000e+00 : f32
    %6 = vector.broadcast %cst_5 : f32 to vector<8x896xf32>
    %7 = arith.maximumf %5, %6 : vector<8x896xf32>
    %8 = vector.extract_strided_slice %7 {offsets = [0, 0], sizes = [8, 128], strides = [1, 1]} : vector<8x896xf32> to vector<8x128xf32>
    %9 = vector.extract_strided_slice %7 {offsets = [0, 128], sizes = [8, 128], strides = [1, 1]} : vector<8x896xf32> to vector<8x128xf32>
    %10 = vector.extract_strided_slice %7 {offsets = [0, 256], sizes = [8, 128], strides = [1, 1]} : vector<8x896xf32> to vector<8x128xf32>
    %11 = vector.extract_strided_slice %7 {offsets = [0, 384], sizes = [8, 128], strides = [1, 1]} : vector<8x896xf32> to vector<8x128xf32>
    %12 = vector.extract_strided_slice %7 {offsets = [0, 512], sizes = [8, 128], strides = [1, 1]} : vector<8x896xf32> to vector<8x128xf32>
    %13 = vector.extract_strided_slice %7 {offsets = [0, 640], sizes = [8, 128], strides = [1, 1]} : vector<8x896xf32> to vector<8x128xf32>
    %14 = vector.extract_strided_slice %7 {offsets = [0, 768], sizes = [8, 128], strides = [1, 1]} : vector<8x896xf32> to vector<8x128xf32>
    %c0_6 = arith.constant 0 : index
    %c0_7 = arith.constant 0 : index
    %c0_8 = arith.constant 0 : index
    %15 = vector.load %arg6[%c0_6, %c0_7, %c0_8] : memref<7x128x128xbf16, #tpu.memory_space<vmem>>, vector<1x128x128xbf16>
    %16 = vector.shape_cast %15 : vector<1x128x128xbf16> to vector<128x128xbf16>
    %17 = arith.truncf %11 : vector<8x128xf32> to vector<8x128xbf16>
    %cst_9 = arith.constant dense<0.000000e+00> : vector<8x128xf32>
    %18 = tpu.matmul %17, %16, %cst_9 {dimension_numbers = #tpu.dot_dimension_numbers<[1], [0], [0], [1], [0, 0, 1, 1], [], []>} : vector<8x128xbf16>, vector<128x128xbf16>, vector<8x128xf32> -> vector<8x128xf32>
    %c0_10 = arith.constant 0 : index
    %c0_11 = arith.constant 0 : index
    %c0_12 = arith.constant 0 : index
    %19 = vector.load %arg4[%c0_10, %c0_11, %c0_12] : memref<7x8x8xbf16, #tpu.memory_space<vmem>>, vector<1x8x8xbf16>
    %20 = vector.shape_cast %19 : vector<1x8x8xbf16> to vector<8x8xbf16>
    %21 = arith.truncf %18 : vector<8x128xf32> to vector<8x128xbf16>
    %cst_13 = arith.constant dense<0.000000e+00> : vector<8x128xf32>
    %22 = tpu.matmul %20, %21, %cst_13 {dimension_numbers = #tpu.dot_dimension_numbers<[1], [0], [0], [1], [0, 0, 1, 1], [], []>} : vector<8x8xbf16>, vector<8x128xbf16>, vector<8x128xf32> -> vector<8x128xf32>
    %c1 = arith.constant 1 : index
    %c0_14 = arith.constant 0 : index
    %23 = vector.load %arg12[%c1, %c0_14] : memref<30x896xf32, #tpu.memory_space<vmem>>, vector<1x128xf32>
    %24 = vector.broadcast %23 : vector<1x128xf32> to vector<8x128xf32>
    %25 = arith.addf %22, %24 : vector<8x128xf32>
    %cst_15 = arith.constant 0.000000e+00 : f32
    %26 = vector.broadcast %cst_15 : f32 to vector<8x128xf32>
    %27 = arith.maximumf %25, %26 : vector<8x128xf32>
    %28 = arith.addf %27, %11 : vector<8x128xf32>
    %c1_16 = arith.constant 1 : index
    %c0_17 = arith.constant 0 : index
    %c0_18 = arith.constant 0 : index
    %29 = vector.load %arg6[%c1_16, %c0_17, %c0_18] : memref<7x128x128xbf16, #tpu.memory_space<vmem>>, vector<1x128x128xbf16>
    %30 = vector.shape_cast %29 : vector<1x128x128xbf16> to vector<128x128xbf16>
    %31 = arith.truncf %12 : vector<8x128xf32> to vector<8x128xbf16>
    %cst_19 = arith.constant dense<0.000000e+00> : vector<8x128xf32>
    %32 = tpu.matmul %31, %30, %cst_19 {dimension_numbers = #tpu.dot_dimension_numbers<[1], [0], [0], [1], [0, 0, 1, 1], [], []>} : vector<8x128xbf16>, vector<128x128xbf16>, vector<8x128xf32> -> vector<8x128xf32>
    %c1_20 = arith.constant 1 : index
    %c0_21 = arith.constant 0 : index
    %c0_22 = arith.constant 0 : index
    %33 = vector.load %arg4[%c1_20, %c0_21, %c0_22] : memref<7x8x8xbf16, #tpu.memory_space<vmem>>, vector<1x8x8xbf16>
    %34 = vector.shape_cast %33 : vector<1x8x8xbf16> to vector<8x8xbf16>
    %35 = arith.truncf %32 : vector<8x128xf32> to vector<8x128xbf16>
    %cst_23 = arith.constant dense<0.000000e+00> : vector<8x128xf32>
    %36 = tpu.matmul %34, %35, %cst_23 {dimension_numbers = #tpu.dot_dimension_numbers<[1], [0], [0], [1], [0, 0, 1, 1], [], []>} : vector<8x8xbf16>, vector<8x128xbf16>, vector<8x128xf32> -> vector<8x128xf32>
    %c2 = arith.constant 2 : index
    %c0_24 = arith.constant 0 : index
    %37 = vector.load %arg12[%c2, %c0_24] : memref<30x896xf32, #tpu.memory_space<vmem>>, vector<1x128xf32>
    %38 = vector.broadcast %37 : vector<1x128xf32> to vector<8x128xf32>
    %39 = arith.addf %36, %38 : vector<8x128xf32>
    %cst_25 = arith.constant 0.000000e+00 : f32
    %40 = vector.broadcast %cst_25 : f32 to vector<8x128xf32>
    %41 = arith.maximumf %39, %40 : vector<8x128xf32>
    %42 = arith.addf %41, %12 : vector<8x128xf32>
    %c2_26 = arith.constant 2 : index
    %c0_27 = arith.constant 0 : index
    %c0_28 = arith.constant 0 : index
    %43 = vector.load %arg6[%c2_26, %c0_27, %c0_28] : memref<7x128x128xbf16, #tpu.memory_space<vmem>>, vector<1x128x128xbf16>
    %44 = vector.shape_cast %43 : vector<1x128x128xbf16> to vector<128x128xbf16>
    %45 = arith.truncf %13 : vector<8x128xf32> to vector<8x128xbf16>
    %cst_29 = arith.constant dense<0.000000e+00> : vector<8x128xf32>
    %46 = tpu.matmul %45, %44, %cst_29 {dimension_numbers = #tpu.dot_dimension_numbers<[1], [0], [0], [1], [0, 0, 1, 1], [], []>} : vector<8x128xbf16>, vector<128x128xbf16>, vector<8x128xf32> -> vector<8x128xf32>
    %c2_30 = arith.constant 2 : index
    %c0_31 = arith.constant 0 : index
    %c0_32 = arith.constant 0 : index
    %47 = vector.load %arg4[%c2_30, %c0_31, %c0_32] : memref<7x8x8xbf16, #tpu.memory_space<vmem>>, vector<1x8x8xbf16>
    %48 = vector.shape_cast %47 : vector<1x8x8xbf16> to vector<8x8xbf16>
    %49 = arith.truncf %46 : vector<8x128xf32> to vector<8x128xbf16>
    %cst_33 = arith.constant dense<0.000000e+00> : vector<8x128xf32>
    %50 = tpu.matmul %48, %49, %cst_33 {dimension_numbers = #tpu.dot_dimension_numbers<[1], [0], [0], [1], [0, 0, 1, 1], [], []>} : vector<8x8xbf16>, vector<8x128xbf16>, vector<8x128xf32> -> vector<8x128xf32>
    %c3 = arith.constant 3 : index
    %c0_34 = arith.constant 0 : index
    %51 = vector.load %arg12[%c3, %c0_34] : memref<30x896xf32, #tpu.memory_space<vmem>>, vector<1x128xf32>
    %52 = vector.broadcast %51 : vector<1x128xf32> to vector<8x128xf32>
    %53 = arith.addf %50, %52 : vector<8x128xf32>
    %cst_35 = arith.constant 0.000000e+00 : f32
    %54 = vector.broadcast %cst_35 : f32 to vector<8x128xf32>
    %55 = arith.maximumf %53, %54 : vector<8x128xf32>
    %56 = arith.addf %55, %13 : vector<8x128xf32>
    %c3_36 = arith.constant 3 : index
    %c0_37 = arith.constant 0 : index
    %c0_38 = arith.constant 0 : index
    %57 = vector.load %arg6[%c3_36, %c0_37, %c0_38] : memref<7x128x128xbf16, #tpu.memory_space<vmem>>, vector<1x128x128xbf16>
    %58 = vector.shape_cast %57 : vector<1x128x128xbf16> to vector<128x128xbf16>
    %59 = arith.truncf %28 : vector<8x128xf32> to vector<8x128xbf16>
    %cst_39 = arith.constant dense<0.000000e+00> : vector<8x128xf32>
    %60 = tpu.matmul %59, %58, %cst_39 {dimension_numbers = #tpu.dot_dimension_numbers<[1], [0], [0], [1], [0, 0, 1, 1], [], []>} : vector<8x128xbf16>, vector<128x128xbf16>, vector<8x128xf32> -> vector<8x128xf32>
    %c3_40 = arith.constant 3 : index
    %c0_41 = arith.constant 0 : index
    %c0_42 = arith.constant 0 : index
    %61 = vector.load %arg4[%c3_40, %c0_41, %c0_42] : memref<7x8x8xbf16, #tpu.memory_space<vmem>>, vector<1x8x8xbf16>
    %62 = vector.shape_cast %61 : vector<1x8x8xbf16> to vector<8x8xbf16>
    %63 = arith.truncf %60 : vector<8x128xf32> to vector<8x128xbf16>
    %cst_43 = arith.constant dense<0.000000e+00> : vector<8x128xf32>
    %64 = tpu.matmul %62, %63, %cst_43 {dimension_numbers = #tpu.dot_dimension_numbers<[1], [0], [0], [1], [0, 0, 1, 1], [], []>} : vector<8x8xbf16>, vector<8x128xbf16>, vector<8x128xf32> -> vector<8x128xf32>
    %c4 = arith.constant 4 : index
    %c0_44 = arith.constant 0 : index
    %65 = vector.load %arg12[%c4, %c0_44] : memref<30x896xf32, #tpu.memory_space<vmem>>, vector<1x128xf32>
    %66 = vector.broadcast %65 : vector<1x128xf32> to vector<8x128xf32>
    %67 = arith.addf %64, %66 : vector<8x128xf32>
    %cst_45 = arith.constant 0.000000e+00 : f32
    %68 = vector.broadcast %cst_45 : f32 to vector<8x128xf32>
    %69 = arith.maximumf %67, %68 : vector<8x128xf32>
    %c4_46 = arith.constant 4 : index
    %c0_47 = arith.constant 0 : index
    %c0_48 = arith.constant 0 : index
    %70 = vector.load %arg6[%c4_46, %c0_47, %c0_48] : memref<7x128x128xbf16, #tpu.memory_space<vmem>>, vector<1x128x128xbf16>
    %71 = vector.shape_cast %70 : vector<1x128x128xbf16> to vector<128x128xbf16>
    %72 = arith.truncf %42 : vector<8x128xf32> to vector<8x128xbf16>
    %cst_49 = arith.constant dense<0.000000e+00> : vector<8x128xf32>
    %73 = tpu.matmul %72, %71, %cst_49 {dimension_numbers = #tpu.dot_dimension_numbers<[1], [0], [0], [1], [0, 0, 1, 1], [], []>} : vector<8x128xbf16>, vector<128x128xbf16>, vector<8x128xf32> -> vector<8x128xf32>
    %c4_50 = arith.constant 4 : index
    %c0_51 = arith.constant 0 : index
    %c0_52 = arith.constant 0 : index
    %74 = vector.load %arg4[%c4_50, %c0_51, %c0_52] : memref<7x8x8xbf16, #tpu.memory_space<vmem>>, vector<1x8x8xbf16>
    %75 = vector.shape_cast %74 : vector<1x8x8xbf16> to vector<8x8xbf16>
    %76 = arith.truncf %73 : vector<8x128xf32> to vector<8x128xbf16>
    %cst_53 = arith.constant dense<0.000000e+00> : vector<8x128xf32>
    %77 = tpu.matmul %75, %76, %cst_53 {dimension_numbers = #tpu.dot_dimension_numbers<[1], [0], [0], [1], [0, 0, 1, 1], [], []>} : vector<8x8xbf16>, vector<8x128xbf16>, vector<8x128xf32> -> vector<8x128xf32>
    %c5 = arith.constant 5 : index
    %c0_54 = arith.constant 0 : index
    %78 = vector.load %arg12[%c5, %c0_54] : memref<30x896xf32, #tpu.memory_space<vmem>>, vector<1x128xf32>
    %79 = vector.broadcast %78 : vector<1x128xf32> to vector<8x128xf32>
    %80 = arith.addf %77, %79 : vector<8x128xf32>
    %cst_55 = arith.constant 0.000000e+00 : f32
    %81 = vector.broadcast %cst_55 : f32 to vector<8x128xf32>
    %82 = arith.maximumf %80, %81 : vector<8x128xf32>
    %83 = arith.addf %69, %82 : vector<8x128xf32>
    %c5_56 = arith.constant 5 : index
    %c0_57 = arith.constant 0 : index
    %c0_58 = arith.constant 0 : index
    %84 = vector.load %arg6[%c5_56, %c0_57, %c0_58] : memref<7x128x128xbf16, #tpu.memory_space<vmem>>, vector<1x128x128xbf16>
    %85 = vector.shape_cast %84 : vector<1x128x128xbf16> to vector<128x128xbf16>
    %86 = arith.truncf %56 : vector<8x128xf32> to vector<8x128xbf16>
    %cst_59 = arith.constant dense<0.000000e+00> : vector<8x128xf32>
    %87 = tpu.matmul %86, %85, %cst_59 {dimension_numbers = #tpu.dot_dimension_numbers<[1], [0], [0], [1], [0, 0, 1, 1], [], []>} : vector<8x128xbf16>, vector<128x128xbf16>, vector<8x128xf32> -> vector<8x128xf32>
    %c5_60 = arith.constant 5 : index
    %c0_61 = arith.constant 0 : index
    %c0_62 = arith.constant 0 : index
    %88 = vector.load %arg4[%c5_60, %c0_61, %c0_62] : memref<7x8x8xbf16, #tpu.memory_space<vmem>>, vector<1x8x8xbf16>
    %89 = vector.shape_cast %88 : vector<1x8x8xbf16> to vector<8x8xbf16>
    %90 = arith.truncf %87 : vector<8x128xf32> to vector<8x128xbf16>
    %cst_63 = arith.constant dense<0.000000e+00> : vector<8x128xf32>
    %91 = tpu.matmul %89, %90, %cst_63 {dimension_numbers = #tpu.dot_dimension_numbers<[1], [0], [0], [1], [0, 0, 1, 1], [], []>} : vector<8x8xbf16>, vector<8x128xbf16>, vector<8x128xf32> -> vector<8x128xf32>
    %c6 = arith.constant 6 : index
    %c0_64 = arith.constant 0 : index
    %92 = vector.load %arg12[%c6, %c0_64] : memref<30x896xf32, #tpu.memory_space<vmem>>, vector<1x128xf32>
    %93 = vector.broadcast %92 : vector<1x128xf32> to vector<8x128xf32>
    %94 = arith.addf %91, %93 : vector<8x128xf32>
    %cst_65 = arith.constant 0.000000e+00 : f32
    %95 = vector.broadcast %cst_65 : f32 to vector<8x128xf32>
    %96 = arith.maximumf %94, %95 : vector<8x128xf32>
    %97 = arith.addf %83, %96 : vector<8x128xf32>
    %c6_66 = arith.constant 6 : index
    %c0_67 = arith.constant 0 : index
    %c0_68 = arith.constant 0 : index
    %98 = vector.load %arg6[%c6_66, %c0_67, %c0_68] : memref<7x128x128xbf16, #tpu.memory_space<vmem>>, vector<1x128x128xbf16>
    %99 = vector.shape_cast %98 : vector<1x128x128xbf16> to vector<128x128xbf16>
    %100 = arith.truncf %14 : vector<8x128xf32> to vector<8x128xbf16>
    %cst_69 = arith.constant dense<0.000000e+00> : vector<8x128xf32>
    %101 = tpu.matmul %100, %99, %cst_69 {dimension_numbers = #tpu.dot_dimension_numbers<[1], [0], [0], [1], [0, 0, 1, 1], [], []>} : vector<8x128xbf16>, vector<128x128xbf16>, vector<8x128xf32> -> vector<8x128xf32>
    %c6_70 = arith.constant 6 : index
    %c0_71 = arith.constant 0 : index
    %c0_72 = arith.constant 0 : index
    %102 = vector.load %arg4[%c6_70, %c0_71, %c0_72] : memref<7x8x8xbf16, #tpu.memory_space<vmem>>, vector<1x8x8xbf16>
    %103 = vector.shape_cast %102 : vector<1x8x8xbf16> to vector<8x8xbf16>
    %104 = arith.truncf %101 : vector<8x128xf32> to vector<8x128xbf16>
    %cst_73 = arith.constant dense<0.000000e+00> : vector<8x128xf32>
    %105 = tpu.matmul %103, %104, %cst_73 {dimension_numbers = #tpu.dot_dimension_numbers<[1], [0], [0], [1], [0, 0, 1, 1], [], []>} : vector<8x8xbf16>, vector<8x128xbf16>, vector<8x128xf32> -> vector<8x128xf32>
    %c7 = arith.constant 7 : index
    %c0_74 = arith.constant 0 : index
    %106 = vector.load %arg12[%c7, %c0_74] : memref<30x896xf32, #tpu.memory_space<vmem>>, vector<1x128xf32>
    %107 = vector.broadcast %106 : vector<1x128xf32> to vector<8x128xf32>
    %108 = arith.addf %105, %107 : vector<8x128xf32>
    %cst_75 = arith.constant 0.000000e+00 : f32
    %109 = vector.broadcast %cst_75 : f32 to vector<8x128xf32>
    %110 = arith.maximumf %108, %109 : vector<8x128xf32>
    %111 = arith.addf %97, %110 : vector<8x128xf32>
    %c0_76 = arith.constant 0 : index
    %c0_77 = arith.constant 0 : index
    %c0_78 = arith.constant 0 : index
    %112 = vector.load %arg7[%c0_76, %c0_77, %c0_78] : memref<3x128x384xbf16, #tpu.memory_space<vmem>>, vector<1x128x384xbf16>
    %113 = vector.shape_cast %112 : vector<1x128x384xbf16> to vector<128x384xbf16>
    %114 = arith.truncf %10 : vector<8x128xf32> to vector<8x128xbf16>
    %cst_79 = arith.constant dense<0.000000e+00> : vector<8x384xf32>
    %115 = tpu.matmul %114, %113, %cst_79 {dimension_numbers = #tpu.dot_dimension_numbers<[1], [0], [0], [1], [0, 0, 1, 1], [], []>} : vector<8x128xbf16>, vector<128x384xbf16>, vector<8x384xf32> -> vector<8x384xf32>
    %c8 = arith.constant 8 : index
    %c0_80 = arith.constant 0 : index
    %116 = vector.load %arg12[%c8, %c0_80] : memref<30x896xf32, #tpu.memory_space<vmem>>, vector<1x384xf32>
    %117 = vector.broadcast %116 : vector<1x384xf32> to vector<8x384xf32>
    %118 = arith.addf %115, %117 : vector<8x384xf32>
    %cst_81 = arith.constant 0.000000e+00 : f32
    %119 = vector.broadcast %cst_81 : f32 to vector<8x384xf32>
    %120 = arith.maximumf %118, %119 : vector<8x384xf32>
    %c1_82 = arith.constant 1 : index
    %c0_83 = arith.constant 0 : index
    %c0_84 = arith.constant 0 : index
    %121 = vector.load %arg7[%c1_82, %c0_83, %c0_84] : memref<3x128x384xbf16, #tpu.memory_space<vmem>>, vector<1x128x384xbf16>
    %122 = vector.shape_cast %121 : vector<1x128x384xbf16> to vector<128x384xbf16>
    %123 = arith.truncf %8 : vector<8x128xf32> to vector<8x128xbf16>
    %cst_85 = arith.constant dense<0.000000e+00> : vector<8x384xf32>
    %124 = tpu.matmul %123, %122, %cst_85 {dimension_numbers = #tpu.dot_dimension_numbers<[1], [0], [0], [1], [0, 0, 1, 1], [], []>} : vector<8x128xbf16>, vector<128x384xbf16>, vector<8x384xf32> -> vector<8x384xf32>
    %c9 = arith.constant 9 : index
    %c0_86 = arith.constant 0 : index
    %125 = vector.load %arg12[%c9, %c0_86] : memref<30x896xf32, #tpu.memory_space<vmem>>, vector<1x384xf32>
    %126 = vector.broadcast %125 : vector<1x384xf32> to vector<8x384xf32>
    %127 = arith.addf %124, %126 : vector<8x384xf32>
    %cst_87 = arith.constant 0.000000e+00 : f32
    %128 = vector.broadcast %cst_87 : f32 to vector<8x384xf32>
    %129 = arith.maximumf %127, %128 : vector<8x384xf32>
    %c2_88 = arith.constant 2 : index
    %c0_89 = arith.constant 0 : index
    %c0_90 = arith.constant 0 : index
    %130 = vector.load %arg7[%c2_88, %c0_89, %c0_90] : memref<3x128x384xbf16, #tpu.memory_space<vmem>>, vector<1x128x384xbf16>
    %131 = vector.shape_cast %130 : vector<1x128x384xbf16> to vector<128x384xbf16>
    %132 = arith.truncf %9 : vector<8x128xf32> to vector<8x128xbf16>
    %cst_91 = arith.constant dense<0.000000e+00> : vector<8x384xf32>
    %133 = tpu.matmul %132, %131, %cst_91 {dimension_numbers = #tpu.dot_dimension_numbers<[1], [0], [0], [1], [0, 0, 1, 1], [], []>} : vector<8x128xbf16>, vector<128x384xbf16>, vector<8x384xf32> -> vector<8x384xf32>
    %c10 = arith.constant 10 : index
    %c0_92 = arith.constant 0 : index
    %134 = vector.load %arg12[%c10, %c0_92] : memref<30x896xf32, #tpu.memory_space<vmem>>, vector<1x384xf32>
    %135 = vector.broadcast %134 : vector<1x384xf32> to vector<8x384xf32>
    %136 = arith.addf %133, %135 : vector<8x384xf32>
    %cst_93 = arith.constant 0.000000e+00 : f32
    %137 = vector.broadcast %cst_93 : f32 to vector<8x384xf32>
    %138 = arith.maximumf %136, %137 : vector<8x384xf32>
    %139 = vector.extract_strided_slice %120 {offsets = [0, 0], sizes = [8, 128], strides = [1, 1]} : vector<8x384xf32> to vector<8x128xf32>
    %c0_94 = arith.constant 0 : index
    %c0_95 = arith.constant 0 : index
    %c0_96 = arith.constant 0 : index
    %140 = vector.load %arg5[%c0_94, %c0_95, %c0_96] : memref<8x8x8xbf16, #tpu.memory_space<vmem>>, vector<1x8x8xbf16>
    %141 = vector.shape_cast %140 : vector<1x8x8xbf16> to vector<8x8xbf16>
    %142 = vector.shape_cast %141 : vector<8x8xbf16> to vector<8x8x1xbf16>
    %cst_97 = arith.constant 0.000000e+00 : bf16
    %143 = vector.broadcast %cst_97 : bf16 to vector<8x8x1xbf16>
    %144 = arith.cmpf ogt, %142, %143 : vector<8x8x1xbf16>
    %145 = vector.shape_cast %139 : vector<8x128xf32> to vector<1x8x128xf32>
    %cst_98 = arith.constant 0xFF800000 : f32
    %146 = vector.shape_cast %144 : vector<8x8x1xi1> to vector<8x8x1xi1>
    %147 = vector.broadcast %146 : vector<8x8x1xi1> to vector<8x8x128xi1>
    %148 = vector.shape_cast %145 : vector<1x8x128xf32> to vector<1x8x128xf32>
    %149 = vector.broadcast %148 : vector<1x8x128xf32> to vector<8x8x128xf32>
    %150 = vector.broadcast %cst_98 : f32 to vector<8x8x128xf32>
    %151 = arith.select %147, %149, %150 : vector<8x8x128xi1>, vector<8x8x128xf32>
    %cst_99 = arith.constant dense<0xFF800000> : vector<8x128xf32>
    %152 = vector.multi_reduction <maximumf>, %151, %cst_99 [1] : vector<8x8x128xf32> to vector<8x128xf32>
    %cst_100 = arith.constant 0.000000e+00 : f32
    %153 = vector.broadcast %cst_100 : f32 to vector<8x128xf32>
    %154 = arith.maximumf %152, %153 : vector<8x128xf32>
    %155 = tpu.concatenate %8, %154 in 1 : vector<8x128xf32>, vector<8x128xf32> -> vector<8x256xf32>
    %c0_101 = arith.constant 0 : index
    %c0_102 = arith.constant 0 : index
    %c0_103 = arith.constant 0 : index
    %156 = vector.load %arg8[%c0_101, %c0_102, %c0_103] : memref<8x256x128xbf16, #tpu.memory_space<vmem>>, vector<1x256x128xbf16>
    %157 = vector.shape_cast %156 : vector<1x256x128xbf16> to vector<256x128xbf16>
    %158 = arith.truncf %155 : vector<8x256xf32> to vector<8x256xbf16>
    %cst_104 = arith.constant dense<0.000000e+00> : vector<8x128xf32>
    %159 = tpu.matmul %158, %157, %cst_104 {dimension_numbers = #tpu.dot_dimension_numbers<[1], [0], [0], [1], [0, 0, 1, 1], [], []>} : vector<8x256xbf16>, vector<256x128xbf16>, vector<8x128xf32> -> vector<8x128xf32>
    %c11 = arith.constant 11 : index
    %c0_105 = arith.constant 0 : index
    %160 = vector.load %arg12[%c11, %c0_105] : memref<30x896xf32, #tpu.memory_space<vmem>>, vector<1x128xf32>
    %161 = vector.broadcast %160 : vector<1x128xf32> to vector<8x128xf32>
    %162 = arith.addf %159, %161 : vector<8x128xf32>
    %cst_106 = arith.constant 0.000000e+00 : f32
    %163 = vector.broadcast %cst_106 : f32 to vector<8x128xf32>
    %164 = arith.maximumf %162, %163 : vector<8x128xf32>
    %165 = vector.extract_strided_slice %120 {offsets = [0, 128], sizes = [8, 128], strides = [1, 1]} : vector<8x384xf32> to vector<8x128xf32>
    %c1_107 = arith.constant 1 : index
    %c0_108 = arith.constant 0 : index
    %c0_109 = arith.constant 0 : index
    %166 = vector.load %arg5[%c1_107, %c0_108, %c0_109] : memref<8x8x8xbf16, #tpu.memory_space<vmem>>, vector<1x8x8xbf16>
    %167 = vector.shape_cast %166 : vector<1x8x8xbf16> to vector<8x8xbf16>
    %168 = vector.shape_cast %167 : vector<8x8xbf16> to vector<8x8x1xbf16>
    %cst_110 = arith.constant 0.000000e+00 : bf16
    %169 = vector.broadcast %cst_110 : bf16 to vector<8x8x1xbf16>
    %170 = arith.cmpf ogt, %168, %169 : vector<8x8x1xbf16>
    %171 = vector.shape_cast %165 : vector<8x128xf32> to vector<1x8x128xf32>
    %cst_111 = arith.constant 0xFF800000 : f32
    %172 = vector.shape_cast %170 : vector<8x8x1xi1> to vector<8x8x1xi1>
    %173 = vector.broadcast %172 : vector<8x8x1xi1> to vector<8x8x128xi1>
    %174 = vector.shape_cast %171 : vector<1x8x128xf32> to vector<1x8x128xf32>
    %175 = vector.broadcast %174 : vector<1x8x128xf32> to vector<8x8x128xf32>
    %176 = vector.broadcast %cst_111 : f32 to vector<8x8x128xf32>
    %177 = arith.select %173, %175, %176 : vector<8x8x128xi1>, vector<8x8x128xf32>
    %cst_112 = arith.constant dense<0xFF800000> : vector<8x128xf32>
    %178 = vector.multi_reduction <maximumf>, %177, %cst_112 [1] : vector<8x8x128xf32> to vector<8x128xf32>
    %cst_113 = arith.constant 0.000000e+00 : f32
    %179 = vector.broadcast %cst_113 : f32 to vector<8x128xf32>
    %180 = arith.maximumf %178, %179 : vector<8x128xf32>
    %181 = tpu.concatenate %8, %180 in 1 : vector<8x128xf32>, vector<8x128xf32> -> vector<8x256xf32>
    %c1_114 = arith.constant 1 : index
    %c0_115 = arith.constant 0 : index
    %c0_116 = arith.constant 0 : index
    %182 = vector.load %arg8[%c1_114, %c0_115, %c0_116] : memref<8x256x128xbf16, #tpu.memory_space<vmem>>, vector<1x256x128xbf16>
    %183 = vector.shape_cast %182 : vector<1x256x128xbf16> to vector<256x128xbf16>
    %184 = arith.truncf %181 : vector<8x256xf32> to vector<8x256xbf16>
    %cst_117 = arith.constant dense<0.000000e+00> : vector<8x128xf32>
    %185 = tpu.matmul %184, %183, %cst_117 {dimension_numbers = #tpu.dot_dimension_numbers<[1], [0], [0], [1], [0, 0, 1, 1], [], []>} : vector<8x256xbf16>, vector<256x128xbf16>, vector<8x128xf32> -> vector<8x128xf32>
    %c12 = arith.constant 12 : index
    %c0_118 = arith.constant 0 : index
    %186 = vector.load %arg12[%c12, %c0_118] : memref<30x896xf32, #tpu.memory_space<vmem>>, vector<1x128xf32>
    %187 = vector.broadcast %186 : vector<1x128xf32> to vector<8x128xf32>
    %188 = arith.addf %185, %187 : vector<8x128xf32>
    %cst_119 = arith.constant 0.000000e+00 : f32
    %189 = vector.broadcast %cst_119 : f32 to vector<8x128xf32>
    %190 = arith.maximumf %188, %189 : vector<8x128xf32>
    %191 = arith.addf %164, %190 : vector<8x128xf32>
    %192 = vector.extract_strided_slice %129 {offsets = [0, 256], sizes = [8, 128], strides = [1, 1]} : vector<8x384xf32> to vector<8x128xf32>
    %c6_120 = arith.constant 6 : index
    %c0_121 = arith.constant 0 : index
    %c0_122 = arith.constant 0 : index
    %193 = vector.load %arg5[%c6_120, %c0_121, %c0_122] : memref<8x8x8xbf16, #tpu.memory_space<vmem>>, vector<1x8x8xbf16>
    %194 = vector.shape_cast %193 : vector<1x8x8xbf16> to vector<8x8xbf16>
    %195 = vector.shape_cast %194 : vector<8x8xbf16> to vector<8x8x1xbf16>
    %cst_123 = arith.constant 0.000000e+00 : bf16
    %196 = vector.broadcast %cst_123 : bf16 to vector<8x8x1xbf16>
    %197 = arith.cmpf ogt, %195, %196 : vector<8x8x1xbf16>
    %198 = vector.shape_cast %192 : vector<8x128xf32> to vector<1x8x128xf32>
    %cst_124 = arith.constant 0xFF800000 : f32
    %199 = vector.shape_cast %197 : vector<8x8x1xi1> to vector<8x8x1xi1>
    %200 = vector.broadcast %199 : vector<8x8x1xi1> to vector<8x8x128xi1>
    %201 = vector.shape_cast %198 : vector<1x8x128xf32> to vector<1x8x128xf32>
    %202 = vector.broadcast %201 : vector<1x8x128xf32> to vector<8x8x128xf32>
    %203 = vector.broadcast %cst_124 : f32 to vector<8x8x128xf32>
    %204 = arith.select %200, %202, %203 : vector<8x8x128xi1>, vector<8x8x128xf32>
    %cst_125 = arith.constant dense<0xFF800000> : vector<8x128xf32>
    %205 = vector.multi_reduction <maximumf>, %204, %cst_125 [1] : vector<8x8x128xf32> to vector<8x128xf32>
    %cst_126 = arith.constant 0.000000e+00 : f32
    %206 = vector.broadcast %cst_126 : f32 to vector<8x128xf32>
    %207 = arith.maximumf %205, %206 : vector<8x128xf32>
    %208 = tpu.concatenate %8, %207 in 1 : vector<8x128xf32>, vector<8x128xf32> -> vector<8x256xf32>
    %c6_127 = arith.constant 6 : index
    %c0_128 = arith.constant 0 : index
    %c0_129 = arith.constant 0 : index
    %209 = vector.load %arg8[%c6_127, %c0_128, %c0_129] : memref<8x256x128xbf16, #tpu.memory_space<vmem>>, vector<1x256x128xbf16>
    %210 = vector.shape_cast %209 : vector<1x256x128xbf16> to vector<256x128xbf16>
    %211 = arith.truncf %208 : vector<8x256xf32> to vector<8x256xbf16>
    %cst_130 = arith.constant dense<0.000000e+00> : vector<8x128xf32>
    %212 = tpu.matmul %211, %210, %cst_130 {dimension_numbers = #tpu.dot_dimension_numbers<[1], [0], [0], [1], [0, 0, 1, 1], [], []>} : vector<8x256xbf16>, vector<256x128xbf16>, vector<8x128xf32> -> vector<8x128xf32>
    %c17 = arith.constant 17 : index
    %c0_131 = arith.constant 0 : index
    %213 = vector.load %arg12[%c17, %c0_131] : memref<30x896xf32, #tpu.memory_space<vmem>>, vector<1x128xf32>
    %214 = vector.broadcast %213 : vector<1x128xf32> to vector<8x128xf32>
    %215 = arith.addf %212, %214 : vector<8x128xf32>
    %cst_132 = arith.constant 0.000000e+00 : f32
    %216 = vector.broadcast %cst_132 : f32 to vector<8x128xf32>
    %217 = arith.maximumf %215, %216 : vector<8x128xf32>
    %218 = arith.addf %191, %217 : vector<8x128xf32>
    %219 = vector.extract_strided_slice %120 {offsets = [0, 256], sizes = [8, 128], strides = [1, 1]} : vector<8x384xf32> to vector<8x128xf32>
    %c2_133 = arith.constant 2 : index
    %c0_134 = arith.constant 0 : index
    %c0_135 = arith.constant 0 : index
    %220 = vector.load %arg5[%c2_133, %c0_134, %c0_135] : memref<8x8x8xbf16, #tpu.memory_space<vmem>>, vector<1x8x8xbf16>
    %221 = vector.shape_cast %220 : vector<1x8x8xbf16> to vector<8x8xbf16>
    %222 = vector.shape_cast %221 : vector<8x8xbf16> to vector<8x8x1xbf16>
    %cst_136 = arith.constant 0.000000e+00 : bf16
    %223 = vector.broadcast %cst_136 : bf16 to vector<8x8x1xbf16>
    %224 = arith.cmpf ogt, %222, %223 : vector<8x8x1xbf16>
    %225 = vector.shape_cast %219 : vector<8x128xf32> to vector<1x8x128xf32>
    %cst_137 = arith.constant 0xFF800000 : f32
    %226 = vector.shape_cast %224 : vector<8x8x1xi1> to vector<8x8x1xi1>
    %227 = vector.broadcast %226 : vector<8x8x1xi1> to vector<8x8x128xi1>
    %228 = vector.shape_cast %225 : vector<1x8x128xf32> to vector<1x8x128xf32>
    %229 = vector.broadcast %228 : vector<1x8x128xf32> to vector<8x8x128xf32>
    %230 = vector.broadcast %cst_137 : f32 to vector<8x8x128xf32>
    %231 = arith.select %227, %229, %230 : vector<8x8x128xi1>, vector<8x8x128xf32>
    %cst_138 = arith.constant dense<0xFF800000> : vector<8x128xf32>
    %232 = vector.multi_reduction <maximumf>, %231, %cst_138 [1] : vector<8x8x128xf32> to vector<8x128xf32>
    %cst_139 = arith.constant 0.000000e+00 : f32
    %233 = vector.broadcast %cst_139 : f32 to vector<8x128xf32>
    %234 = arith.maximumf %232, %233 : vector<8x128xf32>
    %235 = tpu.concatenate %9, %234 in 1 : vector<8x128xf32>, vector<8x128xf32> -> vector<8x256xf32>
    %c2_140 = arith.constant 2 : index
    %c0_141 = arith.constant 0 : index
    %c0_142 = arith.constant 0 : index
    %236 = vector.load %arg8[%c2_140, %c0_141, %c0_142] : memref<8x256x128xbf16, #tpu.memory_space<vmem>>, vector<1x256x128xbf16>
    %237 = vector.shape_cast %236 : vector<1x256x128xbf16> to vector<256x128xbf16>
    %238 = arith.truncf %235 : vector<8x256xf32> to vector<8x256xbf16>
    %cst_143 = arith.constant dense<0.000000e+00> : vector<8x128xf32>
    %239 = tpu.matmul %238, %237, %cst_143 {dimension_numbers = #tpu.dot_dimension_numbers<[1], [0], [0], [1], [0, 0, 1, 1], [], []>} : vector<8x256xbf16>, vector<256x128xbf16>, vector<8x128xf32> -> vector<8x128xf32>
    %c13 = arith.constant 13 : index
    %c0_144 = arith.constant 0 : index
    %240 = vector.load %arg12[%c13, %c0_144] : memref<30x896xf32, #tpu.memory_space<vmem>>, vector<1x128xf32>
    %241 = vector.broadcast %240 : vector<1x128xf32> to vector<8x128xf32>
    %242 = arith.addf %239, %241 : vector<8x128xf32>
    %cst_145 = arith.constant 0.000000e+00 : f32
    %243 = vector.broadcast %cst_145 : f32 to vector<8x128xf32>
    %244 = arith.maximumf %242, %243 : vector<8x128xf32>
    %245 = vector.extract_strided_slice %138 {offsets = [0, 128], sizes = [8, 128], strides = [1, 1]} : vector<8x384xf32> to vector<8x128xf32>
    %c7_146 = arith.constant 7 : index
    %c0_147 = arith.constant 0 : index
    %c0_148 = arith.constant 0 : index
    %246 = vector.load %arg5[%c7_146, %c0_147, %c0_148] : memref<8x8x8xbf16, #tpu.memory_space<vmem>>, vector<1x8x8xbf16>
    %247 = vector.shape_cast %246 : vector<1x8x8xbf16> to vector<8x8xbf16>
    %248 = vector.shape_cast %247 : vector<8x8xbf16> to vector<8x8x1xbf16>
    %cst_149 = arith.constant 0.000000e+00 : bf16
    %249 = vector.broadcast %cst_149 : bf16 to vector<8x8x1xbf16>
    %250 = arith.cmpf ogt, %248, %249 : vector<8x8x1xbf16>
    %251 = vector.shape_cast %245 : vector<8x128xf32> to vector<1x8x128xf32>
    %cst_150 = arith.constant 0xFF800000 : f32
    %252 = vector.shape_cast %250 : vector<8x8x1xi1> to vector<8x8x1xi1>
    %253 = vector.broadcast %252 : vector<8x8x1xi1> to vector<8x8x128xi1>
    %254 = vector.shape_cast %251 : vector<1x8x128xf32> to vector<1x8x128xf32>
    %255 = vector.broadcast %254 : vector<1x8x128xf32> to vector<8x8x128xf32>
    %256 = vector.broadcast %cst_150 : f32 to vector<8x8x128xf32>
    %257 = arith.select %253, %255, %256 : vector<8x8x128xi1>, vector<8x8x128xf32>
    %cst_151 = arith.constant dense<0xFF800000> : vector<8x128xf32>
    %258 = vector.multi_reduction <maximumf>, %257, %cst_151 [1] : vector<8x8x128xf32> to vector<8x128xf32>
    %cst_152 = arith.constant 0.000000e+00 : f32
    %259 = vector.broadcast %cst_152 : f32 to vector<8x128xf32>
    %260 = arith.maximumf %258, %259 : vector<8x128xf32>
    %261 = tpu.concatenate %9, %260 in 1 : vector<8x128xf32>, vector<8x128xf32> -> vector<8x256xf32>
    %c7_153 = arith.constant 7 : index
    %c0_154 = arith.constant 0 : index
    %c0_155 = arith.constant 0 : index
    %262 = vector.load %arg8[%c7_153, %c0_154, %c0_155] : memref<8x256x128xbf16, #tpu.memory_space<vmem>>, vector<1x256x128xbf16>
    %263 = vector.shape_cast %262 : vector<1x256x128xbf16> to vector<256x128xbf16>
    %264 = arith.truncf %261 : vector<8x256xf32> to vector<8x256xbf16>
    %cst_156 = arith.constant dense<0.000000e+00> : vector<8x128xf32>
    %265 = tpu.matmul %264, %263, %cst_156 {dimension_numbers = #tpu.dot_dimension_numbers<[1], [0], [0], [1], [0, 0, 1, 1], [], []>} : vector<8x256xbf16>, vector<256x128xbf16>, vector<8x128xf32> -> vector<8x128xf32>
    %c18 = arith.constant 18 : index
    %c0_157 = arith.constant 0 : index
    %266 = vector.load %arg12[%c18, %c0_157] : memref<30x896xf32, #tpu.memory_space<vmem>>, vector<1x128xf32>
    %267 = vector.broadcast %266 : vector<1x128xf32> to vector<8x128xf32>
    %268 = arith.addf %265, %267 : vector<8x128xf32>
    %cst_158 = arith.constant 0.000000e+00 : f32
    %269 = vector.broadcast %cst_158 : f32 to vector<8x128xf32>
    %270 = arith.maximumf %268, %269 : vector<8x128xf32>
    %271 = arith.addf %244, %270 : vector<8x128xf32>
    %272 = vector.extract_strided_slice %129 {offsets = [0, 0], sizes = [8, 128], strides = [1, 1]} : vector<8x384xf32> to vector<8x128xf32>
    %c3_159 = arith.constant 3 : index
    %c0_160 = arith.constant 0 : index
    %c0_161 = arith.constant 0 : index
    %273 = vector.load %arg5[%c3_159, %c0_160, %c0_161] : memref<8x8x8xbf16, #tpu.memory_space<vmem>>, vector<1x8x8xbf16>
    %274 = vector.shape_cast %273 : vector<1x8x8xbf16> to vector<8x8xbf16>
    %275 = vector.shape_cast %274 : vector<8x8xbf16> to vector<8x8x1xbf16>
    %cst_162 = arith.constant 0.000000e+00 : bf16
    %276 = vector.broadcast %cst_162 : bf16 to vector<8x8x1xbf16>
    %277 = arith.cmpf ogt, %275, %276 : vector<8x8x1xbf16>
    %278 = vector.shape_cast %272 : vector<8x128xf32> to vector<1x8x128xf32>
    %cst_163 = arith.constant 0xFF800000 : f32
    %279 = vector.shape_cast %277 : vector<8x8x1xi1> to vector<8x8x1xi1>
    %280 = vector.broadcast %279 : vector<8x8x1xi1> to vector<8x8x128xi1>
    %281 = vector.shape_cast %278 : vector<1x8x128xf32> to vector<1x8x128xf32>
    %282 = vector.broadcast %281 : vector<1x8x128xf32> to vector<8x8x128xf32>
    %283 = vector.broadcast %cst_163 : f32 to vector<8x8x128xf32>
    %284 = arith.select %280, %282, %283 : vector<8x8x128xi1>, vector<8x8x128xf32>
    %cst_164 = arith.constant dense<0xFF800000> : vector<8x128xf32>
    %285 = vector.multi_reduction <maximumf>, %284, %cst_164 [1] : vector<8x8x128xf32> to vector<8x128xf32>
    %cst_165 = arith.constant 0.000000e+00 : f32
    %286 = vector.broadcast %cst_165 : f32 to vector<8x128xf32>
    %287 = arith.maximumf %285, %286 : vector<8x128xf32>
    %288 = tpu.concatenate %10, %287 in 1 : vector<8x128xf32>, vector<8x128xf32> -> vector<8x256xf32>
    %c3_166 = arith.constant 3 : index
    %c0_167 = arith.constant 0 : index
    %c0_168 = arith.constant 0 : index
    %289 = vector.load %arg8[%c3_166, %c0_167, %c0_168] : memref<8x256x128xbf16, #tpu.memory_space<vmem>>, vector<1x256x128xbf16>
    %290 = vector.shape_cast %289 : vector<1x256x128xbf16> to vector<256x128xbf16>
    %291 = arith.truncf %288 : vector<8x256xf32> to vector<8x256xbf16>
    %cst_169 = arith.constant dense<0.000000e+00> : vector<8x128xf32>
    %292 = tpu.matmul %291, %290, %cst_169 {dimension_numbers = #tpu.dot_dimension_numbers<[1], [0], [0], [1], [0, 0, 1, 1], [], []>} : vector<8x256xbf16>, vector<256x128xbf16>, vector<8x128xf32> -> vector<8x128xf32>
    %c14 = arith.constant 14 : index
    %c0_170 = arith.constant 0 : index
    %293 = vector.load %arg12[%c14, %c0_170] : memref<30x896xf32, #tpu.memory_space<vmem>>, vector<1x128xf32>
    %294 = vector.broadcast %293 : vector<1x128xf32> to vector<8x128xf32>
    %295 = arith.addf %292, %294 : vector<8x128xf32>
    %cst_171 = arith.constant 0.000000e+00 : f32
    %296 = vector.broadcast %cst_171 : f32 to vector<8x128xf32>
    %297 = arith.maximumf %295, %296 : vector<8x128xf32>
    %298 = vector.extract_strided_slice %129 {offsets = [0, 128], sizes = [8, 128], strides = [1, 1]} : vector<8x384xf32> to vector<8x128xf32>
    %c4_172 = arith.constant 4 : index
    %c0_173 = arith.constant 0 : index
    %c0_174 = arith.constant 0 : index
    %299 = vector.load %arg5[%c4_172, %c0_173, %c0_174] : memref<8x8x8xbf16, #tpu.memory_space<vmem>>, vector<1x8x8xbf16>
    %300 = vector.shape_cast %299 : vector<1x8x8xbf16> to vector<8x8xbf16>
    %301 = vector.shape_cast %300 : vector<8x8xbf16> to vector<8x8x1xbf16>
    %cst_175 = arith.constant 0.000000e+00 : bf16
    %302 = vector.broadcast %cst_175 : bf16 to vector<8x8x1xbf16>
    %303 = arith.cmpf ogt, %301, %302 : vector<8x8x1xbf16>
    %304 = vector.shape_cast %298 : vector<8x128xf32> to vector<1x8x128xf32>
    %cst_176 = arith.constant 0xFF800000 : f32
    %305 = vector.shape_cast %303 : vector<8x8x1xi1> to vector<8x8x1xi1>
    %306 = vector.broadcast %305 : vector<8x8x1xi1> to vector<8x8x128xi1>
    %307 = vector.shape_cast %304 : vector<1x8x128xf32> to vector<1x8x128xf32>
    %308 = vector.broadcast %307 : vector<1x8x128xf32> to vector<8x8x128xf32>
    %309 = vector.broadcast %cst_176 : f32 to vector<8x8x128xf32>
    %310 = arith.select %306, %308, %309 : vector<8x8x128xi1>, vector<8x8x128xf32>
    %cst_177 = arith.constant dense<0xFF800000> : vector<8x128xf32>
    %311 = vector.multi_reduction <maximumf>, %310, %cst_177 [1] : vector<8x8x128xf32> to vector<8x128xf32>
    %cst_178 = arith.constant 0.000000e+00 : f32
    %312 = vector.broadcast %cst_178 : f32 to vector<8x128xf32>
    %313 = arith.maximumf %311, %312 : vector<8x128xf32>
    %314 = tpu.concatenate %10, %313 in 1 : vector<8x128xf32>, vector<8x128xf32> -> vector<8x256xf32>
    %c4_179 = arith.constant 4 : index
    %c0_180 = arith.constant 0 : index
    %c0_181 = arith.constant 0 : index
    %315 = vector.load %arg8[%c4_179, %c0_180, %c0_181] : memref<8x256x128xbf16, #tpu.memory_space<vmem>>, vector<1x256x128xbf16>
    %316 = vector.shape_cast %315 : vector<1x256x128xbf16> to vector<256x128xbf16>
    %317 = arith.truncf %314 : vector<8x256xf32> to vector<8x256xbf16>
    %cst_182 = arith.constant dense<0.000000e+00> : vector<8x128xf32>
    %318 = tpu.matmul %317, %316, %cst_182 {dimension_numbers = #tpu.dot_dimension_numbers<[1], [0], [0], [1], [0, 0, 1, 1], [], []>} : vector<8x256xbf16>, vector<256x128xbf16>, vector<8x128xf32> -> vector<8x128xf32>
    %c15 = arith.constant 15 : index
    %c0_183 = arith.constant 0 : index
    %319 = vector.load %arg12[%c15, %c0_183] : memref<30x896xf32, #tpu.memory_space<vmem>>, vector<1x128xf32>
    %320 = vector.broadcast %319 : vector<1x128xf32> to vector<8x128xf32>
    %321 = arith.addf %318, %320 : vector<8x128xf32>
    %cst_184 = arith.constant 0.000000e+00 : f32
    %322 = vector.broadcast %cst_184 : f32 to vector<8x128xf32>
    %323 = arith.maximumf %321, %322 : vector<8x128xf32>
    %324 = arith.addf %297, %323 : vector<8x128xf32>
    %325 = vector.extract_strided_slice %138 {offsets = [0, 0], sizes = [8, 128], strides = [1, 1]} : vector<8x384xf32> to vector<8x128xf32>
    %c5_185 = arith.constant 5 : index
    %c0_186 = arith.constant 0 : index
    %c0_187 = arith.constant 0 : index
    %326 = vector.load %arg5[%c5_185, %c0_186, %c0_187] : memref<8x8x8xbf16, #tpu.memory_space<vmem>>, vector<1x8x8xbf16>
    %327 = vector.shape_cast %326 : vector<1x8x8xbf16> to vector<8x8xbf16>
    %328 = vector.shape_cast %327 : vector<8x8xbf16> to vector<8x8x1xbf16>
    %cst_188 = arith.constant 0.000000e+00 : bf16
    %329 = vector.broadcast %cst_188 : bf16 to vector<8x8x1xbf16>
    %330 = arith.cmpf ogt, %328, %329 : vector<8x8x1xbf16>
    %331 = vector.shape_cast %325 : vector<8x128xf32> to vector<1x8x128xf32>
    %cst_189 = arith.constant 0xFF800000 : f32
    %332 = vector.shape_cast %330 : vector<8x8x1xi1> to vector<8x8x1xi1>
    %333 = vector.broadcast %332 : vector<8x8x1xi1> to vector<8x8x128xi1>
    %334 = vector.shape_cast %331 : vector<1x8x128xf32> to vector<1x8x128xf32>
    %335 = vector.broadcast %334 : vector<1x8x128xf32> to vector<8x8x128xf32>
    %336 = vector.broadcast %cst_189 : f32 to vector<8x8x128xf32>
    %337 = arith.select %333, %335, %336 : vector<8x8x128xi1>, vector<8x8x128xf32>
    %cst_190 = arith.constant dense<0xFF800000> : vector<8x128xf32>
    %338 = vector.multi_reduction <maximumf>, %337, %cst_190 [1] : vector<8x8x128xf32> to vector<8x128xf32>
    %cst_191 = arith.constant 0.000000e+00 : f32
    %339 = vector.broadcast %cst_191 : f32 to vector<8x128xf32>
    %340 = arith.maximumf %338, %339 : vector<8x128xf32>
    %341 = tpu.concatenate %10, %340 in 1 : vector<8x128xf32>, vector<8x128xf32> -> vector<8x256xf32>
    %c5_192 = arith.constant 5 : index
    %c0_193 = arith.constant 0 : index
    %c0_194 = arith.constant 0 : index
    %342 = vector.load %arg8[%c5_192, %c0_193, %c0_194] : memref<8x256x128xbf16, #tpu.memory_space<vmem>>, vector<1x256x128xbf16>
    %343 = vector.shape_cast %342 : vector<1x256x128xbf16> to vector<256x128xbf16>
    %344 = arith.truncf %341 : vector<8x256xf32> to vector<8x256xbf16>
    %cst_195 = arith.constant dense<0.000000e+00> : vector<8x128xf32>
    %345 = tpu.matmul %344, %343, %cst_195 {dimension_numbers = #tpu.dot_dimension_numbers<[1], [0], [0], [1], [0, 0, 1, 1], [], []>} : vector<8x256xbf16>, vector<256x128xbf16>, vector<8x128xf32> -> vector<8x128xf32>
    %c16 = arith.constant 16 : index
    %c0_196 = arith.constant 0 : index
    %346 = vector.load %arg12[%c16, %c0_196] : memref<30x896xf32, #tpu.memory_space<vmem>>, vector<1x128xf32>
    %347 = vector.broadcast %346 : vector<1x128xf32> to vector<8x128xf32>
    %348 = arith.addf %345, %347 : vector<8x128xf32>
    %cst_197 = arith.constant 0.000000e+00 : f32
    %349 = vector.broadcast %cst_197 : f32 to vector<8x128xf32>
    %350 = arith.maximumf %348, %349 : vector<8x128xf32>
    %351 = arith.addf %324, %350 : vector<8x128xf32>
    %c0_198 = arith.constant 0 : index
    %c0_199 = arith.constant 0 : index
    %c0_200 = arith.constant 0 : index
    %352 = vector.load %arg7[%c0_198, %c0_199, %c0_200] : memref<3x128x384xbf16, #tpu.memory_space<vmem>>, vector<1x128x384xbf16>
    %353 = vector.shape_cast %352 : vector<1x128x384xbf16> to vector<128x384xbf16>
    %354 = arith.truncf %351 : vector<8x128xf32> to vector<8x128xbf16>
    %cst_201 = arith.constant dense<0.000000e+00> : vector<8x384xf32>
    %355 = tpu.matmul %354, %353, %cst_201 {dimension_numbers = #tpu.dot_dimension_numbers<[1], [0], [0], [1], [0, 0, 1, 1], [], []>} : vector<8x128xbf16>, vector<128x384xbf16>, vector<8x384xf32> -> vector<8x384xf32>
    %c8_202 = arith.constant 8 : index
    %c0_203 = arith.constant 0 : index
    %356 = vector.load %arg12[%c8_202, %c0_203] : memref<30x896xf32, #tpu.memory_space<vmem>>, vector<1x384xf32>
    %357 = vector.broadcast %356 : vector<1x384xf32> to vector<8x384xf32>
    %358 = arith.addf %355, %357 : vector<8x384xf32>
    %cst_204 = arith.constant 0.000000e+00 : f32
    %359 = vector.broadcast %cst_204 : f32 to vector<8x384xf32>
    %360 = arith.maximumf %358, %359 : vector<8x384xf32>
    %c1_205 = arith.constant 1 : index
    %c0_206 = arith.constant 0 : index
    %c0_207 = arith.constant 0 : index
    %361 = vector.load %arg7[%c1_205, %c0_206, %c0_207] : memref<3x128x384xbf16, #tpu.memory_space<vmem>>, vector<1x128x384xbf16>
    %362 = vector.shape_cast %361 : vector<1x128x384xbf16> to vector<128x384xbf16>
    %363 = arith.truncf %218 : vector<8x128xf32> to vector<8x128xbf16>
    %cst_208 = arith.constant dense<0.000000e+00> : vector<8x384xf32>
    %364 = tpu.matmul %363, %362, %cst_208 {dimension_numbers = #tpu.dot_dimension_numbers<[1], [0], [0], [1], [0, 0, 1, 1], [], []>} : vector<8x128xbf16>, vector<128x384xbf16>, vector<8x384xf32> -> vector<8x384xf32>
    %c9_209 = arith.constant 9 : index
    %c0_210 = arith.constant 0 : index
    %365 = vector.load %arg12[%c9_209, %c0_210] : memref<30x896xf32, #tpu.memory_space<vmem>>, vector<1x384xf32>
    %366 = vector.broadcast %365 : vector<1x384xf32> to vector<8x384xf32>
    %367 = arith.addf %364, %366 : vector<8x384xf32>
    %cst_211 = arith.constant 0.000000e+00 : f32
    %368 = vector.broadcast %cst_211 : f32 to vector<8x384xf32>
    %369 = arith.maximumf %367, %368 : vector<8x384xf32>
    %c2_212 = arith.constant 2 : index
    %c0_213 = arith.constant 0 : index
    %c0_214 = arith.constant 0 : index
    %370 = vector.load %arg7[%c2_212, %c0_213, %c0_214] : memref<3x128x384xbf16, #tpu.memory_space<vmem>>, vector<1x128x384xbf16>
    %371 = vector.shape_cast %370 : vector<1x128x384xbf16> to vector<128x384xbf16>
    %372 = arith.truncf %271 : vector<8x128xf32> to vector<8x128xbf16>
    %cst_215 = arith.constant dense<0.000000e+00> : vector<8x384xf32>
    %373 = tpu.matmul %372, %371, %cst_215 {dimension_numbers = #tpu.dot_dimension_numbers<[1], [0], [0], [1], [0, 0, 1, 1], [], []>} : vector<8x128xbf16>, vector<128x384xbf16>, vector<8x384xf32> -> vector<8x384xf32>
    %c10_216 = arith.constant 10 : index
    %c0_217 = arith.constant 0 : index
    %374 = vector.load %arg12[%c10_216, %c0_217] : memref<30x896xf32, #tpu.memory_space<vmem>>, vector<1x384xf32>
    %375 = vector.broadcast %374 : vector<1x384xf32> to vector<8x384xf32>
    %376 = arith.addf %373, %375 : vector<8x384xf32>
    %cst_218 = arith.constant 0.000000e+00 : f32
    %377 = vector.broadcast %cst_218 : f32 to vector<8x384xf32>
    %378 = arith.maximumf %376, %377 : vector<8x384xf32>
    %379 = vector.extract_strided_slice %360 {offsets = [0, 0], sizes = [8, 128], strides = [1, 1]} : vector<8x384xf32> to vector<8x128xf32>
    %c0_219 = arith.constant 0 : index
    %c0_220 = arith.constant 0 : index
    %c0_221 = arith.constant 0 : index
    %380 = vector.load %arg5[%c0_219, %c0_220, %c0_221] : memref<8x8x8xbf16, #tpu.memory_space<vmem>>, vector<1x8x8xbf16>
    %381 = vector.shape_cast %380 : vector<1x8x8xbf16> to vector<8x8xbf16>
    %382 = vector.shape_cast %381 : vector<8x8xbf16> to vector<8x8x1xbf16>
    %cst_222 = arith.constant 0.000000e+00 : bf16
    %383 = vector.broadcast %cst_222 : bf16 to vector<8x8x1xbf16>
    %384 = arith.cmpf ogt, %382, %383 : vector<8x8x1xbf16>
    %385 = vector.shape_cast %379 : vector<8x128xf32> to vector<1x8x128xf32>
    %cst_223 = arith.constant 0xFF800000 : f32
    %386 = vector.shape_cast %384 : vector<8x8x1xi1> to vector<8x8x1xi1>
    %387 = vector.broadcast %386 : vector<8x8x1xi1> to vector<8x8x128xi1>
    %388 = vector.shape_cast %385 : vector<1x8x128xf32> to vector<1x8x128xf32>
    %389 = vector.broadcast %388 : vector<1x8x128xf32> to vector<8x8x128xf32>
    %390 = vector.broadcast %cst_223 : f32 to vector<8x8x128xf32>
    %391 = arith.select %387, %389, %390 : vector<8x8x128xi1>, vector<8x8x128xf32>
    %cst_224 = arith.constant dense<0xFF800000> : vector<8x128xf32>
    %392 = vector.multi_reduction <maximumf>, %391, %cst_224 [1] : vector<8x8x128xf32> to vector<8x128xf32>
    %cst_225 = arith.constant 0.000000e+00 : f32
    %393 = vector.broadcast %cst_225 : f32 to vector<8x128xf32>
    %394 = arith.maximumf %392, %393 : vector<8x128xf32>
    %395 = tpu.concatenate %218, %394 in 1 : vector<8x128xf32>, vector<8x128xf32> -> vector<8x256xf32>
    %c0_226 = arith.constant 0 : index
    %c0_227 = arith.constant 0 : index
    %c0_228 = arith.constant 0 : index
    %396 = vector.load %arg8[%c0_226, %c0_227, %c0_228] : memref<8x256x128xbf16, #tpu.memory_space<vmem>>, vector<1x256x128xbf16>
    %397 = vector.shape_cast %396 : vector<1x256x128xbf16> to vector<256x128xbf16>
    %398 = arith.truncf %395 : vector<8x256xf32> to vector<8x256xbf16>
    %cst_229 = arith.constant dense<0.000000e+00> : vector<8x128xf32>
    %399 = tpu.matmul %398, %397, %cst_229 {dimension_numbers = #tpu.dot_dimension_numbers<[1], [0], [0], [1], [0, 0, 1, 1], [], []>} : vector<8x256xbf16>, vector<256x128xbf16>, vector<8x128xf32> -> vector<8x128xf32>
    %c11_230 = arith.constant 11 : index
    %c0_231 = arith.constant 0 : index
    %400 = vector.load %arg12[%c11_230, %c0_231] : memref<30x896xf32, #tpu.memory_space<vmem>>, vector<1x128xf32>
    %401 = vector.broadcast %400 : vector<1x128xf32> to vector<8x128xf32>
    %402 = arith.addf %399, %401 : vector<8x128xf32>
    %cst_232 = arith.constant 0.000000e+00 : f32
    %403 = vector.broadcast %cst_232 : f32 to vector<8x128xf32>
    %404 = arith.maximumf %402, %403 : vector<8x128xf32>
    %405 = vector.extract_strided_slice %360 {offsets = [0, 128], sizes = [8, 128], strides = [1, 1]} : vector<8x384xf32> to vector<8x128xf32>
    %c1_233 = arith.constant 1 : index
    %c0_234 = arith.constant 0 : index
    %c0_235 = arith.constant 0 : index
    %406 = vector.load %arg5[%c1_233, %c0_234, %c0_235] : memref<8x8x8xbf16, #tpu.memory_space<vmem>>, vector<1x8x8xbf16>
    %407 = vector.shape_cast %406 : vector<1x8x8xbf16> to vector<8x8xbf16>
    %408 = vector.shape_cast %407 : vector<8x8xbf16> to vector<8x8x1xbf16>
    %cst_236 = arith.constant 0.000000e+00 : bf16
    %409 = vector.broadcast %cst_236 : bf16 to vector<8x8x1xbf16>
    %410 = arith.cmpf ogt, %408, %409 : vector<8x8x1xbf16>
    %411 = vector.shape_cast %405 : vector<8x128xf32> to vector<1x8x128xf32>
    %cst_237 = arith.constant 0xFF800000 : f32
    %412 = vector.shape_cast %410 : vector<8x8x1xi1> to vector<8x8x1xi1>
    %413 = vector.broadcast %412 : vector<8x8x1xi1> to vector<8x8x128xi1>
    %414 = vector.shape_cast %411 : vector<1x8x128xf32> to vector<1x8x128xf32>
    %415 = vector.broadcast %414 : vector<1x8x128xf32> to vector<8x8x128xf32>
    %416 = vector.broadcast %cst_237 : f32 to vector<8x8x128xf32>
    %417 = arith.select %413, %415, %416 : vector<8x8x128xi1>, vector<8x8x128xf32>
    %cst_238 = arith.constant dense<0xFF800000> : vector<8x128xf32>
    %418 = vector.multi_reduction <maximumf>, %417, %cst_238 [1] : vector<8x8x128xf32> to vector<8x128xf32>
    %cst_239 = arith.constant 0.000000e+00 : f32
    %419 = vector.broadcast %cst_239 : f32 to vector<8x128xf32>
    %420 = arith.maximumf %418, %419 : vector<8x128xf32>
    %421 = tpu.concatenate %218, %420 in 1 : vector<8x128xf32>, vector<8x128xf32> -> vector<8x256xf32>
    %c1_240 = arith.constant 1 : index
    %c0_241 = arith.constant 0 : index
    %c0_242 = arith.constant 0 : index
    %422 = vector.load %arg8[%c1_240, %c0_241, %c0_242] : memref<8x256x128xbf16, #tpu.memory_space<vmem>>, vector<1x256x128xbf16>
    %423 = vector.shape_cast %422 : vector<1x256x128xbf16> to vector<256x128xbf16>
    %424 = arith.truncf %421 : vector<8x256xf32> to vector<8x256xbf16>
    %cst_243 = arith.constant dense<0.000000e+00> : vector<8x128xf32>
    %425 = tpu.matmul %424, %423, %cst_243 {dimension_numbers = #tpu.dot_dimension_numbers<[1], [0], [0], [1], [0, 0, 1, 1], [], []>} : vector<8x256xbf16>, vector<256x128xbf16>, vector<8x128xf32> -> vector<8x128xf32>
    %c12_244 = arith.constant 12 : index
    %c0_245 = arith.constant 0 : index
    %426 = vector.load %arg12[%c12_244, %c0_245] : memref<30x896xf32, #tpu.memory_space<vmem>>, vector<1x128xf32>
    %427 = vector.broadcast %426 : vector<1x128xf32> to vector<8x128xf32>
    %428 = arith.addf %425, %427 : vector<8x128xf32>
    %cst_246 = arith.constant 0.000000e+00 : f32
    %429 = vector.broadcast %cst_246 : f32 to vector<8x128xf32>
    %430 = arith.maximumf %428, %429 : vector<8x128xf32>
    %431 = arith.addf %404, %430 : vector<8x128xf32>
    %432 = vector.extract_strided_slice %369 {offsets = [0, 256], sizes = [8, 128], strides = [1, 1]} : vector<8x384xf32> to vector<8x128xf32>
    %c6_247 = arith.constant 6 : index
    %c0_248 = arith.constant 0 : index
    %c0_249 = arith.constant 0 : index
    %433 = vector.load %arg5[%c6_247, %c0_248, %c0_249] : memref<8x8x8xbf16, #tpu.memory_space<vmem>>, vector<1x8x8xbf16>
    %434 = vector.shape_cast %433 : vector<1x8x8xbf16> to vector<8x8xbf16>
    %435 = vector.shape_cast %434 : vector<8x8xbf16> to vector<8x8x1xbf16>
    %cst_250 = arith.constant 0.000000e+00 : bf16
    %436 = vector.broadcast %cst_250 : bf16 to vector<8x8x1xbf16>
    %437 = arith.cmpf ogt, %435, %436 : vector<8x8x1xbf16>
    %438 = vector.shape_cast %432 : vector<8x128xf32> to vector<1x8x128xf32>
    %cst_251 = arith.constant 0xFF800000 : f32
    %439 = vector.shape_cast %437 : vector<8x8x1xi1> to vector<8x8x1xi1>
    %440 = vector.broadcast %439 : vector<8x8x1xi1> to vector<8x8x128xi1>
    %441 = vector.shape_cast %438 : vector<1x8x128xf32> to vector<1x8x128xf32>
    %442 = vector.broadcast %441 : vector<1x8x128xf32> to vector<8x8x128xf32>
    %443 = vector.broadcast %cst_251 : f32 to vector<8x8x128xf32>
    %444 = arith.select %440, %442, %443 : vector<8x8x128xi1>, vector<8x8x128xf32>
    %cst_252 = arith.constant dense<0xFF800000> : vector<8x128xf32>
    %445 = vector.multi_reduction <maximumf>, %444, %cst_252 [1] : vector<8x8x128xf32> to vector<8x128xf32>
    %cst_253 = arith.constant 0.000000e+00 : f32
    %446 = vector.broadcast %cst_253 : f32 to vector<8x128xf32>
    %447 = arith.maximumf %445, %446 : vector<8x128xf32>
    %448 = tpu.concatenate %218, %447 in 1 : vector<8x128xf32>, vector<8x128xf32> -> vector<8x256xf32>
    %c6_254 = arith.constant 6 : index
    %c0_255 = arith.constant 0 : index
    %c0_256 = arith.constant 0 : index
    %449 = vector.load %arg8[%c6_254, %c0_255, %c0_256] : memref<8x256x128xbf16, #tpu.memory_space<vmem>>, vector<1x256x128xbf16>
    %450 = vector.shape_cast %449 : vector<1x256x128xbf16> to vector<256x128xbf16>
    %451 = arith.truncf %448 : vector<8x256xf32> to vector<8x256xbf16>
    %cst_257 = arith.constant dense<0.000000e+00> : vector<8x128xf32>
    %452 = tpu.matmul %451, %450, %cst_257 {dimension_numbers = #tpu.dot_dimension_numbers<[1], [0], [0], [1], [0, 0, 1, 1], [], []>} : vector<8x256xbf16>, vector<256x128xbf16>, vector<8x128xf32> -> vector<8x128xf32>
    %c17_258 = arith.constant 17 : index
    %c0_259 = arith.constant 0 : index
    %453 = vector.load %arg12[%c17_258, %c0_259] : memref<30x896xf32, #tpu.memory_space<vmem>>, vector<1x128xf32>
    %454 = vector.broadcast %453 : vector<1x128xf32> to vector<8x128xf32>
    %455 = arith.addf %452, %454 : vector<8x128xf32>
    %cst_260 = arith.constant 0.000000e+00 : f32
    %456 = vector.broadcast %cst_260 : f32 to vector<8x128xf32>
    %457 = arith.maximumf %455, %456 : vector<8x128xf32>
    %458 = arith.addf %431, %457 : vector<8x128xf32>
    %459 = vector.extract_strided_slice %360 {offsets = [0, 256], sizes = [8, 128], strides = [1, 1]} : vector<8x384xf32> to vector<8x128xf32>
    %c2_261 = arith.constant 2 : index
    %c0_262 = arith.constant 0 : index
    %c0_263 = arith.constant 0 : index
    %460 = vector.load %arg5[%c2_261, %c0_262, %c0_263] : memref<8x8x8xbf16, #tpu.memory_space<vmem>>, vector<1x8x8xbf16>
    %461 = vector.shape_cast %460 : vector<1x8x8xbf16> to vector<8x8xbf16>
    %462 = vector.shape_cast %461 : vector<8x8xbf16> to vector<8x8x1xbf16>
    %cst_264 = arith.constant 0.000000e+00 : bf16
    %463 = vector.broadcast %cst_264 : bf16 to vector<8x8x1xbf16>
    %464 = arith.cmpf ogt, %462, %463 : vector<8x8x1xbf16>
    %465 = vector.shape_cast %459 : vector<8x128xf32> to vector<1x8x128xf32>
    %cst_265 = arith.constant 0xFF800000 : f32
    %466 = vector.shape_cast %464 : vector<8x8x1xi1> to vector<8x8x1xi1>
    %467 = vector.broadcast %466 : vector<8x8x1xi1> to vector<8x8x128xi1>
    %468 = vector.shape_cast %465 : vector<1x8x128xf32> to vector<1x8x128xf32>
    %469 = vector.broadcast %468 : vector<1x8x128xf32> to vector<8x8x128xf32>
    %470 = vector.broadcast %cst_265 : f32 to vector<8x8x128xf32>
    %471 = arith.select %467, %469, %470 : vector<8x8x128xi1>, vector<8x8x128xf32>
    %cst_266 = arith.constant dense<0xFF800000> : vector<8x128xf32>
    %472 = vector.multi_reduction <maximumf>, %471, %cst_266 [1] : vector<8x8x128xf32> to vector<8x128xf32>
    %cst_267 = arith.constant 0.000000e+00 : f32
    %473 = vector.broadcast %cst_267 : f32 to vector<8x128xf32>
    %474 = arith.maximumf %472, %473 : vector<8x128xf32>
    %475 = tpu.concatenate %271, %474 in 1 : vector<8x128xf32>, vector<8x128xf32> -> vector<8x256xf32>
    %c2_268 = arith.constant 2 : index
    %c0_269 = arith.constant 0 : index
    %c0_270 = arith.constant 0 : index
    %476 = vector.load %arg8[%c2_268, %c0_269, %c0_270] : memref<8x256x128xbf16, #tpu.memory_space<vmem>>, vector<1x256x128xbf16>
    %477 = vector.shape_cast %476 : vector<1x256x128xbf16> to vector<256x128xbf16>
    %478 = arith.truncf %475 : vector<8x256xf32> to vector<8x256xbf16>
    %cst_271 = arith.constant dense<0.000000e+00> : vector<8x128xf32>
    %479 = tpu.matmul %478, %477, %cst_271 {dimension_numbers = #tpu.dot_dimension_numbers<[1], [0], [0], [1], [0, 0, 1, 1], [], []>} : vector<8x256xbf16>, vector<256x128xbf16>, vector<8x128xf32> -> vector<8x128xf32>
    %c13_272 = arith.constant 13 : index
    %c0_273 = arith.constant 0 : index
    %480 = vector.load %arg12[%c13_272, %c0_273] : memref<30x896xf32, #tpu.memory_space<vmem>>, vector<1x128xf32>
    %481 = vector.broadcast %480 : vector<1x128xf32> to vector<8x128xf32>
    %482 = arith.addf %479, %481 : vector<8x128xf32>
    %cst_274 = arith.constant 0.000000e+00 : f32
    %483 = vector.broadcast %cst_274 : f32 to vector<8x128xf32>
    %484 = arith.maximumf %482, %483 : vector<8x128xf32>
    %485 = vector.extract_strided_slice %378 {offsets = [0, 128], sizes = [8, 128], strides = [1, 1]} : vector<8x384xf32> to vector<8x128xf32>
    %c7_275 = arith.constant 7 : index
    %c0_276 = arith.constant 0 : index
    %c0_277 = arith.constant 0 : index
    %486 = vector.load %arg5[%c7_275, %c0_276, %c0_277] : memref<8x8x8xbf16, #tpu.memory_space<vmem>>, vector<1x8x8xbf16>
    %487 = vector.shape_cast %486 : vector<1x8x8xbf16> to vector<8x8xbf16>
    %488 = vector.shape_cast %487 : vector<8x8xbf16> to vector<8x8x1xbf16>
    %cst_278 = arith.constant 0.000000e+00 : bf16
    %489 = vector.broadcast %cst_278 : bf16 to vector<8x8x1xbf16>
    %490 = arith.cmpf ogt, %488, %489 : vector<8x8x1xbf16>
    %491 = vector.shape_cast %485 : vector<8x128xf32> to vector<1x8x128xf32>
    %cst_279 = arith.constant 0xFF800000 : f32
    %492 = vector.shape_cast %490 : vector<8x8x1xi1> to vector<8x8x1xi1>
    %493 = vector.broadcast %492 : vector<8x8x1xi1> to vector<8x8x128xi1>
    %494 = vector.shape_cast %491 : vector<1x8x128xf32> to vector<1x8x128xf32>
    %495 = vector.broadcast %494 : vector<1x8x128xf32> to vector<8x8x128xf32>
    %496 = vector.broadcast %cst_279 : f32 to vector<8x8x128xf32>
    %497 = arith.select %493, %495, %496 : vector<8x8x128xi1>, vector<8x8x128xf32>
    %cst_280 = arith.constant dense<0xFF800000> : vector<8x128xf32>
    %498 = vector.multi_reduction <maximumf>, %497, %cst_280 [1] : vector<8x8x128xf32> to vector<8x128xf32>
    %cst_281 = arith.constant 0.000000e+00 : f32
    %499 = vector.broadcast %cst_281 : f32 to vector<8x128xf32>
    %500 = arith.maximumf %498, %499 : vector<8x128xf32>
    %501 = tpu.concatenate %271, %500 in 1 : vector<8x128xf32>, vector<8x128xf32> -> vector<8x256xf32>
    %c7_282 = arith.constant 7 : index
    %c0_283 = arith.constant 0 : index
    %c0_284 = arith.constant 0 : index
    %502 = vector.load %arg8[%c7_282, %c0_283, %c0_284] : memref<8x256x128xbf16, #tpu.memory_space<vmem>>, vector<1x256x128xbf16>
    %503 = vector.shape_cast %502 : vector<1x256x128xbf16> to vector<256x128xbf16>
    %504 = arith.truncf %501 : vector<8x256xf32> to vector<8x256xbf16>
    %cst_285 = arith.constant dense<0.000000e+00> : vector<8x128xf32>
    %505 = tpu.matmul %504, %503, %cst_285 {dimension_numbers = #tpu.dot_dimension_numbers<[1], [0], [0], [1], [0, 0, 1, 1], [], []>} : vector<8x256xbf16>, vector<256x128xbf16>, vector<8x128xf32> -> vector<8x128xf32>
    %c18_286 = arith.constant 18 : index
    %c0_287 = arith.constant 0 : index
    %506 = vector.load %arg12[%c18_286, %c0_287] : memref<30x896xf32, #tpu.memory_space<vmem>>, vector<1x128xf32>
    %507 = vector.broadcast %506 : vector<1x128xf32> to vector<8x128xf32>
    %508 = arith.addf %505, %507 : vector<8x128xf32>
    %cst_288 = arith.constant 0.000000e+00 : f32
    %509 = vector.broadcast %cst_288 : f32 to vector<8x128xf32>
    %510 = arith.maximumf %508, %509 : vector<8x128xf32>
    %511 = arith.addf %484, %510 : vector<8x128xf32>
    %512 = tpu.concatenate %8, %218, %458 in 1 : vector<8x128xf32>, vector<8x128xf32>, vector<8x128xf32> -> vector<8x384xf32>
    %c0_289 = arith.constant 0 : index
    %c0_290 = arith.constant 0 : index
    %513 = vector.load %arg14[%c0_289, %c0_290] : memref<8x384xf32, #tpu.memory_space<vmem>>, vector<8x384xf32>
    tpu.vector_store %arg14[%c0_289, %c0_290], %512 {strides = array<i32>} : memref<8x384xf32, #tpu.memory_space<vmem>>, vector<8x384xf32>,
    %514 = tpu.concatenate %9, %271, %511, %111 in 1 : vector<8x128xf32>, vector<8x128xf32>, vector<8x128xf32>, vector<8x128xf32> -> vector<8x512xf32>
    %c0_291 = arith.constant 0 : index
    %c0_292 = arith.constant 0 : index
    %515 = vector.load %arg15[%c0_291, %c0_292] : memref<8x512xf32, #tpu.memory_space<vmem>>, vector<8x512xf32>
    tpu.vector_store %arg15[%c0_291, %c0_292], %514 {strides = array<i32>} : memref<8x512xf32, #tpu.memory_space<vmem>>, vector<8x512xf32>,
    %c0_293 = arith.constant 0 : index
    %516 = memref.load %arg0[%c0_293] : memref<8xi32, #tpu.memory_space<smem>>
    %517 = arith.index_cast %516 : i32 to index
    %c0_294 = arith.constant 0 : index
    %518 = vector.load %arg14[%517, %c0_294] : memref<8x384xf32, #tpu.memory_space<vmem>>, vector<1x384xf32>
    %c1_295 = arith.constant 1 : index
    %519 = memref.load %arg0[%c1_295] : memref<8xi32, #tpu.memory_space<smem>>
    %520 = arith.index_cast %519 : i32 to index
    %c0_296 = arith.constant 0 : index
    %521 = vector.load %arg14[%520, %c0_296] : memref<8x384xf32, #tpu.memory_space<vmem>>, vector<1x384xf32>
    %c2_297 = arith.constant 2 : index
    %522 = memref.load %arg0[%c2_297] : memref<8xi32, #tpu.memory_space<smem>>
    %523 = arith.index_cast %522 : i32 to index
    %c0_298 = arith.constant 0 : index
    %524 = vector.load %arg14[%523, %c0_298] : memref<8x384xf32, #tpu.memory_space<vmem>>, vector<1x384xf32>
    %c3_299 = arith.constant 3 : index
    %525 = memref.load %arg0[%c3_299] : memref<8xi32, #tpu.memory_space<smem>>
    %526 = arith.index_cast %525 : i32 to index
    %c0_300 = arith.constant 0 : index
    %527 = vector.load %arg14[%526, %c0_300] : memref<8x384xf32, #tpu.memory_space<vmem>>, vector<1x384xf32>
    %c4_301 = arith.constant 4 : index
    %528 = memref.load %arg0[%c4_301] : memref<8xi32, #tpu.memory_space<smem>>
    %529 = arith.index_cast %528 : i32 to index
    %c0_302 = arith.constant 0 : index
    %530 = vector.load %arg14[%529, %c0_302] : memref<8x384xf32, #tpu.memory_space<vmem>>, vector<1x384xf32>
    %c5_303 = arith.constant 5 : index
    %531 = memref.load %arg0[%c5_303] : memref<8xi32, #tpu.memory_space<smem>>
    %532 = arith.index_cast %531 : i32 to index
    %c0_304 = arith.constant 0 : index
    %533 = vector.load %arg14[%532, %c0_304] : memref<8x384xf32, #tpu.memory_space<vmem>>, vector<1x384xf32>
    %c6_305 = arith.constant 6 : index
    %534 = memref.load %arg0[%c6_305] : memref<8xi32, #tpu.memory_space<smem>>
    %535 = arith.index_cast %534 : i32 to index
    %c0_306 = arith.constant 0 : index
    %536 = vector.load %arg14[%535, %c0_306] : memref<8x384xf32, #tpu.memory_space<vmem>>, vector<1x384xf32>
    %c7_307 = arith.constant 7 : index
    %537 = memref.load %arg0[%c7_307] : memref<8xi32, #tpu.memory_space<smem>>
    %538 = arith.index_cast %537 : i32 to index
    %c0_308 = arith.constant 0 : index
    %539 = vector.load %arg14[%538, %c0_308] : memref<8x384xf32, #tpu.memory_space<vmem>>, vector<1x384xf32>
    %c0_309 = arith.constant 0 : index
    %540 = memref.load %arg1[%c0_309] : memref<8xi32, #tpu.memory_space<smem>>
    %541 = arith.index_cast %540 : i32 to index
    %c0_310 = arith.constant 0 : index
    %542 = vector.load %arg15[%541, %c0_310] : memref<8x512xf32, #tpu.memory_space<vmem>>, vector<1x512xf32>
    %c1_311 = arith.constant 1 : index
    %543 = memref.load %arg1[%c1_311] : memref<8xi32, #tpu.memory_space<smem>>
    %544 = arith.index_cast %543 : i32 to index
    %c0_312 = arith.constant 0 : index
    %545 = vector.load %arg15[%544, %c0_312] : memref<8x512xf32, #tpu.memory_space<vmem>>, vector<1x512xf32>
    %c2_313 = arith.constant 2 : index
    %546 = memref.load %arg1[%c2_313] : memref<8xi32, #tpu.memory_space<smem>>
    %547 = arith.index_cast %546 : i32 to index
    %c0_314 = arith.constant 0 : index
    %548 = vector.load %arg15[%547, %c0_314] : memref<8x512xf32, #tpu.memory_space<vmem>>, vector<1x512xf32>
    %c3_315 = arith.constant 3 : index
    %549 = memref.load %arg1[%c3_315] : memref<8xi32, #tpu.memory_space<smem>>
    %550 = arith.index_cast %549 : i32 to index
    %c0_316 = arith.constant 0 : index
    %551 = vector.load %arg15[%550, %c0_316] : memref<8x512xf32, #tpu.memory_space<vmem>>, vector<1x512xf32>
    %c4_317 = arith.constant 4 : index
    %552 = memref.load %arg1[%c4_317] : memref<8xi32, #tpu.memory_space<smem>>
    %553 = arith.index_cast %552 : i32 to index
    %c0_318 = arith.constant 0 : index
    %554 = vector.load %arg15[%553, %c0_318] : memref<8x512xf32, #tpu.memory_space<vmem>>, vector<1x512xf32>
    %c5_319 = arith.constant 5 : index
    %555 = memref.load %arg1[%c5_319] : memref<8xi32, #tpu.memory_space<smem>>
    %556 = arith.index_cast %555 : i32 to index
    %c0_320 = arith.constant 0 : index
    %557 = vector.load %arg15[%556, %c0_320] : memref<8x512xf32, #tpu.memory_space<vmem>>, vector<1x512xf32>
    %c6_321 = arith.constant 6 : index
    %558 = memref.load %arg1[%c6_321] : memref<8xi32, #tpu.memory_space<smem>>
    %559 = arith.index_cast %558 : i32 to index
    %c0_322 = arith.constant 0 : index
    %560 = vector.load %arg15[%559, %c0_322] : memref<8x512xf32, #tpu.memory_space<vmem>>, vector<1x512xf32>
    %c7_323 = arith.constant 7 : index
    %561 = memref.load %arg1[%c7_323] : memref<8xi32, #tpu.memory_space<smem>>
    %562 = arith.index_cast %561 : i32 to index
    %c0_324 = arith.constant 0 : index
    %563 = vector.load %arg15[%562, %c0_324] : memref<8x512xf32, #tpu.memory_space<vmem>>, vector<1x512xf32>
    %564 = tpu.concatenate %518, %521, %524, %527, %530, %533, %536, %539 in 0 : vector<1x384xf32>, vector<1x384xf32>, vector<1x384xf32>, vector<1x384xf32>, vector<1x384xf32>, vector<1x384xf32>, vector<1x384xf32>, vector<1x384xf32> -> vector<8x384xf32>
    %565 = tpu.concatenate %542, %545, %548, %551, %554, %557, %560, %563 in 0 : vector<1x512xf32>, vector<1x512xf32>, vector<1x512xf32>, vector<1x512xf32>, vector<1x512xf32>, vector<1x512xf32>, vector<1x512xf32>, vector<1x512xf32> -> vector<8x512xf32>
    %566 = tpu.concatenate %564, %565 in 1 : vector<8x384xf32>, vector<8x512xf32> -> vector<8x896xf32>
    %c0_325 = arith.constant 0 : index
    %c0_326 = arith.constant 0 : index
    %567 = vector.load %arg9[%c0_325, %c0_326] : memref<896x256xbf16, #tpu.memory_space<vmem>>, vector<896x256xbf16>
    %568 = arith.truncf %566 : vector<8x896xf32> to vector<8x896xbf16>
    %cst_327 = arith.constant dense<0.000000e+00> : vector<8x256xf32>
    %569 = tpu.matmul %568, %567, %cst_327 {dimension_numbers = #tpu.dot_dimension_numbers<[1], [0], [0], [1], [0, 0, 1, 1], [], []>} : vector<8x896xbf16>, vector<896x256xbf16>, vector<8x256xf32> -> vector<8x256xf32>
    %c19 = arith.constant 19 : index
    %c0_328 = arith.constant 0 : index
    %570 = vector.load %arg12[%c19, %c0_328] : memref<30x896xf32, #tpu.memory_space<vmem>>, vector<1x256xf32>
    %571 = vector.broadcast %570 : vector<1x256xf32> to vector<8x256xf32>
    %572 = arith.addf %569, %571 : vector<8x256xf32>
    %cst_329 = arith.constant dense<0.000000e+00> : vector<256xf32>
    %573 = vector.multi_reduction <add>, %572, %cst_329 [0] : vector<8x256xf32> to vector<256xf32>
    %574 = vector.shape_cast %573 : vector<256xf32> to vector<1x256xf32>
    %cst_330 = arith.constant 8.000000e+00 : f32
    %575 = vector.broadcast %cst_330 : f32 to vector<1x256xf32>
    %576 = arith.divf %574, %575 : vector<1x256xf32>
    %577 = arith.mulf %572, %572 : vector<8x256xf32>
    %cst_331 = arith.constant dense<0.000000e+00> : vector<256xf32>
    %578 = vector.multi_reduction <add>, %577, %cst_331 [0] : vector<8x256xf32> to vector<256xf32>
    %579 = vector.shape_cast %578 : vector<256xf32> to vector<1x256xf32>
    %cst_332 = arith.constant 8.000000e+00 : f32
    %580 = vector.broadcast %cst_332 : f32 to vector<1x256xf32>
    %581 = arith.divf %579, %580 : vector<1x256xf32>
    %582 = arith.mulf %576, %576 : vector<1x256xf32>
    %583 = arith.subf %581, %582 : vector<1x256xf32>
    %584 = vector.broadcast %576 : vector<1x256xf32> to vector<8x256xf32>
    %585 = arith.subf %572, %584 : vector<8x256xf32>
    %cst_333 = arith.constant 9.99999974E-6 : f32
    %586 = vector.broadcast %cst_333 : f32 to vector<1x256xf32>
    %587 = arith.addf %583, %586 : vector<1x256xf32>
    %588 = math.rsqrt %587 : vector<1x256xf32>
    %589 = vector.broadcast %588 : vector<1x256xf32> to vector<8x256xf32>
    %590 = arith.mulf %585, %589 : vector<8x256xf32>
    %c20 = arith.constant 20 : index
    %c0_334 = arith.constant 0 : index
    %591 = vector.load %arg12[%c20, %c0_334] : memref<30x896xf32, #tpu.memory_space<vmem>>, vector<1x256xf32>
    %592 = vector.broadcast %591 : vector<1x256xf32> to vector<8x256xf32>
    %593 = arith.mulf %590, %592 : vector<8x256xf32>
    %c21 = arith.constant 21 : index
    %c0_335 = arith.constant 0 : index
    %594 = vector.load %arg12[%c21, %c0_335] : memref<30x896xf32, #tpu.memory_space<vmem>>, vector<1x256xf32>
    %595 = vector.broadcast %594 : vector<1x256xf32> to vector<8x256xf32>
    %596 = arith.addf %593, %595 : vector<8x256xf32>
    %cst_336 = arith.constant 0.000000e+00 : f32
    %597 = vector.broadcast %cst_336 : f32 to vector<8x256xf32>
    %598 = arith.maximumf %596, %597 : vector<8x256xf32>
    %c0_337 = arith.constant 0 : index
    %c0_338 = arith.constant 0 : index
    %599 = vector.load %arg10[%c0_337, %c0_338] : memref<256x128xbf16, #tpu.memory_space<vmem>>, vector<256x128xbf16>
    %600 = arith.truncf %598 : vector<8x256xf32> to vector<8x256xbf16>
    %cst_339 = arith.constant dense<0.000000e+00> : vector<8x128xf32>
    %601 = tpu.matmul %600, %599, %cst_339 {dimension_numbers = #tpu.dot_dimension_numbers<[1], [0], [0], [1], [0, 0, 1, 1], [], []>} : vector<8x256xbf16>, vector<256x128xbf16>, vector<8x128xf32> -> vector<8x128xf32>
    %c22 = arith.constant 22 : index
    %c0_340 = arith.constant 0 : index
    %602 = vector.load %arg12[%c22, %c0_340] : memref<30x896xf32, #tpu.memory_space<vmem>>, vector<1x128xf32>
    %603 = vector.broadcast %602 : vector<1x128xf32> to vector<8x128xf32>
    %604 = arith.addf %601, %603 : vector<8x128xf32>
    %cst_341 = arith.constant dense<0.000000e+00> : vector<128xf32>
    %605 = vector.multi_reduction <add>, %604, %cst_341 [0] : vector<8x128xf32> to vector<128xf32>
    %606 = vector.shape_cast %605 : vector<128xf32> to vector<1x128xf32>
    %cst_342 = arith.constant 8.000000e+00 : f32
    %607 = vector.broadcast %cst_342 : f32 to vector<1x128xf32>
    %608 = arith.divf %606, %607 : vector<1x128xf32>
    %609 = arith.mulf %604, %604 : vector<8x128xf32>
    %cst_343 = arith.constant dense<0.000000e+00> : vector<128xf32>
    %610 = vector.multi_reduction <add>, %609, %cst_343 [0] : vector<8x128xf32> to vector<128xf32>
    %611 = vector.shape_cast %610 : vector<128xf32> to vector<1x128xf32>
    %cst_344 = arith.constant 8.000000e+00 : f32
    %612 = vector.broadcast %cst_344 : f32 to vector<1x128xf32>
    %613 = arith.divf %611, %612 : vector<1x128xf32>
    %614 = arith.mulf %608, %608 : vector<1x128xf32>
    %615 = arith.subf %613, %614 : vector<1x128xf32>
    %616 = vector.broadcast %608 : vector<1x128xf32> to vector<8x128xf32>
    %617 = arith.subf %604, %616 : vector<8x128xf32>
    %cst_345 = arith.constant 9.99999974E-6 : f32
    %618 = vector.broadcast %cst_345 : f32 to vector<1x128xf32>
    %619 = arith.addf %615, %618 : vector<1x128xf32>
    %620 = math.rsqrt %619 : vector<1x128xf32>
    %621 = vector.broadcast %620 : vector<1x128xf32> to vector<8x128xf32>
    %622 = arith.mulf %617, %621 : vector<8x128xf32>
    %c23 = arith.constant 23 : index
    %c0_346 = arith.constant 0 : index
    %623 = vector.load %arg12[%c23, %c0_346] : memref<30x896xf32, #tpu.memory_space<vmem>>, vector<1x128xf32>
    %624 = vector.broadcast %623 : vector<1x128xf32> to vector<8x128xf32>
    %625 = arith.mulf %622, %624 : vector<8x128xf32>
    %c24 = arith.constant 24 : index
    %c0_347 = arith.constant 0 : index
    %626 = vector.load %arg12[%c24, %c0_347] : memref<30x896xf32, #tpu.memory_space<vmem>>, vector<1x128xf32>
    %627 = vector.broadcast %626 : vector<1x128xf32> to vector<8x128xf32>
    %628 = arith.addf %625, %627 : vector<8x128xf32>
    %cst_348 = arith.constant 0.000000e+00 : f32
    %629 = vector.broadcast %cst_348 : f32 to vector<8x128xf32>
    %630 = arith.maximumf %628, %629 : vector<8x128xf32>
    %c0_349 = arith.constant 0 : index
    %c0_350 = arith.constant 0 : index
    %631 = vector.load %arg11[%c0_349, %c0_350] : memref<128x64xbf16, #tpu.memory_space<vmem>>, vector<128x64xbf16>
    %632 = arith.truncf %630 : vector<8x128xf32> to vector<8x128xbf16>
    %cst_351 = arith.constant dense<0.000000e+00> : vector<8x64xf32>
    %633 = tpu.matmul %632, %631, %cst_351 {dimension_numbers = #tpu.dot_dimension_numbers<[1], [0], [0], [1], [0, 0, 1, 1], [], []>} : vector<8x128xbf16>, vector<128x64xbf16>, vector<8x64xf32> -> vector<8x64xf32>
    %c25 = arith.constant 25 : index
    %c0_352 = arith.constant 0 : index
    %634 = vector.load %arg12[%c25, %c0_352] : memref<30x896xf32, #tpu.memory_space<vmem>>, vector<1x64xf32>
    %635 = vector.broadcast %634 : vector<1x64xf32> to vector<8x64xf32>
    %636 = arith.addf %633, %635 : vector<8x64xf32>
    %cst_353 = arith.constant dense<0.000000e+00> : vector<64xf32>
    %637 = vector.multi_reduction <add>, %636, %cst_353 [0] : vector<8x64xf32> to vector<64xf32>
    %638 = vector.shape_cast %637 : vector<64xf32> to vector<1x64xf32>
    %cst_354 = arith.constant 8.000000e+00 : f32
    %639 = vector.broadcast %cst_354 : f32 to vector<1x64xf32>
    %640 = arith.divf %638, %639 : vector<1x64xf32>
    %641 = arith.mulf %636, %636 : vector<8x64xf32>
    %cst_355 = arith.constant dense<0.000000e+00> : vector<64xf32>
    %642 = vector.multi_reduction <add>, %641, %cst_355 [0] : vector<8x64xf32> to vector<64xf32>
    %643 = vector.shape_cast %642 : vector<64xf32> to vector<1x64xf32>
    %cst_356 = arith.constant 8.000000e+00 : f32
    %644 = vector.broadcast %cst_356 : f32 to vector<1x64xf32>
    %645 = arith.divf %643, %644 : vector<1x64xf32>
    %646 = arith.mulf %640, %640 : vector<1x64xf32>
    %647 = arith.subf %645, %646 : vector<1x64xf32>
    %648 = vector.broadcast %640 : vector<1x64xf32> to vector<8x64xf32>
    %649 = arith.subf %636, %648 : vector<8x64xf32>
    %cst_357 = arith.constant 9.99999974E-6 : f32
    %650 = vector.broadcast %cst_357 : f32 to vector<1x64xf32>
    %651 = arith.addf %647, %650 : vector<1x64xf32>
    %652 = math.rsqrt %651 : vector<1x64xf32>
    %653 = vector.broadcast %652 : vector<1x64xf32> to vector<8x64xf32>
    %654 = arith.mulf %649, %653 : vector<8x64xf32>
    %c26 = arith.constant 26 : index
    %c0_358 = arith.constant 0 : index
    %655 = vector.load %arg12[%c26, %c0_358] : memref<30x896xf32, #tpu.memory_space<vmem>>, vector<1x64xf32>
    %656 = vector.broadcast %655 : vector<1x64xf32> to vector<8x64xf32>
    %657 = arith.mulf %654, %656 : vector<8x64xf32>
    %c27 = arith.constant 27 : index
    %c0_359 = arith.constant 0 : index
    %658 = vector.load %arg12[%c27, %c0_359] : memref<30x896xf32, #tpu.memory_space<vmem>>, vector<1x64xf32>
    %659 = vector.broadcast %658 : vector<1x64xf32> to vector<8x64xf32>
    %660 = arith.addf %657, %659 : vector<8x64xf32>
    %cst_360 = arith.constant 0.000000e+00 : f32
    %661 = vector.broadcast %cst_360 : f32 to vector<8x64xf32>
    %662 = arith.maximumf %660, %661 : vector<8x64xf32>
    %c28 = arith.constant 28 : index
    %c0_361 = arith.constant 0 : index
    %663 = vector.load %arg12[%c28, %c0_361] : memref<30x896xf32, #tpu.memory_space<vmem>>, vector<1x64xf32>
    %664 = vector.broadcast %663 : vector<1x64xf32> to vector<8x64xf32>
    %665 = arith.mulf %662, %664 : vector<8x64xf32>
    %cst_362 = arith.constant dense<0.000000e+00> : vector<8xf32>
    %666 = vector.multi_reduction <add>, %665, %cst_362 [1] : vector<8x64xf32> to vector<8xf32>
    %667 = vector.shape_cast %666 : vector<8xf32> to vector<8x1xf32>
    %c29 = arith.constant 29 : index
    %c0_363 = arith.constant 0 : index
    %668 = vector.load %arg12[%c29, %c0_363] : memref<30x896xf32, #tpu.memory_space<vmem>>, vector<1x1xf32>
    %669 = vector.broadcast %668 : vector<1x1xf32> to vector<8x1xf32>
    %670 = arith.addf %667, %669 : vector<8x1xf32>
    %671 = arith.negf %670 : vector<8x1xf32>
    %672 = math.exp %671 : vector<8x1xf32>
    %cst_364 = arith.constant 1.000000e+00 : f32
    %673 = vector.broadcast %cst_364 : f32 to vector<8x1xf32>
    %674 = arith.addf %673, %672 : vector<8x1xf32>
    %675 = arith.divf %673, %674 : vector<8x1xf32>
    %c0_365 = arith.constant 0 : index
    %c0_366 = arith.constant 0 : index
    %676 = vector.load %arg13[%c0_365, %c0_366] : memref<8x1xf32, #tpu.memory_space<vmem>>, vector<8x1xf32>
    tpu.vector_store %arg13[%c0_365, %c0_366], %675 {strides = array<i32>} : memref<8x1xf32, #tpu.memory_space<vmem>>, vector<8x1xf32>,
    return
  }
}

</mosaic_0001>

<llo_original>
// kernel: my_net_forward.1
$region0: #{my_net_forward.1}
  #allocation0 [shape = 'u32[]', space=smem, size = 0x4, offset = 0x4, fixed_abs, tag = 'smem constant byte address 0x4 - core index']
  #allocation1 [shape = 'u32[144,128]{1,0:T(1,128)}', space=vmem, size = 0x12000, scoped, tag = 'internal scratch']
  #allocation2 [shape = 'f32[8,384]{1,0:T(8,128)}', space=vmem, size = 0x3000, scoped, tag = 'scratch operand']
  #allocation3 [shape = 'f32[8,512]{1,0:T(8,128)}', space=vmem, size = 0x4000, scoped, tag = 'scratch operand']
  %s0 = inlined_call_operand.vmem [shape: s32[8], index: 0, kind: input, shape index: {}]
  %s1 = inlined_call_operand.vmem [shape: s32[8], index: 1, kind: input, shape index: {}]
  %s2 = inlined_call_operand.vmem [shape: bf16[8,128], index: 2, kind: input, shape index: {}]
  %s3 = inlined_call_operand.hbm [shape: bf16[128,896], index: 3, kind: input, shape index: {}]
  %s4 = inlined_call_operand.vmem [shape: bf16[7,8,8], index: 4, kind: input, shape index: {}]
  %s5 = inlined_call_operand.vmem [shape: bf16[8,8,8], index: 5, kind: input, shape index: {}]
  %s6 = inlined_call_operand.hbm [shape: bf16[7,128,128], index: 6, kind: input, shape index: {}]
  %s7 = inlined_call_operand.hbm [shape: bf16[3,128,384], index: 7, kind: input, shape index: {}]
  %s8 = inlined_call_operand.hbm [shape: bf16[8,256,128], index: 8, kind: input, shape index: {}]
  %s9 = inlined_call_operand.hbm [shape: bf16[896,256], index: 9, kind: input, shape index: {}]
  %s10 = inlined_call_operand.hbm [shape: bf16[256,128], index: 10, kind: input, shape index: {}]
  %s11 = inlined_call_operand.vmem [shape: bf16[128,64], index: 11, kind: input, shape index: {}]
  %s12 = inlined_call_operand.hbm [shape: f32[30,896], index: 12, kind: input, shape index: {}]
  %s13 = inlined_call_operand.vmem [shape: f32[8,1], index: 13, kind: output, shape index: {}]
  %s14 = sld [smem:[#allocation0]]
  $region98: #{my_net_forward.1} parent=0
    _
  %s16 = ssub.s32 1, %s14
  %s17 = scalar_select 0, %s16, %s14
  $region1: #{my_net_forward.1} parent=0
    #allocation4 [shape = 'u8[512]{0}', space=smem, size = 0x200, scoped, tag = 'input window, operand 0, single buffered']
    #allocation5 [shape = 's32[1]{0}', space=sflag, size = 0x4, scoped, tag = 'scoped memory for my_net_forward.1']
    #allocation6 [shape = 's32[1]{0}', space=sflag, size = 0x4, scoped, tag = 'scoped memory for my_net_forward.1']
    #allocation7 [shape = 'u8[512]{0}', space=smem, size = 0x200, scoped, tag = 'input window, operand 1, single buffered']
    #allocation8 [shape = 's32[1]{0}', space=sflag, size = 0x4, scoped, tag = 'scoped memory for my_net_forward.1']
    #allocation9 [shape = 'u8[229376]{0}', space=vmem, size = 0x38000, scoped, tag = 'input window, operand 3, single buffered']
    #allocation10 [shape = 'u8[229376]{0}', space=vmem, size = 0x38000, scoped, tag = 'input window, operand 6, single buffered']
    #allocation11 [shape = 's32[1]{0}', space=sflag, size = 0x4, scoped, tag = 'scoped memory for my_net_forward.1']
    #allocation12 [shape = 'u8[294912]{0}', space=vmem, size = 0x48000, scoped, tag = 'input window, operand 7, single buffered']
    #allocation13 [shape = 'u8[524288]{0}', space=vmem, size = 0x80000, scoped, tag = 'input window, operand 8, single buffered']
    #allocation14 [shape = 's32[1]{0}', space=sflag, size = 0x4, scoped, tag = 'scoped memory for my_net_forward.1']
    #allocation15 [shape = 'u8[458752]{0}', space=vmem, size = 0x70000, scoped, tag = 'input window, operand 9, single buffered']
    #allocation16 [shape = 'u8[65536]{0}', space=vmem, size = 0x10000, scoped, tag = 'input window, operand 10, single buffered']
    #allocation17 [shape = 's32[1]{0}', space=sflag, size = 0x4, scoped, tag = 'scoped memory for my_net_forward.1']
    #allocation18 [shape = 'u8[114688]{0}', space=vmem, size = 0x1c000, scoped, tag = 'input window, operand 12, single buffered']
    %18 = vsyncpa [#allocation6], 0
    %19 = vsyncpa [#allocation8], 0
    %20 = vsyncpa [#allocation5], 0
    %21 = vsyncpa [#allocation11], 0
    %22 = vsyncpa [#allocation14], 0
    %23 = vsyncpa [#allocation17], 0
    // Predicated region
    $region2: #{my_net_forward.1} parent=1 // pred_check
      _
    $region3: #{my_net_forward.1} parent=1 // pred_check_branch
      %25 = sbr.rel (0) target = $region5
    $region4: #{my_net_forward.1} parent=1 // pred_region
      %s27 = ssub.s32 16, 16
      %28 = vsyncadd [#allocation6], %s27
      %s30 = sshll.u32 %s0, 4
      %s31 = int_to_ptr.vmem [resolvable:$true] %s30
      %33 = dma.vmem_to_smem %s31, 16, [#allocation4], [#allocation6]
    $region5: #{my_net_forward.1} parent=1 // pred_fallthru
      _
    // Predicated region
    $region6: #{my_net_forward.1} parent=1 // pred_check
      _
    $region7: #{my_net_forward.1} parent=1 // pred_check_branch
      %35 = sbr.rel (0) target = $region9
    $region8: #{my_net_forward.1} parent=1 // pred_region
      %s37 = ssub.s32 16, 16
      %38 = vsyncadd [#allocation8], %s37
      %s40 = sshll.u32 %s1, 4
      %s41 = int_to_ptr.vmem [resolvable:$true] %s40
      %43 = dma.vmem_to_smem %s41, 16, [#allocation7], [#allocation8]
    $region9: #{my_net_forward.1} parent=1 // pred_fallthru
      _
    // Predicated region
    $region10: #{my_net_forward.1} parent=1 // pred_check
      _
    $region11: #{my_net_forward.1} parent=1 // pred_check_branch
      %45 = sbr.rel (0) target = $region13
    $region12: #{my_net_forward.1} parent=1 // pred_region
      _
    $region13: #{my_net_forward.1} parent=1 // pred_fallthru
      _
    // Predicated region
    $region14: #{my_net_forward.1} parent=1 // pred_check
      _
    $region15: #{my_net_forward.1} parent=1 // pred_check_branch
      %47 = sbr.rel (0) target = $region17
    $region16: #{my_net_forward.1} parent=1 // pred_region
      %s49 = ssub.s32 7168, 7168
      %50 = vsyncadd [#allocation5], %s49
      %s51 = sshll.u32 [#allocation9], 4
      %s52 = int_to_ptr.vmem [resolvable:$true] %s51
      %57 = dma.hbm_to_vmem [thread:$0]  %s3, 7168, %s52, [#allocation5], 448, 448, 28
    $region17: #{my_net_forward.1} parent=1 // pred_fallthru
      _
    // Predicated region
    $region18: #{my_net_forward.1} parent=1 // pred_check
      _
    $region19: #{my_net_forward.1} parent=1 // pred_check_branch
      %59 = sbr.rel (0) target = $region21
    $region20: #{my_net_forward.1} parent=1 // pred_region
      _
    $region21: #{my_net_forward.1} parent=1 // pred_fallthru
      _
    // Predicated region
    $region22: #{my_net_forward.1} parent=1 // pred_check
      _
    $region23: #{my_net_forward.1} parent=1 // pred_check_branch
      %61 = sbr.rel (0) target = $region25
    $region24: #{my_net_forward.1} parent=1 // pred_region
      _
    $region25: #{my_net_forward.1} parent=1 // pred_fallthru
      _
    // Predicated region
    $region26: #{my_net_forward.1} parent=1 // pred_check
      _
    $region27: #{my_net_forward.1} parent=1 // pred_check_branch
      %63 = sbr.rel (0) target = $region29
    $region28: #{my_net_forward.1} parent=1 // pred_region
      %s65 = ssub.s32 7168, 7168
      %66 = vsyncadd [#allocation11], %s65
      %s67 = sshll.u32 [#allocation10], 4
      %s68 = int_to_ptr.vmem [resolvable:$true] %s67
      %73 = dma.hbm_to_vmem [thread:$0]  %s6, 7168, %s68, [#allocation11], 64, 64, 4
    $region29: #{my_net_forward.1} parent=1 // pred_fallthru
      _
    // Predicated region
    $region30: #{my_net_forward.1} parent=1 // pred_check
      _
    $region31: #{my_net_forward.1} parent=1 // pred_check_branch
      %75 = sbr.rel (0) target = $region33
    $region32: #{my_net_forward.1} parent=1 // pred_region
      %s77 = ssub.s32 9216, 9216
      %78 = vsyncadd [#allocation11], %s77
      %s79 = sshll.u32 [#allocation12], 4
      %s80 = int_to_ptr.vmem [resolvable:$true] %s79
      %85 = dma.hbm_to_vmem [thread:$0]  %s7, 9216, %s80, [#allocation11], 192, 192, 12
    $region33: #{my_net_forward.1} parent=1 // pred_fallthru
      _
    // Predicated region
    $region34: #{my_net_forward.1} parent=1 // pred_check
      _
    $region35: #{my_net_forward.1} parent=1 // pred_check_branch
      %87 = sbr.rel (0) target = $region37
    $region36: #{my_net_forward.1} parent=1 // pred_region
      %s89 = ssub.s32 16384, 16384
      %90 = vsyncadd [#allocation14], %s89
      %s91 = sshll.u32 [#allocation13], 4
      %s92 = int_to_ptr.vmem [resolvable:$true] %s91
      %97 = dma.hbm_to_vmem [thread:$0]  %s8, 16384, %s92, [#allocation14], 64, 64, 4
    $region37: #{my_net_forward.1} parent=1 // pred_fallthru
      _
    // Predicated region
    $region38: #{my_net_forward.1} parent=1 // pred_check
      _
    $region39: #{my_net_forward.1} parent=1 // pred_check_branch
      %99 = sbr.rel (0) target = $region41
    $region40: #{my_net_forward.1} parent=1 // pred_region
      %s101 = ssub.s32 14336, 14336
      %102 = vsyncadd [#allocation14], %s101
      %s103 = sshll.u32 [#allocation15], 4
      %s104 = int_to_ptr.vmem [resolvable:$true] %s103
      %109 = dma.hbm_to_vmem [thread:$0]  %s9, 14336, %s104, [#allocation14], 128, 128, 8
    $region41: #{my_net_forward.1} parent=1 // pred_fallthru
      _
    // Predicated region
    $region42: #{my_net_forward.1} parent=1 // pred_check
      _
    $region43: #{my_net_forward.1} parent=1 // pred_check_branch
      %111 = sbr.rel (0) target = $region45
    $region44: #{my_net_forward.1} parent=1 // pred_region
      %s113 = ssub.s32 2048, 2048
      %114 = vsyncadd [#allocation17], %s113
      %s115 = sshll.u32 [#allocation16], 4
      %s116 = int_to_ptr.vmem [resolvable:$true] %s115
      %121 = dma.hbm_to_vmem [thread:$0]  %s10, 2048, %s116, [#allocation17], 64, 64, 4
    $region45: #{my_net_forward.1} parent=1 // pred_fallthru
      _
    // Predicated region
    $region46: #{my_net_forward.1} parent=1 // pred_check
      _
    $region47: #{my_net_forward.1} parent=1 // pred_check_branch
      %123 = sbr.rel (0) target = $region49
    $region48: #{my_net_forward.1} parent=1 // pred_region
      _
    $region49: #{my_net_forward.1} parent=1 // pred_fallthru
      _
    // Predicated region
    $region50: #{my_net_forward.1} parent=1 // pred_check
      _
    $region51: #{my_net_forward.1} parent=1 // pred_check_branch
      %125 = sbr.rel (0) target = $region53
    $region52: #{my_net_forward.1} parent=1 // pred_region
      %s127 = ssub.s32 3584, 3584
      %128 = vsyncadd [#allocation17], %s127
      %s129 = sshll.u32 [#allocation18], 4
      %s130 = int_to_ptr.vmem [resolvable:$true] %s129
      %135 = dma.hbm_to_vmem [thread:$0]  %s12, 3584, %s130, [#allocation17], 896, 896, 56
    $region53: #{my_net_forward.1} parent=1 // pred_fallthru
      _
    // Predicated region
    $region54: #{my_net_forward.1} parent=1 // pred_check
      _
    $region55: #{my_net_forward.1} parent=1 // pred_check_branch
      %137 = sbr.rel (0) target = $region57
    $region56: #{my_net_forward.1} parent=1 // pred_region
      %138 = dma.done [#allocation6], 16
    $region57: #{my_net_forward.1} parent=1 // pred_fallthru
      _
    // Predicated region
    $region58: #{my_net_forward.1} parent=1 // pred_check
      _
    $region59: #{my_net_forward.1} parent=1 // pred_check_branch
      %140 = sbr.rel (0) target = $region61
    $region60: #{my_net_forward.1} parent=1 // pred_region
      %141 = dma.done [#allocation8], 16
    $region61: #{my_net_forward.1} parent=1 // pred_fallthru
      _
    // Predicated region
    $region62: #{my_net_forward.1} parent=1 // pred_check
      _
    $region63: #{my_net_forward.1} parent=1 // pred_check_branch
      %143 = sbr.rel (0) target = $region65
    $region64: #{my_net_forward.1} parent=1 // pred_region
      %144 = dma.done [#allocation5], 7168
    $region65: #{my_net_forward.1} parent=1 // pred_fallthru
      _
    // Predicated region
    $region66: #{my_net_forward.1} parent=1 // pred_check
      _
    $region67: #{my_net_forward.1} parent=1 // pred_check_branch
      %146 = sbr.rel (0) target = $region69
    $region68: #{my_net_forward.1} parent=1 // pred_region
      %147 = dma.done [#allocation11], 7168
    $region69: #{my_net_forward.1} parent=1 // pred_fallthru
      _
    // Predicated region
    $region70: #{my_net_forward.1} parent=1 // pred_check
      _
    $region71: #{my_net_forward.1} parent=1 // pred_check_branch
      %149 = sbr.rel (0) target = $region73
    $region72: #{my_net_forward.1} parent=1 // pred_region
      %150 = dma.done [#allocation11], 9216
    $region73: #{my_net_forward.1} parent=1 // pred_fallthru
      _
    // Predicated region
    $region74: #{my_net_forward.1} parent=1 // pred_check
      _
    $region75: #{my_net_forward.1} parent=1 // pred_check_branch
      %152 = sbr.rel (0) target = $region77
    $region76: #{my_net_forward.1} parent=1 // pred_region
      %153 = dma.done [#allocation14], 16384
    $region77: #{my_net_forward.1} parent=1 // pred_fallthru
      _
    // Predicated region
    $region78: #{my_net_forward.1} parent=1 // pred_check
      _
    $region79: #{my_net_forward.1} parent=1 // pred_check_branch
      %155 = sbr.rel (0) target = $region81
    $region80: #{my_net_forward.1} parent=1 // pred_region
      %156 = dma.done [#allocation14], 14336
    $region81: #{my_net_forward.1} parent=1 // pred_fallthru
      _
    // Predicated region
    $region82: #{my_net_forward.1} parent=1 // pred_check
      _
    $region83: #{my_net_forward.1} parent=1 // pred_check_branch
      %158 = sbr.rel (0) target = $region85
    $region84: #{my_net_forward.1} parent=1 // pred_region
      %159 = dma.done [#allocation17], 2048
    $region85: #{my_net_forward.1} parent=1 // pred_fallthru
      _
    // Predicated region
    $region86: #{my_net_forward.1} parent=1 // pred_check
      _
    $region87: #{my_net_forward.1} parent=1 // pred_check_branch
      %161 = sbr.rel (0) target = $region89
    $region88: #{my_net_forward.1} parent=1 // pred_region
      %162 = dma.done [#allocation17], 3584
    $region89: #{my_net_forward.1} parent=1 // pred_fallthru
      _
    %163 = sfence
    %v167 = vld [vmem:[%s2] sm:$0xf]
    %v168 = vld [vmem:[#allocation9] sm:$0xff]
    %v169 = vld [vmem:[#allocation9 + $0x8] sm:$0xff]
    %v170 = vld [vmem:[#allocation9 + $0x10] sm:$0xff]
    %v171 = vld [vmem:[#allocation9 + $0x18] sm:$0xf]
    %v172 = vld [vmem:[#allocation9 + $0x1c] sm:$0xff]
    %v173 = vld [vmem:[#allocation9 + $0x24] sm:$0xff]
    %v174 = vld [vmem:[#allocation9 + $0x2c] sm:$0xff]
    %v175 = vld [vmem:[#allocation9 + $0x34] sm:$0xf]
    %v176 = vld [vmem:[#allocation9 + $0x38] sm:$0xff]
    %v177 = vld [vmem:[#allocation9 + $0x40] sm:$0xff]
    %v178 = vld [vmem:[#allocation9 + $0x48] sm:$0xff]
    %v179 = vld [vmem:[#allocation9 + $0x50] sm:$0xf]
    %v180 = vld [vmem:[#allocation9 + $0x54] sm:$0xff]
    %v181 = vld [vmem:[#allocation9 + $0x5c] sm:$0xff]
    %v182 = vld [vmem:[#allocation9 + $0x64] sm:$0xff]
    %v183 = vld [vmem:[#allocation9 + $0x6c] sm:$0xf]
    %v184 = vld [vmem:[#allocation9 + $0x70] sm:$0xff]
    %v185 = vld [vmem:[#allocation9 + $0x78] sm:$0xff]
    %v186 = vld [vmem:[#allocation9 + $0x80] sm:$0xff]
    %v187 = vld [vmem:[#allocation9 + $0x88] sm:$0xf]
    %v188 = vld [vmem:[#allocation9 + $0x8c] sm:$0xff]
    %v189 = vld [vmem:[#allocation9 + $0x94] sm:$0xff]
    %v190 = vld [vmem:[#allocation9 + $0x9c] sm:$0xff]
    %v191 = vld [vmem:[#allocation9 + $0xa4] sm:$0xf]
    %v192 = vld [vmem:[#allocation9 + $0xa8] sm:$0xff]
    %v193 = vld [vmem:[#allocation9 + $0xb0] sm:$0xff]
    %v194 = vld [vmem:[#allocation9 + $0xb8] sm:$0xff]
    %v195 = vld [vmem:[#allocation9 + $0xc0] sm:$0xf]
    %v196 = vld [vmem:[#allocation9 + $0xc4] sm:$0xff]
    %v197 = vld [vmem:[#allocation9 + $0xcc] sm:$0xff]
    %v198 = vld [vmem:[#allocation9 + $0xd4] sm:$0xff]
    %v199 = vld [vmem:[#allocation9 + $0xdc] sm:$0xf]
    %v200 = vld [vmem:[#allocation9 + $0xe0] sm:$0xff]
    %v201 = vld [vmem:[#allocation9 + $0xe8] sm:$0xff]
    %v202 = vld [vmem:[#allocation9 + $0xf0] sm:$0xff]
    %v203 = vld [vmem:[#allocation9 + $0xf8] sm:$0xf]
    %v204 = vld [vmem:[#allocation9 + $0xfc] sm:$0xff]
    %v205 = vld [vmem:[#allocation9 + $0x104] sm:$0xff]
    %v206 = vld [vmem:[#allocation9 + $0x10c] sm:$0xff]
    %v207 = vld [vmem:[#allocation9 + $0x114] sm:$0xf]
    %v208 = vld [vmem:[#allocation9 + $0x118] sm:$0xff]
    %v209 = vld [vmem:[#allocation9 + $0x120] sm:$0xff]
    %v210 = vld [vmem:[#allocation9 + $0x128] sm:$0xff]
    %v211 = vld [vmem:[#allocation9 + $0x130] sm:$0xf]
    %v212 = vld [vmem:[#allocation9 + $0x134] sm:$0xff]
    %v213 = vld [vmem:[#allocation9 + $0x13c] sm:$0xff]
    %v214 = vld [vmem:[#allocation9 + $0x144] sm:$0xff]
    %v215 = vld [vmem:[#allocation9 + $0x14c] sm:$0xf]
    %v216 = vld [vmem:[#allocation9 + $0x150] sm:$0xff]
    %v217 = vld [vmem:[#allocation9 + $0x158] sm:$0xff]
    %v218 = vld [vmem:[#allocation9 + $0x160] sm:$0xff]
    %v219 = vld [vmem:[#allocation9 + $0x168] sm:$0xf]
    %v220 = vld [vmem:[#allocation9 + $0x16c] sm:$0xff]
    %v221 = vld [vmem:[#allocation9 + $0x174] sm:$0xff]
    %v222 = vld [vmem:[#allocation9 + $0x17c] sm:$0xff]
    %v223 = vld [vmem:[#allocation9 + $0x184] sm:$0xf]
    %v224 = vld [vmem:[#allocation9 + $0x188] sm:$0xff]
    %v225 = vld [vmem:[#allocation9 + $0x190] sm:$0xff]
    %v226 = vld [vmem:[#allocation9 + $0x198] sm:$0xff]
    %v227 = vld [vmem:[#allocation9 + $0x1a0] sm:$0xf]
    %v228 = vld [vmem:[#allocation9 + $0x1a4] sm:$0xff]
    %v229 = vld [vmem:[#allocation9 + $0x1ac] sm:$0xff]
    %v230 = vld [vmem:[#allocation9 + $0x1b4] sm:$0xff]
    %v231 = vld [vmem:[#allocation9 + $0x1bc] sm:$0xf]
    %v232 = vld [vmem:[#allocation18] ss:$8 sm:$0xf]
    %v233 = vld [vmem:[#allocation18] ss:$8 sm:$0xf0]
    %v234 = vor.u32 %v232, %v233
    %v236 = vlaneseq
    %v237 = vshrl.u32 %v236, 7
    %v238 = vsub.s32 0, %v237
    %v239 = vrot.slane %v234, %v238
    %v240 = vlaneseq
    %v241 = vshrl.u32 %v240, 7
    %v242 = vsub.s32 1, %v241
    %v243 = vrot.slane %v234, %v242
    %v244 = vlaneseq
    %v245 = vshrl.u32 %v244, 7
    %v246 = vsub.s32 2, %v245
    %v247 = vrot.slane %v234, %v246
    %v248 = vlaneseq
    %v249 = vshrl.u32 %v248, 7
    %v250 = vsub.s32 3, %v249
    %v251 = vrot.slane %v234, %v250
    %v252 = vlaneseq
    %v253 = vshrl.u32 %v252, 7
    %v254 = vsub.s32 4, %v253
    %v255 = vrot.slane %v234, %v254
    %v256 = vlaneseq
    %v257 = vshrl.u32 %v256, 7
    %v258 = vsub.s32 5, %v257
    %v259 = vrot.slane %v234, %v258
    %v260 = vlaneseq
    %v261 = vshrl.u32 %v260, 7
    %v262 = vsub.s32 6, %v261
    %v263 = vrot.slane %v234, %v262
    %v335 = vunpack.c.l.b16 %v168
    %v336 = vunpack.c.h.b16 %v168
    %v337 = vunpack.c.l.b16 %v169
    %v338 = vunpack.c.h.b16 %v169
    %v339 = vunpack.c.l.b16 %v170
    %v340 = vunpack.c.h.b16 %v170
    %v341 = vunpack.c.l.b16 %v171
    %v342 = vunpack.c.l.b16 %v172
    %v343 = vunpack.c.h.b16 %v172
    %v344 = vunpack.c.l.b16 %v173
    %v345 = vunpack.c.h.b16 %v173
    %v346 = vunpack.c.l.b16 %v174
    %v347 = vunpack.c.h.b16 %v174
    %v348 = vunpack.c.l.b16 %v175
    %v349 = vunpack.c.l.b16 %v176
    %v350 = vunpack.c.h.b16 %v176
    %v351 = vunpack.c.l.b16 %v177
    %v352 = vunpack.c.h.b16 %v177
    %v353 = vunpack.c.l.b16 %v178
    %v354 = vunpack.c.h.b16 %v178
    %v355 = vunpack.c.l.b16 %v179
    %v356 = vunpack.c.l.b16 %v180
    %v357 = vunpack.c.h.b16 %v180
    %v358 = vunpack.c.l.b16 %v181
    %v359 = vunpack.c.h.b16 %v181
    %v360 = vunpack.c.l.b16 %v182
    %v361 = vunpack.c.h.b16 %v182
    %v362 = vunpack.c.l.b16 %v183
    %v363 = vunpack.c.l.b16 %v184
    %v364 = vunpack.c.h.b16 %v184
    %v365 = vunpack.c.l.b16 %v185
    %v366 = vunpack.c.h.b16 %v185
    %v367 = vunpack.c.l.b16 %v186
    %v368 = vunpack.c.h.b16 %v186
    %v369 = vunpack.c.l.b16 %v187
    %v370 = vunpack.c.l.b16 %v188
    %v371 = vunpack.c.h.b16 %v188
    %v372 = vunpack.c.l.b16 %v189
    %v373 = vunpack.c.h.b16 %v189
    %v374 = vunpack.c.l.b16 %v190
    %v375 = vunpack.c.h.b16 %v190
    %v376 = vunpack.c.l.b16 %v191
    %v377 = vunpack.c.l.b16 %v192
    %v378 = vunpack.c.h.b16 %v192
    %v379 = vunpack.c.l.b16 %v193
    %v380 = vunpack.c.h.b16 %v193
    %v381 = vunpack.c.l.b16 %v194
    %v382 = vunpack.c.h.b16 %v194
    %v383 = vunpack.c.l.b16 %v195
    %v384 = vunpack.c.l.b16 %v196
    %v385 = vunpack.c.h.b16 %v196
    %v386 = vunpack.c.l.b16 %v197
    %v387 = vunpack.c.h.b16 %v197
    %v388 = vunpack.c.l.b16 %v198
    %v389 = vunpack.c.h.b16 %v198
    %v390 = vunpack.c.l.b16 %v199
    %v391 = vunpack.c.l.b16 %v200
    %v392 = vunpack.c.h.b16 %v200
    %v393 = vunpack.c.l.b16 %v201
    %v394 = vunpack.c.h.b16 %v201
    %v395 = vunpack.c.l.b16 %v202
    %v396 = vunpack.c.h.b16 %v202
    %v397 = vunpack.c.l.b16 %v203
    %v398 = vunpack.c.l.b16 %v204
    %v399 = vunpack.c.h.b16 %v204
    %v400 = vunpack.c.l.b16 %v205
    %v401 = vunpack.c.h.b16 %v205
    %v402 = vunpack.c.l.b16 %v206
    %v403 = vunpack.c.h.b16 %v206
    %v404 = vunpack.c.l.b16 %v207
    %v405 = vunpack.c.l.b16 %v208
    %v406 = vunpack.c.h.b16 %v208
    %v407 = vunpack.c.l.b16 %v209
    %v408 = vunpack.c.h.b16 %v209
    %v409 = vunpack.c.l.b16 %v210
    %v410 = vunpack.c.h.b16 %v210
    %v411 = vunpack.c.l.b16 %v211
    %v412 = vunpack.c.l.b16 %v212
    %v413 = vunpack.c.h.b16 %v212
    %v414 = vunpack.c.l.b16 %v213
    %v415 = vunpack.c.h.b16 %v213
    %v416 = vunpack.c.l.b16 %v214
    %v417 = vunpack.c.h.b16 %v214
    %v418 = vunpack.c.l.b16 %v215
    %v419 = vunpack.c.l.b16 %v216
    %v420 = vunpack.c.h.b16 %v216
    %v421 = vunpack.c.l.b16 %v217
    %v422 = vunpack.c.h.b16 %v217
    %v423 = vunpack.c.l.b16 %v218
    %v424 = vunpack.c.h.b16 %v218
    %v425 = vunpack.c.l.b16 %v219
    %v426 = vunpack.c.l.b16 %v220
    %v427 = vunpack.c.h.b16 %v220
    %v428 = vunpack.c.l.b16 %v221
    %v429 = vunpack.c.h.b16 %v221
    %v430 = vunpack.c.l.b16 %v222
    %v431 = vunpack.c.h.b16 %v222
    %v432 = vunpack.c.l.b16 %v223
    %v433 = vunpack.c.l.b16 %v224
    %v434 = vunpack.c.h.b16 %v224
    %v435 = vunpack.c.l.b16 %v225
    %v436 = vunpack.c.h.b16 %v225
    %v437 = vunpack.c.l.b16 %v226
    %v438 = vunpack.c.h.b16 %v226
    %v439 = vunpack.c.l.b16 %v227
    %v440 = vunpack.c.l.b16 %v228
    %v441 = vunpack.c.h.b16 %v228
    %v442 = vunpack.c.l.b16 %v229
    %v443 = vunpack.c.h.b16 %v229
    %v444 = vunpack.c.l.b16 %v230
    %v445 = vunpack.c.h.b16 %v230
    %v446 = vunpack.c.l.b16 %v231
    %v447 = vpack.c.b16 %v342, %v335
    %v448 = vpack.c.b16 %v343, %v336
    %v449 = vpack.c.b16 %v344, %v337
    %v450 = vpack.c.b16 %v345, %v338
    %v451 = vpack.c.b16 %v346, %v339
    %v452 = vpack.c.b16 %v347, %v340
    %v453 = vpack.c.b16 %v348, %v341
    %v454 = vpack.c.b16 %v356, %v349
    %v455 = vpack.c.b16 %v357, %v350
    %v456 = vpack.c.b16 %v358, %v351
    %v457 = vpack.c.b16 %v359, %v352
    %v458 = vpack.c.b16 %v360, %v353
    %v459 = vpack.c.b16 %v361, %v354
    %v460 = vpack.c.b16 %v362, %v355
    %v461 = vpack.c.b16 %v370, %v363
    %v462 = vpack.c.b16 %v371, %v364
    %v463 = vpack.c.b16 %v372, %v365
    %v464 = vpack.c.b16 %v373, %v366
    %v465 = vpack.c.b16 %v374, %v367
    %v466 = vpack.c.b16 %v375, %v368
    %v467 = vpack.c.b16 %v376, %v369
    %v468 = vpack.c.b16 %v384, %v377
    %v469 = vpack.c.b16 %v385, %v378
    %v470 = vpack.c.b16 %v386, %v379
    %v471 = vpack.c.b16 %v387, %v380
    %v472 = vpack.c.b16 %v388, %v381
    %v473 = vpack.c.b16 %v389, %v382
    %v474 = vpack.c.b16 %v390, %v383
    %v475 = vpack.c.b16 %v398, %v391
    %v476 = vpack.c.b16 %v399, %v392
    %v477 = vpack.c.b16 %v400, %v393
    %v478 = vpack.c.b16 %v401, %v394
    %v479 = vpack.c.b16 %v402, %v395
    %v480 = vpack.c.b16 %v403, %v396
    %v481 = vpack.c.b16 %v404, %v397
    %v482 = vpack.c.b16 %v412, %v405
    %v483 = vpack.c.b16 %v413, %v406
    %v484 = vpack.c.b16 %v414, %v407
    %v485 = vpack.c.b16 %v415, %v408
    %v486 = vpack.c.b16 %v416, %v409
    %v487 = vpack.c.b16 %v417, %v410
    %v488 = vpack.c.b16 %v418, %v411
    %v489 = vpack.c.b16 %v426, %v419
    %v490 = vpack.c.b16 %v427, %v420
    %v491 = vpack.c.b16 %v428, %v421
    %v492 = vpack.c.b16 %v429, %v422
    %v493 = vpack.c.b16 %v430, %v423
    %v494 = vpack.c.b16 %v431, %v424
    %v495 = vpack.c.b16 %v432, %v425
    %v496 = vpack.c.b16 %v440, %v433
    %v497 = vpack.c.b16 %v441, %v434
    %v498 = vpack.c.b16 %v442, %v435
    %v499 = vpack.c.b16 %v443, %v436
    %v500 = vpack.c.b16 %v444, %v437
    %v501 = vpack.c.b16 %v445, %v438
    %v502 = vpack.c.b16 %v446, %v439
    %559 = vmatprep.subr.bf16.mxu0 %v448
    %560 = vmatpush1.bf16.msra.mxu0 %v447
    %561 = vmatprep.subr.bf16.mxu0 %v455
    %562 = vmatpush1.bf16.msra.mxu0 %v454
    %563 = vmatprep.subr.bf16.mxu0 %v462
    %564 = vmatpush1.bf16.msra.mxu0 %v461
    %565 = vmatprep.subr.bf16.mxu0 %v469
    %566 = vmatpush1.bf16.msra.mxu0 %v468
    %567 = vmatprep.subr.bf16.mxu0 %v476
    %568 = vmatpush1.bf16.msra.mxu0 %v475
    %569 = vmatprep.subr.bf16.mxu0 %v483
    %570 = vmatpush1.bf16.msra.mxu0 %v482
    %571 = vmatprep.subr.bf16.mxu0 %v490
    %572 = vmatpush1.bf16.msra.mxu0 %v489
    %573 = vmatprep.subr.bf16.mxu0 %v497
    %574 = vmatpush1.bf16.msra.mxu0 %v496
    %575 = vmatprep.subr.bf16.mxu0 0
    %576 = vmatpush1.bf16.msra.mxu0 0
    %577 = vmatprep.subr.bf16.mxu0 0
    %578 = vmatpush1.bf16.msra.mxu0 0
    %579 = vmatprep.subr.bf16.mxu0 0
    %580 = vmatpush1.bf16.msra.mxu0 0
    %581 = vmatprep.subr.bf16.mxu0 0
    %582 = vmatpush1.bf16.msra.mxu0 0
    %583 = vmatprep.subr.bf16.mxu0 0
    %584 = vmatpush1.bf16.msra.mxu0 0
    %585 = vmatprep.subr.bf16.mxu0 0
    %586 = vmatpush1.bf16.msra.mxu0 0
    %587 = vmatprep.subr.bf16.mxu0 0
    %588 = vmatpush1.bf16.msra.mxu0 0
    %589 = vmatprep.subr.bf16.mxu0 0
    %590 = vmatpush1.bf16.msra.mxu0 0
    %591 = vmatprep.mubr.bf16.mxu0 0
    %592 = vmatmul.mubr.bf16.gmra.mrb[0].mxu0 %v167
    %v593 = vpop.f32.mrb[0].mxu0
    %v594 = vadd.f32 %v239, %v593
    %v595 = vpop.f32.mrb[0].mxu0
    %v596 = vadd.f32 %v243, %v595
    %v597 = vpop.f32.mrb[0].mxu0
    %v598 = vpop.f32.mrb[0].mxu0
    %599 = vdwg.mxu0
    %600 = vmatprep.subr.bf16.mxu0 %v450
    %601 = vmatpush1.bf16.msra.mxu0 %v449
    %602 = vmatprep.subr.bf16.mxu0 %v457
    %603 = vmatpush1.bf16.msra.mxu0 %v456
    %604 = vmatprep.subr.bf16.mxu0 %v464
    %605 = vmatpush1.bf16.msra.mxu0 %v463
    %606 = vmatprep.subr.bf16.mxu0 %v471
    %607 = vmatpush1.bf16.msra.mxu0 %v470
    %608 = vmatprep.subr.bf16.mxu0 %v478
    %609 = vmatpush1.bf16.msra.mxu0 %v477
    %610 = vmatprep.subr.bf16.mxu0 %v485
    %611 = vmatpush1.bf16.msra.mxu0 %v484
    %612 = vmatprep.subr.bf16.mxu0 %v492
    %613 = vmatpush1.bf16.msra.mxu0 %v491
    %614 = vmatprep.subr.bf16.mxu0 %v499
    %615 = vmatpush1.bf16.msra.mxu0 %v498
    %616 = vmatprep.subr.bf16.mxu0 0
    %617 = vmatpush1.bf16.msra.mxu0 0
    %618 = vmatprep.subr.bf16.mxu0 0
    %619 = vmatpush1.bf16.msra.mxu0 0
    %620 = vmatprep.subr.bf16.mxu0 0
    %621 = vmatpush1.bf16.msra.mxu0 0
    %622 = vmatprep.subr.bf16.mxu0 0
    %623 = vmatpush1.bf16.msra.mxu0 0
    %624 = vmatprep.subr.bf16.mxu0 0
    %625 = vmatpush1.bf16.msra.mxu0 0
    %626 = vmatprep.subr.bf16.mxu0 0
    %627 = vmatpush1.bf16.msra.mxu0 0
    %628 = vmatprep.subr.bf16.mxu0 0
    %629 = vmatpush1.bf16.msra.mxu0 0
    %630 = vmatprep.subr.bf16.mxu0 0
    %631 = vmatpush1.bf16.msra.mxu0 0
    %632 = vmatprep.mubr.bf16.mxu0 0
    %633 = vmatmul.mubr.bf16.gmra.mrb[0].mxu0 %v167
    %v634 = vpop.f32.mrb[0].mxu0
    %v635 = vadd.f32 %v247, %v634
    %v636 = vpop.f32.mrb[0].mxu0
    %v637 = vadd.f32 %v251, %v636
    %v638 = vpop.f32.mrb[0].mxu0
    %v639 = vpop.f32.mrb[0].mxu0
    %640 = vdwg.mxu0
    %641 = vmatprep.subr.bf16.mxu0 %v452
    %642 = vmatpush1.bf16.msra.mxu0 %v451
    %643 = vmatprep.subr.bf16.mxu0 %v459
    %644 = vmatpush1.bf16.msra.mxu0 %v458
    %645 = vmatprep.subr.bf16.mxu0 %v466
    %646 = vmatpush1.bf16.msra.mxu0 %v465
    %647 = vmatprep.subr.bf16.mxu0 %v473
    %648 = vmatpush1.bf16.msra.mxu0 %v472
    %649 = vmatprep.subr.bf16.mxu0 %v480
    %650 = vmatpush1.bf16.msra.mxu0 %v479
    %651 = vmatprep.subr.bf16.mxu0 %v487
    %652 = vmatpush1.bf16.msra.mxu0 %v486
    %653 = vmatprep.subr.bf16.mxu0 %v494
    %654 = vmatpush1.bf16.msra.mxu0 %v493
    %655 = vmatprep.subr.bf16.mxu0 %v501
    %656 = vmatpush1.bf16.msra.mxu0 %v500
    %657 = vmatprep.subr.bf16.mxu0 0
    %658 = vmatpush1.bf16.msra.mxu0 0
    %659 = vmatprep.subr.bf16.mxu0 0
    %660 = vmatpush1.bf16.msra.mxu0 0
    %661 = vmatprep.subr.bf16.mxu0 0
    %662 = vmatpush1.bf16.msra.mxu0 0
    %663 = vmatprep.subr.bf16.mxu0 0
    %664 = vmatpush1.bf16.msra.mxu0 0
    %665 = vmatprep.subr.bf16.mxu0 0
    %666 = vmatpush1.bf16.msra.mxu0 0
    %667 = vmatprep.subr.bf16.mxu0 0
    %668 = vmatpush1.bf16.msra.mxu0 0
    %669 = vmatprep.subr.bf16.mxu0 0
    %670 = vmatpush1.bf16.msra.mxu0 0
    %671 = vmatprep.subr.bf16.mxu0 0
    %672 = vmatpush1.bf16.msra.mxu0 0
    %673 = vmatprep.mubr.bf16.mxu0 0
    %674 = vmatmul.mubr.bf16.gmra.mrb[0].mxu0 %v167
    %v675 = vpop.f32.mrb[0].mxu0
    %v676 = vadd.f32 %v255, %v675
    %v677 = vpop.f32.mrb[0].mxu0
    %v678 = vadd.f32 %v259, %v677
    %v679 = vpop.f32.mrb[0].mxu0
    %v680 = vpop.f32.mrb[0].mxu0
    %681 = vdwg.mxu0
    %682 = vmatprep.subr.bf16.mxu0 0
    %683 = vmatpush1.bf16.msra.mxu0 %v453
    %684 = vmatprep.subr.bf16.mxu0 0
    %685 = vmatpush1.bf16.msra.mxu0 %v460
    %686 = vmatprep.subr.bf16.mxu0 0
    %687 = vmatpush1.bf16.msra.mxu0 %v467
    %688 = vmatprep.subr.bf16.mxu0 0
    %689 = vmatpush1.bf16.msra.mxu0 %v474
    %690 = vmatprep.subr.bf16.mxu0 0
    %691 = vmatpush1.bf16.msra.mxu0 %v481
    %692 = vmatprep.subr.bf16.mxu0 0
    %693 = vmatpush1.bf16.msra.mxu0 %v488
    %694 = vmatprep.subr.bf16.mxu0 0
    %695 = vmatpush1.bf16.msra.mxu0 %v495
    %696 = vmatprep.subr.bf16.mxu0 0
    %697 = vmatpush1.bf16.msra.mxu0 %v502
    %698 = vmatprep.subr.bf16.mxu0 0
    %699 = vmatpush1.bf16.msra.mxu0 0
    %700 = vmatprep.subr.bf16.mxu0 0
    %701 = vmatpush1.bf16.msra.mxu0 0
    %702 = vmatprep.subr.bf16.mxu0 0
    %703 = vmatpush1.bf16.msra.mxu0 0
    %704 = vmatprep.subr.bf16.mxu0 0
    %705 = vmatpush1.bf16.msra.mxu0 0
    %706 = vmatprep.subr.bf16.mxu0 0
    %707 = vmatpush1.bf16.msra.mxu0 0
    %708 = vmatprep.subr.bf16.mxu0 0
    %709 = vmatpush1.bf16.msra.mxu0 0
    %710 = vmatprep.subr.bf16.mxu0 0
    %711 = vmatpush1.bf16.msra.mxu0 0
    %712 = vmatprep.subr.bf16.mxu0 0
    %713 = vmatpush1.bf16.msra.mxu0 0
    %714 = vmatprep.mubr.bf16.mxu0 0
    %715 = vmatmul.mubr.bf16.gmra.mrb[0].mxu0 %v167
    %v716 = vpop.f32.mrb[0].mxu0
    %v717 = vadd.f32 %v263, %v716
    %v718 = vpop.f32.mrb[0].mxu0
    %v719 = vpop.f32.mrb[0].mxu0
    %v720 = vpop.f32.mrb[0].mxu0
    %721 = vdwg.mxu0
    %v722 = vmax.f32 %v594, 0.0
    %v723 = vmax.f32 %v596, 0.0
    %v724 = vmax.f32 %v635, 0.0
    %v725 = vmax.f32 %v637, 0.0
    %v726 = vmax.f32 %v676, 0.0
    %v727 = vmax.f32 %v678, 0.0
    %v728 = vmax.f32 %v717, 0.0
    %v729 = vld [vmem:[#allocation10] sm:$0xf]
    %v730 = vld [vmem:[#allocation10 + $0x4] sm:$0xf]
    %v731 = vld [vmem:[#allocation10 + $0x8] sm:$0xf]
    %v732 = vld [vmem:[#allocation10 + $0xc] sm:$0xf]
    %v733 = vld [vmem:[#allocation10 + $0x10] sm:$0xf]
    %v734 = vld [vmem:[#allocation10 + $0x14] sm:$0xf]
    %v735 = vld [vmem:[#allocation10 + $0x18] sm:$0xf]
    %v736 = vld [vmem:[#allocation10 + $0x1c] sm:$0xf]
    %v737 = vld [vmem:[#allocation10 + $0x20] sm:$0xf]
    %v738 = vld [vmem:[#allocation10 + $0x24] sm:$0xf]
    %v739 = vld [vmem:[#allocation10 + $0x28] sm:$0xf]
    %v740 = vld [vmem:[#allocation10 + $0x2c] sm:$0xf]
    %v741 = vld [vmem:[#allocation10 + $0x30] sm:$0xf]
    %v742 = vld [vmem:[#allocation10 + $0x34] sm:$0xf]
    %v743 = vld [vmem:[#allocation10 + $0x38] sm:$0xf]
    %v744 = vld [vmem:[#allocation10 + $0x3c] sm:$0xf]
    %v745 = vpack.c.bf16 %v725, %v725
    %v762 = vunpack.c.l.b16 %v729
    %v763 = vunpack.c.l.b16 %v730
    %v764 = vunpack.c.l.b16 %v731
    %v765 = vunpack.c.l.b16 %v732
    %v766 = vunpack.c.l.b16 %v733
    %v767 = vunpack.c.l.b16 %v734
    %v768 = vunpack.c.l.b16 %v735
    %v769 = vunpack.c.l.b16 %v736
    %v770 = vunpack.c.l.b16 %v737
    %v771 = vunpack.c.l.b16 %v738
    %v772 = vunpack.c.l.b16 %v739
    %v773 = vunpack.c.l.b16 %v740
    %v774 = vunpack.c.l.b16 %v741
    %v775 = vunpack.c.l.b16 %v742
    %v776 = vunpack.c.l.b16 %v743
    %v777 = vunpack.c.l.b16 %v744
    %v778 = vpack.c.b16 %v763, %v762
    %v779 = vpack.c.b16 %v765, %v764
    %v780 = vpack.c.b16 %v767, %v766
    %v781 = vpack.c.b16 %v769, %v768
    %v782 = vpack.c.b16 %v771, %v770
    %v783 = vpack.c.b16 %v773, %v772
    %v784 = vpack.c.b16 %v775, %v774
    %v785 = vpack.c.b16 %v777, %v776
    %794 = vmatprep.subr.bf16.mxu0 0
    %795 = vmatpush1.bf16.msra.mxu0 %v778
    %796 = vmatprep.subr.bf16.mxu0 0
    %797 = vmatpush1.bf16.msra.mxu0 %v779
    %798 = vmatprep.subr.bf16.mxu0 0
    %799 = vmatpush1.bf16.msra.mxu0 %v780
    %800 = vmatprep.subr.bf16.mxu0 0
    %801 = vmatpush1.bf16.msra.mxu0 %v781
    %802 = vmatprep.subr.bf16.mxu0 0
    %803 = vmatpush1.bf16.msra.mxu0 %v782
    %804 = vmatprep.subr.bf16.mxu0 0
    %805 = vmatpush1.bf16.msra.mxu0 %v783
    %806 = vmatprep.subr.bf16.mxu0 0
    %807 = vmatpush1.bf16.msra.mxu0 %v784
    %808 = vmatprep.subr.bf16.mxu0 0
    %809 = vmatpush1.bf16.msra.mxu0 %v785
    %810 = vmatprep.subr.bf16.mxu0 0
    %811 = vmatpush1.bf16.msra.mxu0 0
    %812 = vmatprep.subr.bf16.mxu0 0
    %813 = vmatpush1.bf16.msra.mxu0 0
    %814 = vmatprep.subr.bf16.mxu0 0
    %815 = vmatpush1.bf16.msra.mxu0 0
    %816 = vmatprep.subr.bf16.mxu0 0
    %817 = vmatpush1.bf16.msra.mxu0 0
    %818 = vmatprep.subr.bf16.mxu0 0
    %819 = vmatpush1.bf16.msra.mxu0 0
    %820 = vmatprep.subr.bf16.mxu0 0
    %821 = vmatpush1.bf16.msra.mxu0 0
    %822 = vmatprep.subr.bf16.mxu0 0
    %823 = vmatpush1.bf16.msra.mxu0 0
    %824 = vmatprep.subr.bf16.mxu0 0
    %825 = vmatpush1.bf16.msra.mxu0 0
    %826 = vmatprep.mubr.bf16.mxu0 0
    %827 = vmatmul.mubr.bf16.gmra.mrb[0].mxu0 %v745
    %v828 = vpop.f32.mrb[0].mxu0
    %v829 = vadd.f32 0.0, %v828
    %v830 = vpop.f32.mrb[0].mxu0
    %v831 = vpop.f32.mrb[0].mxu0
    %v832 = vpop.f32.mrb[0].mxu0
    %833 = vdwg.mxu0
    %v834 = vld [vmem:[%s4] sm:$0xf]
    %v835 = vpack.c.bf16 %v829, %v829
    %v836 = vld [vmem:[#allocation18 + $0x1] ss:$0 sm:$0xff]
    %vm837 = vcmask 64512
    %v839 = vsel %vm837, %v834, 0
    %vm841 = vcmask 1043456
    %v843 = vsel %vm841, %v835, 0
    %845 = vmatprep.subr.bf16.mxu0 0
    %846 = vmatpush1.bf16.msra.mxu0 %v843
    %847 = vmatprep.subr.bf16.mxu0 0
    %848 = vmatpush1.bf16.msra.mxu0 0
    %849 = vmatprep.subr.bf16.mxu0 0
    %850 = vmatpush1.bf16.msra.mxu0 0
    %851 = vmatprep.subr.bf16.mxu0 0
    %852 = vmatpush1.bf16.msra.mxu0 0
    %853 = vmatprep.subr.bf16.mxu0 0
    %854 = vmatpush1.bf16.msra.mxu0 0
    %855 = vmatprep.subr.bf16.mxu0 0
    %856 = vmatpush1.bf16.msra.mxu0 0
    %857 = vmatprep.subr.bf16.mxu0 0
    %858 = vmatpush1.bf16.msra.mxu0 0
    %859 = vmatprep.subr.bf16.mxu0 0
    %860 = vmatpush1.bf16.msra.mxu0 0
    %861 = vmatprep.subr.bf16.mxu0 0
    %862 = vmatpush1.bf16.msra.mxu0 0
    %863 = vmatprep.subr.bf16.mxu0 0
    %864 = vmatpush1.bf16.msra.mxu0 0
    %865 = vmatprep.subr.bf16.mxu0 0
    %866 = vmatpush1.bf16.msra.mxu0 0
    %867 = vmatprep.subr.bf16.mxu0 0
    %868 = vmatpush1.bf16.msra.mxu0 0
    %869 = vmatprep.subr.bf16.mxu0 0
    %870 = vmatpush1.bf16.msra.mxu0 0
    %871 = vmatprep.subr.bf16.mxu0 0
    %872 = vmatpush1.bf16.msra.mxu0 0
    %873 = vmatprep.subr.bf16.mxu0 0
    %874 = vmatpush1.bf16.msra.mxu0 0
    %875 = vmatprep.subr.bf16.mxu0 0
    %876 = vmatpush1.bf16.msra.mxu0 0
    %877 = vmatprep.mubr.bf16.mxu0 0
    %878 = vmatmul.mubr.bf16.gmra.mrb[0].mxu0 %v839
    %v879 = vpop.f32.mrb[0].mxu0
    %v880 = vadd.f32 %v836, %v879
    %v881 = vpop.f32.mrb[0].mxu0
    %v882 = vpop.f32.mrb[0].mxu0
    %v883 = vpop.f32.mrb[0].mxu0
    %884 = vdwg.mxu0
    %v885 = vmax.f32 %v880, 0.0
    %v886 = vadd.f32 %v885, %v725
    %s887 = scalar_lea.vmem [#allocation10], 64
    %v888 = vld [vmem:[%s887] sm:$0xf]
    %v889 = vld [vmem:[%s887 + $0x4] sm:$0xf]
    %v890 = vld [vmem:[%s887 + $0x8] sm:$0xf]
    %v891 = vld [vmem:[%s887 + $0xc] sm:$0xf]
    %v892 = vld [vmem:[%s887 + $0x10] sm:$0xf]
    %v893 = vld [vmem:[%s887 + $0x14] sm:$0xf]
    %v894 = vld [vmem:[%s887 + $0x18] sm:$0xf]
    %v895 = vld [vmem:[%s887 + $0x1c] sm:$0xf]
    %v896 = vld [vmem:[%s887 + $0x20] sm:$0xf]
    %v897 = vld [vmem:[%s887 + $0x24] sm:$0xf]
    %v898 = vld [vmem:[%s887 + $0x28] sm:$0xf]
    %v899 = vld [vmem:[%s887 + $0x2c] sm:$0xf]
    %v900 = vld [vmem:[%s887 + $0x30] sm:$0xf]
    %v901 = vld [vmem:[%s887 + $0x34] sm:$0xf]
    %v902 = vld [vmem:[%s887 + $0x38] sm:$0xf]
    %v903 = vld [vmem:[%s887 + $0x3c] sm:$0xf]
    %v904 = vpack.c.bf16 %v726, %v726
    %v921 = vunpack.c.l.b16 %v888
    %v922 = vunpack.c.l.b16 %v889
    %v923 = vunpack.c.l.b16 %v890
    %v924 = vunpack.c.l.b16 %v891
    %v925 = vunpack.c.l.b16 %v892
    %v926 = vunpack.c.l.b16 %v893
    %v927 = vunpack.c.l.b16 %v894
    %v928 = vunpack.c.l.b16 %v895
    %v929 = vunpack.c.l.b16 %v896
    %v930 = vunpack.c.l.b16 %v897
    %v931 = vunpack.c.l.b16 %v898
    %v932 = vunpack.c.l.b16 %v899
    %v933 = vunpack.c.l.b16 %v900
    %v934 = vunpack.c.l.b16 %v901
    %v935 = vunpack.c.l.b16 %v902
    %v936 = vunpack.c.l.b16 %v903
    %v937 = vpack.c.b16 %v922, %v921
    %v938 = vpack.c.b16 %v924, %v923
    %v939 = vpack.c.b16 %v926, %v925
    %v940 = vpack.c.b16 %v928, %v927
    %v941 = vpack.c.b16 %v930, %v929
    %v942 = vpack.c.b16 %v932, %v931
    %v943 = vpack.c.b16 %v934, %v933
    %v944 = vpack.c.b16 %v936, %v935
    %953 = vmatprep.subr.bf16.mxu0 0
    %954 = vmatpush1.bf16.msra.mxu0 %v937
    %955 = vmatprep.subr.bf16.mxu0 0
    %956 = vmatpush1.bf16.msra.mxu0 %v938
    %957 = vmatprep.subr.bf16.mxu0 0
    %958 = vmatpush1.bf16.msra.mxu0 %v939
    %959 = vmatprep.subr.bf16.mxu0 0
    %960 = vmatpush1.bf16.msra.mxu0 %v940
    %961 = vmatprep.subr.bf16.mxu0 0
    %962 = vmatpush1.bf16.msra.mxu0 %v941
    %963 = vmatprep.subr.bf16.mxu0 0
    %964 = vmatpush1.bf16.msra.mxu0 %v942
    %965 = vmatprep.subr.bf16.mxu0 0
    %966 = vmatpush1.bf16.msra.mxu0 %v943
    %967 = vmatprep.subr.bf16.mxu0 0
    %968 = vmatpush1.bf16.msra.mxu0 %v944
    %969 = vmatprep.subr.bf16.mxu0 0
    %970 = vmatpush1.bf16.msra.mxu0 0
    %971 = vmatprep.subr.bf16.mxu0 0
    %972 = vmatpush1.bf16.msra.mxu0 0
    %973 = vmatprep.subr.bf16.mxu0 0
    %974 = vmatpush1.bf16.msra.mxu0 0
    %975 = vmatprep.subr.bf16.mxu0 0
    %976 = vmatpush1.bf16.msra.mxu0 0
    %977 = vmatprep.subr.bf16.mxu0 0
    %978 = vmatpush1.bf16.msra.mxu0 0
    %979 = vmatprep.subr.bf16.mxu0 0
    %980 = vmatpush1.bf16.msra.mxu0 0
    %981 = vmatprep.subr.bf16.mxu0 0
    %982 = vmatpush1.bf16.msra.mxu0 0
    %983 = vmatprep.subr.bf16.mxu0 0
    %984 = vmatpush1.bf16.msra.mxu0 0
    %985 = vmatprep.mubr.bf16.mxu0 0
    %986 = vmatmul.mubr.bf16.gmra.mrb[0].mxu0 %v904
    %v987 = vpop.f32.mrb[0].mxu0
    %v988 = vadd.f32 0.0, %v987
    %v989 = vpop.f32.mrb[0].mxu0
    %v990 = vpop.f32.mrb[0].mxu0
    %v991 = vpop.f32.mrb[0].mxu0
    %992 = vdwg.mxu0
    %s993 = scalar_lea.vmem %s4, 4
    %v994 = vld [vmem:[%s993] sm:$0xf]
    %v995 = vpack.c.bf16 %v988, %v988
    %v996 = vld [vmem:[#allocation18 + $0x2] ss:$0 sm:$0xff]
    %v998 = vsel %vm837, %v994, 0
    %v1001 = vsel %vm841, %v995, 0
    %1003 = vmatprep.subr.bf16.mxu0 0
    %1004 = vmatpush1.bf16.msra.mxu0 %v1001
    %1005 = vmatprep.subr.bf16.mxu0 0
    %1006 = vmatpush1.bf16.msra.mxu0 0
    %1007 = vmatprep.subr.bf16.mxu0 0
    %1008 = vmatpush1.bf16.msra.mxu0 0
    %1009 = vmatprep.subr.bf16.mxu0 0
    %1010 = vmatpush1.bf16.msra.mxu0 0
    %1011 = vmatprep.subr.bf16.mxu0 0
    %1012 = vmatpush1.bf16.msra.mxu0 0
    %1013 = vmatprep.subr.bf16.mxu0 0
    %1014 = vmatpush1.bf16.msra.mxu0 0
    %1015 = vmatprep.subr.bf16.mxu0 0
    %1016 = vmatpush1.bf16.msra.mxu0 0
    %1017 = vmatprep.subr.bf16.mxu0 0
    %1018 = vmatpush1.bf16.msra.mxu0 0
    %1019 = vmatprep.subr.bf16.mxu0 0
    %1020 = vmatpush1.bf16.msra.mxu0 0
    %1021 = vmatprep.subr.bf16.mxu0 0
    %1022 = vmatpush1.bf16.msra.mxu0 0
    %1023 = vmatprep.subr.bf16.mxu0 0
    %1024 = vmatpush1.bf16.msra.mxu0 0
    %1025 = vmatprep.subr.bf16.mxu0 0
    %1026 = vmatpush1.bf16.msra.mxu0 0
    %1027 = vmatprep.subr.bf16.mxu0 0
    %1028 = vmatpush1.bf16.msra.mxu0 0
    %1029 = vmatprep.subr.bf16.mxu0 0
    %1030 = vmatpush1.bf16.msra.mxu0 0
    %1031 = vmatprep.subr.bf16.mxu0 0
    %1032 = vmatpush1.bf16.msra.mxu0 0
    %1033 = vmatprep.subr.bf16.mxu0 0
    %1034 = vmatpush1.bf16.msra.mxu0 0
    %1035 = vmatprep.mubr.bf16.mxu0 0
    %1036 = vmatmul.mubr.bf16.gmra.mrb[0].mxu0 %v998
    %v1037 = vpop.f32.mrb[0].mxu0
    %v1038 = vadd.f32 %v996, %v1037
    %v1039 = vpop.f32.mrb[0].mxu0
    %v1040 = vpop.f32.mrb[0].mxu0
    %v1041 = vpop.f32.mrb[0].mxu0
    %1042 = vdwg.mxu0
    %v1043 = vmax.f32 %v1038, 0.0
    %v1044 = vadd.f32 %v1043, %v726
    %s1045 = scalar_lea.vmem [#allocation10], 128
    %v1046 = vld [vmem:[%s1045] sm:$0xf]
    %v1047 = vld [vmem:[%s1045 + $0x4] sm:$0xf]
    %v1048 = vld [vmem:[%s1045 + $0x8] sm:$0xf]
    %v1049 = vld [vmem:[%s1045 + $0xc] sm:$0xf]
    %v1050 = vld [vmem:[%s1045 + $0x10] sm:$0xf]
    %v1051 = vld [vmem:[%s1045 + $0x14] sm:$0xf]
    %v1052 = vld [vmem:[%s1045 + $0x18] sm:$0xf]
    %v1053 = vld [vmem:[%s1045 + $0x1c] sm:$0xf]
    %v1054 = vld [vmem:[%s1045 + $0x20] sm:$0xf]
    %v1055 = vld [vmem:[%s1045 + $0x24] sm:$0xf]
    %v1056 = vld [vmem:[%s1045 + $0x28] sm:$0xf]
    %v1057 = vld [vmem:[%s1045 + $0x2c] sm:$0xf]
    %v1058 = vld [vmem:[%s1045 + $0x30] sm:$0xf]
    %v1059 = vld [vmem:[%s1045 + $0x34] sm:$0xf]
    %v1060 = vld [vmem:[%s1045 + $0x38] sm:$0xf]
    %v1061 = vld [vmem:[%s1045 + $0x3c] sm:$0xf]
    %v1062 = vpack.c.bf16 %v727, %v727
    %v1079 = vunpack.c.l.b16 %v1046
    %v1080 = vunpack.c.l.b16 %v1047
    %v1081 = vunpack.c.l.b16 %v1048
    %v1082 = vunpack.c.l.b16 %v1049
    %v1083 = vunpack.c.l.b16 %v1050
    %v1084 = vunpack.c.l.b16 %v1051
    %v1085 = vunpack.c.l.b16 %v1052
    %v1086 = vunpack.c.l.b16 %v1053
    %v1087 = vunpack.c.l.b16 %v1054
    %v1088 = vunpack.c.l.b16 %v1055
    %v1089 = vunpack.c.l.b16 %v1056
    %v1090 = vunpack.c.l.b16 %v1057
    %v1091 = vunpack.c.l.b16 %v1058
    %v1092 = vunpack.c.l.b16 %v1059
    %v1093 = vunpack.c.l.b16 %v1060
    %v1094 = vunpack.c.l.b16 %v1061
    %v1095 = vpack.c.b16 %v1080, %v1079
    %v1096 = vpack.c.b16 %v1082, %v1081
    %v1097 = vpack.c.b16 %v1084, %v1083
    %v1098 = vpack.c.b16 %v1086, %v1085
    %v1099 = vpack.c.b16 %v1088, %v1087
    %v1100 = vpack.c.b16 %v1090, %v1089
    %v1101 = vpack.c.b16 %v1092, %v1091
    %v1102 = vpack.c.b16 %v1094, %v1093
    %1111 = vmatprep.subr.bf16.mxu0 0
    %1112 = vmatpush1.bf16.msra.mxu0 %v1095
    %1113 = vmatprep.subr.bf16.mxu0 0
    %1114 = vmatpush1.bf16.msra.mxu0 %v1096
    %1115 = vmatprep.subr.bf16.mxu0 0
    %1116 = vmatpush1.bf16.msra.mxu0 %v1097
    %1117 = vmatprep.subr.bf16.mxu0 0
    %1118 = vmatpush1.bf16.msra.mxu0 %v1098
    %1119 = vmatprep.subr.bf16.mxu0 0
    %1120 = vmatpush1.bf16.msra.mxu0 %v1099
    %1121 = vmatprep.subr.bf16.mxu0 0
    %1122 = vmatpush1.bf16.msra.mxu0 %v1100
    %1123 = vmatprep.subr.bf16.mxu0 0
    %1124 = vmatpush1.bf16.msra.mxu0 %v1101
    %1125 = vmatprep.subr.bf16.mxu0 0
    %1126 = vmatpush1.bf16.msra.mxu0 %v1102
    %1127 = vmatprep.subr.bf16.mxu0 0
    %1128 = vmatpush1.bf16.msra.mxu0 0
    %1129 = vmatprep.subr.bf16.mxu0 0
    %1130 = vmatpush1.bf16.msra.mxu0 0
    %1131 = vmatprep.subr.bf16.mxu0 0
    %1132 = vmatpush1.bf16.msra.mxu0 0
    %1133 = vmatprep.subr.bf16.mxu0 0
    %1134 = vmatpush1.bf16.msra.mxu0 0
    %1135 = vmatprep.subr.bf16.mxu0 0
    %1136 = vmatpush1.bf16.msra.mxu0 0
    %1137 = vmatprep.subr.bf16.mxu0 0
    %1138 = vmatpush1.bf16.msra.mxu0 0
    %1139 = vmatprep.subr.bf16.mxu0 0
    %1140 = vmatpush1.bf16.msra.mxu0 0
    %1141 = vmatprep.subr.bf16.mxu0 0
    %1142 = vmatpush1.bf16.msra.mxu0 0
    %1143 = vmatprep.mubr.bf16.mxu0 0
    %1144 = vmatmul.mubr.bf16.gmra.mrb[0].mxu0 %v1062
    %v1145 = vpop.f32.mrb[0].mxu0
    %v1146 = vadd.f32 0.0, %v1145
    %v1147 = vpop.f32.mrb[0].mxu0
    %v1148 = vpop.f32.mrb[0].mxu0
    %v1149 = vpop.f32.mrb[0].mxu0
    %1150 = vdwg.mxu0
    %s1151 = scalar_lea.vmem %s4, 8
    %v1152 = vld [vmem:[%s1151] sm:$0xf]
    %v1153 = vpack.c.bf16 %v1146, %v1146
    %v1154 = vld [vmem:[#allocation18 + $0x3] ss:$0 sm:$0xff]
    %v1156 = vsel %vm837, %v1152, 0
    %v1159 = vsel %vm841, %v1153, 0
    %1161 = vmatprep.subr.bf16.mxu0 0
    %1162 = vmatpush1.bf16.msra.mxu0 %v1159
    %1163 = vmatprep.subr.bf16.mxu0 0
    %1164 = vmatpush1.bf16.msra.mxu0 0
    %1165 = vmatprep.subr.bf16.mxu0 0
    %1166 = vmatpush1.bf16.msra.mxu0 0
    %1167 = vmatprep.subr.bf16.mxu0 0
    %1168 = vmatpush1.bf16.msra.mxu0 0
    %1169 = vmatprep.subr.bf16.mxu0 0
    %1170 = vmatpush1.bf16.msra.mxu0 0
    %1171 = vmatprep.subr.bf16.mxu0 0
    %1172 = vmatpush1.bf16.msra.mxu0 0
    %1173 = vmatprep.subr.bf16.mxu0 0
    %1174 = vmatpush1.bf16.msra.mxu0 0
    %1175 = vmatprep.subr.bf16.mxu0 0
    %1176 = vmatpush1.bf16.msra.mxu0 0
    %1177 = vmatprep.subr.bf16.mxu0 0
    %1178 = vmatpush1.bf16.msra.mxu0 0
    %1179 = vmatprep.subr.bf16.mxu0 0
    %1180 = vmatpush1.bf16.msra.mxu0 0
    %1181 = vmatprep.subr.bf16.mxu0 0
    %1182 = vmatpush1.bf16.msra.mxu0 0
    %1183 = vmatprep.subr.bf16.mxu0 0
    %1184 = vmatpush1.bf16.msra.mxu0 0
    %1185 = vmatprep.subr.bf16.mxu0 0
    %1186 = vmatpush1.bf16.msra.mxu0 0
    %1187 = vmatprep.subr.bf16.mxu0 0
    %1188 = vmatpush1.bf16.msra.mxu0 0
    %1189 = vmatprep.subr.bf16.mxu0 0
    %1190 = vmatpush1.bf16.msra.mxu0 0
    %1191 = vmatprep.subr.bf16.mxu0 0
    %1192 = vmatpush1.bf16.msra.mxu0 0
    %1193 = vmatprep.mubr.bf16.mxu0 0
    %1194 = vmatmul.mubr.bf16.gmra.mrb[0].mxu0 %v1156
    %v1195 = vpop.f32.mrb[0].mxu0
    %v1196 = vadd.f32 %v1154, %v1195
    %v1197 = vpop.f32.mrb[0].mxu0
    %v1198 = vpop.f32.mrb[0].mxu0
    %v1199 = vpop.f32.mrb[0].mxu0
    %1200 = vdwg.mxu0
    %v1201 = vmax.f32 %v1196, 0.0
    %v1202 = vadd.f32 %v1201, %v727
    %s1203 = scalar_lea.vmem [#allocation10], 192
    %v1204 = vld [vmem:[%s1203] sm:$0xf]
    %v1205 = vld [vmem:[%s1203 + $0x4] sm:$0xf]
    %v1206 = vld [vmem:[%s1203 + $0x8] sm:$0xf]
    %v1207 = vld [vmem:[%s1203 + $0xc] sm:$0xf]
    %v1208 = vld [vmem:[%s1203 + $0x10] sm:$0xf]
    %v1209 = vld [vmem:[%s1203 + $0x14] sm:$0xf]
    %v1210 = vld [vmem:[%s1203 + $0x18] sm:$0xf]
    %v1211 = vld [vmem:[%s1203 + $0x1c] sm:$0xf]
    %v1212 = vld [vmem:[%s1203 + $0x20] sm:$0xf]
    %v1213 = vld [vmem:[%s1203 + $0x24] sm:$0xf]
    %v1214 = vld [vmem:[%s1203 + $0x28] sm:$0xf]
    %v1215 = vld [vmem:[%s1203 + $0x2c] sm:$0xf]
    %v1216 = vld [vmem:[%s1203 + $0x30] sm:$0xf]
    %v1217 = vld [vmem:[%s1203 + $0x34] sm:$0xf]
    %v1218 = vld [vmem:[%s1203 + $0x38] sm:$0xf]
    %v1219 = vld [vmem:[%s1203 + $0x3c] sm:$0xf]
    %v1220 = vpack.c.bf16 %v886, %v886
    %v1237 = vunpack.c.l.b16 %v1204
    %v1238 = vunpack.c.l.b16 %v1205
    %v1239 = vunpack.c.l.b16 %v1206
    %v1240 = vunpack.c.l.b16 %v1207
    %v1241 = vunpack.c.l.b16 %v1208
    %v1242 = vunpack.c.l.b16 %v1209
    %v1243 = vunpack.c.l.b16 %v1210
    %v1244 = vunpack.c.l.b16 %v1211
    %v1245 = vunpack.c.l.b16 %v1212
    %v1246 = vunpack.c.l.b16 %v1213
    %v1247 = vunpack.c.l.b16 %v1214
    %v1248 = vunpack.c.l.b16 %v1215
    %v1249 = vunpack.c.l.b16 %v1216
    %v1250 = vunpack.c.l.b16 %v1217
    %v1251 = vunpack.c.l.b16 %v1218
    %v1252 = vunpack.c.l.b16 %v1219
    %v1253 = vpack.c.b16 %v1238, %v1237
    %v1254 = vpack.c.b16 %v1240, %v1239
    %v1255 = vpack.c.b16 %v1242, %v1241
    %v1256 = vpack.c.b16 %v1244, %v1243
    %v1257 = vpack.c.b16 %v1246, %v1245
    %v1258 = vpack.c.b16 %v1248, %v1247
    %v1259 = vpack.c.b16 %v1250, %v1249
    %v1260 = vpack.c.b16 %v1252, %v1251
    %1269 = vmatprep.subr.bf16.mxu0 0
    %1270 = vmatpush1.bf16.msra.mxu0 %v1253
    %1271 = vmatprep.subr.bf16.mxu0 0
    %1272 = vmatpush1.bf16.msra.mxu0 %v1254
    %1273 = vmatprep.subr.bf16.mxu0 0
    %1274 = vmatpush1.bf16.msra.mxu0 %v1255
    %1275 = vmatprep.subr.bf16.mxu0 0
    %1276 = vmatpush1.bf16.msra.mxu0 %v1256
    %1277 = vmatprep.subr.bf16.mxu0 0
    %1278 = vmatpush1.bf16.msra.mxu0 %v1257
    %1279 = vmatprep.subr.bf16.mxu0 0
    %1280 = vmatpush1.bf16.msra.mxu0 %v1258
    %1281 = vmatprep.subr.bf16.mxu0 0
    %1282 = vmatpush1.bf16.msra.mxu0 %v1259
    %1283 = vmatprep.subr.bf16.mxu0 0
    %1284 = vmatpush1.bf16.msra.mxu0 %v1260
    %1285 = vmatprep.subr.bf16.mxu0 0
    %1286 = vmatpush1.bf16.msra.mxu0 0
    %1287 = vmatprep.subr.bf16.mxu0 0
    %1288 = vmatpush1.bf16.msra.mxu0 0
    %1289 = vmatprep.subr.bf16.mxu0 0
    %1290 = vmatpush1.bf16.msra.mxu0 0
    %1291 = vmatprep.subr.bf16.mxu0 0
    %1292 = vmatpush1.bf16.msra.mxu0 0
    %1293 = vmatprep.subr.bf16.mxu0 0
    %1294 = vmatpush1.bf16.msra.mxu0 0
    %1295 = vmatprep.subr.bf16.mxu0 0
    %1296 = vmatpush1.bf16.msra.mxu0 0
    %1297 = vmatprep.subr.bf16.mxu0 0
    %1298 = vmatpush1.bf16.msra.mxu0 0
    %1299 = vmatprep.subr.bf16.mxu0 0
    %1300 = vmatpush1.bf16.msra.mxu0 0
    %1301 = vmatprep.mubr.bf16.mxu0 0
    %1302 = vmatmul.mubr.bf16.gmra.mrb[0].mxu0 %v1220
    %v1303 = vpop.f32.mrb[0].mxu0
    %v1304 = vadd.f32 0.0, %v1303
    %v1305 = vpop.f32.mrb[0].mxu0
    %v1306 = vpop.f32.mrb[0].mxu0
    %v1307 = vpop.f32.mrb[0].mxu0
    %1308 = vdwg.mxu0
    %s1309 = scalar_lea.vmem %s4, 12
    %v1310 = vld [vmem:[%s1309] sm:$0xf]
    %v1311 = vpack.c.bf16 %v1304, %v1304
    %v1312 = vld [vmem:[#allocation18 + $0x4] ss:$0 sm:$0xff]
    %v1314 = vsel %vm837, %v1310, 0
    %v1317 = vsel %vm841, %v1311, 0
    %1319 = vmatprep.subr.bf16.mxu0 0
    %1320 = vmatpush1.bf16.msra.mxu0 %v1317
    %1321 = vmatprep.subr.bf16.mxu0 0
    %1322 = vmatpush1.bf16.msra.mxu0 0
    %1323 = vmatprep.subr.bf16.mxu0 0
    %1324 = vmatpush1.bf16.msra.mxu0 0
    %1325 = vmatprep.subr.bf16.mxu0 0
    %1326 = vmatpush1.bf16.msra.mxu0 0
    %1327 = vmatprep.subr.bf16.mxu0 0
    %1328 = vmatpush1.bf16.msra.mxu0 0
    %1329 = vmatprep.subr.bf16.mxu0 0
    %1330 = vmatpush1.bf16.msra.mxu0 0
    %1331 = vmatprep.subr.bf16.mxu0 0
    %1332 = vmatpush1.bf16.msra.mxu0 0
    %1333 = vmatprep.subr.bf16.mxu0 0
    %1334 = vmatpush1.bf16.msra.mxu0 0
    %1335 = vmatprep.subr.bf16.mxu0 0
    %1336 = vmatpush1.bf16.msra.mxu0 0
    %1337 = vmatprep.subr.bf16.mxu0 0
    %1338 = vmatpush1.bf16.msra.mxu0 0
    %1339 = vmatprep.subr.bf16.mxu0 0
    %1340 = vmatpush1.bf16.msra.mxu0 0
    %1341 = vmatprep.subr.bf16.mxu0 0
    %1342 = vmatpush1.bf16.msra.mxu0 0
    %1343 = vmatprep.subr.bf16.mxu0 0
    %1344 = vmatpush1.bf16.msra.mxu0 0
    %1345 = vmatprep.subr.bf16.mxu0 0
    %1346 = vmatpush1.bf16.msra.mxu0 0
    %1347 = vmatprep.subr.bf16.mxu0 0
    %1348 = vmatpush1.bf16.msra.mxu0 0
    %1349 = vmatprep.subr.bf16.mxu0 0
    %1350 = vmatpush1.bf16.msra.mxu0 0
    %1351 = vmatprep.mubr.bf16.mxu0 0
    %1352 = vmatmul.mubr.bf16.gmra.mrb[0].mxu0 %v1314
    %v1353 = vpop.f32.mrb[0].mxu0
    %v1354 = vadd.f32 %v1312, %v1353
    %v1355 = vpop.f32.mrb[0].mxu0
    %v1356 = vpop.f32.mrb[0].mxu0
    %v1357 = vpop.f32.mrb[0].mxu0
    %1358 = vdwg.mxu0
    %v1359 = vmax.f32 %v1354, 0.0
    %s1360 = scalar_lea.vmem [#allocation10], 256
    %v1361 = vld [vmem:[%s1360] sm:$0xf]
    %v1362 = vld [vmem:[%s1360 + $0x4] sm:$0xf]
    %v1363 = vld [vmem:[%s1360 + $0x8] sm:$0xf]
    %v1364 = vld [vmem:[%s1360 + $0xc] sm:$0xf]
    %v1365 = vld [vmem:[%s1360 + $0x10] sm:$0xf]
    %v1366 = vld [vmem:[%s1360 + $0x14] sm:$0xf]
    %v1367 = vld [vmem:[%s1360 + $0x18] sm:$0xf]
    %v1368 = vld [vmem:[%s1360 + $0x1c] sm:$0xf]
    %v1369 = vld [vmem:[%s1360 + $0x20] sm:$0xf]
    %v1370 = vld [vmem:[%s1360 + $0x24] sm:$0xf]
    %v1371 = vld [vmem:[%s1360 + $0x28] sm:$0xf]
    %v1372 = vld [vmem:[%s1360 + $0x2c] sm:$0xf]
    %v1373 = vld [vmem:[%s1360 + $0x30] sm:$0xf]
    %v1374 = vld [vmem:[%s1360 + $0x34] sm:$0xf]
    %v1375 = vld [vmem:[%s1360 + $0x38] sm:$0xf]
    %v1376 = vld [vmem:[%s1360 + $0x3c] sm:$0xf]
    %v1377 = vpack.c.bf16 %v1044, %v1044
    %v1394 = vunpack.c.l.b16 %v1361
    %v1395 = vunpack.c.l.b16 %v1362
    %v1396 = vunpack.c.l.b16 %v1363
    %v1397 = vunpack.c.l.b16 %v1364
    %v1398 = vunpack.c.l.b16 %v1365
    %v1399 = vunpack.c.l.b16 %v1366
    %v1400 = vunpack.c.l.b16 %v1367
    %v1401 = vunpack.c.l.b16 %v1368
    %v1402 = vunpack.c.l.b16 %v1369
    %v1403 = vunpack.c.l.b16 %v1370
    %v1404 = vunpack.c.l.b16 %v1371
    %v1405 = vunpack.c.l.b16 %v1372
    %v1406 = vunpack.c.l.b16 %v1373
    %v1407 = vunpack.c.l.b16 %v1374
    %v1408 = vunpack.c.l.b16 %v1375
    %v1409 = vunpack.c.l.b16 %v1376
    %v1410 = vpack.c.b16 %v1395, %v1394
    %v1411 = vpack.c.b16 %v1397, %v1396
    %v1412 = vpack.c.b16 %v1399, %v1398
    %v1413 = vpack.c.b16 %v1401, %v1400
    %v1414 = vpack.c.b16 %v1403, %v1402
    %v1415 = vpack.c.b16 %v1405, %v1404
    %v1416 = vpack.c.b16 %v1407, %v1406
    %v1417 = vpack.c.b16 %v1409, %v1408
    %1426 = vmatprep.subr.bf16.mxu0 0
    %1427 = vmatpush1.bf16.msra.mxu0 %v1410
    %1428 = vmatprep.subr.bf16.mxu0 0
    %1429 = vmatpush1.bf16.msra.mxu0 %v1411
    %1430 = vmatprep.subr.bf16.mxu0 0
    %1431 = vmatpush1.bf16.msra.mxu0 %v1412
    %1432 = vmatprep.subr.bf16.mxu0 0
    %1433 = vmatpush1.bf16.msra.mxu0 %v1413
    %1434 = vmatprep.subr.bf16.mxu0 0
    %1435 = vmatpush1.bf16.msra.mxu0 %v1414
    %1436 = vmatprep.subr.bf16.mxu0 0
    %1437 = vmatpush1.bf16.msra.mxu0 %v1415
    %1438 = vmatprep.subr.bf16.mxu0 0
    %1439 = vmatpush1.bf16.msra.mxu0 %v1416
    %1440 = vmatprep.subr.bf16.mxu0 0
    %1441 = vmatpush1.bf16.msra.mxu0 %v1417
    %1442 = vmatprep.subr.bf16.mxu0 0
    %1443 = vmatpush1.bf16.msra.mxu0 0
    %1444 = vmatprep.subr.bf16.mxu0 0
    %1445 = vmatpush1.bf16.msra.mxu0 0
    %1446 = vmatprep.subr.bf16.mxu0 0
    %1447 = vmatpush1.bf16.msra.mxu0 0
    %1448 = vmatprep.subr.bf16.mxu0 0
    %1449 = vmatpush1.bf16.msra.mxu0 0
    %1450 = vmatprep.subr.bf16.mxu0 0
    %1451 = vmatpush1.bf16.msra.mxu0 0
    %1452 = vmatprep.subr.bf16.mxu0 0
    %1453 = vmatpush1.bf16.msra.mxu0 0
    %1454 = vmatprep.subr.bf16.mxu0 0
    %1455 = vmatpush1.bf16.msra.mxu0 0
    %1456 = vmatprep.subr.bf16.mxu0 0
    %1457 = vmatpush1.bf16.msra.mxu0 0
    %1458 = vmatprep.mubr.bf16.mxu0 0
    %1459 = vmatmul.mubr.bf16.gmra.mrb[0].mxu0 %v1377
    %v1460 = vpop.f32.mrb[0].mxu0
    %v1461 = vadd.f32 0.0, %v1460
    %v1462 = vpop.f32.mrb[0].mxu0
    %v1463 = vpop.f32.mrb[0].mxu0
    %v1464 = vpop.f32.mrb[0].mxu0
    %1465 = vdwg.mxu0
    %s1466 = scalar_lea.vmem %s4, 16
    %v1467 = vld [vmem:[%s1466] sm:$0xf]
    %v1468 = vpack.c.bf16 %v1461, %v1461
    %v1469 = vld [vmem:[#allocation18 + $0x5] ss:$0 sm:$0xff]
    %v1471 = vsel %vm837, %v1467, 0
    %v1474 = vsel %vm841, %v1468, 0
    %1476 = vmatprep.subr.bf16.mxu0 0
    %1477 = vmatpush1.bf16.msra.mxu0 %v1474
    %1478 = vmatprep.subr.bf16.mxu0 0
    %1479 = vmatpush1.bf16.msra.mxu0 0
    %1480 = vmatprep.subr.bf16.mxu0 0
    %1481 = vmatpush1.bf16.msra.mxu0 0
    %1482 = vmatprep.subr.bf16.mxu0 0
    %1483 = vmatpush1.bf16.msra.mxu0 0
    %1484 = vmatprep.subr.bf16.mxu0 0
    %1485 = vmatpush1.bf16.msra.mxu0 0
    %1486 = vmatprep.subr.bf16.mxu0 0
    %1487 = vmatpush1.bf16.msra.mxu0 0
    %1488 = vmatprep.subr.bf16.mxu0 0
    %1489 = vmatpush1.bf16.msra.mxu0 0
    %1490 = vmatprep.subr.bf16.mxu0 0
    %1491 = vmatpush1.bf16.msra.mxu0 0
    %1492 = vmatprep.subr.bf16.mxu0 0
    %1493 = vmatpush1.bf16.msra.mxu0 0
    %1494 = vmatprep.subr.bf16.mxu0 0
    %1495 = vmatpush1.bf16.msra.mxu0 0
    %1496 = vmatprep.subr.bf16.mxu0 0
    %1497 = vmatpush1.bf16.msra.mxu0 0
    %1498 = vmatprep.subr.bf16.mxu0 0
    %1499 = vmatpush1.bf16.msra.mxu0 0
    %1500 = vmatprep.subr.bf16.mxu0 0
    %1501 = vmatpush1.bf16.msra.mxu0 0
    %1502 = vmatprep.subr.bf16.mxu0 0
    %1503 = vmatpush1.bf16.msra.mxu0 0
    %1504 = vmatprep.subr.bf16.mxu0 0
    %1505 = vmatpush1.bf16.msra.mxu0 0
    %1506 = vmatprep.subr.bf16.mxu0 0
    %1507 = vmatpush1.bf16.msra.mxu0 0
    %1508 = vmatprep.mubr.bf16.mxu0 0
    %1509 = vmatmul.mubr.bf16.gmra.mrb[0].mxu0 %v1471
    %v1510 = vpop.f32.mrb[0].mxu0
    %v1511 = vadd.f32 %v1469, %v1510
    %v1512 = vpop.f32.mrb[0].mxu0
    %v1513 = vpop.f32.mrb[0].mxu0
    %v1514 = vpop.f32.mrb[0].mxu0
    %1515 = vdwg.mxu0
    %v1516 = vmax.f32 %v1511, 0.0
    %v1517 = vadd.f32 %v1359, %v1516
    %s1518 = scalar_lea.vmem [#allocation10], 320
    %v1519 = vld [vmem:[%s1518] sm:$0xf]
    %v1520 = vld [vmem:[%s1518 + $0x4] sm:$0xf]
    %v1521 = vld [vmem:[%s1518 + $0x8] sm:$0xf]
    %v1522 = vld [vmem:[%s1518 + $0xc] sm:$0xf]
    %v1523 = vld [vmem:[%s1518 + $0x10] sm:$0xf]
    %v1524 = vld [vmem:[%s1518 + $0x14] sm:$0xf]
    %v1525 = vld [vmem:[%s1518 + $0x18] sm:$0xf]
    %v1526 = vld [vmem:[%s1518 + $0x1c] sm:$0xf]
    %v1527 = vld [vmem:[%s1518 + $0x20] sm:$0xf]
    %v1528 = vld [vmem:[%s1518 + $0x24] sm:$0xf]
    %v1529 = vld [vmem:[%s1518 + $0x28] sm:$0xf]
    %v1530 = vld [vmem:[%s1518 + $0x2c] sm:$0xf]
    %v1531 = vld [vmem:[%s1518 + $0x30] sm:$0xf]
    %v1532 = vld [vmem:[%s1518 + $0x34] sm:$0xf]
    %v1533 = vld [vmem:[%s1518 + $0x38] sm:$0xf]
    %v1534 = vld [vmem:[%s1518 + $0x3c] sm:$0xf]
    %v1535 = vpack.c.bf16 %v1202, %v1202
    %v1552 = vunpack.c.l.b16 %v1519
    %v1553 = vunpack.c.l.b16 %v1520
    %v1554 = vunpack.c.l.b16 %v1521
    %v1555 = vunpack.c.l.b16 %v1522
    %v1556 = vunpack.c.l.b16 %v1523
    %v1557 = vunpack.c.l.b16 %v1524
    %v1558 = vunpack.c.l.b16 %v1525
    %v1559 = vunpack.c.l.b16 %v1526
    %v1560 = vunpack.c.l.b16 %v1527
    %v1561 = vunpack.c.l.b16 %v1528
    %v1562 = vunpack.c.l.b16 %v1529
    %v1563 = vunpack.c.l.b16 %v1530
    %v1564 = vunpack.c.l.b16 %v1531
    %v1565 = vunpack.c.l.b16 %v1532
    %v1566 = vunpack.c.l.b16 %v1533
    %v1567 = vunpack.c.l.b16 %v1534
    %v1568 = vpack.c.b16 %v1553, %v1552
    %v1569 = vpack.c.b16 %v1555, %v1554
    %v1570 = vpack.c.b16 %v1557, %v1556
    %v1571 = vpack.c.b16 %v1559, %v1558
    %v1572 = vpack.c.b16 %v1561, %v1560
    %v1573 = vpack.c.b16 %v1563, %v1562
    %v1574 = vpack.c.b16 %v1565, %v1564
    %v1575 = vpack.c.b16 %v1567, %v1566
    %1584 = vmatprep.subr.bf16.mxu0 0
    %1585 = vmatpush1.bf16.msra.mxu0 %v1568
    %1586 = vmatprep.subr.bf16.mxu0 0
    %1587 = vmatpush1.bf16.msra.mxu0 %v1569
    %1588 = vmatprep.subr.bf16.mxu0 0
    %1589 = vmatpush1.bf16.msra.mxu0 %v1570
    %1590 = vmatprep.subr.bf16.mxu0 0
    %1591 = vmatpush1.bf16.msra.mxu0 %v1571
    %1592 = vmatprep.subr.bf16.mxu0 0
    %1593 = vmatpush1.bf16.msra.mxu0 %v1572
    %1594 = vmatprep.subr.bf16.mxu0 0
    %1595 = vmatpush1.bf16.msra.mxu0 %v1573
    %1596 = vmatprep.subr.bf16.mxu0 0
    %1597 = vmatpush1.bf16.msra.mxu0 %v1574
    %1598 = vmatprep.subr.bf16.mxu0 0
    %1599 = vmatpush1.bf16.msra.mxu0 %v1575
    %1600 = vmatprep.subr.bf16.mxu0 0
    %1601 = vmatpush1.bf16.msra.mxu0 0
    %1602 = vmatprep.subr.bf16.mxu0 0
    %1603 = vmatpush1.bf16.msra.mxu0 0
    %1604 = vmatprep.subr.bf16.mxu0 0
    %1605 = vmatpush1.bf16.msra.mxu0 0
    %1606 = vmatprep.subr.bf16.mxu0 0
    %1607 = vmatpush1.bf16.msra.mxu0 0
    %1608 = vmatprep.subr.bf16.mxu0 0
    %1609 = vmatpush1.bf16.msra.mxu0 0
    %1610 = vmatprep.subr.bf16.mxu0 0
    %1611 = vmatpush1.bf16.msra.mxu0 0
    %1612 = vmatprep.subr.bf16.mxu0 0
    %1613 = vmatpush1.bf16.msra.mxu0 0
    %1614 = vmatprep.subr.bf16.mxu0 0
    %1615 = vmatpush1.bf16.msra.mxu0 0
    %1616 = vmatprep.mubr.bf16.mxu0 0
    %1617 = vmatmul.mubr.bf16.gmra.mrb[0].mxu0 %v1535
    %v1618 = vpop.f32.mrb[0].mxu0
    %v1619 = vadd.f32 0.0, %v1618
    %v1620 = vpop.f32.mrb[0].mxu0
    %v1621 = vpop.f32.mrb[0].mxu0
    %v1622 = vpop.f32.mrb[0].mxu0
    %1623 = vdwg.mxu0
    %s1624 = scalar_lea.vmem %s4, 20
    %v1625 = vld [vmem:[%s1624] sm:$0xf]
    %v1626 = vpack.c.bf16 %v1619, %v1619
    %v1627 = vld [vmem:[#allocation18 + $0x6] ss:$0 sm:$0xff]
    %v1629 = vsel %vm837, %v1625, 0
    %v1632 = vsel %vm841, %v1626, 0
    %1634 = vmatprep.subr.bf16.mxu0 0
    %1635 = vmatpush1.bf16.msra.mxu0 %v1632
    %1636 = vmatprep.subr.bf16.mxu0 0
    %1637 = vmatpush1.bf16.msra.mxu0 0
    %1638 = vmatprep.subr.bf16.mxu0 0
    %1639 = vmatpush1.bf16.msra.mxu0 0
    %1640 = vmatprep.subr.bf16.mxu0 0
    %1641 = vmatpush1.bf16.msra.mxu0 0
    %1642 = vmatprep.subr.bf16.mxu0 0
    %1643 = vmatpush1.bf16.msra.mxu0 0
    %1644 = vmatprep.subr.bf16.mxu0 0
    %1645 = vmatpush1.bf16.msra.mxu0 0
    %1646 = vmatprep.subr.bf16.mxu0 0
    %1647 = vmatpush1.bf16.msra.mxu0 0
    %1648 = vmatprep.subr.bf16.mxu0 0
    %1649 = vmatpush1.bf16.msra.mxu0 0
    %1650 = vmatprep.subr.bf16.mxu0 0
    %1651 = vmatpush1.bf16.msra.mxu0 0
    %1652 = vmatprep.subr.bf16.mxu0 0
    %1653 = vmatpush1.bf16.msra.mxu0 0
    %1654 = vmatprep.subr.bf16.mxu0 0
    %1655 = vmatpush1.bf16.msra.mxu0 0
    %1656 = vmatprep.subr.bf16.mxu0 0
    %1657 = vmatpush1.bf16.msra.mxu0 0
    %1658 = vmatprep.subr.bf16.mxu0 0
    %1659 = vmatpush1.bf16.msra.mxu0 0
    %1660 = vmatprep.subr.bf16.mxu0 0
    %1661 = vmatpush1.bf16.msra.mxu0 0
    %1662 = vmatprep.subr.bf16.mxu0 0
    %1663 = vmatpush1.bf16.msra.mxu0 0
    %1664 = vmatprep.subr.bf16.mxu0 0
    %1665 = vmatpush1.bf16.msra.mxu0 0
    %1666 = vmatprep.mubr.bf16.mxu0 0
    %1667 = vmatmul.mubr.bf16.gmra.mrb[0].mxu0 %v1629
    %v1668 = vpop.f32.mrb[0].mxu0
    %v1669 = vadd.f32 %v1627, %v1668
    %v1670 = vpop.f32.mrb[0].mxu0
    %v1671 = vpop.f32.mrb[0].mxu0
    %v1672 = vpop.f32.mrb[0].mxu0
    %1673 = vdwg.mxu0
    %v1674 = vmax.f32 %v1669, 0.0
    %v1675 = vadd.f32 %v1517, %v1674
    %s1676 = scalar_lea.vmem [#allocation10], 384
    %v1677 = vld [vmem:[%s1676] sm:$0xf]
    %v1678 = vld [vmem:[%s1676 + $0x4] sm:$0xf]
    %v1679 = vld [vmem:[%s1676 + $0x8] sm:$0xf]
    %v1680 = vld [vmem:[%s1676 + $0xc] sm:$0xf]
    %v1681 = vld [vmem:[%s1676 + $0x10] sm:$0xf]
    %v1682 = vld [vmem:[%s1676 + $0x14] sm:$0xf]
    %v1683 = vld [vmem:[%s1676 + $0x18] sm:$0xf]
    %v1684 = vld [vmem:[%s1676 + $0x1c] sm:$0xf]
    %v1685 = vld [vmem:[%s1676 + $0x20] sm:$0xf]
    %v1686 = vld [vmem:[%s1676 + $0x24] sm:$0xf]
    %v1687 = vld [vmem:[%s1676 + $0x28] sm:$0xf]
    %v1688 = vld [vmem:[%s1676 + $0x2c] sm:$0xf]
    %v1689 = vld [vmem:[%s1676 + $0x30] sm:$0xf]
    %v1690 = vld [vmem:[%s1676 + $0x34] sm:$0xf]
    %v1691 = vld [vmem:[%s1676 + $0x38] sm:$0xf]
    %v1692 = vld [vmem:[%s1676 + $0x3c] sm:$0xf]
    %v1693 = vpack.c.bf16 %v728, %v728
    %v1710 = vunpack.c.l.b16 %v1677
    %v1711 = vunpack.c.l.b16 %v1678
    %v1712 = vunpack.c.l.b16 %v1679
    %v1713 = vunpack.c.l.b16 %v1680
    %v1714 = vunpack.c.l.b16 %v1681
    %v1715 = vunpack.c.l.b16 %v1682
    %v1716 = vunpack.c.l.b16 %v1683
    %v1717 = vunpack.c.l.b16 %v1684
    %v1718 = vunpack.c.l.b16 %v1685
    %v1719 = vunpack.c.l.b16 %v1686
    %v1720 = vunpack.c.l.b16 %v1687
    %v1721 = vunpack.c.l.b16 %v1688
    %v1722 = vunpack.c.l.b16 %v1689
    %v1723 = vunpack.c.l.b16 %v1690
    %v1724 = vunpack.c.l.b16 %v1691
    %v1725 = vunpack.c.l.b16 %v1692
    %v1726 = vpack.c.b16 %v1711, %v1710
    %v1727 = vpack.c.b16 %v1713, %v1712
    %v1728 = vpack.c.b16 %v1715, %v1714
    %v1729 = vpack.c.b16 %v1717, %v1716
    %v1730 = vpack.c.b16 %v1719, %v1718
    %v1731 = vpack.c.b16 %v1721, %v1720
    %v1732 = vpack.c.b16 %v1723, %v1722
    %v1733 = vpack.c.b16 %v1725, %v1724
    %1742 = vmatprep.subr.bf16.mxu0 0
    %1743 = vmatpush1.bf16.msra.mxu0 %v1726
    %1744 = vmatprep.subr.bf16.mxu0 0
    %1745 = vmatpush1.bf16.msra.mxu0 %v1727
    %1746 = vmatprep.subr.bf16.mxu0 0
    %1747 = vmatpush1.bf16.msra.mxu0 %v1728
    %1748 = vmatprep.subr.bf16.mxu0 0
    %1749 = vmatpush1.bf16.msra.mxu0 %v1729
    %1750 = vmatprep.subr.bf16.mxu0 0
    %1751 = vmatpush1.bf16.msra.mxu0 %v1730
    %1752 = vmatprep.subr.bf16.mxu0 0
    %1753 = vmatpush1.bf16.msra.mxu0 %v1731
    %1754 = vmatprep.subr.bf16.mxu0 0
    %1755 = vmatpush1.bf16.msra.mxu0 %v1732
    %1756 = vmatprep.subr.bf16.mxu0 0
    %1757 = vmatpush1.bf16.msra.mxu0 %v1733
    %1758 = vmatprep.subr.bf16.mxu0 0
    %1759 = vmatpush1.bf16.msra.mxu0 0
    %1760 = vmatprep.subr.bf16.mxu0 0
    %1761 = vmatpush1.bf16.msra.mxu0 0
    %1762 = vmatprep.subr.bf16.mxu0 0
    %1763 = vmatpush1.bf16.msra.mxu0 0
    %1764 = vmatprep.subr.bf16.mxu0 0
    %1765 = vmatpush1.bf16.msra.mxu0 0
    %1766 = vmatprep.subr.bf16.mxu0 0
    %1767 = vmatpush1.bf16.msra.mxu0 0
    %1768 = vmatprep.subr.bf16.mxu0 0
    %1769 = vmatpush1.bf16.msra.mxu0 0
    %1770 = vmatprep.subr.bf16.mxu0 0
    %1771 = vmatpush1.bf16.msra.mxu0 0
    %1772 = vmatprep.subr.bf16.mxu0 0
    %1773 = vmatpush1.bf16.msra.mxu0 0
    %1774 = vmatprep.mubr.bf16.mxu0 0
    %1775 = vmatmul.mubr.bf16.gmra.mrb[0].mxu0 %v1693
    %v1776 = vpop.f32.mrb[0].mxu0
    %v1777 = vadd.f32 0.0, %v1776
    %v1778 = vpop.f32.mrb[0].mxu0
    %v1779 = vpop.f32.mrb[0].mxu0
    %v1780 = vpop.f32.mrb[0].mxu0
    %1781 = vdwg.mxu0
    %s1782 = scalar_lea.vmem %s4, 24
    %v1783 = vld [vmem:[%s1782] sm:$0xf]
    %v1784 = vpack.c.bf16 %v1777, %v1777
    %v1785 = vld [vmem:[#allocation18 + $0x7] ss:$0 sm:$0xff]
    %v1787 = vsel %vm837, %v1783, 0
    %v1790 = vsel %vm841, %v1784, 0
    %1792 = vmatprep.subr.bf16.mxu0 0
    %1793 = vmatpush1.bf16.msra.mxu0 %v1790
    %1794 = vmatprep.subr.bf16.mxu0 0
    %1795 = vmatpush1.bf16.msra.mxu0 0
    %1796 = vmatprep.subr.bf16.mxu0 0
    %1797 = vmatpush1.bf16.msra.mxu0 0
    %1798 = vmatprep.subr.bf16.mxu0 0
    %1799 = vmatpush1.bf16.msra.mxu0 0
    %1800 = vmatprep.subr.bf16.mxu0 0
    %1801 = vmatpush1.bf16.msra.mxu0 0
    %1802 = vmatprep.subr.bf16.mxu0 0
    %1803 = vmatpush1.bf16.msra.mxu0 0
    %1804 = vmatprep.subr.bf16.mxu0 0
    %1805 = vmatpush1.bf16.msra.mxu0 0
    %1806 = vmatprep.subr.bf16.mxu0 0
    %1807 = vmatpush1.bf16.msra.mxu0 0
    %1808 = vmatprep.subr.bf16.mxu0 0
    %1809 = vmatpush1.bf16.msra.mxu0 0
    %1810 = vmatprep.subr.bf16.mxu0 0
    %1811 = vmatpush1.bf16.msra.mxu0 0
    %1812 = vmatprep.subr.bf16.mxu0 0
    %1813 = vmatpush1.bf16.msra.mxu0 0
    %1814 = vmatprep.subr.bf16.mxu0 0
    %1815 = vmatpush1.bf16.msra.mxu0 0
    %1816 = vmatprep.subr.bf16.mxu0 0
    %1817 = vmatpush1.bf16.msra.mxu0 0
    %1818 = vmatprep.subr.bf16.mxu0 0
    %1819 = vmatpush1.bf16.msra.mxu0 0
    %1820 = vmatprep.subr.bf16.mxu0 0
    %1821 = vmatpush1.bf16.msra.mxu0 0
    %1822 = vmatprep.subr.bf16.mxu0 0
    %1823 = vmatpush1.bf16.msra.mxu0 0
    %1824 = vmatprep.mubr.bf16.mxu0 0
    %1825 = vmatmul.mubr.bf16.gmra.mrb[0].mxu0 %v1787
    %v1826 = vpop.f32.mrb[0].mxu0
    %v1827 = vadd.f32 %v1785, %v1826
    %v1828 = vpop.f32.mrb[0].mxu0
    %v1829 = vpop.f32.mrb[0].mxu0
    %v1830 = vpop.f32.mrb[0].mxu0
    %1831 = vdwg.mxu0
    %v1832 = vmax.f32 %v1827, 0.0
    %v1833 = vadd.f32 %v1675, %v1832
    %v1834 = vld [vmem:[#allocation12] sm:$0xff]
    %v1835 = vld [vmem:[#allocation12 + $0x8] sm:$0xf]
    %v1836 = vld [vmem:[#allocation12 + $0xc] sm:$0xff]
    %v1837 = vld [vmem:[#allocation12 + $0x14] sm:$0xf]
    %v1838 = vld [vmem:[#allocation12 + $0x18] sm:$0xff]
    %v1839 = vld [vmem:[#allocation12 + $0x20] sm:$0xf]
    %v1840 = vld [vmem:[#allocation12 + $0x24] sm:$0xff]
    %v1841 = vld [vmem:[#allocation12 + $0x2c] sm:$0xf]
    %v1842 = vld [vmem:[#allocation12 + $0x30] sm:$0xff]
    %v1843 = vld [vmem:[#allocation12 + $0x38] sm:$0xf]
    %v1844 = vld [vmem:[#allocation12 + $0x3c] sm:$0xff]
    %v1845 = vld [vmem:[#allocation12 + $0x44] sm:$0xf]
    %v1846 = vld [vmem:[#allocation12 + $0x48] sm:$0xff]
    %v1847 = vld [vmem:[#allocation12 + $0x50] sm:$0xf]
    %v1848 = vld [vmem:[#allocation12 + $0x54] sm:$0xff]
    %v1849 = vld [vmem:[#allocation12 + $0x5c] sm:$0xf]
    %v1850 = vld [vmem:[#allocation12 + $0x60] sm:$0xff]
    %v1851 = vld [vmem:[#allocation12 + $0x68] sm:$0xf]
    %v1852 = vld [vmem:[#allocation12 + $0x6c] sm:$0xff]
    %v1853 = vld [vmem:[#allocation12 + $0x74] sm:$0xf]
    %v1854 = vld [vmem:[#allocation12 + $0x78] sm:$0xff]
    %v1855 = vld [vmem:[#allocation12 + $0x80] sm:$0xf]
    %v1856 = vld [vmem:[#allocation12 + $0x84] sm:$0xff]
    %v1857 = vld [vmem:[#allocation12 + $0x8c] sm:$0xf]
    %v1858 = vld [vmem:[#allocation12 + $0x90] sm:$0xff]
    %v1859 = vld [vmem:[#allocation12 + $0x98] sm:$0xf]
    %v1860 = vld [vmem:[#allocation12 + $0x9c] sm:$0xff]
    %v1861 = vld [vmem:[#allocation12 + $0xa4] sm:$0xf]
    %v1862 = vld [vmem:[#allocation12 + $0xa8] sm:$0xff]
    %v1863 = vld [vmem:[#allocation12 + $0xb0] sm:$0xf]
    %v1864 = vld [vmem:[#allocation12 + $0xb4] sm:$0xff]
    %v1865 = vld [vmem:[#allocation12 + $0xbc] sm:$0xf]
    %v1866 = vpack.c.bf16 %v724, %v724
    %s1867 = scalar_lea.vmem [#allocation18], 56
    %v1868 = vld [vmem:[%s1867] ss:$8 sm:$0x7]
    %v1870 = vlaneseq
    %v1871 = vshrl.u32 %v1870, 7
    %v1872 = vsub.s32 0, %v1871
    %v1873 = vrot.slane %v1868, %v1872
    %v1874 = vlaneseq
    %v1875 = vshrl.u32 %v1874, 7
    %v1876 = vsub.s32 1, %v1875
    %v1877 = vrot.slane %v1868, %v1876
    %v1878 = vlaneseq
    %v1879 = vshrl.u32 %v1878, 7
    %v1880 = vsub.s32 2, %v1879
    %v1881 = vrot.slane %v1868, %v1880
    %v1917 = vunpack.c.l.b16 %v1834
    %v1918 = vunpack.c.h.b16 %v1834
    %v1919 = vunpack.c.l.b16 %v1835
    %v1920 = vunpack.c.l.b16 %v1836
    %v1921 = vunpack.c.h.b16 %v1836
    %v1922 = vunpack.c.l.b16 %v1837
    %v1923 = vunpack.c.l.b16 %v1838
    %v1924 = vunpack.c.h.b16 %v1838
    %v1925 = vunpack.c.l.b16 %v1839
    %v1926 = vunpack.c.l.b16 %v1840
    %v1927 = vunpack.c.h.b16 %v1840
    %v1928 = vunpack.c.l.b16 %v1841
    %v1929 = vunpack.c.l.b16 %v1842
    %v1930 = vunpack.c.h.b16 %v1842
    %v1931 = vunpack.c.l.b16 %v1843
    %v1932 = vunpack.c.l.b16 %v1844
    %v1933 = vunpack.c.h.b16 %v1844
    %v1934 = vunpack.c.l.b16 %v1845
    %v1935 = vunpack.c.l.b16 %v1846
    %v1936 = vunpack.c.h.b16 %v1846
    %v1937 = vunpack.c.l.b16 %v1847
    %v1938 = vunpack.c.l.b16 %v1848
    %v1939 = vunpack.c.h.b16 %v1848
    %v1940 = vunpack.c.l.b16 %v1849
    %v1941 = vunpack.c.l.b16 %v1850
    %v1942 = vunpack.c.h.b16 %v1850
    %v1943 = vunpack.c.l.b16 %v1851
    %v1944 = vunpack.c.l.b16 %v1852
    %v1945 = vunpack.c.h.b16 %v1852
    %v1946 = vunpack.c.l.b16 %v1853
    %v1947 = vunpack.c.l.b16 %v1854
    %v1948 = vunpack.c.h.b16 %v1854
    %v1949 = vunpack.c.l.b16 %v1855
    %v1950 = vunpack.c.l.b16 %v1856
    %v1951 = vunpack.c.h.b16 %v1856
    %v1952 = vunpack.c.l.b16 %v1857
    %v1953 = vunpack.c.l.b16 %v1858
    %v1954 = vunpack.c.h.b16 %v1858
    %v1955 = vunpack.c.l.b16 %v1859
    %v1956 = vunpack.c.l.b16 %v1860
    %v1957 = vunpack.c.h.b16 %v1860
    %v1958 = vunpack.c.l.b16 %v1861
    %v1959 = vunpack.c.l.b16 %v1862
    %v1960 = vunpack.c.h.b16 %v1862
    %v1961 = vunpack.c.l.b16 %v1863
    %v1962 = vunpack.c.l.b16 %v1864
    %v1963 = vunpack.c.h.b16 %v1864
    %v1964 = vunpack.c.l.b16 %v1865
    %v1965 = vpack.c.b16 %v1920, %v1917
    %v1966 = vpack.c.b16 %v1921, %v1918
    %v1967 = vpack.c.b16 %v1922, %v1919
    %v1968 = vpack.c.b16 %v1926, %v1923
    %v1969 = vpack.c.b16 %v1927, %v1924
    %v1970 = vpack.c.b16 %v1928, %v1925
    %v1971 = vpack.c.b16 %v1932, %v1929
    %v1972 = vpack.c.b16 %v1933, %v1930
    %v1973 = vpack.c.b16 %v1934, %v1931
    %v1974 = vpack.c.b16 %v1938, %v1935
    %v1975 = vpack.c.b16 %v1939, %v1936
    %v1976 = vpack.c.b16 %v1940, %v1937
    %v1977 = vpack.c.b16 %v1944, %v1941
    %v1978 = vpack.c.b16 %v1945, %v1942
    %v1979 = vpack.c.b16 %v1946, %v1943
    %v1980 = vpack.c.b16 %v1950, %v1947
    %v1981 = vpack.c.b16 %v1951, %v1948
    %v1982 = vpack.c.b16 %v1952, %v1949
    %v1983 = vpack.c.b16 %v1956, %v1953
    %v1984 = vpack.c.b16 %v1957, %v1954
    %v1985 = vpack.c.b16 %v1958, %v1955
    %v1986 = vpack.c.b16 %v1962, %v1959
    %v1987 = vpack.c.b16 %v1963, %v1960
    %v1988 = vpack.c.b16 %v1964, %v1961
    %2013 = vmatprep.subr.bf16.mxu0 %v1966
    %2014 = vmatpush1.bf16.msra.mxu0 %v1965
    %2015 = vmatprep.subr.bf16.mxu0 %v1969
    %2016 = vmatpush1.bf16.msra.mxu0 %v1968
    %2017 = vmatprep.subr.bf16.mxu0 %v1972
    %2018 = vmatpush1.bf16.msra.mxu0 %v1971
    %2019 = vmatprep.subr.bf16.mxu0 %v1975
    %2020 = vmatpush1.bf16.msra.mxu0 %v1974
    %2021 = vmatprep.subr.bf16.mxu0 %v1978
    %2022 = vmatpush1.bf16.msra.mxu0 %v1977
    %2023 = vmatprep.subr.bf16.mxu0 %v1981
    %2024 = vmatpush1.bf16.msra.mxu0 %v1980
    %2025 = vmatprep.subr.bf16.mxu0 %v1984
    %2026 = vmatpush1.bf16.msra.mxu0 %v1983
    %2027 = vmatprep.subr.bf16.mxu0 %v1987
    %2028 = vmatpush1.bf16.msra.mxu0 %v1986
    %2029 = vmatprep.subr.bf16.mxu0 0
    %2030 = vmatpush1.bf16.msra.mxu0 0
    %2031 = vmatprep.subr.bf16.mxu0 0
    %2032 = vmatpush1.bf16.msra.mxu0 0
    %2033 = vmatprep.subr.bf16.mxu0 0
    %2034 = vmatpush1.bf16.msra.mxu0 0
    %2035 = vmatprep.subr.bf16.mxu0 0
    %2036 = vmatpush1.bf16.msra.mxu0 0
    %2037 = vmatprep.subr.bf16.mxu0 0
    %2038 = vmatpush1.bf16.msra.mxu0 0
    %2039 = vmatprep.subr.bf16.mxu0 0
    %2040 = vmatpush1.bf16.msra.mxu0 0
    %2041 = vmatprep.subr.bf16.mxu0 0
    %2042 = vmatpush1.bf16.msra.mxu0 0
    %2043 = vmatprep.subr.bf16.mxu0 0
    %2044 = vmatpush1.bf16.msra.mxu0 0
    %2045 = vmatprep.mubr.bf16.mxu0 0
    %2046 = vmatmul.mubr.bf16.gmra.mrb[0].mxu0 %v1866
    %v2047 = vpop.f32.mrb[0].mxu0
    %v2048 = vadd.f32 %v1873, %v2047
    %v2049 = vpop.f32.mrb[0].mxu0
    %v2050 = vadd.f32 %v1877, %v2049
    %v2051 = vpop.f32.mrb[0].mxu0
    %v2052 = vpop.f32.mrb[0].mxu0
    %2053 = vdwg.mxu0
    %2054 = vmatprep.subr.bf16.mxu0 0
    %2055 = vmatpush1.bf16.msra.mxu0 %v1967
    %2056 = vmatprep.subr.bf16.mxu0 0
    %2057 = vmatpush1.bf16.msra.mxu0 %v1970
    %2058 = vmatprep.subr.bf16.mxu0 0
    %2059 = vmatpush1.bf16.msra.mxu0 %v1973
    %2060 = vmatprep.subr.bf16.mxu0 0
    %2061 = vmatpush1.bf16.msra.mxu0 %v1976
    %2062 = vmatprep.subr.bf16.mxu0 0
    %2063 = vmatpush1.bf16.msra.mxu0 %v1979
    %2064 = vmatprep.subr.bf16.mxu0 0
    %2065 = vmatpush1.bf16.msra.mxu0 %v1982
    %2066 = vmatprep.subr.bf16.mxu0 0
    %2067 = vmatpush1.bf16.msra.mxu0 %v1985
    %2068 = vmatprep.subr.bf16.mxu0 0
    %2069 = vmatpush1.bf16.msra.mxu0 %v1988
    %2070 = vmatprep.subr.bf16.mxu0 0
    %2071 = vmatpush1.bf16.msra.mxu0 0
    %2072 = vmatprep.subr.bf16.mxu0 0
    %2073 = vmatpush1.bf16.msra.mxu0 0
    %2074 = vmatprep.subr.bf16.mxu0 0
    %2075 = vmatpush1.bf16.msra.mxu0 0
    %2076 = vmatprep.subr.bf16.mxu0 0
    %2077 = vmatpush1.bf16.msra.mxu0 0
    %2078 = vmatprep.subr.bf16.mxu0 0
    %2079 = vmatpush1.bf16.msra.mxu0 0
    %2080 = vmatprep.subr.bf16.mxu0 0
    %2081 = vmatpush1.bf16.msra.mxu0 0
    %2082 = vmatprep.subr.bf16.mxu0 0
    %2083 = vmatpush1.bf16.msra.mxu0 0
    %2084 = vmatprep.subr.bf16.mxu0 0
    %2085 = vmatpush1.bf16.msra.mxu0 0
    %2086 = vmatprep.mubr.bf16.mxu0 0
    %2087 = vmatmul.mubr.bf16.gmra.mrb[0].mxu0 %v1866
    %v2088 = vpop.f32.mrb[0].mxu0
    %v2089 = vadd.f32 %v1881, %v2088
    %v2090 = vpop.f32.mrb[0].mxu0
    %v2091 = vpop.f32.mrb[0].mxu0
    %v2092 = vpop.f32.mrb[0].mxu0
    %2093 = vdwg.mxu0
    %v2094 = vmax.f32 %v2048, 0.0
    %v2095 = vmax.f32 %v2050, 0.0
    %v2096 = vmax.f32 %v2089, 0.0
    %s2097 = scalar_lea.vmem [#allocation12], 192
    %v2098 = vld [vmem:[%s2097] sm:$0xff]
    %v2099 = vld [vmem:[%s2097 + $0x8] sm:$0xf]
    %v2100 = vld [vmem:[%s2097 + $0xc] sm:$0xff]
    %v2101 = vld [vmem:[%s2097 + $0x14] sm:$0xf]
    %v2102 = vld [vmem:[%s2097 + $0x18] sm:$0xff]
    %v2103 = vld [vmem:[%s2097 + $0x20] sm:$0xf]
    %v2104 = vld [vmem:[%s2097 + $0x24] sm:$0xff]
    %v2105 = vld [vmem:[%s2097 + $0x2c] sm:$0xf]
    %v2106 = vld [vmem:[%s2097 + $0x30] sm:$0xff]
    %v2107 = vld [vmem:[%s2097 + $0x38] sm:$0xf]
    %v2108 = vld [vmem:[%s2097 + $0x3c] sm:$0xff]
    %v2109 = vld [vmem:[%s2097 + $0x44] sm:$0xf]
    %v2110 = vld [vmem:[%s2097 + $0x48] sm:$0xff]
    %v2111 = vld [vmem:[%s2097 + $0x50] sm:$0xf]
    %v2112 = vld [vmem:[%s2097 + $0x54] sm:$0xff]
    %v2113 = vld [vmem:[%s2097 + $0x5c] sm:$0xf]
    %v2114 = vld [vmem:[%s2097 + $0x60] sm:$0xff]
    %v2115 = vld [vmem:[%s2097 + $0x68] sm:$0xf]
    %v2116 = vld [vmem:[%s2097 + $0x6c] sm:$0xff]
    %v2117 = vld [vmem:[%s2097 + $0x74] sm:$0xf]
    %v2118 = vld [vmem:[%s2097 + $0x78] sm:$0xff]
    %v2119 = vld [vmem:[%s2097 + $0x80] sm:$0xf]
    %v2120 = vld [vmem:[%s2097 + $0x84] sm:$0xff]
    %v2121 = vld [vmem:[%s2097 + $0x8c] sm:$0xf]
    %v2122 = vld [vmem:[%s2097 + $0x90] sm:$0xff]
    %v2123 = vld [vmem:[%s2097 + $0x98] sm:$0xf]
    %v2124 = vld [vmem:[%s2097 + $0x9c] sm:$0xff]
    %v2125 = vld [vmem:[%s2097 + $0xa4] sm:$0xf]
    %v2126 = vld [vmem:[%s2097 + $0xa8] sm:$0xff]
    %v2127 = vld [vmem:[%s2097 + $0xb0] sm:$0xf]
    %v2128 = vld [vmem:[%s2097 + $0xb4] sm:$0xff]
    %v2129 = vld [vmem:[%s2097 + $0xbc] sm:$0xf]
    %v2130 = vpack.c.bf16 %v722, %v722
    %s2131 = scalar_lea.vmem [#allocation18], 57
    %v2132 = vld [vmem:[%s2131] ss:$8 sm:$0x7]
    %v2134 = vlaneseq
    %v2135 = vshrl.u32 %v2134, 7
    %v2136 = vsub.s32 0, %v2135
    %v2137 = vrot.slane %v2132, %v2136
    %v2138 = vlaneseq
    %v2139 = vshrl.u32 %v2138, 7
    %v2140 = vsub.s32 1, %v2139
    %v2141 = vrot.slane %v2132, %v2140
    %v2142 = vlaneseq
    %v2143 = vshrl.u32 %v2142, 7
    %v2144 = vsub.s32 2, %v2143
    %v2145 = vrot.slane %v2132, %v2144
    %v2181 = vunpack.c.l.b16 %v2098
    %v2182 = vunpack.c.h.b16 %v2098
    %v2183 = vunpack.c.l.b16 %v2099
    %v2184 = vunpack.c.l.b16 %v2100
    %v2185 = vunpack.c.h.b16 %v2100
    %v2186 = vunpack.c.l.b16 %v2101
    %v2187 = vunpack.c.l.b16 %v2102
    %v2188 = vunpack.c.h.b16 %v2102
    %v2189 = vunpack.c.l.b16 %v2103
    %v2190 = vunpack.c.l.b16 %v2104
    %v2191 = vunpack.c.h.b16 %v2104
    %v2192 = vunpack.c.l.b16 %v2105
    %v2193 = vunpack.c.l.b16 %v2106
    %v2194 = vunpack.c.h.b16 %v2106
    %v2195 = vunpack.c.l.b16 %v2107
    %v2196 = vunpack.c.l.b16 %v2108
    %v2197 = vunpack.c.h.b16 %v2108
    %v2198 = vunpack.c.l.b16 %v2109
    %v2199 = vunpack.c.l.b16 %v2110
    %v2200 = vunpack.c.h.b16 %v2110
    %v2201 = vunpack.c.l.b16 %v2111
    %v2202 = vunpack.c.l.b16 %v2112
    %v2203 = vunpack.c.h.b16 %v2112
    %v2204 = vunpack.c.l.b16 %v2113
    %v2205 = vunpack.c.l.b16 %v2114
    %v2206 = vunpack.c.h.b16 %v2114
    %v2207 = vunpack.c.l.b16 %v2115
    %v2208 = vunpack.c.l.b16 %v2116
    %v2209 = vunpack.c.h.b16 %v2116
    %v2210 = vunpack.c.l.b16 %v2117
    %v2211 = vunpack.c.l.b16 %v2118
    %v2212 = vunpack.c.h.b16 %v2118
    %v2213 = vunpack.c.l.b16 %v2119
    %v2214 = vunpack.c.l.b16 %v2120
    %v2215 = vunpack.c.h.b16 %v2120
    %v2216 = vunpack.c.l.b16 %v2121
    %v2217 = vunpack.c.l.b16 %v2122
    %v2218 = vunpack.c.h.b16 %v2122
    %v2219 = vunpack.c.l.b16 %v2123
    %v2220 = vunpack.c.l.b16 %v2124
    %v2221 = vunpack.c.h.b16 %v2124
    %v2222 = vunpack.c.l.b16 %v2125
    %v2223 = vunpack.c.l.b16 %v2126
    %v2224 = vunpack.c.h.b16 %v2126
    %v2225 = vunpack.c.l.b16 %v2127
    %v2226 = vunpack.c.l.b16 %v2128
    %v2227 = vunpack.c.h.b16 %v2128
    %v2228 = vunpack.c.l.b16 %v2129
    %v2229 = vpack.c.b16 %v2184, %v2181
    %v2230 = vpack.c.b16 %v2185, %v2182
    %v2231 = vpack.c.b16 %v2186, %v2183
    %v2232 = vpack.c.b16 %v2190, %v2187
    %v2233 = vpack.c.b16 %v2191, %v2188
    %v2234 = vpack.c.b16 %v2192, %v2189
    %v2235 = vpack.c.b16 %v2196, %v2193
    %v2236 = vpack.c.b16 %v2197, %v2194
    %v2237 = vpack.c.b16 %v2198, %v2195
    %v2238 = vpack.c.b16 %v2202, %v2199
    %v2239 = vpack.c.b16 %v2203, %v2200
    %v2240 = vpack.c.b16 %v2204, %v2201
    %v2241 = vpack.c.b16 %v2208, %v2205
    %v2242 = vpack.c.b16 %v2209, %v2206
    %v2243 = vpack.c.b16 %v2210, %v2207
    %v2244 = vpack.c.b16 %v2214, %v2211
    %v2245 = vpack.c.b16 %v2215, %v2212
    %v2246 = vpack.c.b16 %v2216, %v2213
    %v2247 = vpack.c.b16 %v2220, %v2217
    %v2248 = vpack.c.b16 %v2221, %v2218
    %v2249 = vpack.c.b16 %v2222, %v2219
    %v2250 = vpack.c.b16 %v2226, %v2223
    %v2251 = vpack.c.b16 %v2227, %v2224
    %v2252 = vpack.c.b16 %v2228, %v2225
    %2277 = vmatprep.subr.bf16.mxu0 %v2230
    %2278 = vmatpush1.bf16.msra.mxu0 %v2229
    %2279 = vmatprep.subr.bf16.mxu0 %v2233
    %2280 = vmatpush1.bf16.msra.mxu0 %v2232
    %2281 = vmatprep.subr.bf16.mxu0 %v2236
    %2282 = vmatpush1.bf16.msra.mxu0 %v2235
    %2283 = vmatprep.subr.bf16.mxu0 %v2239
    %2284 = vmatpush1.bf16.msra.mxu0 %v2238
    %2285 = vmatprep.subr.bf16.mxu0 %v2242
    %2286 = vmatpush1.bf16.msra.mxu0 %v2241
    %2287 = vmatprep.subr.bf16.mxu0 %v2245
    %2288 = vmatpush1.bf16.msra.mxu0 %v2244
    %2289 = vmatprep.subr.bf16.mxu0 %v2248
    %2290 = vmatpush1.bf16.msra.mxu0 %v2247
    %2291 = vmatprep.subr.bf16.mxu0 %v2251
    %2292 = vmatpush1.bf16.msra.mxu0 %v2250
    %2293 = vmatprep.subr.bf16.mxu0 0
    %2294 = vmatpush1.bf16.msra.mxu0 0
    %2295 = vmatprep.subr.bf16.mxu0 0
    %2296 = vmatpush1.bf16.msra.mxu0 0
    %2297 = vmatprep.subr.bf16.mxu0 0
    %2298 = vmatpush1.bf16.msra.mxu0 0
    %2299 = vmatprep.subr.bf16.mxu0 0
    %2300 = vmatpush1.bf16.msra.mxu0 0
    %2301 = vmatprep.subr.bf16.mxu0 0
    %2302 = vmatpush1.bf16.msra.mxu0 0
    %2303 = vmatprep.subr.bf16.mxu0 0
    %2304 = vmatpush1.bf16.msra.mxu0 0
    %2305 = vmatprep.subr.bf16.mxu0 0
    %2306 = vmatpush1.bf16.msra.mxu0 0
    %2307 = vmatprep.subr.bf16.mxu0 0
    %2308 = vmatpush1.bf16.msra.mxu0 0
    %2309 = vmatprep.mubr.bf16.mxu0 0
    %2310 = vmatmul.mubr.bf16.gmra.mrb[0].mxu0 %v2130
    %v2311 = vpop.f32.mrb[0].mxu0
    %v2312 = vadd.f32 %v2137, %v2311
    %v2313 = vpop.f32.mrb[0].mxu0
    %v2314 = vadd.f32 %v2141, %v2313
    %v2315 = vpop.f32.mrb[0].mxu0
    %v2316 = vpop.f32.mrb[0].mxu0
    %2317 = vdwg.mxu0
    %2318 = vmatprep.subr.bf16.mxu0 0
    %2319 = vmatpush1.bf16.msra.mxu0 %v2231
    %2320 = vmatprep.subr.bf16.mxu0 0
    %2321 = vmatpush1.bf16.msra.mxu0 %v2234
    %2322 = vmatprep.subr.bf16.mxu0 0
    %2323 = vmatpush1.bf16.msra.mxu0 %v2237
    %2324 = vmatprep.subr.bf16.mxu0 0
    %2325 = vmatpush1.bf16.msra.mxu0 %v2240
    %2326 = vmatprep.subr.bf16.mxu0 0
    %2327 = vmatpush1.bf16.msra.mxu0 %v2243
    %2328 = vmatprep.subr.bf16.mxu0 0
    %2329 = vmatpush1.bf16.msra.mxu0 %v2246
    %2330 = vmatprep.subr.bf16.mxu0 0
    %2331 = vmatpush1.bf16.msra.mxu0 %v2249
    %2332 = vmatprep.subr.bf16.mxu0 0
    %2333 = vmatpush1.bf16.msra.mxu0 %v2252
    %2334 = vmatprep.subr.bf16.mxu0 0
    %2335 = vmatpush1.bf16.msra.mxu0 0
    %2336 = vmatprep.subr.bf16.mxu0 0
    %2337 = vmatpush1.bf16.msra.mxu0 0
    %2338 = vmatprep.subr.bf16.mxu0 0
    %2339 = vmatpush1.bf16.msra.mxu0 0
    %2340 = vmatprep.subr.bf16.mxu0 0
    %2341 = vmatpush1.bf16.msra.mxu0 0
    %2342 = vmatprep.subr.bf16.mxu0 0
    %2343 = vmatpush1.bf16.msra.mxu0 0
    %2344 = vmatprep.subr.bf16.mxu0 0
    %2345 = vmatpush1.bf16.msra.mxu0 0
    %2346 = vmatprep.subr.bf16.mxu0 0
    %2347 = vmatpush1.bf16.msra.mxu0 0
    %2348 = vmatprep.subr.bf16.mxu0 0
    %2349 = vmatpush1.bf16.msra.mxu0 0
    %2350 = vmatprep.mubr.bf16.mxu0 0
    %2351 = vmatmul.mubr.bf16.gmra.mrb[0].mxu0 %v2130
    %v2352 = vpop.f32.mrb[0].mxu0
    %v2353 = vadd.f32 %v2145, %v2352
    %v2354 = vpop.f32.mrb[0].mxu0
    %v2355 = vpop.f32.mrb[0].mxu0
    %v2356 = vpop.f32.mrb[0].mxu0
    %2357 = vdwg.mxu0
    %v2358 = vmax.f32 %v2312, 0.0
    %v2359 = vmax.f32 %v2314, 0.0
    %v2360 = vmax.f32 %v2353, 0.0
    %s2361 = scalar_lea.vmem [#allocation12], 384
    %v2362 = vld [vmem:[%s2361] sm:$0xff]
    %v2363 = vld [vmem:[%s2361 + $0xc] sm:$0xff]
    %v2364 = vld [vmem:[%s2361 + $0x18] sm:$0xff]
    %v2365 = vld [vmem:[%s2361 + $0x24] sm:$0xff]
    %v2366 = vld [vmem:[%s2361 + $0x30] sm:$0xff]
    %v2367 = vld [vmem:[%s2361 + $0x3c] sm:$0xff]
    %v2368 = vld [vmem:[%s2361 + $0x48] sm:$0xff]
    %v2369 = vld [vmem:[%s2361 + $0x54] sm:$0xff]
    %v2370 = vld [vmem:[%s2361 + $0x60] sm:$0xff]
    %v2371 = vld [vmem:[%s2361 + $0x6c] sm:$0xff]
    %v2372 = vld [vmem:[%s2361 + $0x78] sm:$0xff]
    %v2373 = vld [vmem:[%s2361 + $0x84] sm:$0xff]
    %v2374 = vld [vmem:[%s2361 + $0x90] sm:$0xff]
    %v2375 = vld [vmem:[%s2361 + $0x9c] sm:$0xff]
    %v2376 = vld [vmem:[%s2361 + $0xa8] sm:$0xff]
    %v2377 = vld [vmem:[%s2361 + $0xb4] sm:$0xff]
    %v2378 = vpack.c.bf16 %v723, %v723
    %s2379 = scalar_lea.vmem [#allocation18], 58
    %v2380 = vld [vmem:[%s2379] ss:$8 sm:$0x7]
    %v2382 = vlaneseq
    %v2383 = vshrl.u32 %v2382, 7
    %v2384 = vsub.s32 0, %v2383
    %v2385 = vrot.slane %v2380, %v2384
    %v2386 = vlaneseq
    %v2387 = vshrl.u32 %v2386, 7
    %v2388 = vsub.s32 1, %v2387
    %v2389 = vrot.slane %v2380, %v2388
    %v2408 = vunpack.c.l.b16 %v2362
    %v2409 = vunpack.c.h.b16 %v2362
    %v2410 = vunpack.c.l.b16 %v2363
    %v2411 = vunpack.c.h.b16 %v2363
    %v2412 = vunpack.c.l.b16 %v2364
    %v2413 = vunpack.c.h.b16 %v2364
    %v2414 = vunpack.c.l.b16 %v2365
    %v2415 = vunpack.c.h.b16 %v2365
    %v2416 = vunpack.c.l.b16 %v2366
    %v2417 = vunpack.c.h.b16 %v2366
    %v2418 = vunpack.c.l.b16 %v2367
    %v2419 = vunpack.c.h.b16 %v2367
    %v2420 = vunpack.c.l.b16 %v2368
    %v2421 = vunpack.c.h.b16 %v2368
    %v2422 = vunpack.c.l.b16 %v2369
    %v2423 = vunpack.c.h.b16 %v2369
    %v2424 = vunpack.c.l.b16 %v2370
    %v2425 = vunpack.c.h.b16 %v2370
    %v2426 = vunpack.c.l.b16 %v2371
    %v2427 = vunpack.c.h.b16 %v2371
    %v2428 = vunpack.c.l.b16 %v2372
    %v2429 = vunpack.c.h.b16 %v2372
    %v2430 = vunpack.c.l.b16 %v2373
    %v2431 = vunpack.c.h.b16 %v2373
    %v2432 = vunpack.c.l.b16 %v2374
    %v2433 = vunpack.c.h.b16 %v2374
    %v2434 = vunpack.c.l.b16 %v2375
    %v2435 = vunpack.c.h.b16 %v2375
    %v2436 = vunpack.c.l.b16 %v2376
    %v2437 = vunpack.c.h.b16 %v2376
    %v2438 = vunpack.c.l.b16 %v2377
    %v2439 = vunpack.c.h.b16 %v2377
    %v2440 = vpack.c.b16 %v2410, %v2408
    %v2441 = vpack.c.b16 %v2411, %v2409
    %v2442 = vpack.c.b16 %v2414, %v2412
    %v2443 = vpack.c.b16 %v2415, %v2413
    %v2444 = vpack.c.b16 %v2418, %v2416
    %v2445 = vpack.c.b16 %v2419, %v2417
    %v2446 = vpack.c.b16 %v2422, %v2420
    %v2447 = vpack.c.b16 %v2423, %v2421
    %v2448 = vpack.c.b16 %v2426, %v2424
    %v2449 = vpack.c.b16 %v2427, %v2425
    %v2450 = vpack.c.b16 %v2430, %v2428
    %v2451 = vpack.c.b16 %v2431, %v2429
    %v2452 = vpack.c.b16 %v2434, %v2432
    %v2453 = vpack.c.b16 %v2435, %v2433
    %v2454 = vpack.c.b16 %v2438, %v2436
    %v2455 = vpack.c.b16 %v2439, %v2437
    %2472 = vmatprep.subr.bf16.mxu0 %v2441
    %2473 = vmatpush1.bf16.msra.mxu0 %v2440
    %2474 = vmatprep.subr.bf16.mxu0 %v2443
    %2475 = vmatpush1.bf16.msra.mxu0 %v2442
    %2476 = vmatprep.subr.bf16.mxu0 %v2445
    %2477 = vmatpush1.bf16.msra.mxu0 %v2444
    %2478 = vmatprep.subr.bf16.mxu0 %v2447
    %2479 = vmatpush1.bf16.msra.mxu0 %v2446
    %2480 = vmatprep.subr.bf16.mxu0 %v2449
    %2481 = vmatpush1.bf16.msra.mxu0 %v2448
    %2482 = vmatprep.subr.bf16.mxu0 %v2451
    %2483 = vmatpush1.bf16.msra.mxu0 %v2450
    %2484 = vmatprep.subr.bf16.mxu0 %v2453
    %2485 = vmatpush1.bf16.msra.mxu0 %v2452
    %2486 = vmatprep.subr.bf16.mxu0 %v2455
    %2487 = vmatpush1.bf16.msra.mxu0 %v2454
    %2488 = vmatprep.subr.bf16.mxu0 0
    %2489 = vmatpush1.bf16.msra.mxu0 0
    %2490 = vmatprep.subr.bf16.mxu0 0
    %2491 = vmatpush1.bf16.msra.mxu0 0
    %2492 = vmatprep.subr.bf16.mxu0 0
    %2493 = vmatpush1.bf16.msra.mxu0 0
    %2494 = vmatprep.subr.bf16.mxu0 0
    %2495 = vmatpush1.bf16.msra.mxu0 0
    %2496 = vmatprep.subr.bf16.mxu0 0
    %2497 = vmatpush1.bf16.msra.mxu0 0
    %2498 = vmatprep.subr.bf16.mxu0 0
    %2499 = vmatpush1.bf16.msra.mxu0 0
    %2500 = vmatprep.subr.bf16.mxu0 0
    %2501 = vmatpush1.bf16.msra.mxu0 0
    %2502 = vmatprep.subr.bf16.mxu0 0
    %2503 = vmatpush1.bf16.msra.mxu0 0
    %2504 = vmatprep.mubr.bf16.mxu0 0
    %2505 = vmatmul.mubr.bf16.gmra.mrb[0].mxu0 %v2378
    %v2506 = vpop.f32.mrb[0].mxu0
    %v2507 = vadd.f32 %v2385, %v2506
    %v2508 = vpop.f32.mrb[0].mxu0
    %v2509 = vadd.f32 %v2389, %v2508
    %v2510 = vpop.f32.mrb[0].mxu0
    %v2511 = vpop.f32.mrb[0].mxu0
    %2512 = vdwg.mxu0
    %v2513 = vmax.f32 %v2507, 0.0
    %v2514 = vmax.f32 %v2509, 0.0
    %v2515 = vld [vmem:[%s5] sm:$0xf]
    %v2517 = vpack.i.b16 %v2515, %v2515
    %v2519 = vlaneseq
    %v2520 = vshrl.u32 %v2519, 7
    %v2521 = vsub.s32 0, %v2520
    %v2522 = vrot.slane %v2517, %v2521
    %2524 = vbcast.lane.c.b16.xlu0 %v2522, 256
    %v2525 = vpop.permute.xlu0 %2524
    %v2526 = vshrl.u32 %v2515, 16
    %v2527 = vpack.i.b16 %v2526, %v2526
    %v2529 = vlaneseq
    %v2530 = vshrl.u32 %v2529, 7
    %v2531 = vsub.s32 0, %v2530
    %v2532 = vrot.slane %v2527, %v2531
    %2534 = vbcast.lane.c.b16.xlu0 %v2532, 256
    %v2535 = vpop.permute.xlu0 %2534
    %v2536 = vlaneseq
    %v2537 = vshrl.u32 %v2536, 7
    %v2538 = vsub.s32 1, %v2537
    %v2539 = vrot.slane %v2517, %v2538
    %2541 = vbcast.lane.c.b16.xlu0 %v2539, 256
    %v2542 = vpop.permute.xlu0 %2541
    %v2543 = vlaneseq
    %v2544 = vshrl.u32 %v2543, 7
    %v2545 = vsub.s32 1, %v2544
    %v2546 = vrot.slane %v2527, %v2545
    %2548 = vbcast.lane.c.b16.xlu0 %v2546, 256
    %v2549 = vpop.permute.xlu0 %2548
    %v2550 = vlaneseq
    %v2551 = vshrl.u32 %v2550, 7
    %v2552 = vsub.s32 2, %v2551
    %v2553 = vrot.slane %v2517, %v2552
    %2555 = vbcast.lane.c.b16.xlu0 %v2553, 256
    %v2556 = vpop.permute.xlu0 %2555
    %v2557 = vlaneseq
    %v2558 = vshrl.u32 %v2557, 7
    %v2559 = vsub.s32 2, %v2558
    %v2560 = vrot.slane %v2527, %v2559
    %2562 = vbcast.lane.c.b16.xlu0 %v2560, 256
    %v2563 = vpop.permute.xlu0 %2562
    %v2564 = vlaneseq
    %v2565 = vshrl.u32 %v2564, 7
    %v2566 = vsub.s32 3, %v2565
    %v2567 = vrot.slane %v2517, %v2566
    %2569 = vbcast.lane.c.b16.xlu0 %v2567, 256
    %v2570 = vpop.permute.xlu0 %2569
    %v2571 = vlaneseq
    %v2572 = vshrl.u32 %v2571, 7
    %v2573 = vsub.s32 3, %v2572
    %v2574 = vrot.slane %v2527, %v2573
    %2576 = vbcast.lane.c.b16.xlu0 %v2574, 256
    %v2577 = vpop.permute.xlu0 %2576
    %vm2578 = vcmp.gt.bf16.partialorder %v2525, 0
    %vm2579 = vcmp.gt.bf16.partialorder %v2535, 0
    %vm2580 = vcmp.gt.bf16.partialorder %v2542, 0
    %vm2581 = vcmp.gt.bf16.partialorder %v2549, 0
    %vm2582 = vcmp.gt.bf16.partialorder %v2556, 0
    %vm2583 = vcmp.gt.bf16.partialorder %v2563, 0
    %vm2584 = vcmp.gt.bf16.partialorder %v2570, 0
    %vm2585 = vcmp.gt.bf16.partialorder %v2577, 0
    %v2586 = vsel %vm2578, 65537, 0
    %v2587 = vsel %vm2579, 65537, 0
    %v2588 = vsel %vm2580, 65537, 0
    %v2589 = vsel %vm2581, 65537, 0
    %v2590 = vsel %vm2582, 65537, 0
    %v2591 = vsel %vm2583, 65537, 0
    %v2592 = vsel %vm2584, 65537, 0
    %v2593 = vsel %vm2585, 65537, 0
    %v2594 = vunpack.c.l.b16 %v2586
    %v2595 = vunpack.c.l.b16 %v2587
    %v2596 = vunpack.c.l.b16 %v2588
    %v2597 = vunpack.c.l.b16 %v2589
    %v2598 = vunpack.c.l.b16 %v2590
    %v2599 = vunpack.c.l.b16 %v2591
    %v2600 = vunpack.c.l.b16 %v2592
    %v2601 = vunpack.c.l.b16 %v2593
    %vm2602 = vcmp.ne.s32.totalorder %v2594, 0
    %vm2603 = vcmp.ne.s32.totalorder %v2595, 0
    %vm2604 = vcmp.ne.s32.totalorder %v2596, 0
    %vm2605 = vcmp.ne.s32.totalorder %v2597, 0
    %vm2606 = vcmp.ne.s32.totalorder %v2598, 0
    %vm2607 = vcmp.ne.s32.totalorder %v2599, 0
    %vm2608 = vcmp.ne.s32.totalorder %v2600, 0
    %vm2609 = vcmp.ne.s32.totalorder %v2601, 0
    %v2610 = vsel %vm2602, 1, 0
    %v2611 = vsel %vm2603, 1, 0
    %v2612 = vsel %vm2604, 1, 0
    %v2613 = vsel %vm2605, 1, 0
    %v2614 = vsel %vm2606, 1, 0
    %v2615 = vsel %vm2607, 1, 0
    %v2616 = vsel %vm2608, 1, 0
    %v2617 = vsel %vm2609, 1, 0
    %2618 = vset.pattern.permute.xlu0 0
    %2619 = vperm.xlu0 %2618, %v2610
    %v2620 = vpop.permute.xlu0 %2619
    %2621 = vset.pattern.permute.xlu0 0
    %2622 = vperm.xlu0 %2621, %v2611
    %v2623 = vpop.permute.xlu0 %2622
    %2624 = vset.pattern.permute.xlu0 0
    %2625 = vperm.xlu0 %2624, %v2612
    %v2626 = vpop.permute.xlu0 %2625
    %2627 = vset.pattern.permute.xlu0 0
    %2628 = vperm.xlu0 %2627, %v2613
    %v2629 = vpop.permute.xlu0 %2628
    %2630 = vset.pattern.permute.xlu0 0
    %2631 = vperm.xlu0 %2630, %v2614
    %v2632 = vpop.permute.xlu0 %2631
    %2633 = vset.pattern.permute.xlu0 0
    %2634 = vperm.xlu0 %2633, %v2615
    %v2635 = vpop.permute.xlu0 %2634
    %2636 = vset.pattern.permute.xlu0 0
    %2637 = vperm.xlu0 %2636, %v2616
    %v2638 = vpop.permute.xlu0 %2637
    %2639 = vset.pattern.permute.xlu0 0
    %2640 = vperm.xlu0 %2639, %v2617
    %v2641 = vpop.permute.xlu0 %2640
    %vm2642 = vcmp.eq.s32.totalorder %v2620, 1
    %vm2643 = vcmp.eq.s32.totalorder %v2623, 1
    %vm2644 = vcmp.eq.s32.totalorder %v2626, 1
    %vm2645 = vcmp.eq.s32.totalorder %v2629, 1
    %vm2646 = vcmp.eq.s32.totalorder %v2632, 1
    %vm2647 = vcmp.eq.s32.totalorder %v2635, 1
    %vm2648 = vcmp.eq.s32.totalorder %v2638, 1
    %vm2649 = vcmp.eq.s32.totalorder %v2641, 1
    %v2650 = vsel %vm2642, %v2094, -inf
    %v2651 = vsel %vm2643, %v2094, -inf
    %v2652 = vsel %vm2644, %v2094, -inf
    %v2653 = vsel %vm2645, %v2094, -inf
    %v2654 = vsel %vm2646, %v2094, -inf
    %v2655 = vsel %vm2647, %v2094, -inf
    %v2656 = vsel %vm2648, %v2094, -inf
    %v2657 = vsel %vm2649, %v2094, -inf
    %v2658 = vrot.slane %v2650, 4
    %v2659 = vmax.f32 %v2650, %v2658
    %v2660 = vrot.slane %v2659, 2
    %v2661 = vmax.f32 %v2659, %v2660
    %v2662 = vrot.slane %v2661, 1
    %v2663 = vmax.f32 %v2661, %v2662
    %v2664 = vrot.slane %v2651, 4
    %v2665 = vmax.f32 %v2651, %v2664
    %v2666 = vrot.slane %v2665, 2
    %v2667 = vmax.f32 %v2665, %v2666
    %v2668 = vrot.slane %v2667, 1
    %v2669 = vmax.f32 %v2667, %v2668
    %v2670 = vrot.slane %v2652, 4
    %v2671 = vmax.f32 %v2652, %v2670
    %v2672 = vrot.slane %v2671, 2
    %v2673 = vmax.f32 %v2671, %v2672
    %v2674 = vrot.slane %v2673, 1
    %v2675 = vmax.f32 %v2673, %v2674
    %v2676 = vrot.slane %v2653, 4
    %v2677 = vmax.f32 %v2653, %v2676
    %v2678 = vrot.slane %v2677, 2
    %v2679 = vmax.f32 %v2677, %v2678
    %v2680 = vrot.slane %v2679, 1
    %v2681 = vmax.f32 %v2679, %v2680
    %v2682 = vrot.slane %v2654, 4
    %v2683 = vmax.f32 %v2654, %v2682
    %v2684 = vrot.slane %v2683, 2
    %v2685 = vmax.f32 %v2683, %v2684
    %v2686 = vrot.slane %v2685, 1
    %v2687 = vmax.f32 %v2685, %v2686
    %v2688 = vrot.slane %v2655, 4
    %v2689 = vmax.f32 %v2655, %v2688
    %v2690 = vrot.slane %v2689, 2
    %v2691 = vmax.f32 %v2689, %v2690
    %v2692 = vrot.slane %v2691, 1
    %v2693 = vmax.f32 %v2691, %v2692
    %v2694 = vrot.slane %v2656, 4
    %v2695 = vmax.f32 %v2656, %v2694
    %v2696 = vrot.slane %v2695, 2
    %v2697 = vmax.f32 %v2695, %v2696
    %v2698 = vrot.slane %v2697, 1
    %v2699 = vmax.f32 %v2697, %v2698
    %v2700 = vrot.slane %v2657, 4
    %v2701 = vmax.f32 %v2657, %v2700
    %v2702 = vrot.slane %v2701, 2
    %v2703 = vmax.f32 %v2701, %v2702
    %v2704 = vrot.slane %v2703, 1
    %v2705 = vmax.f32 %v2703, %v2704
    %v2706 = vmax.f32 %v2663, 0.0
    %v2707 = vmax.f32 %v2669, 0.0
    %v2708 = vmax.f32 %v2675, 0.0
    %v2709 = vmax.f32 %v2681, 0.0
    %v2710 = vmax.f32 %v2687, 0.0
    %v2711 = vmax.f32 %v2693, 0.0
    %v2712 = vmax.f32 %v2699, 0.0
    %v2713 = vmax.f32 %v2705, 0.0
    %vm2722 = vcmask 1041409
    %v2723 = vsel %vm2722, %v2707, %v2706
    %vm2724 = vcmask 1042434
    %v2725 = vsel %vm2724, %v2708, %v2723
    %vm2726 = vcmask 1043459
    %v2727 = vsel %vm2726, %v2709, %v2725
    %vm2728 = vcmask 1044484
    %v2729 = vsel %vm2728, %v2710, %v2727
    %vm2730 = vcmask 1045509
    %v2731 = vsel %vm2730, %v2711, %v2729
    %vm2732 = vcmask 1046534
    %v2733 = vsel %vm2732, %v2712, %v2731
    %vm2734 = vcmask 1047559
    %v2735 = vsel %vm2734, %v2713, %v2733
    %v2737 = vld [vmem:[#allocation13] sm:$0xf]
    %v2738 = vld [vmem:[#allocation13 + $0x4] sm:$0xf]
    %v2739 = vld [vmem:[#allocation13 + $0x8] sm:$0xf]
    %v2740 = vld [vmem:[#allocation13 + $0xc] sm:$0xf]
    %v2741 = vld [vmem:[#allocation13 + $0x10] sm:$0xf]
    %v2742 = vld [vmem:[#allocation13 + $0x14] sm:$0xf]
    %v2743 = vld [vmem:[#allocation13 + $0x18] sm:$0xf]
    %v2744 = vld [vmem:[#allocation13 + $0x1c] sm:$0xf]
    %v2745 = vld [vmem:[#allocation13 + $0x20] sm:$0xf]
    %v2746 = vld [vmem:[#allocation13 + $0x24] sm:$0xf]
    %v2747 = vld [vmem:[#allocation13 + $0x28] sm:$0xf]
    %v2748 = vld [vmem:[#allocation13 + $0x2c] sm:$0xf]
    %v2749 = vld [vmem:[#allocation13 + $0x30] sm:$0xf]
    %v2750 = vld [vmem:[#allocation13 + $0x34] sm:$0xf]
    %v2751 = vld [vmem:[#allocation13 + $0x38] sm:$0xf]
    %v2752 = vld [vmem:[#allocation13 + $0x3c] sm:$0xf]
    %v2753 = vld [vmem:[#allocation13 + $0x40] sm:$0xf]
    %v2754 = vld [vmem:[#allocation13 + $0x44] sm:$0xf]
    %v2755 = vld [vmem:[#allocation13 + $0x48] sm:$0xf]
    %v2756 = vld [vmem:[#allocation13 + $0x4c] sm:$0xf]
    %v2757 = vld [vmem:[#allocation13 + $0x50] sm:$0xf]
    %v2758 = vld [vmem:[#allocation13 + $0x54] sm:$0xf]
    %v2759 = vld [vmem:[#allocation13 + $0x58] sm:$0xf]
    %v2760 = vld [vmem:[#allocation13 + $0x5c] sm:$0xf]
    %v2761 = vld [vmem:[#allocation13 + $0x60] sm:$0xf]
    %v2762 = vld [vmem:[#allocation13 + $0x64] sm:$0xf]
    %v2763 = vld [vmem:[#allocation13 + $0x68] sm:$0xf]
    %v2764 = vld [vmem:[#allocation13 + $0x6c] sm:$0xf]
    %v2765 = vld [vmem:[#allocation13 + $0x70] sm:$0xf]
    %v2766 = vld [vmem:[#allocation13 + $0x74] sm:$0xf]
    %v2767 = vld [vmem:[#allocation13 + $0x78] sm:$0xf]
    %v2768 = vld [vmem:[#allocation13 + $0x7c] sm:$0xf]
    %v2769 = vpack.c.bf16 %v2735, %v2735
    %v2770 = vld [vmem:[#allocation18 + $0x3b] ss:$0 sm:$0xff]
    %v2803 = vunpack.c.l.b16 %v2737
    %v2804 = vunpack.c.l.b16 %v2738
    %v2805 = vunpack.c.l.b16 %v2739
    %v2806 = vunpack.c.l.b16 %v2740
    %v2807 = vunpack.c.l.b16 %v2741
    %v2808 = vunpack.c.l.b16 %v2742
    %v2809 = vunpack.c.l.b16 %v2743
    %v2810 = vunpack.c.l.b16 %v2744
    %v2811 = vunpack.c.l.b16 %v2745
    %v2812 = vunpack.c.l.b16 %v2746
    %v2813 = vunpack.c.l.b16 %v2747
    %v2814 = vunpack.c.l.b16 %v2748
    %v2815 = vunpack.c.l.b16 %v2749
    %v2816 = vunpack.c.l.b16 %v2750
    %v2817 = vunpack.c.l.b16 %v2751
    %v2818 = vunpack.c.l.b16 %v2752
    %v2819 = vunpack.c.l.b16 %v2753
    %v2820 = vunpack.c.l.b16 %v2754
    %v2821 = vunpack.c.l.b16 %v2755
    %v2822 = vunpack.c.l.b16 %v2756
    %v2823 = vunpack.c.l.b16 %v2757
    %v2824 = vunpack.c.l.b16 %v2758
    %v2825 = vunpack.c.l.b16 %v2759
    %v2826 = vunpack.c.l.b16 %v2760
    %v2827 = vunpack.c.l.b16 %v2761
    %v2828 = vunpack.c.l.b16 %v2762
    %v2829 = vunpack.c.l.b16 %v2763
    %v2830 = vunpack.c.l.b16 %v2764
    %v2831 = vunpack.c.l.b16 %v2765
    %v2832 = vunpack.c.l.b16 %v2766
    %v2833 = vunpack.c.l.b16 %v2767
    %v2834 = vunpack.c.l.b16 %v2768
    %v2835 = vpack.c.b16 %v2804, %v2803
    %v2836 = vpack.c.b16 %v2806, %v2805
    %v2837 = vpack.c.b16 %v2808, %v2807
    %v2838 = vpack.c.b16 %v2810, %v2809
    %v2839 = vpack.c.b16 %v2812, %v2811
    %v2840 = vpack.c.b16 %v2814, %v2813
    %v2841 = vpack.c.b16 %v2816, %v2815
    %v2842 = vpack.c.b16 %v2818, %v2817
    %v2843 = vpack.c.b16 %v2820, %v2819
    %v2844 = vpack.c.b16 %v2822, %v2821
    %v2845 = vpack.c.b16 %v2824, %v2823
    %v2846 = vpack.c.b16 %v2826, %v2825
    %v2847 = vpack.c.b16 %v2828, %v2827
    %v2848 = vpack.c.b16 %v2830, %v2829
    %v2849 = vpack.c.b16 %v2832, %v2831
    %v2850 = vpack.c.b16 %v2834, %v2833
    %2867 = vmatprep.subr.bf16.mxu0 0
    %2868 = vmatpush1.bf16.msra.mxu0 %v2835
    %2869 = vmatprep.subr.bf16.mxu0 0
    %2870 = vmatpush1.bf16.msra.mxu0 %v2836
    %2871 = vmatprep.subr.bf16.mxu0 0
    %2872 = vmatpush1.bf16.msra.mxu0 %v2837
    %2873 = vmatprep.subr.bf16.mxu0 0
    %2874 = vmatpush1.bf16.msra.mxu0 %v2838
    %2875 = vmatprep.subr.bf16.mxu0 0
    %2876 = vmatpush1.bf16.msra.mxu0 %v2839
    %2877 = vmatprep.subr.bf16.mxu0 0
    %2878 = vmatpush1.bf16.msra.mxu0 %v2840
    %2879 = vmatprep.subr.bf16.mxu0 0
    %2880 = vmatpush1.bf16.msra.mxu0 %v2841
    %2881 = vmatprep.subr.bf16.mxu0 0
    %2882 = vmatpush1.bf16.msra.mxu0 %v2842
    %2883 = vmatprep.subr.bf16.mxu0 0
    %2884 = vmatpush1.bf16.msra.mxu0 %v2843
    %2885 = vmatprep.subr.bf16.mxu0 0
    %2886 = vmatpush1.bf16.msra.mxu0 %v2844
    %2887 = vmatprep.subr.bf16.mxu0 0
    %2888 = vmatpush1.bf16.msra.mxu0 %v2845
    %2889 = vmatprep.subr.bf16.mxu0 0
    %2890 = vmatpush1.bf16.msra.mxu0 %v2846
    %2891 = vmatprep.subr.bf16.mxu0 0
    %2892 = vmatpush1.bf16.msra.mxu0 %v2847
    %2893 = vmatprep.subr.bf16.mxu0 0
    %2894 = vmatpush1.bf16.msra.mxu0 %v2848
    %2895 = vmatprep.subr.bf16.mxu0 0
    %2896 = vmatpush1.bf16.msra.mxu0 %v2849
    %2897 = vmatprep.subr.bf16.mxu0 0
    %2898 = vmatpush1.bf16.msra.mxu0 %v2850
    %2899 = vmatprep.mubr.bf16.mxu0 %v2769
    %2900 = vmatmul.mubr.bf16.gmra.mrb[0].mxu0 %v2130
    %v2901 = vpop.f32.mrb[0].mxu0
    %v2902 = vadd.f32 %v2770, %v2901
    %v2903 = vpop.f32.mrb[0].mxu0
    %v2904 = vpop.f32.mrb[0].mxu0
    %v2905 = vpop.f32.mrb[0].mxu0
    %2906 = vdwg.mxu0
    %v2907 = vmax.f32 %v2902, 0.0
    %s2908 = scalar_lea.vmem %s5, 4
    %v2909 = vld [vmem:[%s2908] sm:$0xf]
    %v2911 = vpack.i.b16 %v2909, %v2909
    %v2913 = vlaneseq
    %v2914 = vshrl.u32 %v2913, 7
    %v2915 = vsub.s32 0, %v2914
    %v2916 = vrot.slane %v2911, %v2915
    %2918 = vbcast.lane.c.b16.xlu0 %v2916, 256
    %v2919 = vpop.permute.xlu0 %2918
    %v2920 = vshrl.u32 %v2909, 16
    %v2921 = vpack.i.b16 %v2920, %v2920
    %v2923 = vlaneseq
    %v2924 = vshrl.u32 %v2923, 7
    %v2925 = vsub.s32 0, %v2924
    %v2926 = vrot.slane %v2921, %v2925
    %2928 = vbcast.lane.c.b16.xlu0 %v2926, 256
    %v2929 = vpop.permute.xlu0 %2928
    %v2930 = vlaneseq
    %v2931 = vshrl.u32 %v2930, 7
    %v2932 = vsub.s32 1, %v2931
    %v2933 = vrot.slane %v2911, %v2932
    %2935 = vbcast.lane.c.b16.xlu0 %v2933, 256
    %v2936 = vpop.permute.xlu0 %2935
    %v2937 = vlaneseq
    %v2938 = vshrl.u32 %v2937, 7
    %v2939 = vsub.s32 1, %v2938
    %v2940 = vrot.slane %v2921, %v2939
    %2942 = vbcast.lane.c.b16.xlu0 %v2940, 256
    %v2943 = vpop.permute.xlu0 %2942
    %v2944 = vlaneseq
    %v2945 = vshrl.u32 %v2944, 7
    %v2946 = vsub.s32 2, %v2945
    %v2947 = vrot.slane %v2911, %v2946
    %2949 = vbcast.lane.c.b16.xlu0 %v2947, 256
    %v2950 = vpop.permute.xlu0 %2949
    %v2951 = vlaneseq
    %v2952 = vshrl.u32 %v2951, 7
    %v2953 = vsub.s32 2, %v2952
    %v2954 = vrot.slane %v2921, %v2953
    %2956 = vbcast.lane.c.b16.xlu0 %v2954, 256
    %v2957 = vpop.permute.xlu0 %2956
    %v2958 = vlaneseq
    %v2959 = vshrl.u32 %v2958, 7
    %v2960 = vsub.s32 3, %v2959
    %v2961 = vrot.slane %v2911, %v2960
    %2963 = vbcast.lane.c.b16.xlu0 %v2961, 256
    %v2964 = vpop.permute.xlu0 %2963
    %v2965 = vlaneseq
    %v2966 = vshrl.u32 %v2965, 7
    %v2967 = vsub.s32 3, %v2966
    %v2968 = vrot.slane %v2921, %v2967
    %2970 = vbcast.lane.c.b16.xlu0 %v2968, 256
    %v2971 = vpop.permute.xlu0 %2970
    %vm2972 = vcmp.gt.bf16.partialorder %v2919, 0
    %vm2973 = vcmp.gt.bf16.partialorder %v2929, 0
    %vm2974 = vcmp.gt.bf16.partialorder %v2936, 0
    %vm2975 = vcmp.gt.bf16.partialorder %v2943, 0
    %vm2976 = vcmp.gt.bf16.partialorder %v2950, 0
    %vm2977 = vcmp.gt.bf16.partialorder %v2957, 0
    %vm2978 = vcmp.gt.bf16.partialorder %v2964, 0
    %vm2979 = vcmp.gt.bf16.partialorder %v2971, 0
    %v2980 = vsel %vm2972, 65537, 0
    %v2981 = vsel %vm2973, 65537, 0
    %v2982 = vsel %vm2974, 65537, 0
    %v2983 = vsel %vm2975, 65537, 0
    %v2984 = vsel %vm2976, 65537, 0
    %v2985 = vsel %vm2977, 65537, 0
    %v2986 = vsel %vm2978, 65537, 0
    %v2987 = vsel %vm2979, 65537, 0
    %v2988 = vunpack.c.l.b16 %v2980
    %v2989 = vunpack.c.l.b16 %v2981
    %v2990 = vunpack.c.l.b16 %v2982
    %v2991 = vunpack.c.l.b16 %v2983
    %v2992 = vunpack.c.l.b16 %v2984
    %v2993 = vunpack.c.l.b16 %v2985
    %v2994 = vunpack.c.l.b16 %v2986
    %v2995 = vunpack.c.l.b16 %v2987
    %vm2996 = vcmp.ne.s32.totalorder %v2988, 0
    %vm2997 = vcmp.ne.s32.totalorder %v2989, 0
    %vm2998 = vcmp.ne.s32.totalorder %v2990, 0
    %vm2999 = vcmp.ne.s32.totalorder %v2991, 0
    %vm3000 = vcmp.ne.s32.totalorder %v2992, 0
    %vm3001 = vcmp.ne.s32.totalorder %v2993, 0
    %vm3002 = vcmp.ne.s32.totalorder %v2994, 0
    %vm3003 = vcmp.ne.s32.totalorder %v2995, 0
    %v3004 = vsel %vm2996, 1, 0
    %v3005 = vsel %vm2997, 1, 0
    %v3006 = vsel %vm2998, 1, 0
    %v3007 = vsel %vm2999, 1, 0
    %v3008 = vsel %vm3000, 1, 0
    %v3009 = vsel %vm3001, 1, 0
    %v3010 = vsel %vm3002, 1, 0
    %v3011 = vsel %vm3003, 1, 0
    %3012 = vset.pattern.permute.xlu0 0
    %3013 = vperm.xlu0 %3012, %v3004
    %v3014 = vpop.permute.xlu0 %3013
    %3015 = vset.pattern.permute.xlu0 0
    %3016 = vperm.xlu0 %3015, %v3005
    %v3017 = vpop.permute.xlu0 %3016
    %3018 = vset.pattern.permute.xlu0 0
    %3019 = vperm.xlu0 %3018, %v3006
    %v3020 = vpop.permute.xlu0 %3019
    %3021 = vset.pattern.permute.xlu0 0
    %3022 = vperm.xlu0 %3021, %v3007
    %v3023 = vpop.permute.xlu0 %3022
    %3024 = vset.pattern.permute.xlu0 0
    %3025 = vperm.xlu0 %3024, %v3008
    %v3026 = vpop.permute.xlu0 %3025
    %3027 = vset.pattern.permute.xlu0 0
    %3028 = vperm.xlu0 %3027, %v3009
    %v3029 = vpop.permute.xlu0 %3028
    %3030 = vset.pattern.permute.xlu0 0
    %3031 = vperm.xlu0 %3030, %v3010
    %v3032 = vpop.permute.xlu0 %3031
    %3033 = vset.pattern.permute.xlu0 0
    %3034 = vperm.xlu0 %3033, %v3011
    %v3035 = vpop.permute.xlu0 %3034
    %vm3036 = vcmp.eq.s32.totalorder %v3014, 1
    %vm3037 = vcmp.eq.s32.totalorder %v3017, 1
    %vm3038 = vcmp.eq.s32.totalorder %v3020, 1
    %vm3039 = vcmp.eq.s32.totalorder %v3023, 1
    %vm3040 = vcmp.eq.s32.totalorder %v3026, 1
    %vm3041 = vcmp.eq.s32.totalorder %v3029, 1
    %vm3042 = vcmp.eq.s32.totalorder %v3032, 1
    %vm3043 = vcmp.eq.s32.totalorder %v3035, 1
    %v3044 = vsel %vm3036, %v2095, -inf
    %v3045 = vsel %vm3037, %v2095, -inf
    %v3046 = vsel %vm3038, %v2095, -inf
    %v3047 = vsel %vm3039, %v2095, -inf
    %v3048 = vsel %vm3040, %v2095, -inf
    %v3049 = vsel %vm3041, %v2095, -inf
    %v3050 = vsel %vm3042, %v2095, -inf
    %v3051 = vsel %vm3043, %v2095, -inf
    %v3052 = vrot.slane %v3044, 4
    %v3053 = vmax.f32 %v3044, %v3052
    %v3054 = vrot.slane %v3053, 2
    %v3055 = vmax.f32 %v3053, %v3054
    %v3056 = vrot.slane %v3055, 1
    %v3057 = vmax.f32 %v3055, %v3056
    %v3058 = vrot.slane %v3045, 4
    %v3059 = vmax.f32 %v3045, %v3058
    %v3060 = vrot.slane %v3059, 2
    %v3061 = vmax.f32 %v3059, %v3060
    %v3062 = vrot.slane %v3061, 1
    %v3063 = vmax.f32 %v3061, %v3062
    %v3064 = vrot.slane %v3046, 4
    %v3065 = vmax.f32 %v3046, %v3064
    %v3066 = vrot.slane %v3065, 2
    %v3067 = vmax.f32 %v3065, %v3066
    %v3068 = vrot.slane %v3067, 1
    %v3069 = vmax.f32 %v3067, %v3068
    %v3070 = vrot.slane %v3047, 4
    %v3071 = vmax.f32 %v3047, %v3070
    %v3072 = vrot.slane %v3071, 2
    %v3073 = vmax.f32 %v3071, %v3072
    %v3074 = vrot.slane %v3073, 1
    %v3075 = vmax.f32 %v3073, %v3074
    %v3076 = vrot.slane %v3048, 4
    %v3077 = vmax.f32 %v3048, %v3076
    %v3078 = vrot.slane %v3077, 2
    %v3079 = vmax.f32 %v3077, %v3078
    %v3080 = vrot.slane %v3079, 1
    %v3081 = vmax.f32 %v3079, %v3080
    %v3082 = vrot.slane %v3049, 4
    %v3083 = vmax.f32 %v3049, %v3082
    %v3084 = vrot.slane %v3083, 2
    %v3085 = vmax.f32 %v3083, %v3084
    %v3086 = vrot.slane %v3085, 1
    %v3087 = vmax.f32 %v3085, %v3086
    %v3088 = vrot.slane %v3050, 4
    %v3089 = vmax.f32 %v3050, %v3088
    %v3090 = vrot.slane %v3089, 2
    %v3091 = vmax.f32 %v3089, %v3090
    %v3092 = vrot.slane %v3091, 1
    %v3093 = vmax.f32 %v3091, %v3092
    %v3094 = vrot.slane %v3051, 4
    %v3095 = vmax.f32 %v3051, %v3094
    %v3096 = vrot.slane %v3095, 2
    %v3097 = vmax.f32 %v3095, %v3096
    %v3098 = vrot.slane %v3097, 1
    %v3099 = vmax.f32 %v3097, %v3098
    %v3100 = vmax.f32 %v3057, 0.0
    %v3101 = vmax.f32 %v3063, 0.0
    %v3102 = vmax.f32 %v3069, 0.0
    %v3103 = vmax.f32 %v3075, 0.0
    %v3104 = vmax.f32 %v3081, 0.0
    %v3105 = vmax.f32 %v3087, 0.0
    %v3106 = vmax.f32 %v3093, 0.0
    %v3107 = vmax.f32 %v3099, 0.0
    %v3116 = vsel %vm2722, %v3101, %v3100
    %v3117 = vsel %vm2724, %v3102, %v3116
    %v3118 = vsel %vm2726, %v3103, %v3117
    %v3119 = vsel %vm2728, %v3104, %v3118
    %v3120 = vsel %vm2730, %v3105, %v3119
    %v3121 = vsel %vm2732, %v3106, %v3120
    %v3122 = vsel %vm2734, %v3107, %v3121
    %s3124 = scalar_lea.vmem [#allocation13], 128
    %v3125 = vld [vmem:[%s3124] sm:$0xf]
    %v3126 = vld [vmem:[%s3124 + $0x4] sm:$0xf]
    %v3127 = vld [vmem:[%s3124 + $0x8] sm:$0xf]
    %v3128 = vld [vmem:[%s3124 + $0xc] sm:$0xf]
    %v3129 = vld [vmem:[%s3124 + $0x10] sm:$0xf]
    %v3130 = vld [vmem:[%s3124 + $0x14] sm:$0xf]
    %v3131 = vld [vmem:[%s3124 + $0x18] sm:$0xf]
    %v3132 = vld [vmem:[%s3124 + $0x1c] sm:$0xf]
    %v3133 = vld [vmem:[%s3124 + $0x20] sm:$0xf]
    %v3134 = vld [vmem:[%s3124 + $0x24] sm:$0xf]
    %v3135 = vld [vmem:[%s3124 + $0x28] sm:$0xf]
    %v3136 = vld [vmem:[%s3124 + $0x2c] sm:$0xf]
    %v3137 = vld [vmem:[%s3124 + $0x30] sm:$0xf]
    %v3138 = vld [vmem:[%s3124 + $0x34] sm:$0xf]
    %v3139 = vld [vmem:[%s3124 + $0x38] sm:$0xf]
    %v3140 = vld [vmem:[%s3124 + $0x3c] sm:$0xf]
    %v3141 = vld [vmem:[%s3124 + $0x40] sm:$0xf]
    %v3142 = vld [vmem:[%s3124 + $0x44] sm:$0xf]
    %v3143 = vld [vmem:[%s3124 + $0x48] sm:$0xf]
    %v3144 = vld [vmem:[%s3124 + $0x4c] sm:$0xf]
    %v3145 = vld [vmem:[%s3124 + $0x50] sm:$0xf]
    %v3146 = vld [vmem:[%s3124 + $0x54] sm:$0xf]
    %v3147 = vld [vmem:[%s3124 + $0x58] sm:$0xf]
    %v3148 = vld [vmem:[%s3124 + $0x5c] sm:$0xf]
    %v3149 = vld [vmem:[%s3124 + $0x60] sm:$0xf]
    %v3150 = vld [vmem:[%s3124 + $0x64] sm:$0xf]
    %v3151 = vld [vmem:[%s3124 + $0x68] sm:$0xf]
    %v3152 = vld [vmem:[%s3124 + $0x6c] sm:$0xf]
    %v3153 = vld [vmem:[%s3124 + $0x70] sm:$0xf]
    %v3154 = vld [vmem:[%s3124 + $0x74] sm:$0xf]
    %v3155 = vld [vmem:[%s3124 + $0x78] sm:$0xf]
    %v3156 = vld [vmem:[%s3124 + $0x7c] sm:$0xf]
    %v3157 = vpack.c.bf16 %v3122, %v3122
    %v3158 = vld [vmem:[#allocation18 + $0x3c] ss:$0 sm:$0xff]
    %v3191 = vunpack.c.l.b16 %v3125
    %v3192 = vunpack.c.l.b16 %v3126
    %v3193 = vunpack.c.l.b16 %v3127
    %v3194 = vunpack.c.l.b16 %v3128
    %v3195 = vunpack.c.l.b16 %v3129
    %v3196 = vunpack.c.l.b16 %v3130
    %v3197 = vunpack.c.l.b16 %v3131
    %v3198 = vunpack.c.l.b16 %v3132
    %v3199 = vunpack.c.l.b16 %v3133
    %v3200 = vunpack.c.l.b16 %v3134
    %v3201 = vunpack.c.l.b16 %v3135
    %v3202 = vunpack.c.l.b16 %v3136
    %v3203 = vunpack.c.l.b16 %v3137
    %v3204 = vunpack.c.l.b16 %v3138
    %v3205 = vunpack.c.l.b16 %v3139
    %v3206 = vunpack.c.l.b16 %v3140
    %v3207 = vunpack.c.l.b16 %v3141
    %v3208 = vunpack.c.l.b16 %v3142
    %v3209 = vunpack.c.l.b16 %v3143
    %v3210 = vunpack.c.l.b16 %v3144
    %v3211 = vunpack.c.l.b16 %v3145
    %v3212 = vunpack.c.l.b16 %v3146
    %v3213 = vunpack.c.l.b16 %v3147
    %v3214 = vunpack.c.l.b16 %v3148
    %v3215 = vunpack.c.l.b16 %v3149
    %v3216 = vunpack.c.l.b16 %v3150
    %v3217 = vunpack.c.l.b16 %v3151
    %v3218 = vunpack.c.l.b16 %v3152
    %v3219 = vunpack.c.l.b16 %v3153
    %v3220 = vunpack.c.l.b16 %v3154
    %v3221 = vunpack.c.l.b16 %v3155
    %v3222 = vunpack.c.l.b16 %v3156
    %v3223 = vpack.c.b16 %v3192, %v3191
    %v3224 = vpack.c.b16 %v3194, %v3193
    %v3225 = vpack.c.b16 %v3196, %v3195
    %v3226 = vpack.c.b16 %v3198, %v3197
    %v3227 = vpack.c.b16 %v3200, %v3199
    %v3228 = vpack.c.b16 %v3202, %v3201
    %v3229 = vpack.c.b16 %v3204, %v3203
    %v3230 = vpack.c.b16 %v3206, %v3205
    %v3231 = vpack.c.b16 %v3208, %v3207
    %v3232 = vpack.c.b16 %v3210, %v3209
    %v3233 = vpack.c.b16 %v3212, %v3211
    %v3234 = vpack.c.b16 %v3214, %v3213
    %v3235 = vpack.c.b16 %v3216, %v3215
    %v3236 = vpack.c.b16 %v3218, %v3217
    %v3237 = vpack.c.b16 %v3220, %v3219
    %v3238 = vpack.c.b16 %v3222, %v3221
    %3255 = vmatprep.subr.bf16.mxu0 0
    %3256 = vmatpush1.bf16.msra.mxu0 %v3223
    %3257 = vmatprep.subr.bf16.mxu0 0
    %3258 = vmatpush1.bf16.msra.mxu0 %v3224
    %3259 = vmatprep.subr.bf16.mxu0 0
    %3260 = vmatpush1.bf16.msra.mxu0 %v3225
    %3261 = vmatprep.subr.bf16.mxu0 0
    %3262 = vmatpush1.bf16.msra.mxu0 %v3226
    %3263 = vmatprep.subr.bf16.mxu0 0
    %3264 = vmatpush1.bf16.msra.mxu0 %v3227
    %3265 = vmatprep.subr.bf16.mxu0 0
    %3266 = vmatpush1.bf16.msra.mxu0 %v3228
    %3267 = vmatprep.subr.bf16.mxu0 0
    %3268 = vmatpush1.bf16.msra.mxu0 %v3229
    %3269 = vmatprep.subr.bf16.mxu0 0
    %3270 = vmatpush1.bf16.msra.mxu0 %v3230
    %3271 = vmatprep.subr.bf16.mxu0 0
    %3272 = vmatpush1.bf16.msra.mxu0 %v3231
    %3273 = vmatprep.subr.bf16.mxu0 0
    %3274 = vmatpush1.bf16.msra.mxu0 %v3232
    %3275 = vmatprep.subr.bf16.mxu0 0
    %3276 = vmatpush1.bf16.msra.mxu0 %v3233
    %3277 = vmatprep.subr.bf16.mxu0 0
    %3278 = vmatpush1.bf16.msra.mxu0 %v3234
    %3279 = vmatprep.subr.bf16.mxu0 0
    %3280 = vmatpush1.bf16.msra.mxu0 %v3235
    %3281 = vmatprep.subr.bf16.mxu0 0
    %3282 = vmatpush1.bf16.msra.mxu0 %v3236
    %3283 = vmatprep.subr.bf16.mxu0 0
    %3284 = vmatpush1.bf16.msra.mxu0 %v3237
    %3285 = vmatprep.subr.bf16.mxu0 0
    %3286 = vmatpush1.bf16.msra.mxu0 %v3238
    %3287 = vmatprep.mubr.bf16.mxu0 %v3157
    %3288 = vmatmul.mubr.bf16.gmra.mrb[0].mxu0 %v2130
    %v3289 = vpop.f32.mrb[0].mxu0
    %v3290 = vadd.f32 %v3158, %v3289
    %v3291 = vpop.f32.mrb[0].mxu0
    %v3292 = vpop.f32.mrb[0].mxu0
    %v3293 = vpop.f32.mrb[0].mxu0
    %3294 = vdwg.mxu0
    %v3295 = vmax.f32 %v3290, 0.0
    %v3296 = vadd.f32 %v2907, %v3295
    %s3297 = scalar_lea.vmem %s5, 24
    %v3298 = vld [vmem:[%s3297] sm:$0xf]
    %v3300 = vpack.i.b16 %v3298, %v3298
    %v3302 = vlaneseq
    %v3303 = vshrl.u32 %v3302, 7
    %v3304 = vsub.s32 0, %v3303
    %v3305 = vrot.slane %v3300, %v3304
    %3307 = vbcast.lane.c.b16.xlu0 %v3305, 256
    %v3308 = vpop.permute.xlu0 %3307
    %v3309 = vshrl.u32 %v3298, 16
    %v3310 = vpack.i.b16 %v3309, %v3309
    %v3312 = vlaneseq
    %v3313 = vshrl.u32 %v3312, 7
    %v3314 = vsub.s32 0, %v3313
    %v3315 = vrot.slane %v3310, %v3314
    %3317 = vbcast.lane.c.b16.xlu0 %v3315, 256
    %v3318 = vpop.permute.xlu0 %3317
    %v3319 = vlaneseq
    %v3320 = vshrl.u32 %v3319, 7
    %v3321 = vsub.s32 1, %v3320
    %v3322 = vrot.slane %v3300, %v3321
    %3324 = vbcast.lane.c.b16.xlu0 %v3322, 256
    %v3325 = vpop.permute.xlu0 %3324
    %v3326 = vlaneseq
    %v3327 = vshrl.u32 %v3326, 7
    %v3328 = vsub.s32 1, %v3327
    %v3329 = vrot.slane %v3310, %v3328
    %3331 = vbcast.lane.c.b16.xlu0 %v3329, 256
    %v3332 = vpop.permute.xlu0 %3331
    %v3333 = vlaneseq
    %v3334 = vshrl.u32 %v3333, 7
    %v3335 = vsub.s32 2, %v3334
    %v3336 = vrot.slane %v3300, %v3335
    %3338 = vbcast.lane.c.b16.xlu0 %v3336, 256
    %v3339 = vpop.permute.xlu0 %3338
    %v3340 = vlaneseq
    %v3341 = vshrl.u32 %v3340, 7
    %v3342 = vsub.s32 2, %v3341
    %v3343 = vrot.slane %v3310, %v3342
    %3345 = vbcast.lane.c.b16.xlu0 %v3343, 256
    %v3346 = vpop.permute.xlu0 %3345
    %v3347 = vlaneseq
    %v3348 = vshrl.u32 %v3347, 7
    %v3349 = vsub.s32 3, %v3348
    %v3350 = vrot.slane %v3300, %v3349
    %3352 = vbcast.lane.c.b16.xlu0 %v3350, 256
    %v3353 = vpop.permute.xlu0 %3352
    %v3354 = vlaneseq
    %v3355 = vshrl.u32 %v3354, 7
    %v3356 = vsub.s32 3, %v3355
    %v3357 = vrot.slane %v3310, %v3356
    %3359 = vbcast.lane.c.b16.xlu0 %v3357, 256
    %v3360 = vpop.permute.xlu0 %3359
    %vm3361 = vcmp.gt.bf16.partialorder %v3308, 0
    %vm3362 = vcmp.gt.bf16.partialorder %v3318, 0
    %vm3363 = vcmp.gt.bf16.partialorder %v3325, 0
    %vm3364 = vcmp.gt.bf16.partialorder %v3332, 0
    %vm3365 = vcmp.gt.bf16.partialorder %v3339, 0
    %vm3366 = vcmp.gt.bf16.partialorder %v3346, 0
    %vm3367 = vcmp.gt.bf16.partialorder %v3353, 0
    %vm3368 = vcmp.gt.bf16.partialorder %v3360, 0
    %v3369 = vsel %vm3361, 65537, 0
    %v3370 = vsel %vm3362, 65537, 0
    %v3371 = vsel %vm3363, 65537, 0
    %v3372 = vsel %vm3364, 65537, 0
    %v3373 = vsel %vm3365, 65537, 0
    %v3374 = vsel %vm3366, 65537, 0
    %v3375 = vsel %vm3367, 65537, 0
    %v3376 = vsel %vm3368, 65537, 0
    %v3377 = vunpack.c.l.b16 %v3369
    %v3378 = vunpack.c.l.b16 %v3370
    %v3379 = vunpack.c.l.b16 %v3371
    %v3380 = vunpack.c.l.b16 %v3372
    %v3381 = vunpack.c.l.b16 %v3373
    %v3382 = vunpack.c.l.b16 %v3374
    %v3383 = vunpack.c.l.b16 %v3375
    %v3384 = vunpack.c.l.b16 %v3376
    %vm3385 = vcmp.ne.s32.totalorder %v3377, 0
    %vm3386 = vcmp.ne.s32.totalorder %v3378, 0
    %vm3387 = vcmp.ne.s32.totalorder %v3379, 0
    %vm3388 = vcmp.ne.s32.totalorder %v3380, 0
    %vm3389 = vcmp.ne.s32.totalorder %v3381, 0
    %vm3390 = vcmp.ne.s32.totalorder %v3382, 0
    %vm3391 = vcmp.ne.s32.totalorder %v3383, 0
    %vm3392 = vcmp.ne.s32.totalorder %v3384, 0
    %v3393 = vsel %vm3385, 1, 0
    %v3394 = vsel %vm3386, 1, 0
    %v3395 = vsel %vm3387, 1, 0
    %v3396 = vsel %vm3388, 1, 0
    %v3397 = vsel %vm3389, 1, 0
    %v3398 = vsel %vm3390, 1, 0
    %v3399 = vsel %vm3391, 1, 0
    %v3400 = vsel %vm3392, 1, 0
    %3401 = vset.pattern.permute.xlu0 0
    %3402 = vperm.xlu0 %3401, %v3393
    %v3403 = vpop.permute.xlu0 %3402
    %3404 = vset.pattern.permute.xlu0 0
    %3405 = vperm.xlu0 %3404, %v3394
    %v3406 = vpop.permute.xlu0 %3405
    %3407 = vset.pattern.permute.xlu0 0
    %3408 = vperm.xlu0 %3407, %v3395
    %v3409 = vpop.permute.xlu0 %3408
    %3410 = vset.pattern.permute.xlu0 0
    %3411 = vperm.xlu0 %3410, %v3396
    %v3412 = vpop.permute.xlu0 %3411
    %3413 = vset.pattern.permute.xlu0 0
    %3414 = vperm.xlu0 %3413, %v3397
    %v3415 = vpop.permute.xlu0 %3414
    %3416 = vset.pattern.permute.xlu0 0
    %3417 = vperm.xlu0 %3416, %v3398
    %v3418 = vpop.permute.xlu0 %3417
    %3419 = vset.pattern.permute.xlu0 0
    %3420 = vperm.xlu0 %3419, %v3399
    %v3421 = vpop.permute.xlu0 %3420
    %3422 = vset.pattern.permute.xlu0 0
    %3423 = vperm.xlu0 %3422, %v3400
    %v3424 = vpop.permute.xlu0 %3423
    %vm3425 = vcmp.eq.s32.totalorder %v3403, 1
    %vm3426 = vcmp.eq.s32.totalorder %v3406, 1
    %vm3427 = vcmp.eq.s32.totalorder %v3409, 1
    %vm3428 = vcmp.eq.s32.totalorder %v3412, 1
    %vm3429 = vcmp.eq.s32.totalorder %v3415, 1
    %vm3430 = vcmp.eq.s32.totalorder %v3418, 1
    %vm3431 = vcmp.eq.s32.totalorder %v3421, 1
    %vm3432 = vcmp.eq.s32.totalorder %v3424, 1
    %v3433 = vsel %vm3425, %v2360, -inf
    %v3434 = vsel %vm3426, %v2360, -inf
    %v3435 = vsel %vm3427, %v2360, -inf
    %v3436 = vsel %vm3428, %v2360, -inf
    %v3437 = vsel %vm3429, %v2360, -inf
    %v3438 = vsel %vm3430, %v2360, -inf
    %v3439 = vsel %vm3431, %v2360, -inf
    %v3440 = vsel %vm3432, %v2360, -inf
    %v3441 = vrot.slane %v3433, 4
    %v3442 = vmax.f32 %v3433, %v3441
    %v3443 = vrot.slane %v3442, 2
    %v3444 = vmax.f32 %v3442, %v3443
    %v3445 = vrot.slane %v3444, 1
    %v3446 = vmax.f32 %v3444, %v3445
    %v3447 = vrot.slane %v3434, 4
    %v3448 = vmax.f32 %v3434, %v3447
    %v3449 = vrot.slane %v3448, 2
    %v3450 = vmax.f32 %v3448, %v3449
    %v3451 = vrot.slane %v3450, 1
    %v3452 = vmax.f32 %v3450, %v3451
    %v3453 = vrot.slane %v3435, 4
    %v3454 = vmax.f32 %v3435, %v3453
    %v3455 = vrot.slane %v3454, 2
    %v3456 = vmax.f32 %v3454, %v3455
    %v3457 = vrot.slane %v3456, 1
    %v3458 = vmax.f32 %v3456, %v3457
    %v3459 = vrot.slane %v3436, 4
    %v3460 = vmax.f32 %v3436, %v3459
    %v3461 = vrot.slane %v3460, 2
    %v3462 = vmax.f32 %v3460, %v3461
    %v3463 = vrot.slane %v3462, 1
    %v3464 = vmax.f32 %v3462, %v3463
    %v3465 = vrot.slane %v3437, 4
    %v3466 = vmax.f32 %v3437, %v3465
    %v3467 = vrot.slane %v3466, 2
    %v3468 = vmax.f32 %v3466, %v3467
    %v3469 = vrot.slane %v3468, 1
    %v3470 = vmax.f32 %v3468, %v3469
    %v3471 = vrot.slane %v3438, 4
    %v3472 = vmax.f32 %v3438, %v3471
    %v3473 = vrot.slane %v3472, 2
    %v3474 = vmax.f32 %v3472, %v3473
    %v3475 = vrot.slane %v3474, 1
    %v3476 = vmax.f32 %v3474, %v3475
    %v3477 = vrot.slane %v3439, 4
    %v3478 = vmax.f32 %v3439, %v3477
    %v3479 = vrot.slane %v3478, 2
    %v3480 = vmax.f32 %v3478, %v3479
    %v3481 = vrot.slane %v3480, 1
    %v3482 = vmax.f32 %v3480, %v3481
    %v3483 = vrot.slane %v3440, 4
    %v3484 = vmax.f32 %v3440, %v3483
    %v3485 = vrot.slane %v3484, 2
    %v3486 = vmax.f32 %v3484, %v3485
    %v3487 = vrot.slane %v3486, 1
    %v3488 = vmax.f32 %v3486, %v3487
    %v3489 = vmax.f32 %v3446, 0.0
    %v3490 = vmax.f32 %v3452, 0.0
    %v3491 = vmax.f32 %v3458, 0.0
    %v3492 = vmax.f32 %v3464, 0.0
    %v3493 = vmax.f32 %v3470, 0.0
    %v3494 = vmax.f32 %v3476, 0.0
    %v3495 = vmax.f32 %v3482, 0.0
    %v3496 = vmax.f32 %v3488, 0.0
    %v3505 = vsel %vm2722, %v3490, %v3489
    %v3506 = vsel %vm2724, %v3491, %v3505
    %v3507 = vsel %vm2726, %v3492, %v3506
    %v3508 = vsel %vm2728, %v3493, %v3507
    %v3509 = vsel %vm2730, %v3494, %v3508
    %v3510 = vsel %vm2732, %v3495, %v3509
    %v3511 = vsel %vm2734, %v3496, %v3510
    %s3513 = scalar_lea.vmem [#allocation13], 768
    %v3514 = vld [vmem:[%s3513] sm:$0xf]
    %v3515 = vld [vmem:[%s3513 + $0x4] sm:$0xf]
    %v3516 = vld [vmem:[%s3513 + $0x8] sm:$0xf]
    %v3517 = vld [vmem:[%s3513 + $0xc] sm:$0xf]
    %v3518 = vld [vmem:[%s3513 + $0x10] sm:$0xf]
    %v3519 = vld [vmem:[%s3513 + $0x14] sm:$0xf]
    %v3520 = vld [vmem:[%s3513 + $0x18] sm:$0xf]
    %v3521 = vld [vmem:[%s3513 + $0x1c] sm:$0xf]
    %v3522 = vld [vmem:[%s3513 + $0x20] sm:$0xf]
    %v3523 = vld [vmem:[%s3513 + $0x24] sm:$0xf]
    %v3524 = vld [vmem:[%s3513 + $0x28] sm:$0xf]
    %v3525 = vld [vmem:[%s3513 + $0x2c] sm:$0xf]
    %v3526 = vld [vmem:[%s3513 + $0x30] sm:$0xf]
    %v3527 = vld [vmem:[%s3513 + $0x34] sm:$0xf]
    %v3528 = vld [vmem:[%s3513 + $0x38] sm:$0xf]
    %v3529 = vld [vmem:[%s3513 + $0x3c] sm:$0xf]
    %v3530 = vld [vmem:[%s3513 + $0x40] sm:$0xf]
    %v3531 = vld [vmem:[%s3513 + $0x44] sm:$0xf]
    %v3532 = vld [vmem:[%s3513 + $0x48] sm:$0xf]
    %v3533 = vld [vmem:[%s3513 + $0x4c] sm:$0xf]
    %v3534 = vld [vmem:[%s3513 + $0x50] sm:$0xf]
    %v3535 = vld [vmem:[%s3513 + $0x54] sm:$0xf]
    %v3536 = vld [vmem:[%s3513 + $0x58] sm:$0xf]
    %v3537 = vld [vmem:[%s3513 + $0x5c] sm:$0xf]
    %v3538 = vld [vmem:[%s3513 + $0x60] sm:$0xf]
    %v3539 = vld [vmem:[%s3513 + $0x64] sm:$0xf]
    %v3540 = vld [vmem:[%s3513 + $0x68] sm:$0xf]
    %v3541 = vld [vmem:[%s3513 + $0x6c] sm:$0xf]
    %v3542 = vld [vmem:[%s3513 + $0x70] sm:$0xf]
    %v3543 = vld [vmem:[%s3513 + $0x74] sm:$0xf]
    %v3544 = vld [vmem:[%s3513 + $0x78] sm:$0xf]
    %v3545 = vld [vmem:[%s3513 + $0x7c] sm:$0xf]
    %v3546 = vpack.c.bf16 %v3511, %v3511
    %v3547 = vld [vmem:[#allocation18 + $0x71] ss:$0 sm:$0xff]
    %v3580 = vunpack.c.l.b16 %v3514
    %v3581 = vunpack.c.l.b16 %v3515
    %v3582 = vunpack.c.l.b16 %v3516
    %v3583 = vunpack.c.l.b16 %v3517
    %v3584 = vunpack.c.l.b16 %v3518
    %v3585 = vunpack.c.l.b16 %v3519
    %v3586 = vunpack.c.l.b16 %v3520
    %v3587 = vunpack.c.l.b16 %v3521
    %v3588 = vunpack.c.l.b16 %v3522
    %v3589 = vunpack.c.l.b16 %v3523
    %v3590 = vunpack.c.l.b16 %v3524
    %v3591 = vunpack.c.l.b16 %v3525
    %v3592 = vunpack.c.l.b16 %v3526
    %v3593 = vunpack.c.l.b16 %v3527
    %v3594 = vunpack.c.l.b16 %v3528
    %v3595 = vunpack.c.l.b16 %v3529
    %v3596 = vunpack.c.l.b16 %v3530
    %v3597 = vunpack.c.l.b16 %v3531
    %v3598 = vunpack.c.l.b16 %v3532
    %v3599 = vunpack.c.l.b16 %v3533
    %v3600 = vunpack.c.l.b16 %v3534
    %v3601 = vunpack.c.l.b16 %v3535
    %v3602 = vunpack.c.l.b16 %v3536
    %v3603 = vunpack.c.l.b16 %v3537
    %v3604 = vunpack.c.l.b16 %v3538
    %v3605 = vunpack.c.l.b16 %v3539
    %v3606 = vunpack.c.l.b16 %v3540
    %v3607 = vunpack.c.l.b16 %v3541
    %v3608 = vunpack.c.l.b16 %v3542
    %v3609 = vunpack.c.l.b16 %v3543
    %v3610 = vunpack.c.l.b16 %v3544
    %v3611 = vunpack.c.l.b16 %v3545
    %v3612 = vpack.c.b16 %v3581, %v3580
    %v3613 = vpack.c.b16 %v3583, %v3582
    %v3614 = vpack.c.b16 %v3585, %v3584
    %v3615 = vpack.c.b16 %v3587, %v3586
    %v3616 = vpack.c.b16 %v3589, %v3588
    %v3617 = vpack.c.b16 %v3591, %v3590
    %v3618 = vpack.c.b16 %v3593, %v3592
    %v3619 = vpack.c.b16 %v3595, %v3594
    %v3620 = vpack.c.b16 %v3597, %v3596
    %v3621 = vpack.c.b16 %v3599, %v3598
    %v3622 = vpack.c.b16 %v3601, %v3600
    %v3623 = vpack.c.b16 %v3603, %v3602
    %v3624 = vpack.c.b16 %v3605, %v3604
    %v3625 = vpack.c.b16 %v3607, %v3606
    %v3626 = vpack.c.b16 %v3609, %v3608
    %v3627 = vpack.c.b16 %v3611, %v3610
    %3644 = vmatprep.subr.bf16.mxu0 0
    %3645 = vmatpush1.bf16.msra.mxu0 %v3612
    %3646 = vmatprep.subr.bf16.mxu0 0
    %3647 = vmatpush1.bf16.msra.mxu0 %v3613
    %3648 = vmatprep.subr.bf16.mxu0 0
    %3649 = vmatpush1.bf16.msra.mxu0 %v3614
    %3650 = vmatprep.subr.bf16.mxu0 0
    %3651 = vmatpush1.bf16.msra.mxu0 %v3615
    %3652 = vmatprep.subr.bf16.mxu0 0
    %3653 = vmatpush1.bf16.msra.mxu0 %v3616
    %3654 = vmatprep.subr.bf16.mxu0 0
    %3655 = vmatpush1.bf16.msra.mxu0 %v3617
    %3656 = vmatprep.subr.bf16.mxu0 0
    %3657 = vmatpush1.bf16.msra.mxu0 %v3618
    %3658 = vmatprep.subr.bf16.mxu0 0
    %3659 = vmatpush1.bf16.msra.mxu0 %v3619
    %3660 = vmatprep.subr.bf16.mxu0 0
    %3661 = vmatpush1.bf16.msra.mxu0 %v3620
    %3662 = vmatprep.subr.bf16.mxu0 0
    %3663 = vmatpush1.bf16.msra.mxu0 %v3621
    %3664 = vmatprep.subr.bf16.mxu0 0
    %3665 = vmatpush1.bf16.msra.mxu0 %v3622
    %3666 = vmatprep.subr.bf16.mxu0 0
    %3667 = vmatpush1.bf16.msra.mxu0 %v3623
    %3668 = vmatprep.subr.bf16.mxu0 0
    %3669 = vmatpush1.bf16.msra.mxu0 %v3624
    %3670 = vmatprep.subr.bf16.mxu0 0
    %3671 = vmatpush1.bf16.msra.mxu0 %v3625
    %3672 = vmatprep.subr.bf16.mxu0 0
    %3673 = vmatpush1.bf16.msra.mxu0 %v3626
    %3674 = vmatprep.subr.bf16.mxu0 0
    %3675 = vmatpush1.bf16.msra.mxu0 %v3627
    %3676 = vmatprep.mubr.bf16.mxu0 %v3546
    %3677 = vmatmul.mubr.bf16.gmra.mrb[0].mxu0 %v2130
    %v3678 = vpop.f32.mrb[0].mxu0
    %v3679 = vadd.f32 %v3547, %v3678
    %v3680 = vpop.f32.mrb[0].mxu0
    %v3681 = vpop.f32.mrb[0].mxu0
    %v3682 = vpop.f32.mrb[0].mxu0
    %3683 = vdwg.mxu0
    %v3684 = vmax.f32 %v3679, 0.0
    %v3685 = vadd.f32 %v3296, %v3684
    %s3686 = scalar_lea.vmem %s5, 8
    %v3687 = vld [vmem:[%s3686] sm:$0xf]
    %v3689 = vpack.i.b16 %v3687, %v3687
    %v3691 = vlaneseq
    %v3692 = vshrl.u32 %v3691, 7
    %v3693 = vsub.s32 0, %v3692
    %v3694 = vrot.slane %v3689, %v3693
    %3696 = vbcast.lane.c.b16.xlu0 %v3694, 256
    %v3697 = vpop.permute.xlu0 %3696
    %v3698 = vshrl.u32 %v3687, 16
    %v3699 = vpack.i.b16 %v3698, %v3698
    %v3701 = vlaneseq
    %v3702 = vshrl.u32 %v3701, 7
    %v3703 = vsub.s32 0, %v3702
    %v3704 = vrot.slane %v3699, %v3703
    %3706 = vbcast.lane.c.b16.xlu0 %v3704, 256
    %v3707 = vpop.permute.xlu0 %3706
    %v3708 = vlaneseq
    %v3709 = vshrl.u32 %v3708, 7
    %v3710 = vsub.s32 1, %v3709
    %v3711 = vrot.slane %v3689, %v3710
    %3713 = vbcast.lane.c.b16.xlu0 %v3711, 256
    %v3714 = vpop.permute.xlu0 %3713
    %v3715 = vlaneseq
    %v3716 = vshrl.u32 %v3715, 7
    %v3717 = vsub.s32 1, %v3716
    %v3718 = vrot.slane %v3699, %v3717
    %3720 = vbcast.lane.c.b16.xlu0 %v3718, 256
    %v3721 = vpop.permute.xlu0 %3720
    %v3722 = vlaneseq
    %v3723 = vshrl.u32 %v3722, 7
    %v3724 = vsub.s32 2, %v3723
    %v3725 = vrot.slane %v3689, %v3724
    %3727 = vbcast.lane.c.b16.xlu0 %v3725, 256
    %v3728 = vpop.permute.xlu0 %3727
    %v3729 = vlaneseq
    %v3730 = vshrl.u32 %v3729, 7
    %v3731 = vsub.s32 2, %v3730
    %v3732 = vrot.slane %v3699, %v3731
    %3734 = vbcast.lane.c.b16.xlu0 %v3732, 256
    %v3735 = vpop.permute.xlu0 %3734
    %v3736 = vlaneseq
    %v3737 = vshrl.u32 %v3736, 7
    %v3738 = vsub.s32 3, %v3737
    %v3739 = vrot.slane %v3689, %v3738
    %3741 = vbcast.lane.c.b16.xlu0 %v3739, 256
    %v3742 = vpop.permute.xlu0 %3741
    %v3743 = vlaneseq
    %v3744 = vshrl.u32 %v3743, 7
    %v3745 = vsub.s32 3, %v3744
    %v3746 = vrot.slane %v3699, %v3745
    %3748 = vbcast.lane.c.b16.xlu0 %v3746, 256
    %v3749 = vpop.permute.xlu0 %3748
    %vm3750 = vcmp.gt.bf16.partialorder %v3697, 0
    %vm3751 = vcmp.gt.bf16.partialorder %v3707, 0
    %vm3752 = vcmp.gt.bf16.partialorder %v3714, 0
    %vm3753 = vcmp.gt.bf16.partialorder %v3721, 0
    %vm3754 = vcmp.gt.bf16.partialorder %v3728, 0
    %vm3755 = vcmp.gt.bf16.partialorder %v3735, 0
    %vm3756 = vcmp.gt.bf16.partialorder %v3742, 0
    %vm3757 = vcmp.gt.bf16.partialorder %v3749, 0
    %v3758 = vsel %vm3750, 65537, 0
    %v3759 = vsel %vm3751, 65537, 0
    %v3760 = vsel %vm3752, 65537, 0
    %v3761 = vsel %vm3753, 65537, 0
    %v3762 = vsel %vm3754, 65537, 0
    %v3763 = vsel %vm3755, 65537, 0
    %v3764 = vsel %vm3756, 65537, 0
    %v3765 = vsel %vm3757, 65537, 0
    %v3766 = vunpack.c.l.b16 %v3758
    %v3767 = vunpack.c.l.b16 %v3759
    %v3768 = vunpack.c.l.b16 %v3760
    %v3769 = vunpack.c.l.b16 %v3761
    %v3770 = vunpack.c.l.b16 %v3762
    %v3771 = vunpack.c.l.b16 %v3763
    %v3772 = vunpack.c.l.b16 %v3764
    %v3773 = vunpack.c.l.b16 %v3765
    %vm3774 = vcmp.ne.s32.totalorder %v3766, 0
    %vm3775 = vcmp.ne.s32.totalorder %v3767, 0
    %vm3776 = vcmp.ne.s32.totalorder %v3768, 0
    %vm3777 = vcmp.ne.s32.totalorder %v3769, 0
    %vm3778 = vcmp.ne.s32.totalorder %v3770, 0
    %vm3779 = vcmp.ne.s32.totalorder %v3771, 0
    %vm3780 = vcmp.ne.s32.totalorder %v3772, 0
    %vm3781 = vcmp.ne.s32.totalorder %v3773, 0
    %v3782 = vsel %vm3774, 1, 0
    %v3783 = vsel %vm3775, 1, 0
    %v3784 = vsel %vm3776, 1, 0
    %v3785 = vsel %vm3777, 1, 0
    %v3786 = vsel %vm3778, 1, 0
    %v3787 = vsel %vm3779, 1, 0
    %v3788 = vsel %vm3780, 1, 0
    %v3789 = vsel %vm3781, 1, 0
    %3790 = vset.pattern.permute.xlu0 0
    %3791 = vperm.xlu0 %3790, %v3782
    %v3792 = vpop.permute.xlu0 %3791
    %3793 = vset.pattern.permute.xlu0 0
    %3794 = vperm.xlu0 %3793, %v3783
    %v3795 = vpop.permute.xlu0 %3794
    %3796 = vset.pattern.permute.xlu0 0
    %3797 = vperm.xlu0 %3796, %v3784
    %v3798 = vpop.permute.xlu0 %3797
    %3799 = vset.pattern.permute.xlu0 0
    %3800 = vperm.xlu0 %3799, %v3785
    %v3801 = vpop.permute.xlu0 %3800
    %3802 = vset.pattern.permute.xlu0 0
    %3803 = vperm.xlu0 %3802, %v3786
    %v3804 = vpop.permute.xlu0 %3803
    %3805 = vset.pattern.permute.xlu0 0
    %3806 = vperm.xlu0 %3805, %v3787
    %v3807 = vpop.permute.xlu0 %3806
    %3808 = vset.pattern.permute.xlu0 0
    %3809 = vperm.xlu0 %3808, %v3788
    %v3810 = vpop.permute.xlu0 %3809
    %3811 = vset.pattern.permute.xlu0 0
    %3812 = vperm.xlu0 %3811, %v3789
    %v3813 = vpop.permute.xlu0 %3812
    %vm3814 = vcmp.eq.s32.totalorder %v3792, 1
    %vm3815 = vcmp.eq.s32.totalorder %v3795, 1
    %vm3816 = vcmp.eq.s32.totalorder %v3798, 1
    %vm3817 = vcmp.eq.s32.totalorder %v3801, 1
    %vm3818 = vcmp.eq.s32.totalorder %v3804, 1
    %vm3819 = vcmp.eq.s32.totalorder %v3807, 1
    %vm3820 = vcmp.eq.s32.totalorder %v3810, 1
    %vm3821 = vcmp.eq.s32.totalorder %v3813, 1
    %v3822 = vsel %vm3814, %v2096, -inf
    %v3823 = vsel %vm3815, %v2096, -inf
    %v3824 = vsel %vm3816, %v2096, -inf
    %v3825 = vsel %vm3817, %v2096, -inf
    %v3826 = vsel %vm3818, %v2096, -inf
    %v3827 = vsel %vm3819, %v2096, -inf
    %v3828 = vsel %vm3820, %v2096, -inf
    %v3829 = vsel %vm3821, %v2096, -inf
    %v3830 = vrot.slane %v3822, 4
    %v3831 = vmax.f32 %v3822, %v3830
    %v3832 = vrot.slane %v3831, 2
    %v3833 = vmax.f32 %v3831, %v3832
    %v3834 = vrot.slane %v3833, 1
    %v3835 = vmax.f32 %v3833, %v3834
    %v3836 = vrot.slane %v3823, 4
    %v3837 = vmax.f32 %v3823, %v3836
    %v3838 = vrot.slane %v3837, 2
    %v3839 = vmax.f32 %v3837, %v3838
    %v3840 = vrot.slane %v3839, 1
    %v3841 = vmax.f32 %v3839, %v3840
    %v3842 = vrot.slane %v3824, 4
    %v3843 = vmax.f32 %v3824, %v3842
    %v3844 = vrot.slane %v3843, 2
    %v3845 = vmax.f32 %v3843, %v3844
    %v3846 = vrot.slane %v3845, 1
    %v3847 = vmax.f32 %v3845, %v3846
    %v3848 = vrot.slane %v3825, 4
    %v3849 = vmax.f32 %v3825, %v3848
    %v3850 = vrot.slane %v3849, 2
    %v3851 = vmax.f32 %v3849, %v3850
    %v3852 = vrot.slane %v3851, 1
    %v3853 = vmax.f32 %v3851, %v3852
    %v3854 = vrot.slane %v3826, 4
    %v3855 = vmax.f32 %v3826, %v3854
    %v3856 = vrot.slane %v3855, 2
    %v3857 = vmax.f32 %v3855, %v3856
    %v3858 = vrot.slane %v3857, 1
    %v3859 = vmax.f32 %v3857, %v3858
    %v3860 = vrot.slane %v3827, 4
    %v3861 = vmax.f32 %v3827, %v3860
    %v3862 = vrot.slane %v3861, 2
    %v3863 = vmax.f32 %v3861, %v3862
    %v3864 = vrot.slane %v3863, 1
    %v3865 = vmax.f32 %v3863, %v3864
    %v3866 = vrot.slane %v3828, 4
    %v3867 = vmax.f32 %v3828, %v3866
    %v3868 = vrot.slane %v3867, 2
    %v3869 = vmax.f32 %v3867, %v3868
    %v3870 = vrot.slane %v3869, 1
    %v3871 = vmax.f32 %v3869, %v3870
    %v3872 = vrot.slane %v3829, 4
    %v3873 = vmax.f32 %v3829, %v3872
    %v3874 = vrot.slane %v3873, 2
    %v3875 = vmax.f32 %v3873, %v3874
    %v3876 = vrot.slane %v3875, 1
    %v3877 = vmax.f32 %v3875, %v3876
    %v3878 = vmax.f32 %v3835, 0.0
    %v3879 = vmax.f32 %v3841, 0.0
    %v3880 = vmax.f32 %v3847, 0.0
    %v3881 = vmax.f32 %v3853, 0.0
    %v3882 = vmax.f32 %v3859, 0.0
    %v3883 = vmax.f32 %v3865, 0.0
    %v3884 = vmax.f32 %v3871, 0.0
    %v3885 = vmax.f32 %v3877, 0.0
    %v3894 = vsel %vm2722, %v3879, %v3878
    %v3895 = vsel %vm2724, %v3880, %v3894
    %v3896 = vsel %vm2726, %v3881, %v3895
    %v3897 = vsel %vm2728, %v3882, %v3896
    %v3898 = vsel %vm2730, %v3883, %v3897
    %v3899 = vsel %vm2732, %v3884, %v3898
    %v3900 = vsel %vm2734, %v3885, %v3899
    %s3902 = scalar_lea.vmem [#allocation13], 256
    %v3903 = vld [vmem:[%s3902] sm:$0xf]
    %v3904 = vld [vmem:[%s3902 + $0x4] sm:$0xf]
    %v3905 = vld [vmem:[%s3902 + $0x8] sm:$0xf]
    %v3906 = vld [vmem:[%s3902 + $0xc] sm:$0xf]
    %v3907 = vld [vmem:[%s3902 + $0x10] sm:$0xf]
    %v3908 = vld [vmem:[%s3902 + $0x14] sm:$0xf]
    %v3909 = vld [vmem:[%s3902 + $0x18] sm:$0xf]
    %v3910 = vld [vmem:[%s3902 + $0x1c] sm:$0xf]
    %v3911 = vld [vmem:[%s3902 + $0x20] sm:$0xf]
    %v3912 = vld [vmem:[%s3902 + $0x24] sm:$0xf]
    %v3913 = vld [vmem:[%s3902 + $0x28] sm:$0xf]
    %v3914 = vld [vmem:[%s3902 + $0x2c] sm:$0xf]
    %v3915 = vld [vmem:[%s3902 + $0x30] sm:$0xf]
    %v3916 = vld [vmem:[%s3902 + $0x34] sm:$0xf]
    %v3917 = vld [vmem:[%s3902 + $0x38] sm:$0xf]
    %v3918 = vld [vmem:[%s3902 + $0x3c] sm:$0xf]
    %v3919 = vld [vmem:[%s3902 + $0x40] sm:$0xf]
    %v3920 = vld [vmem:[%s3902 + $0x44] sm:$0xf]
    %v3921 = vld [vmem:[%s3902 + $0x48] sm:$0xf]
    %v3922 = vld [vmem:[%s3902 + $0x4c] sm:$0xf]
    %v3923 = vld [vmem:[%s3902 + $0x50] sm:$0xf]
    %v3924 = vld [vmem:[%s3902 + $0x54] sm:$0xf]
    %v3925 = vld [vmem:[%s3902 + $0x58] sm:$0xf]
    %v3926 = vld [vmem:[%s3902 + $0x5c] sm:$0xf]
    %v3927 = vld [vmem:[%s3902 + $0x60] sm:$0xf]
    %v3928 = vld [vmem:[%s3902 + $0x64] sm:$0xf]
    %v3929 = vld [vmem:[%s3902 + $0x68] sm:$0xf]
    %v3930 = vld [vmem:[%s3902 + $0x6c] sm:$0xf]
    %v3931 = vld [vmem:[%s3902 + $0x70] sm:$0xf]
    %v3932 = vld [vmem:[%s3902 + $0x74] sm:$0xf]
    %v3933 = vld [vmem:[%s3902 + $0x78] sm:$0xf]
    %v3934 = vld [vmem:[%s3902 + $0x7c] sm:$0xf]
    %v3935 = vpack.c.bf16 %v3900, %v3900
    %v3936 = vld [vmem:[#allocation18 + $0x3d] ss:$0 sm:$0xff]
    %v3969 = vunpack.c.l.b16 %v3903
    %v3970 = vunpack.c.l.b16 %v3904
    %v3971 = vunpack.c.l.b16 %v3905
    %v3972 = vunpack.c.l.b16 %v3906
    %v3973 = vunpack.c.l.b16 %v3907
    %v3974 = vunpack.c.l.b16 %v3908
    %v3975 = vunpack.c.l.b16 %v3909
    %v3976 = vunpack.c.l.b16 %v3910
    %v3977 = vunpack.c.l.b16 %v3911
    %v3978 = vunpack.c.l.b16 %v3912
    %v3979 = vunpack.c.l.b16 %v3913
    %v3980 = vunpack.c.l.b16 %v3914
    %v3981 = vunpack.c.l.b16 %v3915
    %v3982 = vunpack.c.l.b16 %v3916
    %v3983 = vunpack.c.l.b16 %v3917
    %v3984 = vunpack.c.l.b16 %v3918
    %v3985 = vunpack.c.l.b16 %v3919
    %v3986 = vunpack.c.l.b16 %v3920
    %v3987 = vunpack.c.l.b16 %v3921
    %v3988 = vunpack.c.l.b16 %v3922
    %v3989 = vunpack.c.l.b16 %v3923
    %v3990 = vunpack.c.l.b16 %v3924
    %v3991 = vunpack.c.l.b16 %v3925
    %v3992 = vunpack.c.l.b16 %v3926
    %v3993 = vunpack.c.l.b16 %v3927
    %v3994 = vunpack.c.l.b16 %v3928
    %v3995 = vunpack.c.l.b16 %v3929
    %v3996 = vunpack.c.l.b16 %v3930
    %v3997 = vunpack.c.l.b16 %v3931
    %v3998 = vunpack.c.l.b16 %v3932
    %v3999 = vunpack.c.l.b16 %v3933
    %v4000 = vunpack.c.l.b16 %v3934
    %v4001 = vpack.c.b16 %v3970, %v3969
    %v4002 = vpack.c.b16 %v3972, %v3971
    %v4003 = vpack.c.b16 %v3974, %v3973
    %v4004 = vpack.c.b16 %v3976, %v3975
    %v4005 = vpack.c.b16 %v3978, %v3977
    %v4006 = vpack.c.b16 %v3980, %v3979
    %v4007 = vpack.c.b16 %v3982, %v3981
    %v4008 = vpack.c.b16 %v3984, %v3983
    %v4009 = vpack.c.b16 %v3986, %v3985
    %v4010 = vpack.c.b16 %v3988, %v3987
    %v4011 = vpack.c.b16 %v3990, %v3989
    %v4012 = vpack.c.b16 %v3992, %v3991
    %v4013 = vpack.c.b16 %v3994, %v3993
    %v4014 = vpack.c.b16 %v3996, %v3995
    %v4015 = vpack.c.b16 %v3998, %v3997
    %v4016 = vpack.c.b16 %v4000, %v3999
    %4033 = vmatprep.subr.bf16.mxu0 0
    %4034 = vmatpush1.bf16.msra.mxu0 %v4001
    %4035 = vmatprep.subr.bf16.mxu0 0
    %4036 = vmatpush1.bf16.msra.mxu0 %v4002
    %4037 = vmatprep.subr.bf16.mxu0 0
    %4038 = vmatpush1.bf16.msra.mxu0 %v4003
    %4039 = vmatprep.subr.bf16.mxu0 0
    %4040 = vmatpush1.bf16.msra.mxu0 %v4004
    %4041 = vmatprep.subr.bf16.mxu0 0
    %4042 = vmatpush1.bf16.msra.mxu0 %v4005
    %4043 = vmatprep.subr.bf16.mxu0 0
    %4044 = vmatpush1.bf16.msra.mxu0 %v4006
    %4045 = vmatprep.subr.bf16.mxu0 0
    %4046 = vmatpush1.bf16.msra.mxu0 %v4007
    %4047 = vmatprep.subr.bf16.mxu0 0
    %4048 = vmatpush1.bf16.msra.mxu0 %v4008
    %4049 = vmatprep.subr.bf16.mxu0 0
    %4050 = vmatpush1.bf16.msra.mxu0 %v4009
    %4051 = vmatprep.subr.bf16.mxu0 0
    %4052 = vmatpush1.bf16.msra.mxu0 %v4010
    %4053 = vmatprep.subr.bf16.mxu0 0
    %4054 = vmatpush1.bf16.msra.mxu0 %v4011
    %4055 = vmatprep.subr.bf16.mxu0 0
    %4056 = vmatpush1.bf16.msra.mxu0 %v4012
    %4057 = vmatprep.subr.bf16.mxu0 0
    %4058 = vmatpush1.bf16.msra.mxu0 %v4013
    %4059 = vmatprep.subr.bf16.mxu0 0
    %4060 = vmatpush1.bf16.msra.mxu0 %v4014
    %4061 = vmatprep.subr.bf16.mxu0 0
    %4062 = vmatpush1.bf16.msra.mxu0 %v4015
    %4063 = vmatprep.subr.bf16.mxu0 0
    %4064 = vmatpush1.bf16.msra.mxu0 %v4016
    %4065 = vmatprep.mubr.bf16.mxu0 %v3935
    %4066 = vmatmul.mubr.bf16.gmra.mrb[0].mxu0 %v2378
    %v4067 = vpop.f32.mrb[0].mxu0
    %v4068 = vadd.f32 %v3936, %v4067
    %v4069 = vpop.f32.mrb[0].mxu0
    %v4070 = vpop.f32.mrb[0].mxu0
    %v4071 = vpop.f32.mrb[0].mxu0
    %4072 = vdwg.mxu0
    %v4073 = vmax.f32 %v4068, 0.0
    %s4074 = scalar_lea.vmem %s5, 28
    %v4075 = vld [vmem:[%s4074] sm:$0xf]
    %v4077 = vpack.i.b16 %v4075, %v4075
    %v4079 = vlaneseq
    %v4080 = vshrl.u32 %v4079, 7
    %v4081 = vsub.s32 0, %v4080
    %v4082 = vrot.slane %v4077, %v4081
    %4084 = vbcast.lane.c.b16.xlu0 %v4082, 256
    %v4085 = vpop.permute.xlu0 %4084
    %v4086 = vshrl.u32 %v4075, 16
    %v4087 = vpack.i.b16 %v4086, %v4086
    %v4089 = vlaneseq
    %v4090 = vshrl.u32 %v4089, 7
    %v4091 = vsub.s32 0, %v4090
    %v4092 = vrot.slane %v4087, %v4091
    %4094 = vbcast.lane.c.b16.xlu0 %v4092, 256
    %v4095 = vpop.permute.xlu0 %4094
    %v4096 = vlaneseq
    %v4097 = vshrl.u32 %v4096, 7
    %v4098 = vsub.s32 1, %v4097
    %v4099 = vrot.slane %v4077, %v4098
    %4101 = vbcast.lane.c.b16.xlu0 %v4099, 256
    %v4102 = vpop.permute.xlu0 %4101
    %v4103 = vlaneseq
    %v4104 = vshrl.u32 %v4103, 7
    %v4105 = vsub.s32 1, %v4104
    %v4106 = vrot.slane %v4087, %v4105
    %4108 = vbcast.lane.c.b16.xlu0 %v4106, 256
    %v4109 = vpop.permute.xlu0 %4108
    %v4110 = vlaneseq
    %v4111 = vshrl.u32 %v4110, 7
    %v4112 = vsub.s32 2, %v4111
    %v4113 = vrot.slane %v4077, %v4112
    %4115 = vbcast.lane.c.b16.xlu0 %v4113, 256
    %v4116 = vpop.permute.xlu0 %4115
    %v4117 = vlaneseq
    %v4118 = vshrl.u32 %v4117, 7
    %v4119 = vsub.s32 2, %v4118
    %v4120 = vrot.slane %v4087, %v4119
    %4122 = vbcast.lane.c.b16.xlu0 %v4120, 256
    %v4123 = vpop.permute.xlu0 %4122
    %v4124 = vlaneseq
    %v4125 = vshrl.u32 %v4124, 7
    %v4126 = vsub.s32 3, %v4125
    %v4127 = vrot.slane %v4077, %v4126
    %4129 = vbcast.lane.c.b16.xlu0 %v4127, 256
    %v4130 = vpop.permute.xlu0 %4129
    %v4131 = vlaneseq
    %v4132 = vshrl.u32 %v4131, 7
    %v4133 = vsub.s32 3, %v4132
    %v4134 = vrot.slane %v4087, %v4133
    %4136 = vbcast.lane.c.b16.xlu0 %v4134, 256
    %v4137 = vpop.permute.xlu0 %4136
    %vm4138 = vcmp.gt.bf16.partialorder %v4085, 0
    %vm4139 = vcmp.gt.bf16.partialorder %v4095, 0
    %vm4140 = vcmp.gt.bf16.partialorder %v4102, 0
    %vm4141 = vcmp.gt.bf16.partialorder %v4109, 0
    %vm4142 = vcmp.gt.bf16.partialorder %v4116, 0
    %vm4143 = vcmp.gt.bf16.partialorder %v4123, 0
    %vm4144 = vcmp.gt.bf16.partialorder %v4130, 0
    %vm4145 = vcmp.gt.bf16.partialorder %v4137, 0
    %v4146 = vsel %vm4138, 65537, 0
    %v4147 = vsel %vm4139, 65537, 0
    %v4148 = vsel %vm4140, 65537, 0
    %v4149 = vsel %vm4141, 65537, 0
    %v4150 = vsel %vm4142, 65537, 0
    %v4151 = vsel %vm4143, 65537, 0
    %v4152 = vsel %vm4144, 65537, 0
    %v4153 = vsel %vm4145, 65537, 0
    %v4154 = vunpack.c.l.b16 %v4146
    %v4155 = vunpack.c.l.b16 %v4147
    %v4156 = vunpack.c.l.b16 %v4148
    %v4157 = vunpack.c.l.b16 %v4149
    %v4158 = vunpack.c.l.b16 %v4150
    %v4159 = vunpack.c.l.b16 %v4151
    %v4160 = vunpack.c.l.b16 %v4152
    %v4161 = vunpack.c.l.b16 %v4153
    %vm4162 = vcmp.ne.s32.totalorder %v4154, 0
    %vm4163 = vcmp.ne.s32.totalorder %v4155, 0
    %vm4164 = vcmp.ne.s32.totalorder %v4156, 0
    %vm4165 = vcmp.ne.s32.totalorder %v4157, 0
    %vm4166 = vcmp.ne.s32.totalorder %v4158, 0
    %vm4167 = vcmp.ne.s32.totalorder %v4159, 0
    %vm4168 = vcmp.ne.s32.totalorder %v4160, 0
    %vm4169 = vcmp.ne.s32.totalorder %v4161, 0
    %v4170 = vsel %vm4162, 1, 0
    %v4171 = vsel %vm4163, 1, 0
    %v4172 = vsel %vm4164, 1, 0
    %v4173 = vsel %vm4165, 1, 0
    %v4174 = vsel %vm4166, 1, 0
    %v4175 = vsel %vm4167, 1, 0
    %v4176 = vsel %vm4168, 1, 0
    %v4177 = vsel %vm4169, 1, 0
    %4178 = vset.pattern.permute.xlu0 0
    %4179 = vperm.xlu0 %4178, %v4170
    %v4180 = vpop.permute.xlu0 %4179
    %4181 = vset.pattern.permute.xlu0 0
    %4182 = vperm.xlu0 %4181, %v4171
    %v4183 = vpop.permute.xlu0 %4182
    %4184 = vset.pattern.permute.xlu0 0
    %4185 = vperm.xlu0 %4184, %v4172
    %v4186 = vpop.permute.xlu0 %4185
    %4187 = vset.pattern.permute.xlu0 0
    %4188 = vperm.xlu0 %4187, %v4173
    %v4189 = vpop.permute.xlu0 %4188
    %4190 = vset.pattern.permute.xlu0 0
    %4191 = vperm.xlu0 %4190, %v4174
    %v4192 = vpop.permute.xlu0 %4191
    %4193 = vset.pattern.permute.xlu0 0
    %4194 = vperm.xlu0 %4193, %v4175
    %v4195 = vpop.permute.xlu0 %4194
    %4196 = vset.pattern.permute.xlu0 0
    %4197 = vperm.xlu0 %4196, %v4176
    %v4198 = vpop.permute.xlu0 %4197
    %4199 = vset.pattern.permute.xlu0 0
    %4200 = vperm.xlu0 %4199, %v4177
    %v4201 = vpop.permute.xlu0 %4200
    %vm4202 = vcmp.eq.s32.totalorder %v4180, 1
    %vm4203 = vcmp.eq.s32.totalorder %v4183, 1
    %vm4204 = vcmp.eq.s32.totalorder %v4186, 1
    %vm4205 = vcmp.eq.s32.totalorder %v4189, 1
    %vm4206 = vcmp.eq.s32.totalorder %v4192, 1
    %vm4207 = vcmp.eq.s32.totalorder %v4195, 1
    %vm4208 = vcmp.eq.s32.totalorder %v4198, 1
    %vm4209 = vcmp.eq.s32.totalorder %v4201, 1
    %v4210 = vsel %vm4202, %v2514, -inf
    %v4211 = vsel %vm4203, %v2514, -inf
    %v4212 = vsel %vm4204, %v2514, -inf
    %v4213 = vsel %vm4205, %v2514, -inf
    %v4214 = vsel %vm4206, %v2514, -inf
    %v4215 = vsel %vm4207, %v2514, -inf
    %v4216 = vsel %vm4208, %v2514, -inf
    %v4217 = vsel %vm4209, %v2514, -inf
    %v4218 = vrot.slane %v4210, 4
    %v4219 = vmax.f32 %v4210, %v4218
    %v4220 = vrot.slane %v4219, 2
    %v4221 = vmax.f32 %v4219, %v4220
    %v4222 = vrot.slane %v4221, 1
    %v4223 = vmax.f32 %v4221, %v4222
    %v4224 = vrot.slane %v4211, 4
    %v4225 = vmax.f32 %v4211, %v4224
    %v4226 = vrot.slane %v4225, 2
    %v4227 = vmax.f32 %v4225, %v4226
    %v4228 = vrot.slane %v4227, 1
    %v4229 = vmax.f32 %v4227, %v4228
    %v4230 = vrot.slane %v4212, 4
    %v4231 = vmax.f32 %v4212, %v4230
    %v4232 = vrot.slane %v4231, 2
    %v4233 = vmax.f32 %v4231, %v4232
    %v4234 = vrot.slane %v4233, 1
    %v4235 = vmax.f32 %v4233, %v4234
    %v4236 = vrot.slane %v4213, 4
    %v4237 = vmax.f32 %v4213, %v4236
    %v4238 = vrot.slane %v4237, 2
    %v4239 = vmax.f32 %v4237, %v4238
    %v4240 = vrot.slane %v4239, 1
    %v4241 = vmax.f32 %v4239, %v4240
    %v4242 = vrot.slane %v4214, 4
    %v4243 = vmax.f32 %v4214, %v4242
    %v4244 = vrot.slane %v4243, 2
    %v4245 = vmax.f32 %v4243, %v4244
    %v4246 = vrot.slane %v4245, 1
    %v4247 = vmax.f32 %v4245, %v4246
    %v4248 = vrot.slane %v4215, 4
    %v4249 = vmax.f32 %v4215, %v4248
    %v4250 = vrot.slane %v4249, 2
    %v4251 = vmax.f32 %v4249, %v4250
    %v4252 = vrot.slane %v4251, 1
    %v4253 = vmax.f32 %v4251, %v4252
    %v4254 = vrot.slane %v4216, 4
    %v4255 = vmax.f32 %v4216, %v4254
    %v4256 = vrot.slane %v4255, 2
    %v4257 = vmax.f32 %v4255, %v4256
    %v4258 = vrot.slane %v4257, 1
    %v4259 = vmax.f32 %v4257, %v4258
    %v4260 = vrot.slane %v4217, 4
    %v4261 = vmax.f32 %v4217, %v4260
    %v4262 = vrot.slane %v4261, 2
    %v4263 = vmax.f32 %v4261, %v4262
    %v4264 = vrot.slane %v4263, 1
    %v4265 = vmax.f32 %v4263, %v4264
    %v4266 = vmax.f32 %v4223, 0.0
    %v4267 = vmax.f32 %v4229, 0.0
    %v4268 = vmax.f32 %v4235, 0.0
    %v4269 = vmax.f32 %v4241, 0.0
    %v4270 = vmax.f32 %v4247, 0.0
    %v4271 = vmax.f32 %v4253, 0.0
    %v4272 = vmax.f32 %v4259, 0.0
    %v4273 = vmax.f32 %v4265, 0.0
    %v4282 = vsel %vm2722, %v4267, %v4266
    %v4283 = vsel %vm2724, %v4268, %v4282
    %v4284 = vsel %vm2726, %v4269, %v4283
    %v4285 = vsel %vm2728, %v4270, %v4284
    %v4286 = vsel %vm2730, %v4271, %v4285
    %v4287 = vsel %vm2732, %v4272, %v4286
    %v4288 = vsel %vm2734, %v4273, %v4287
    %s4290 = scalar_lea.vmem [#allocation13], 896
    %v4291 = vld [vmem:[%s4290] sm:$0xf]
    %v4292 = vld [vmem:[%s4290 + $0x4] sm:$0xf]
    %v4293 = vld [vmem:[%s4290 + $0x8] sm:$0xf]
    %v4294 = vld [vmem:[%s4290 + $0xc] sm:$0xf]
    %v4295 = vld [vmem:[%s4290 + $0x10] sm:$0xf]
    %v4296 = vld [vmem:[%s4290 + $0x14] sm:$0xf]
    %v4297 = vld [vmem:[%s4290 + $0x18] sm:$0xf]
    %v4298 = vld [vmem:[%s4290 + $0x1c] sm:$0xf]
    %v4299 = vld [vmem:[%s4290 + $0x20] sm:$0xf]
    %v4300 = vld [vmem:[%s4290 + $0x24] sm:$0xf]
    %v4301 = vld [vmem:[%s4290 + $0x28] sm:$0xf]
    %v4302 = vld [vmem:[%s4290 + $0x2c] sm:$0xf]
    %v4303 = vld [vmem:[%s4290 + $0x30] sm:$0xf]
    %v4304 = vld [vmem:[%s4290 + $0x34] sm:$0xf]
    %v4305 = vld [vmem:[%s4290 + $0x38] sm:$0xf]
    %v4306 = vld [vmem:[%s4290 + $0x3c] sm:$0xf]
    %v4307 = vld [vmem:[%s4290 + $0x40] sm:$0xf]
    %v4308 = vld [vmem:[%s4290 + $0x44] sm:$0xf]
    %v4309 = vld [vmem:[%s4290 + $0x48] sm:$0xf]
    %v4310 = vld [vmem:[%s4290 + $0x4c] sm:$0xf]
    %v4311 = vld [vmem:[%s4290 + $0x50] sm:$0xf]
    %v4312 = vld [vmem:[%s4290 + $0x54] sm:$0xf]
    %v4313 = vld [vmem:[%s4290 + $0x58] sm:$0xf]
    %v4314 = vld [vmem:[%s4290 + $0x5c] sm:$0xf]
    %v4315 = vld [vmem:[%s4290 + $0x60] sm:$0xf]
    %v4316 = vld [vmem:[%s4290 + $0x64] sm:$0xf]
    %v4317 = vld [vmem:[%s4290 + $0x68] sm:$0xf]
    %v4318 = vld [vmem:[%s4290 + $0x6c] sm:$0xf]
    %v4319 = vld [vmem:[%s4290 + $0x70] sm:$0xf]
    %v4320 = vld [vmem:[%s4290 + $0x74] sm:$0xf]
    %v4321 = vld [vmem:[%s4290 + $0x78] sm:$0xf]
    %v4322 = vld [vmem:[%s4290 + $0x7c] sm:$0xf]
    %v4323 = vpack.c.bf16 %v4288, %v4288
    %v4324 = vld [vmem:[#allocation18 + $0x72] ss:$0 sm:$0xff]
    %v4357 = vunpack.c.l.b16 %v4291
    %v4358 = vunpack.c.l.b16 %v4292
    %v4359 = vunpack.c.l.b16 %v4293
    %v4360 = vunpack.c.l.b16 %v4294
    %v4361 = vunpack.c.l.b16 %v4295
    %v4362 = vunpack.c.l.b16 %v4296
    %v4363 = vunpack.c.l.b16 %v4297
    %v4364 = vunpack.c.l.b16 %v4298
    %v4365 = vunpack.c.l.b16 %v4299
    %v4366 = vunpack.c.l.b16 %v4300
    %v4367 = vunpack.c.l.b16 %v4301
    %v4368 = vunpack.c.l.b16 %v4302
    %v4369 = vunpack.c.l.b16 %v4303
    %v4370 = vunpack.c.l.b16 %v4304
    %v4371 = vunpack.c.l.b16 %v4305
    %v4372 = vunpack.c.l.b16 %v4306
    %v4373 = vunpack.c.l.b16 %v4307
    %v4374 = vunpack.c.l.b16 %v4308
    %v4375 = vunpack.c.l.b16 %v4309
    %v4376 = vunpack.c.l.b16 %v4310
    %v4377 = vunpack.c.l.b16 %v4311
    %v4378 = vunpack.c.l.b16 %v4312
    %v4379 = vunpack.c.l.b16 %v4313
    %v4380 = vunpack.c.l.b16 %v4314
    %v4381 = vunpack.c.l.b16 %v4315
    %v4382 = vunpack.c.l.b16 %v4316
    %v4383 = vunpack.c.l.b16 %v4317
    %v4384 = vunpack.c.l.b16 %v4318
    %v4385 = vunpack.c.l.b16 %v4319
    %v4386 = vunpack.c.l.b16 %v4320
    %v4387 = vunpack.c.l.b16 %v4321
    %v4388 = vunpack.c.l.b16 %v4322
    %v4389 = vpack.c.b16 %v4358, %v4357
    %v4390 = vpack.c.b16 %v4360, %v4359
    %v4391 = vpack.c.b16 %v4362, %v4361
    %v4392 = vpack.c.b16 %v4364, %v4363
    %v4393 = vpack.c.b16 %v4366, %v4365
    %v4394 = vpack.c.b16 %v4368, %v4367
    %v4395 = vpack.c.b16 %v4370, %v4369
    %v4396 = vpack.c.b16 %v4372, %v4371
    %v4397 = vpack.c.b16 %v4374, %v4373
    %v4398 = vpack.c.b16 %v4376, %v4375
    %v4399 = vpack.c.b16 %v4378, %v4377
    %v4400 = vpack.c.b16 %v4380, %v4379
    %v4401 = vpack.c.b16 %v4382, %v4381
    %v4402 = vpack.c.b16 %v4384, %v4383
    %v4403 = vpack.c.b16 %v4386, %v4385
    %v4404 = vpack.c.b16 %v4388, %v4387
    %4421 = vmatprep.subr.bf16.mxu0 0
    %4422 = vmatpush1.bf16.msra.mxu0 %v4389
    %4423 = vmatprep.subr.bf16.mxu0 0
    %4424 = vmatpush1.bf16.msra.mxu0 %v4390
    %4425 = vmatprep.subr.bf16.mxu0 0
    %4426 = vmatpush1.bf16.msra.mxu0 %v4391
    %4427 = vmatprep.subr.bf16.mxu0 0
    %4428 = vmatpush1.bf16.msra.mxu0 %v4392
    %4429 = vmatprep.subr.bf16.mxu0 0
    %4430 = vmatpush1.bf16.msra.mxu0 %v4393
    %4431 = vmatprep.subr.bf16.mxu0 0
    %4432 = vmatpush1.bf16.msra.mxu0 %v4394
    %4433 = vmatprep.subr.bf16.mxu0 0
    %4434 = vmatpush1.bf16.msra.mxu0 %v4395
    %4435 = vmatprep.subr.bf16.mxu0 0
    %4436 = vmatpush1.bf16.msra.mxu0 %v4396
    %4437 = vmatprep.subr.bf16.mxu0 0
    %4438 = vmatpush1.bf16.msra.mxu0 %v4397
    %4439 = vmatprep.subr.bf16.mxu0 0
    %4440 = vmatpush1.bf16.msra.mxu0 %v4398
    %4441 = vmatprep.subr.bf16.mxu0 0
    %4442 = vmatpush1.bf16.msra.mxu0 %v4399
    %4443 = vmatprep.subr.bf16.mxu0 0
    %4444 = vmatpush1.bf16.msra.mxu0 %v4400
    %4445 = vmatprep.subr.bf16.mxu0 0
    %4446 = vmatpush1.bf16.msra.mxu0 %v4401
    %4447 = vmatprep.subr.bf16.mxu0 0
    %4448 = vmatpush1.bf16.msra.mxu0 %v4402
    %4449 = vmatprep.subr.bf16.mxu0 0
    %4450 = vmatpush1.bf16.msra.mxu0 %v4403
    %4451 = vmatprep.subr.bf16.mxu0 0
    %4452 = vmatpush1.bf16.msra.mxu0 %v4404
    %4453 = vmatprep.mubr.bf16.mxu0 %v4323
    %4454 = vmatmul.mubr.bf16.gmra.mrb[0].mxu0 %v2378
    %v4455 = vpop.f32.mrb[0].mxu0
    %v4456 = vadd.f32 %v4324, %v4455
    %v4457 = vpop.f32.mrb[0].mxu0
    %v4458 = vpop.f32.mrb[0].mxu0
    %v4459 = vpop.f32.mrb[0].mxu0
    %4460 = vdwg.mxu0
    %v4461 = vmax.f32 %v4456, 0.0
    %v4462 = vadd.f32 %v4073, %v4461
    %s4463 = scalar_lea.vmem %s5, 12
    %v4464 = vld [vmem:[%s4463] sm:$0xf]
    %v4466 = vpack.i.b16 %v4464, %v4464
    %v4468 = vlaneseq
    %v4469 = vshrl.u32 %v4468, 7
    %v4470 = vsub.s32 0, %v4469
    %v4471 = vrot.slane %v4466, %v4470
    %4473 = vbcast.lane.c.b16.xlu0 %v4471, 256
    %v4474 = vpop.permute.xlu0 %4473
    %v4475 = vshrl.u32 %v4464, 16
    %v4476 = vpack.i.b16 %v4475, %v4475
    %v4478 = vlaneseq
    %v4479 = vshrl.u32 %v4478, 7
    %v4480 = vsub.s32 0, %v4479
    %v4481 = vrot.slane %v4476, %v4480
    %4483 = vbcast.lane.c.b16.xlu0 %v4481, 256
    %v4484 = vpop.permute.xlu0 %4483
    %v4485 = vlaneseq
    %v4486 = vshrl.u32 %v4485, 7
    %v4487 = vsub.s32 1, %v4486
    %v4488 = vrot.slane %v4466, %v4487
    %4490 = vbcast.lane.c.b16.xlu0 %v4488, 256
    %v4491 = vpop.permute.xlu0 %4490
    %v4492 = vlaneseq
    %v4493 = vshrl.u32 %v4492, 7
    %v4494 = vsub.s32 1, %v4493
    %v4495 = vrot.slane %v4476, %v4494
    %4497 = vbcast.lane.c.b16.xlu0 %v4495, 256
    %v4498 = vpop.permute.xlu0 %4497
    %v4499 = vlaneseq
    %v4500 = vshrl.u32 %v4499, 7
    %v4501 = vsub.s32 2, %v4500
    %v4502 = vrot.slane %v4466, %v4501
    %4504 = vbcast.lane.c.b16.xlu0 %v4502, 256
    %v4505 = vpop.permute.xlu0 %4504
    %v4506 = vlaneseq
    %v4507 = vshrl.u32 %v4506, 7
    %v4508 = vsub.s32 2, %v4507
    %v4509 = vrot.slane %v4476, %v4508
    %4511 = vbcast.lane.c.b16.xlu0 %v4509, 256
    %v4512 = vpop.permute.xlu0 %4511
    %v4513 = vlaneseq
    %v4514 = vshrl.u32 %v4513, 7
    %v4515 = vsub.s32 3, %v4514
    %v4516 = vrot.slane %v4466, %v4515
    %4518 = vbcast.lane.c.b16.xlu0 %v4516, 256
    %v4519 = vpop.permute.xlu0 %4518
    %v4520 = vlaneseq
    %v4521 = vshrl.u32 %v4520, 7
    %v4522 = vsub.s32 3, %v4521
    %v4523 = vrot.slane %v4476, %v4522
    %4525 = vbcast.lane.c.b16.xlu0 %v4523, 256
    %v4526 = vpop.permute.xlu0 %4525
    %vm4527 = vcmp.gt.bf16.partialorder %v4474, 0
    %vm4528 = vcmp.gt.bf16.partialorder %v4484, 0
    %vm4529 = vcmp.gt.bf16.partialorder %v4491, 0
    %vm4530 = vcmp.gt.bf16.partialorder %v4498, 0
    %vm4531 = vcmp.gt.bf16.partialorder %v4505, 0
    %vm4532 = vcmp.gt.bf16.partialorder %v4512, 0
    %vm4533 = vcmp.gt.bf16.partialorder %v4519, 0
    %vm4534 = vcmp.gt.bf16.partialorder %v4526, 0
    %v4535 = vsel %vm4527, 65537, 0
    %v4536 = vsel %vm4528, 65537, 0
    %v4537 = vsel %vm4529, 65537, 0
    %v4538 = vsel %vm4530, 65537, 0
    %v4539 = vsel %vm4531, 65537, 0
    %v4540 = vsel %vm4532, 65537, 0
    %v4541 = vsel %vm4533, 65537, 0
    %v4542 = vsel %vm4534, 65537, 0
    %v4543 = vunpack.c.l.b16 %v4535
    %v4544 = vunpack.c.l.b16 %v4536
    %v4545 = vunpack.c.l.b16 %v4537
    %v4546 = vunpack.c.l.b16 %v4538
    %v4547 = vunpack.c.l.b16 %v4539
    %v4548 = vunpack.c.l.b16 %v4540
    %v4549 = vunpack.c.l.b16 %v4541
    %v4550 = vunpack.c.l.b16 %v4542
    %vm4551 = vcmp.ne.s32.totalorder %v4543, 0
    %vm4552 = vcmp.ne.s32.totalorder %v4544, 0
    %vm4553 = vcmp.ne.s32.totalorder %v4545, 0
    %vm4554 = vcmp.ne.s32.totalorder %v4546, 0
    %vm4555 = vcmp.ne.s32.totalorder %v4547, 0
    %vm4556 = vcmp.ne.s32.totalorder %v4548, 0
    %vm4557 = vcmp.ne.s32.totalorder %v4549, 0
    %vm4558 = vcmp.ne.s32.totalorder %v4550, 0
    %v4559 = vsel %vm4551, 1, 0
    %v4560 = vsel %vm4552, 1, 0
    %v4561 = vsel %vm4553, 1, 0
    %v4562 = vsel %vm4554, 1, 0
    %v4563 = vsel %vm4555, 1, 0
    %v4564 = vsel %vm4556, 1, 0
    %v4565 = vsel %vm4557, 1, 0
    %v4566 = vsel %vm4558, 1, 0
    %4567 = vset.pattern.permute.xlu0 0
    %4568 = vperm.xlu0 %4567, %v4559
    %v4569 = vpop.permute.xlu0 %4568
    %4570 = vset.pattern.permute.xlu0 0
    %4571 = vperm.xlu0 %4570, %v4560
    %v4572 = vpop.permute.xlu0 %4571
    %4573 = vset.pattern.permute.xlu0 0
    %4574 = vperm.xlu0 %4573, %v4561
    %v4575 = vpop.permute.xlu0 %4574
    %4576 = vset.pattern.permute.xlu0 0
    %4577 = vperm.xlu0 %4576, %v4562
    %v4578 = vpop.permute.xlu0 %4577
    %4579 = vset.pattern.permute.xlu0 0
    %4580 = vperm.xlu0 %4579, %v4563
    %v4581 = vpop.permute.xlu0 %4580
    %4582 = vset.pattern.permute.xlu0 0
    %4583 = vperm.xlu0 %4582, %v4564
    %v4584 = vpop.permute.xlu0 %4583
    %4585 = vset.pattern.permute.xlu0 0
    %4586 = vperm.xlu0 %4585, %v4565
    %v4587 = vpop.permute.xlu0 %4586
    %4588 = vset.pattern.permute.xlu0 0
    %4589 = vperm.xlu0 %4588, %v4566
    %v4590 = vpop.permute.xlu0 %4589
    %vm4591 = vcmp.eq.s32.totalorder %v4569, 1
    %vm4592 = vcmp.eq.s32.totalorder %v4572, 1
    %vm4593 = vcmp.eq.s32.totalorder %v4575, 1
    %vm4594 = vcmp.eq.s32.totalorder %v4578, 1
    %vm4595 = vcmp.eq.s32.totalorder %v4581, 1
    %vm4596 = vcmp.eq.s32.totalorder %v4584, 1
    %vm4597 = vcmp.eq.s32.totalorder %v4587, 1
    %vm4598 = vcmp.eq.s32.totalorder %v4590, 1
    %v4599 = vsel %vm4591, %v2358, -inf
    %v4600 = vsel %vm4592, %v2358, -inf
    %v4601 = vsel %vm4593, %v2358, -inf
    %v4602 = vsel %vm4594, %v2358, -inf
    %v4603 = vsel %vm4595, %v2358, -inf
    %v4604 = vsel %vm4596, %v2358, -inf
    %v4605 = vsel %vm4597, %v2358, -inf
    %v4606 = vsel %vm4598, %v2358, -inf
    %v4607 = vrot.slane %v4599, 4
    %v4608 = vmax.f32 %v4599, %v4607
    %v4609 = vrot.slane %v4608, 2
    %v4610 = vmax.f32 %v4608, %v4609
    %v4611 = vrot.slane %v4610, 1
    %v4612 = vmax.f32 %v4610, %v4611
    %v4613 = vrot.slane %v4600, 4
    %v4614 = vmax.f32 %v4600, %v4613
    %v4615 = vrot.slane %v4614, 2
    %v4616 = vmax.f32 %v4614, %v4615
    %v4617 = vrot.slane %v4616, 1
    %v4618 = vmax.f32 %v4616, %v4617
    %v4619 = vrot.slane %v4601, 4
    %v4620 = vmax.f32 %v4601, %v4619
    %v4621 = vrot.slane %v4620, 2
    %v4622 = vmax.f32 %v4620, %v4621
    %v4623 = vrot.slane %v4622, 1
    %v4624 = vmax.f32 %v4622, %v4623
    %v4625 = vrot.slane %v4602, 4
    %v4626 = vmax.f32 %v4602, %v4625
    %v4627 = vrot.slane %v4626, 2
    %v4628 = vmax.f32 %v4626, %v4627
    %v4629 = vrot.slane %v4628, 1
    %v4630 = vmax.f32 %v4628, %v4629
    %v4631 = vrot.slane %v4603, 4
    %v4632 = vmax.f32 %v4603, %v4631
    %v4633 = vrot.slane %v4632, 2
    %v4634 = vmax.f32 %v4632, %v4633
    %v4635 = vrot.slane %v4634, 1
    %v4636 = vmax.f32 %v4634, %v4635
    %v4637 = vrot.slane %v4604, 4
    %v4638 = vmax.f32 %v4604, %v4637
    %v4639 = vrot.slane %v4638, 2
    %v4640 = vmax.f32 %v4638, %v4639
    %v4641 = vrot.slane %v4640, 1
    %v4642 = vmax.f32 %v4640, %v4641
    %v4643 = vrot.slane %v4605, 4
    %v4644 = vmax.f32 %v4605, %v4643
    %v4645 = vrot.slane %v4644, 2
    %v4646 = vmax.f32 %v4644, %v4645
    %v4647 = vrot.slane %v4646, 1
    %v4648 = vmax.f32 %v4646, %v4647
    %v4649 = vrot.slane %v4606, 4
    %v4650 = vmax.f32 %v4606, %v4649
    %v4651 = vrot.slane %v4650, 2
    %v4652 = vmax.f32 %v4650, %v4651
    %v4653 = vrot.slane %v4652, 1
    %v4654 = vmax.f32 %v4652, %v4653
    %v4655 = vmax.f32 %v4612, 0.0
    %v4656 = vmax.f32 %v4618, 0.0
    %v4657 = vmax.f32 %v4624, 0.0
    %v4658 = vmax.f32 %v4630, 0.0
    %v4659 = vmax.f32 %v4636, 0.0
    %v4660 = vmax.f32 %v4642, 0.0
    %v4661 = vmax.f32 %v4648, 0.0
    %v4662 = vmax.f32 %v4654, 0.0
    %v4671 = vsel %vm2722, %v4656, %v4655
    %v4672 = vsel %vm2724, %v4657, %v4671
    %v4673 = vsel %vm2726, %v4658, %v4672
    %v4674 = vsel %vm2728, %v4659, %v4673
    %v4675 = vsel %vm2730, %v4660, %v4674
    %v4676 = vsel %vm2732, %v4661, %v4675
    %v4677 = vsel %vm2734, %v4662, %v4676
    %s4679 = scalar_lea.vmem [#allocation13], 384
    %v4680 = vld [vmem:[%s4679] sm:$0xf]
    %v4681 = vld [vmem:[%s4679 + $0x4] sm:$0xf]
    %v4682 = vld [vmem:[%s4679 + $0x8] sm:$0xf]
    %v4683 = vld [vmem:[%s4679 + $0xc] sm:$0xf]
    %v4684 = vld [vmem:[%s4679 + $0x10] sm:$0xf]
    %v4685 = vld [vmem:[%s4679 + $0x14] sm:$0xf]
    %v4686 = vld [vmem:[%s4679 + $0x18] sm:$0xf]
    %v4687 = vld [vmem:[%s4679 + $0x1c] sm:$0xf]
    %v4688 = vld [vmem:[%s4679 + $0x20] sm:$0xf]
    %v4689 = vld [vmem:[%s4679 + $0x24] sm:$0xf]
    %v4690 = vld [vmem:[%s4679 + $0x28] sm:$0xf]
    %v4691 = vld [vmem:[%s4679 + $0x2c] sm:$0xf]
    %v4692 = vld [vmem:[%s4679 + $0x30] sm:$0xf]
    %v4693 = vld [vmem:[%s4679 + $0x34] sm:$0xf]
    %v4694 = vld [vmem:[%s4679 + $0x38] sm:$0xf]
    %v4695 = vld [vmem:[%s4679 + $0x3c] sm:$0xf]
    %v4696 = vld [vmem:[%s4679 + $0x40] sm:$0xf]
    %v4697 = vld [vmem:[%s4679 + $0x44] sm:$0xf]
    %v4698 = vld [vmem:[%s4679 + $0x48] sm:$0xf]
    %v4699 = vld [vmem:[%s4679 + $0x4c] sm:$0xf]
    %v4700 = vld [vmem:[%s4679 + $0x50] sm:$0xf]
    %v4701 = vld [vmem:[%s4679 + $0x54] sm:$0xf]
    %v4702 = vld [vmem:[%s4679 + $0x58] sm:$0xf]
    %v4703 = vld [vmem:[%s4679 + $0x5c] sm:$0xf]
    %v4704 = vld [vmem:[%s4679 + $0x60] sm:$0xf]
    %v4705 = vld [vmem:[%s4679 + $0x64] sm:$0xf]
    %v4706 = vld [vmem:[%s4679 + $0x68] sm:$0xf]
    %v4707 = vld [vmem:[%s4679 + $0x6c] sm:$0xf]
    %v4708 = vld [vmem:[%s4679 + $0x70] sm:$0xf]
    %v4709 = vld [vmem:[%s4679 + $0x74] sm:$0xf]
    %v4710 = vld [vmem:[%s4679 + $0x78] sm:$0xf]
    %v4711 = vld [vmem:[%s4679 + $0x7c] sm:$0xf]
    %v4712 = vpack.c.bf16 %v4677, %v4677
    %v4713 = vld [vmem:[#allocation18 + $0x3e] ss:$0 sm:$0xff]
    %v4746 = vunpack.c.l.b16 %v4680
    %v4747 = vunpack.c.l.b16 %v4681
    %v4748 = vunpack.c.l.b16 %v4682
    %v4749 = vunpack.c.l.b16 %v4683
    %v4750 = vunpack.c.l.b16 %v4684
    %v4751 = vunpack.c.l.b16 %v4685
    %v4752 = vunpack.c.l.b16 %v4686
    %v4753 = vunpack.c.l.b16 %v4687
    %v4754 = vunpack.c.l.b16 %v4688
    %v4755 = vunpack.c.l.b16 %v4689
    %v4756 = vunpack.c.l.b16 %v4690
    %v4757 = vunpack.c.l.b16 %v4691
    %v4758 = vunpack.c.l.b16 %v4692
    %v4759 = vunpack.c.l.b16 %v4693
    %v4760 = vunpack.c.l.b16 %v4694
    %v4761 = vunpack.c.l.b16 %v4695
    %v4762 = vunpack.c.l.b16 %v4696
    %v4763 = vunpack.c.l.b16 %v4697
    %v4764 = vunpack.c.l.b16 %v4698
    %v4765 = vunpack.c.l.b16 %v4699
    %v4766 = vunpack.c.l.b16 %v4700
    %v4767 = vunpack.c.l.b16 %v4701
    %v4768 = vunpack.c.l.b16 %v4702
    %v4769 = vunpack.c.l.b16 %v4703
    %v4770 = vunpack.c.l.b16 %v4704
    %v4771 = vunpack.c.l.b16 %v4705
    %v4772 = vunpack.c.l.b16 %v4706
    %v4773 = vunpack.c.l.b16 %v4707
    %v4774 = vunpack.c.l.b16 %v4708
    %v4775 = vunpack.c.l.b16 %v4709
    %v4776 = vunpack.c.l.b16 %v4710
    %v4777 = vunpack.c.l.b16 %v4711
    %v4778 = vpack.c.b16 %v4747, %v4746
    %v4779 = vpack.c.b16 %v4749, %v4748
    %v4780 = vpack.c.b16 %v4751, %v4750
    %v4781 = vpack.c.b16 %v4753, %v4752
    %v4782 = vpack.c.b16 %v4755, %v4754
    %v4783 = vpack.c.b16 %v4757, %v4756
    %v4784 = vpack.c.b16 %v4759, %v4758
    %v4785 = vpack.c.b16 %v4761, %v4760
    %v4786 = vpack.c.b16 %v4763, %v4762
    %v4787 = vpack.c.b16 %v4765, %v4764
    %v4788 = vpack.c.b16 %v4767, %v4766
    %v4789 = vpack.c.b16 %v4769, %v4768
    %v4790 = vpack.c.b16 %v4771, %v4770
    %v4791 = vpack.c.b16 %v4773, %v4772
    %v4792 = vpack.c.b16 %v4775, %v4774
    %v4793 = vpack.c.b16 %v4777, %v4776
    %4810 = vmatprep.subr.bf16.mxu0 0
    %4811 = vmatpush1.bf16.msra.mxu0 %v4778
    %4812 = vmatprep.subr.bf16.mxu0 0
    %4813 = vmatpush1.bf16.msra.mxu0 %v4779
    %4814 = vmatprep.subr.bf16.mxu0 0
    %4815 = vmatpush1.bf16.msra.mxu0 %v4780
    %4816 = vmatprep.subr.bf16.mxu0 0
    %4817 = vmatpush1.bf16.msra.mxu0 %v4781
    %4818 = vmatprep.subr.bf16.mxu0 0
    %4819 = vmatpush1.bf16.msra.mxu0 %v4782
    %4820 = vmatprep.subr.bf16.mxu0 0
    %4821 = vmatpush1.bf16.msra.mxu0 %v4783
    %4822 = vmatprep.subr.bf16.mxu0 0
    %4823 = vmatpush1.bf16.msra.mxu0 %v4784
    %4824 = vmatprep.subr.bf16.mxu0 0
    %4825 = vmatpush1.bf16.msra.mxu0 %v4785
    %4826 = vmatprep.subr.bf16.mxu0 0
    %4827 = vmatpush1.bf16.msra.mxu0 %v4786
    %4828 = vmatprep.subr.bf16.mxu0 0
    %4829 = vmatpush1.bf16.msra.mxu0 %v4787
    %4830 = vmatprep.subr.bf16.mxu0 0
    %4831 = vmatpush1.bf16.msra.mxu0 %v4788
    %4832 = vmatprep.subr.bf16.mxu0 0
    %4833 = vmatpush1.bf16.msra.mxu0 %v4789
    %4834 = vmatprep.subr.bf16.mxu0 0
    %4835 = vmatpush1.bf16.msra.mxu0 %v4790
    %4836 = vmatprep.subr.bf16.mxu0 0
    %4837 = vmatpush1.bf16.msra.mxu0 %v4791
    %4838 = vmatprep.subr.bf16.mxu0 0
    %4839 = vmatpush1.bf16.msra.mxu0 %v4792
    %4840 = vmatprep.subr.bf16.mxu0 0
    %4841 = vmatpush1.bf16.msra.mxu0 %v4793
    %4842 = vmatprep.mubr.bf16.mxu0 %v4712
    %4843 = vmatmul.mubr.bf16.gmra.mrb[0].mxu0 %v1866
    %v4844 = vpop.f32.mrb[0].mxu0
    %v4845 = vadd.f32 %v4713, %v4844
    %v4846 = vpop.f32.mrb[0].mxu0
    %v4847 = vpop.f32.mrb[0].mxu0
    %v4848 = vpop.f32.mrb[0].mxu0
    %4849 = vdwg.mxu0
    %v4850 = vmax.f32 %v4845, 0.0
    %s4851 = scalar_lea.vmem %s5, 16
    %v4852 = vld [vmem:[%s4851] sm:$0xf]
    %v4854 = vpack.i.b16 %v4852, %v4852
    %v4856 = vlaneseq
    %v4857 = vshrl.u32 %v4856, 7
    %v4858 = vsub.s32 0, %v4857
    %v4859 = vrot.slane %v4854, %v4858
    %4861 = vbcast.lane.c.b16.xlu0 %v4859, 256
    %v4862 = vpop.permute.xlu0 %4861
    %v4863 = vshrl.u32 %v4852, 16
    %v4864 = vpack.i.b16 %v4863, %v4863
    %v4866 = vlaneseq
    %v4867 = vshrl.u32 %v4866, 7
    %v4868 = vsub.s32 0, %v4867
    %v4869 = vrot.slane %v4864, %v4868
    %4871 = vbcast.lane.c.b16.xlu0 %v4869, 256
    %v4872 = vpop.permute.xlu0 %4871
    %v4873 = vlaneseq
    %v4874 = vshrl.u32 %v4873, 7
    %v4875 = vsub.s32 1, %v4874
    %v4876 = vrot.slane %v4854, %v4875
    %4878 = vbcast.lane.c.b16.xlu0 %v4876, 256
    %v4879 = vpop.permute.xlu0 %4878
    %v4880 = vlaneseq
    %v4881 = vshrl.u32 %v4880, 7
    %v4882 = vsub.s32 1, %v4881
    %v4883 = vrot.slane %v4864, %v4882
    %4885 = vbcast.lane.c.b16.xlu0 %v4883, 256
    %v4886 = vpop.permute.xlu0 %4885
    %v4887 = vlaneseq
    %v4888 = vshrl.u32 %v4887, 7
    %v4889 = vsub.s32 2, %v4888
    %v4890 = vrot.slane %v4854, %v4889
    %4892 = vbcast.lane.c.b16.xlu0 %v4890, 256
    %v4893 = vpop.permute.xlu0 %4892
    %v4894 = vlaneseq
    %v4895 = vshrl.u32 %v4894, 7
    %v4896 = vsub.s32 2, %v4895
    %v4897 = vrot.slane %v4864, %v4896
    %4899 = vbcast.lane.c.b16.xlu0 %v4897, 256
    %v4900 = vpop.permute.xlu0 %4899
    %v4901 = vlaneseq
    %v4902 = vshrl.u32 %v4901, 7
    %v4903 = vsub.s32 3, %v4902
    %v4904 = vrot.slane %v4854, %v4903
    %4906 = vbcast.lane.c.b16.xlu0 %v4904, 256
    %v4907 = vpop.permute.xlu0 %4906
    %v4908 = vlaneseq
    %v4909 = vshrl.u32 %v4908, 7
    %v4910 = vsub.s32 3, %v4909
    %v4911 = vrot.slane %v4864, %v4910
    %4913 = vbcast.lane.c.b16.xlu0 %v4911, 256
    %v4914 = vpop.permute.xlu0 %4913
    %vm4915 = vcmp.gt.bf16.partialorder %v4862, 0
    %vm4916 = vcmp.gt.bf16.partialorder %v4872, 0
    %vm4917 = vcmp.gt.bf16.partialorder %v4879, 0
    %vm4918 = vcmp.gt.bf16.partialorder %v4886, 0
    %vm4919 = vcmp.gt.bf16.partialorder %v4893, 0
    %vm4920 = vcmp.gt.bf16.partialorder %v4900, 0
    %vm4921 = vcmp.gt.bf16.partialorder %v4907, 0
    %vm4922 = vcmp.gt.bf16.partialorder %v4914, 0
    %v4923 = vsel %vm4915, 65537, 0
    %v4924 = vsel %vm4916, 65537, 0
    %v4925 = vsel %vm4917, 65537, 0
    %v4926 = vsel %vm4918, 65537, 0
    %v4927 = vsel %vm4919, 65537, 0
    %v4928 = vsel %vm4920, 65537, 0
    %v4929 = vsel %vm4921, 65537, 0
    %v4930 = vsel %vm4922, 65537, 0
    %v4931 = vunpack.c.l.b16 %v4923
    %v4932 = vunpack.c.l.b16 %v4924
    %v4933 = vunpack.c.l.b16 %v4925
    %v4934 = vunpack.c.l.b16 %v4926
    %v4935 = vunpack.c.l.b16 %v4927
    %v4936 = vunpack.c.l.b16 %v4928
    %v4937 = vunpack.c.l.b16 %v4929
    %v4938 = vunpack.c.l.b16 %v4930
    %vm4939 = vcmp.ne.s32.totalorder %v4931, 0
    %vm4940 = vcmp.ne.s32.totalorder %v4932, 0
    %vm4941 = vcmp.ne.s32.totalorder %v4933, 0
    %vm4942 = vcmp.ne.s32.totalorder %v4934, 0
    %vm4943 = vcmp.ne.s32.totalorder %v4935, 0
    %vm4944 = vcmp.ne.s32.totalorder %v4936, 0
    %vm4945 = vcmp.ne.s32.totalorder %v4937, 0
    %vm4946 = vcmp.ne.s32.totalorder %v4938, 0
    %v4947 = vsel %vm4939, 1, 0
    %v4948 = vsel %vm4940, 1, 0
    %v4949 = vsel %vm4941, 1, 0
    %v4950 = vsel %vm4942, 1, 0
    %v4951 = vsel %vm4943, 1, 0
    %v4952 = vsel %vm4944, 1, 0
    %v4953 = vsel %vm4945, 1, 0
    %v4954 = vsel %vm4946, 1, 0
    %4955 = vset.pattern.permute.xlu0 0
    %4956 = vperm.xlu0 %4955, %v4947
    %v4957 = vpop.permute.xlu0 %4956
    %4958 = vset.pattern.permute.xlu0 0
    %4959 = vperm.xlu0 %4958, %v4948
    %v4960 = vpop.permute.xlu0 %4959
    %4961 = vset.pattern.permute.xlu0 0
    %4962 = vperm.xlu0 %4961, %v4949
    %v4963 = vpop.permute.xlu0 %4962
    %4964 = vset.pattern.permute.xlu0 0
    %4965 = vperm.xlu0 %4964, %v4950
    %v4966 = vpop.permute.xlu0 %4965
    %4967 = vset.pattern.permute.xlu0 0
    %4968 = vperm.xlu0 %4967, %v4951
    %v4969 = vpop.permute.xlu0 %4968
    %4970 = vset.pattern.permute.xlu0 0
    %4971 = vperm.xlu0 %4970, %v4952
    %v4972 = vpop.permute.xlu0 %4971
    %4973 = vset.pattern.permute.xlu0 0
    %4974 = vperm.xlu0 %4973, %v4953
    %v4975 = vpop.permute.xlu0 %4974
    %4976 = vset.pattern.permute.xlu0 0
    %4977 = vperm.xlu0 %4976, %v4954
    %v4978 = vpop.permute.xlu0 %4977
    %vm4979 = vcmp.eq.s32.totalorder %v4957, 1
    %vm4980 = vcmp.eq.s32.totalorder %v4960, 1
    %vm4981 = vcmp.eq.s32.totalorder %v4963, 1
    %vm4982 = vcmp.eq.s32.totalorder %v4966, 1
    %vm4983 = vcmp.eq.s32.totalorder %v4969, 1
    %vm4984 = vcmp.eq.s32.totalorder %v4972, 1
    %vm4985 = vcmp.eq.s32.totalorder %v4975, 1
    %vm4986 = vcmp.eq.s32.totalorder %v4978, 1
    %v4987 = vsel %vm4979, %v2359, -inf
    %v4988 = vsel %vm4980, %v2359, -inf
    %v4989 = vsel %vm4981, %v2359, -inf
    %v4990 = vsel %vm4982, %v2359, -inf
    %v4991 = vsel %vm4983, %v2359, -inf
    %v4992 = vsel %vm4984, %v2359, -inf
    %v4993 = vsel %vm4985, %v2359, -inf
    %v4994 = vsel %vm4986, %v2359, -inf
    %v4995 = vrot.slane %v4987, 4
    %v4996 = vmax.f32 %v4987, %v4995
    %v4997 = vrot.slane %v4996, 2
    %v4998 = vmax.f32 %v4996, %v4997
    %v4999 = vrot.slane %v4998, 1
    %v5000 = vmax.f32 %v4998, %v4999
    %v5001 = vrot.slane %v4988, 4
    %v5002 = vmax.f32 %v4988, %v5001
    %v5003 = vrot.slane %v5002, 2
    %v5004 = vmax.f32 %v5002, %v5003
    %v5005 = vrot.slane %v5004, 1
    %v5006 = vmax.f32 %v5004, %v5005
    %v5007 = vrot.slane %v4989, 4
    %v5008 = vmax.f32 %v4989, %v5007
    %v5009 = vrot.slane %v5008, 2
    %v5010 = vmax.f32 %v5008, %v5009
    %v5011 = vrot.slane %v5010, 1
    %v5012 = vmax.f32 %v5010, %v5011
    %v5013 = vrot.slane %v4990, 4
    %v5014 = vmax.f32 %v4990, %v5013
    %v5015 = vrot.slane %v5014, 2
    %v5016 = vmax.f32 %v5014, %v5015
    %v5017 = vrot.slane %v5016, 1
    %v5018 = vmax.f32 %v5016, %v5017
    %v5019 = vrot.slane %v4991, 4
    %v5020 = vmax.f32 %v4991, %v5019
    %v5021 = vrot.slane %v5020, 2
    %v5022 = vmax.f32 %v5020, %v5021
    %v5023 = vrot.slane %v5022, 1
    %v5024 = vmax.f32 %v5022, %v5023
    %v5025 = vrot.slane %v4992, 4
    %v5026 = vmax.f32 %v4992, %v5025
    %v5027 = vrot.slane %v5026, 2
    %v5028 = vmax.f32 %v5026, %v5027
    %v5029 = vrot.slane %v5028, 1
    %v5030 = vmax.f32 %v5028, %v5029
    %v5031 = vrot.slane %v4993, 4
    %v5032 = vmax.f32 %v4993, %v5031
    %v5033 = vrot.slane %v5032, 2
    %v5034 = vmax.f32 %v5032, %v5033
    %v5035 = vrot.slane %v5034, 1
    %v5036 = vmax.f32 %v5034, %v5035
    %v5037 = vrot.slane %v4994, 4
    %v5038 = vmax.f32 %v4994, %v5037
    %v5039 = vrot.slane %v5038, 2
    %v5040 = vmax.f32 %v5038, %v5039
    %v5041 = vrot.slane %v5040, 1
    %v5042 = vmax.f32 %v5040, %v5041
    %v5043 = vmax.f32 %v5000, 0.0
    %v5044 = vmax.f32 %v5006, 0.0
    %v5045 = vmax.f32 %v5012, 0.0
    %v5046 = vmax.f32 %v5018, 0.0
    %v5047 = vmax.f32 %v5024, 0.0
    %v5048 = vmax.f32 %v5030, 0.0
    %v5049 = vmax.f32 %v5036, 0.0
    %v5050 = vmax.f32 %v5042, 0.0
    %v5059 = vsel %vm2722, %v5044, %v5043
    %v5060 = vsel %vm2724, %v5045, %v5059
    %v5061 = vsel %vm2726, %v5046, %v5060
    %v5062 = vsel %vm2728, %v5047, %v5061
    %v5063 = vsel %vm2730, %v5048, %v5062
    %v5064 = vsel %vm2732, %v5049, %v5063
    %v5065 = vsel %vm2734, %v5050, %v5064
    %s5067 = scalar_lea.vmem [#allocation13], 512
    %v5068 = vld [vmem:[%s5067] sm:$0xf]
    %v5069 = vld [vmem:[%s5067 + $0x4] sm:$0xf]
    %v5070 = vld [vmem:[%s5067 + $0x8] sm:$0xf]
    %v5071 = vld [vmem:[%s5067 + $0xc] sm:$0xf]
    %v5072 = vld [vmem:[%s5067 + $0x10] sm:$0xf]
    %v5073 = vld [vmem:[%s5067 + $0x14] sm:$0xf]
    %v5074 = vld [vmem:[%s5067 + $0x18] sm:$0xf]
    %v5075 = vld [vmem:[%s5067 + $0x1c] sm:$0xf]
    %v5076 = vld [vmem:[%s5067 + $0x20] sm:$0xf]
    %v5077 = vld [vmem:[%s5067 + $0x24] sm:$0xf]
    %v5078 = vld [vmem:[%s5067 + $0x28] sm:$0xf]
    %v5079 = vld [vmem:[%s5067 + $0x2c] sm:$0xf]
    %v5080 = vld [vmem:[%s5067 + $0x30] sm:$0xf]
    %v5081 = vld [vmem:[%s5067 + $0x34] sm:$0xf]
    %v5082 = vld [vmem:[%s5067 + $0x38] sm:$0xf]
    %v5083 = vld [vmem:[%s5067 + $0x3c] sm:$0xf]
    %v5084 = vld [vmem:[%s5067 + $0x40] sm:$0xf]
    %v5085 = vld [vmem:[%s5067 + $0x44] sm:$0xf]
    %v5086 = vld [vmem:[%s5067 + $0x48] sm:$0xf]
    %v5087 = vld [vmem:[%s5067 + $0x4c] sm:$0xf]
    %v5088 = vld [vmem:[%s5067 + $0x50] sm:$0xf]
    %v5089 = vld [vmem:[%s5067 + $0x54] sm:$0xf]
    %v5090 = vld [vmem:[%s5067 + $0x58] sm:$0xf]
    %v5091 = vld [vmem:[%s5067 + $0x5c] sm:$0xf]
    %v5092 = vld [vmem:[%s5067 + $0x60] sm:$0xf]
    %v5093 = vld [vmem:[%s5067 + $0x64] sm:$0xf]
    %v5094 = vld [vmem:[%s5067 + $0x68] sm:$0xf]
    %v5095 = vld [vmem:[%s5067 + $0x6c] sm:$0xf]
    %v5096 = vld [vmem:[%s5067 + $0x70] sm:$0xf]
    %v5097 = vld [vmem:[%s5067 + $0x74] sm:$0xf]
    %v5098 = vld [vmem:[%s5067 + $0x78] sm:$0xf]
    %v5099 = vld [vmem:[%s5067 + $0x7c] sm:$0xf]
    %v5100 = vpack.c.bf16 %v5065, %v5065
    %v5101 = vld [vmem:[#allocation18 + $0x3f] ss:$0 sm:$0xff]
    %v5134 = vunpack.c.l.b16 %v5068
    %v5135 = vunpack.c.l.b16 %v5069
    %v5136 = vunpack.c.l.b16 %v5070
    %v5137 = vunpack.c.l.b16 %v5071
    %v5138 = vunpack.c.l.b16 %v5072
    %v5139 = vunpack.c.l.b16 %v5073
    %v5140 = vunpack.c.l.b16 %v5074
    %v5141 = vunpack.c.l.b16 %v5075
    %v5142 = vunpack.c.l.b16 %v5076
    %v5143 = vunpack.c.l.b16 %v5077
    %v5144 = vunpack.c.l.b16 %v5078
    %v5145 = vunpack.c.l.b16 %v5079
    %v5146 = vunpack.c.l.b16 %v5080
    %v5147 = vunpack.c.l.b16 %v5081
    %v5148 = vunpack.c.l.b16 %v5082
    %v5149 = vunpack.c.l.b16 %v5083
    %v5150 = vunpack.c.l.b16 %v5084
    %v5151 = vunpack.c.l.b16 %v5085
    %v5152 = vunpack.c.l.b16 %v5086
    %v5153 = vunpack.c.l.b16 %v5087
    %v5154 = vunpack.c.l.b16 %v5088
    %v5155 = vunpack.c.l.b16 %v5089
    %v5156 = vunpack.c.l.b16 %v5090
    %v5157 = vunpack.c.l.b16 %v5091
    %v5158 = vunpack.c.l.b16 %v5092
    %v5159 = vunpack.c.l.b16 %v5093
    %v5160 = vunpack.c.l.b16 %v5094
    %v5161 = vunpack.c.l.b16 %v5095
    %v5162 = vunpack.c.l.b16 %v5096
    %v5163 = vunpack.c.l.b16 %v5097
    %v5164 = vunpack.c.l.b16 %v5098
    %v5165 = vunpack.c.l.b16 %v5099
    %v5166 = vpack.c.b16 %v5135, %v5134
    %v5167 = vpack.c.b16 %v5137, %v5136
    %v5168 = vpack.c.b16 %v5139, %v5138
    %v5169 = vpack.c.b16 %v5141, %v5140
    %v5170 = vpack.c.b16 %v5143, %v5142
    %v5171 = vpack.c.b16 %v5145, %v5144
    %v5172 = vpack.c.b16 %v5147, %v5146
    %v5173 = vpack.c.b16 %v5149, %v5148
    %v5174 = vpack.c.b16 %v5151, %v5150
    %v5175 = vpack.c.b16 %v5153, %v5152
    %v5176 = vpack.c.b16 %v5155, %v5154
    %v5177 = vpack.c.b16 %v5157, %v5156
    %v5178 = vpack.c.b16 %v5159, %v5158
    %v5179 = vpack.c.b16 %v5161, %v5160
    %v5180 = vpack.c.b16 %v5163, %v5162
    %v5181 = vpack.c.b16 %v5165, %v5164
    %5198 = vmatprep.subr.bf16.mxu0 0
    %5199 = vmatpush1.bf16.msra.mxu0 %v5166
    %5200 = vmatprep.subr.bf16.mxu0 0
    %5201 = vmatpush1.bf16.msra.mxu0 %v5167
    %5202 = vmatprep.subr.bf16.mxu0 0
    %5203 = vmatpush1.bf16.msra.mxu0 %v5168
    %5204 = vmatprep.subr.bf16.mxu0 0
    %5205 = vmatpush1.bf16.msra.mxu0 %v5169
    %5206 = vmatprep.subr.bf16.mxu0 0
    %5207 = vmatpush1.bf16.msra.mxu0 %v5170
    %5208 = vmatprep.subr.bf16.mxu0 0
    %5209 = vmatpush1.bf16.msra.mxu0 %v5171
    %5210 = vmatprep.subr.bf16.mxu0 0
    %5211 = vmatpush1.bf16.msra.mxu0 %v5172
    %5212 = vmatprep.subr.bf16.mxu0 0
    %5213 = vmatpush1.bf16.msra.mxu0 %v5173
    %5214 = vmatprep.subr.bf16.mxu0 0
    %5215 = vmatpush1.bf16.msra.mxu0 %v5174
    %5216 = vmatprep.subr.bf16.mxu0 0
    %5217 = vmatpush1.bf16.msra.mxu0 %v5175
    %5218 = vmatprep.subr.bf16.mxu0 0
    %5219 = vmatpush1.bf16.msra.mxu0 %v5176
    %5220 = vmatprep.subr.bf16.mxu0 0
    %5221 = vmatpush1.bf16.msra.mxu0 %v5177
    %5222 = vmatprep.subr.bf16.mxu0 0
    %5223 = vmatpush1.bf16.msra.mxu0 %v5178
    %5224 = vmatprep.subr.bf16.mxu0 0
    %5225 = vmatpush1.bf16.msra.mxu0 %v5179
    %5226 = vmatprep.subr.bf16.mxu0 0
    %5227 = vmatpush1.bf16.msra.mxu0 %v5180
    %5228 = vmatprep.subr.bf16.mxu0 0
    %5229 = vmatpush1.bf16.msra.mxu0 %v5181
    %5230 = vmatprep.mubr.bf16.mxu0 %v5100
    %5231 = vmatmul.mubr.bf16.gmra.mrb[0].mxu0 %v1866
    %v5232 = vpop.f32.mrb[0].mxu0
    %v5233 = vadd.f32 %v5101, %v5232
    %v5234 = vpop.f32.mrb[0].mxu0
    %v5235 = vpop.f32.mrb[0].mxu0
    %v5236 = vpop.f32.mrb[0].mxu0
    %5237 = vdwg.mxu0
    %v5238 = vmax.f32 %v5233, 0.0
    %v5239 = vadd.f32 %v4850, %v5238
    %s5240 = scalar_lea.vmem %s5, 20
    %v5241 = vld [vmem:[%s5240] sm:$0xf]
    %v5243 = vpack.i.b16 %v5241, %v5241
    %v5245 = vlaneseq
    %v5246 = vshrl.u32 %v5245, 7
    %v5247 = vsub.s32 0, %v5246
    %v5248 = vrot.slane %v5243, %v5247
    %5250 = vbcast.lane.c.b16.xlu0 %v5248, 256
    %v5251 = vpop.permute.xlu0 %5250
    %v5252 = vshrl.u32 %v5241, 16
    %v5253 = vpack.i.b16 %v5252, %v5252
    %v5255 = vlaneseq
    %v5256 = vshrl.u32 %v5255, 7
    %v5257 = vsub.s32 0, %v5256
    %v5258 = vrot.slane %v5253, %v5257
    %5260 = vbcast.lane.c.b16.xlu0 %v5258, 256
    %v5261 = vpop.permute.xlu0 %5260
    %v5262 = vlaneseq
    %v5263 = vshrl.u32 %v5262, 7
    %v5264 = vsub.s32 1, %v5263
    %v5265 = vrot.slane %v5243, %v5264
    %5267 = vbcast.lane.c.b16.xlu0 %v5265, 256
    %v5268 = vpop.permute.xlu0 %5267
    %v5269 = vlaneseq
    %v5270 = vshrl.u32 %v5269, 7
    %v5271 = vsub.s32 1, %v5270
    %v5272 = vrot.slane %v5253, %v5271
    %5274 = vbcast.lane.c.b16.xlu0 %v5272, 256
    %v5275 = vpop.permute.xlu0 %5274
    %v5276 = vlaneseq
    %v5277 = vshrl.u32 %v5276, 7
    %v5278 = vsub.s32 2, %v5277
    %v5279 = vrot.slane %v5243, %v5278
    %5281 = vbcast.lane.c.b16.xlu0 %v5279, 256
    %v5282 = vpop.permute.xlu0 %5281
    %v5283 = vlaneseq
    %v5284 = vshrl.u32 %v5283, 7
    %v5285 = vsub.s32 2, %v5284
    %v5286 = vrot.slane %v5253, %v5285
    %5288 = vbcast.lane.c.b16.xlu0 %v5286, 256
    %v5289 = vpop.permute.xlu0 %5288
    %v5290 = vlaneseq
    %v5291 = vshrl.u32 %v5290, 7
    %v5292 = vsub.s32 3, %v5291
    %v5293 = vrot.slane %v5243, %v5292
    %5295 = vbcast.lane.c.b16.xlu0 %v5293, 256
    %v5296 = vpop.permute.xlu0 %5295
    %v5297 = vlaneseq
    %v5298 = vshrl.u32 %v5297, 7
    %v5299 = vsub.s32 3, %v5298
    %v5300 = vrot.slane %v5253, %v5299
    %5302 = vbcast.lane.c.b16.xlu0 %v5300, 256
    %v5303 = vpop.permute.xlu0 %5302
    %vm5304 = vcmp.gt.bf16.partialorder %v5251, 0
    %vm5305 = vcmp.gt.bf16.partialorder %v5261, 0
    %vm5306 = vcmp.gt.bf16.partialorder %v5268, 0
    %vm5307 = vcmp.gt.bf16.partialorder %v5275, 0
    %vm5308 = vcmp.gt.bf16.partialorder %v5282, 0
    %vm5309 = vcmp.gt.bf16.partialorder %v5289, 0
    %vm5310 = vcmp.gt.bf16.partialorder %v5296, 0
    %vm5311 = vcmp.gt.bf16.partialorder %v5303, 0
    %v5312 = vsel %vm5304, 65537, 0
    %v5313 = vsel %vm5305, 65537, 0
    %v5314 = vsel %vm5306, 65537, 0
    %v5315 = vsel %vm5307, 65537, 0
    %v5316 = vsel %vm5308, 65537, 0
    %v5317 = vsel %vm5309, 65537, 0
    %v5318 = vsel %vm5310, 65537, 0
    %v5319 = vsel %vm5311, 65537, 0
    %v5320 = vunpack.c.l.b16 %v5312
    %v5321 = vunpack.c.l.b16 %v5313
    %v5322 = vunpack.c.l.b16 %v5314
    %v5323 = vunpack.c.l.b16 %v5315
    %v5324 = vunpack.c.l.b16 %v5316
    %v5325 = vunpack.c.l.b16 %v5317
    %v5326 = vunpack.c.l.b16 %v5318
    %v5327 = vunpack.c.l.b16 %v5319
    %vm5328 = vcmp.ne.s32.totalorder %v5320, 0
    %vm5329 = vcmp.ne.s32.totalorder %v5321, 0
    %vm5330 = vcmp.ne.s32.totalorder %v5322, 0
    %vm5331 = vcmp.ne.s32.totalorder %v5323, 0
    %vm5332 = vcmp.ne.s32.totalorder %v5324, 0
    %vm5333 = vcmp.ne.s32.totalorder %v5325, 0
    %vm5334 = vcmp.ne.s32.totalorder %v5326, 0
    %vm5335 = vcmp.ne.s32.totalorder %v5327, 0
    %v5336 = vsel %vm5328, 1, 0
    %v5337 = vsel %vm5329, 1, 0
    %v5338 = vsel %vm5330, 1, 0
    %v5339 = vsel %vm5331, 1, 0
    %v5340 = vsel %vm5332, 1, 0
    %v5341 = vsel %vm5333, 1, 0
    %v5342 = vsel %vm5334, 1, 0
    %v5343 = vsel %vm5335, 1, 0
    %5344 = vset.pattern.permute.xlu0 0
    %5345 = vperm.xlu0 %5344, %v5336
    %v5346 = vpop.permute.xlu0 %5345
    %5347 = vset.pattern.permute.xlu0 0
    %5348 = vperm.xlu0 %5347, %v5337
    %v5349 = vpop.permute.xlu0 %5348
    %5350 = vset.pattern.permute.xlu0 0
    %5351 = vperm.xlu0 %5350, %v5338
    %v5352 = vpop.permute.xlu0 %5351
    %5353 = vset.pattern.permute.xlu0 0
    %5354 = vperm.xlu0 %5353, %v5339
    %v5355 = vpop.permute.xlu0 %5354
    %5356 = vset.pattern.permute.xlu0 0
    %5357 = vperm.xlu0 %5356, %v5340
    %v5358 = vpop.permute.xlu0 %5357
    %5359 = vset.pattern.permute.xlu0 0
    %5360 = vperm.xlu0 %5359, %v5341
    %v5361 = vpop.permute.xlu0 %5360
    %5362 = vset.pattern.permute.xlu0 0
    %5363 = vperm.xlu0 %5362, %v5342
    %v5364 = vpop.permute.xlu0 %5363
    %5365 = vset.pattern.permute.xlu0 0
    %5366 = vperm.xlu0 %5365, %v5343
    %v5367 = vpop.permute.xlu0 %5366
    %vm5368 = vcmp.eq.s32.totalorder %v5346, 1
    %vm5369 = vcmp.eq.s32.totalorder %v5349, 1
    %vm5370 = vcmp.eq.s32.totalorder %v5352, 1
    %vm5371 = vcmp.eq.s32.totalorder %v5355, 1
    %vm5372 = vcmp.eq.s32.totalorder %v5358, 1
    %vm5373 = vcmp.eq.s32.totalorder %v5361, 1
    %vm5374 = vcmp.eq.s32.totalorder %v5364, 1
    %vm5375 = vcmp.eq.s32.totalorder %v5367, 1
    %v5376 = vsel %vm5368, %v2513, -inf
    %v5377 = vsel %vm5369, %v2513, -inf
    %v5378 = vsel %vm5370, %v2513, -inf
    %v5379 = vsel %vm5371, %v2513, -inf
    %v5380 = vsel %vm5372, %v2513, -inf
    %v5381 = vsel %vm5373, %v2513, -inf
    %v5382 = vsel %vm5374, %v2513, -inf
    %v5383 = vsel %vm5375, %v2513, -inf
    %v5384 = vrot.slane %v5376, 4
    %v5385 = vmax.f32 %v5376, %v5384
    %v5386 = vrot.slane %v5385, 2
    %v5387 = vmax.f32 %v5385, %v5386
    %v5388 = vrot.slane %v5387, 1
    %v5389 = vmax.f32 %v5387, %v5388
    %v5390 = vrot.slane %v5377, 4
    %v5391 = vmax.f32 %v5377, %v5390
    %v5392 = vrot.slane %v5391, 2
    %v5393 = vmax.f32 %v5391, %v5392
    %v5394 = vrot.slane %v5393, 1
    %v5395 = vmax.f32 %v5393, %v5394
    %v5396 = vrot.slane %v5378, 4
    %v5397 = vmax.f32 %v5378, %v5396
    %v5398 = vrot.slane %v5397, 2
    %v5399 = vmax.f32 %v5397, %v5398
    %v5400 = vrot.slane %v5399, 1
    %v5401 = vmax.f32 %v5399, %v5400
    %v5402 = vrot.slane %v5379, 4
    %v5403 = vmax.f32 %v5379, %v5402
    %v5404 = vrot.slane %v5403, 2
    %v5405 = vmax.f32 %v5403, %v5404
    %v5406 = vrot.slane %v5405, 1
    %v5407 = vmax.f32 %v5405, %v5406
    %v5408 = vrot.slane %v5380, 4
    %v5409 = vmax.f32 %v5380, %v5408
    %v5410 = vrot.slane %v5409, 2
    %v5411 = vmax.f32 %v5409, %v5410
    %v5412 = vrot.slane %v5411, 1
    %v5413 = vmax.f32 %v5411, %v5412
    %v5414 = vrot.slane %v5381, 4
    %v5415 = vmax.f32 %v5381, %v5414
    %v5416 = vrot.slane %v5415, 2
    %v5417 = vmax.f32 %v5415, %v5416
    %v5418 = vrot.slane %v5417, 1
    %v5419 = vmax.f32 %v5417, %v5418
    %v5420 = vrot.slane %v5382, 4
    %v5421 = vmax.f32 %v5382, %v5420
    %v5422 = vrot.slane %v5421, 2
    %v5423 = vmax.f32 %v5421, %v5422
    %v5424 = vrot.slane %v5423, 1
    %v5425 = vmax.f32 %v5423, %v5424
    %v5426 = vrot.slane %v5383, 4
    %v5427 = vmax.f32 %v5383, %v5426
    %v5428 = vrot.slane %v5427, 2
    %v5429 = vmax.f32 %v5427, %v5428
    %v5430 = vrot.slane %v5429, 1
    %v5431 = vmax.f32 %v5429, %v5430
    %v5432 = vmax.f32 %v5389, 0.0
    %v5433 = vmax.f32 %v5395, 0.0
    %v5434 = vmax.f32 %v5401, 0.0
    %v5435 = vmax.f32 %v5407, 0.0
    %v5436 = vmax.f32 %v5413, 0.0
    %v5437 = vmax.f32 %v5419, 0.0
    %v5438 = vmax.f32 %v5425, 0.0
    %v5439 = vmax.f32 %v5431, 0.0
    %v5448 = vsel %vm2722, %v5433, %v5432
    %v5449 = vsel %vm2724, %v5434, %v5448
    %v5450 = vsel %vm2726, %v5435, %v5449
    %v5451 = vsel %vm2728, %v5436, %v5450
    %v5452 = vsel %vm2730, %v5437, %v5451
    %v5453 = vsel %vm2732, %v5438, %v5452
    %v5454 = vsel %vm2734, %v5439, %v5453
    %s5456 = scalar_lea.vmem [#allocation13], 640
    %v5457 = vld [vmem:[%s5456] sm:$0xf]
    %v5458 = vld [vmem:[%s5456 + $0x4] sm:$0xf]
    %v5459 = vld [vmem:[%s5456 + $0x8] sm:$0xf]
    %v5460 = vld [vmem:[%s5456 + $0xc] sm:$0xf]
    %v5461 = vld [vmem:[%s5456 + $0x10] sm:$0xf]
    %v5462 = vld [vmem:[%s5456 + $0x14] sm:$0xf]
    %v5463 = vld [vmem:[%s5456 + $0x18] sm:$0xf]
    %v5464 = vld [vmem:[%s5456 + $0x1c] sm:$0xf]
    %v5465 = vld [vmem:[%s5456 + $0x20] sm:$0xf]
    %v5466 = vld [vmem:[%s5456 + $0x24] sm:$0xf]
    %v5467 = vld [vmem:[%s5456 + $0x28] sm:$0xf]
    %v5468 = vld [vmem:[%s5456 + $0x2c] sm:$0xf]
    %v5469 = vld [vmem:[%s5456 + $0x30] sm:$0xf]
    %v5470 = vld [vmem:[%s5456 + $0x34] sm:$0xf]
    %v5471 = vld [vmem:[%s5456 + $0x38] sm:$0xf]
    %v5472 = vld [vmem:[%s5456 + $0x3c] sm:$0xf]
    %v5473 = vld [vmem:[%s5456 + $0x40] sm:$0xf]
    %v5474 = vld [vmem:[%s5456 + $0x44] sm:$0xf]
    %v5475 = vld [vmem:[%s5456 + $0x48] sm:$0xf]
    %v5476 = vld [vmem:[%s5456 + $0x4c] sm:$0xf]
    %v5477 = vld [vmem:[%s5456 + $0x50] sm:$0xf]
    %v5478 = vld [vmem:[%s5456 + $0x54] sm:$0xf]
    %v5479 = vld [vmem:[%s5456 + $0x58] sm:$0xf]
    %v5480 = vld [vmem:[%s5456 + $0x5c] sm:$0xf]
    %v5481 = vld [vmem:[%s5456 + $0x60] sm:$0xf]
    %v5482 = vld [vmem:[%s5456 + $0x64] sm:$0xf]
    %v5483 = vld [vmem:[%s5456 + $0x68] sm:$0xf]
    %v5484 = vld [vmem:[%s5456 + $0x6c] sm:$0xf]
    %v5485 = vld [vmem:[%s5456 + $0x70] sm:$0xf]
    %v5486 = vld [vmem:[%s5456 + $0x74] sm:$0xf]
    %v5487 = vld [vmem:[%s5456 + $0x78] sm:$0xf]
    %v5488 = vld [vmem:[%s5456 + $0x7c] sm:$0xf]
    %v5489 = vpack.c.bf16 %v5454, %v5454
    %v5490 = vld [vmem:[#allocation18 + $0x70] ss:$0 sm:$0xff]
    %v5523 = vunpack.c.l.b16 %v5457
    %v5524 = vunpack.c.l.b16 %v5458
    %v5525 = vunpack.c.l.b16 %v5459
    %v5526 = vunpack.c.l.b16 %v5460
    %v5527 = vunpack.c.l.b16 %v5461
    %v5528 = vunpack.c.l.b16 %v5462
    %v5529 = vunpack.c.l.b16 %v5463
    %v5530 = vunpack.c.l.b16 %v5464
    %v5531 = vunpack.c.l.b16 %v5465
    %v5532 = vunpack.c.l.b16 %v5466
    %v5533 = vunpack.c.l.b16 %v5467
    %v5534 = vunpack.c.l.b16 %v5468
    %v5535 = vunpack.c.l.b16 %v5469
    %v5536 = vunpack.c.l.b16 %v5470
    %v5537 = vunpack.c.l.b16 %v5471
    %v5538 = vunpack.c.l.b16 %v5472
    %v5539 = vunpack.c.l.b16 %v5473
    %v5540 = vunpack.c.l.b16 %v5474
    %v5541 = vunpack.c.l.b16 %v5475
    %v5542 = vunpack.c.l.b16 %v5476
    %v5543 = vunpack.c.l.b16 %v5477
    %v5544 = vunpack.c.l.b16 %v5478
    %v5545 = vunpack.c.l.b16 %v5479
    %v5546 = vunpack.c.l.b16 %v5480
    %v5547 = vunpack.c.l.b16 %v5481
    %v5548 = vunpack.c.l.b16 %v5482
    %v5549 = vunpack.c.l.b16 %v5483
    %v5550 = vunpack.c.l.b16 %v5484
    %v5551 = vunpack.c.l.b16 %v5485
    %v5552 = vunpack.c.l.b16 %v5486
    %v5553 = vunpack.c.l.b16 %v5487
    %v5554 = vunpack.c.l.b16 %v5488
    %v5555 = vpack.c.b16 %v5524, %v5523
    %v5556 = vpack.c.b16 %v5526, %v5525
    %v5557 = vpack.c.b16 %v5528, %v5527
    %v5558 = vpack.c.b16 %v5530, %v5529
    %v5559 = vpack.c.b16 %v5532, %v5531
    %v5560 = vpack.c.b16 %v5534, %v5533
    %v5561 = vpack.c.b16 %v5536, %v5535
    %v5562 = vpack.c.b16 %v5538, %v5537
    %v5563 = vpack.c.b16 %v5540, %v5539
    %v5564 = vpack.c.b16 %v5542, %v5541
    %v5565 = vpack.c.b16 %v5544, %v5543
    %v5566 = vpack.c.b16 %v5546, %v5545
    %v5567 = vpack.c.b16 %v5548, %v5547
    %v5568 = vpack.c.b16 %v5550, %v5549
    %v5569 = vpack.c.b16 %v5552, %v5551
    %v5570 = vpack.c.b16 %v5554, %v5553
    %5587 = vmatprep.subr.bf16.mxu0 0
    %5588 = vmatpush1.bf16.msra.mxu0 %v5555
    %5589 = vmatprep.subr.bf16.mxu0 0
    %5590 = vmatpush1.bf16.msra.mxu0 %v5556
    %5591 = vmatprep.subr.bf16.mxu0 0
    %5592 = vmatpush1.bf16.msra.mxu0 %v5557
    %5593 = vmatprep.subr.bf16.mxu0 0
    %5594 = vmatpush1.bf16.msra.mxu0 %v5558
    %5595 = vmatprep.subr.bf16.mxu0 0
    %5596 = vmatpush1.bf16.msra.mxu0 %v5559
    %5597 = vmatprep.subr.bf16.mxu0 0
    %5598 = vmatpush1.bf16.msra.mxu0 %v5560
    %5599 = vmatprep.subr.bf16.mxu0 0
    %5600 = vmatpush1.bf16.msra.mxu0 %v5561
    %5601 = vmatprep.subr.bf16.mxu0 0
    %5602 = vmatpush1.bf16.msra.mxu0 %v5562
    %5603 = vmatprep.subr.bf16.mxu0 0
    %5604 = vmatpush1.bf16.msra.mxu0 %v5563
    %5605 = vmatprep.subr.bf16.mxu0 0
    %5606 = vmatpush1.bf16.msra.mxu0 %v5564
    %5607 = vmatprep.subr.bf16.mxu0 0
    %5608 = vmatpush1.bf16.msra.mxu0 %v5565
    %5609 = vmatprep.subr.bf16.mxu0 0
    %5610 = vmatpush1.bf16.msra.mxu0 %v5566
    %5611 = vmatprep.subr.bf16.mxu0 0
    %5612 = vmatpush1.bf16.msra.mxu0 %v5567
    %5613 = vmatprep.subr.bf16.mxu0 0
    %5614 = vmatpush1.bf16.msra.mxu0 %v5568
    %5615 = vmatprep.subr.bf16.mxu0 0
    %5616 = vmatpush1.bf16.msra.mxu0 %v5569
    %5617 = vmatprep.subr.bf16.mxu0 0
    %5618 = vmatpush1.bf16.msra.mxu0 %v5570
    %5619 = vmatprep.mubr.bf16.mxu0 %v5489
    %5620 = vmatmul.mubr.bf16.gmra.mrb[0].mxu0 %v1866
    %v5621 = vpop.f32.mrb[0].mxu0
    %v5622 = vadd.f32 %v5490, %v5621
    %v5623 = vpop.f32.mrb[0].mxu0
    %v5624 = vpop.f32.mrb[0].mxu0
    %v5625 = vpop.f32.mrb[0].mxu0
    %5626 = vdwg.mxu0
    %v5627 = vmax.f32 %v5622, 0.0
    %v5628 = vadd.f32 %v5239, %v5627
    %v5629 = vpack.c.bf16 %v5628, %v5628
    %5630 = vmatprep.subr.bf16.mxu0 %v1966
    %5631 = vmatpush1.bf16.msra.mxu0 %v1965
    %5632 = vmatprep.subr.bf16.mxu0 %v1969
    %5633 = vmatpush1.bf16.msra.mxu0 %v1968
    %5634 = vmatprep.subr.bf16.mxu0 %v1972
    %5635 = vmatpush1.bf16.msra.mxu0 %v1971
    %5636 = vmatprep.subr.bf16.mxu0 %v1975
    %5637 = vmatpush1.bf16.msra.mxu0 %v1974
    %5638 = vmatprep.subr.bf16.mxu0 %v1978
    %5639 = vmatpush1.bf16.msra.mxu0 %v1977
    %5640 = vmatprep.subr.bf16.mxu0 %v1981
    %5641 = vmatpush1.bf16.msra.mxu0 %v1980
    %5642 = vmatprep.subr.bf16.mxu0 %v1984
    %5643 = vmatpush1.bf16.msra.mxu0 %v1983
    %5644 = vmatprep.subr.bf16.mxu0 %v1987
    %5645 = vmatpush1.bf16.msra.mxu0 %v1986
    %5646 = vmatprep.subr.bf16.mxu0 0
    %5647 = vmatpush1.bf16.msra.mxu0 0
    %5648 = vmatprep.subr.bf16.mxu0 0
    %5649 = vmatpush1.bf16.msra.mxu0 0
    %5650 = vmatprep.subr.bf16.mxu0 0
    %5651 = vmatpush1.bf16.msra.mxu0 0
    %5652 = vmatprep.subr.bf16.mxu0 0
    %5653 = vmatpush1.bf16.msra.mxu0 0
    %5654 = vmatprep.subr.bf16.mxu0 0
    %5655 = vmatpush1.bf16.msra.mxu0 0
    %5656 = vmatprep.subr.bf16.mxu0 0
    %5657 = vmatpush1.bf16.msra.mxu0 0
    %5658 = vmatprep.subr.bf16.mxu0 0
    %5659 = vmatpush1.bf16.msra.mxu0 0
    %5660 = vmatprep.subr.bf16.mxu0 0
    %5661 = vmatpush1.bf16.msra.mxu0 0
    %5662 = vmatprep.mubr.bf16.mxu0 0
    %5663 = vmatmul.mubr.bf16.gmra.mrb[0].mxu0 %v5629
    %v5664 = vpop.f32.mrb[0].mxu0
    %v5665 = vadd.f32 %v1873, %v5664
    %v5666 = vpop.f32.mrb[0].mxu0
    %v5667 = vadd.f32 %v1877, %v5666
    %v5668 = vpop.f32.mrb[0].mxu0
    %v5669 = vpop.f32.mrb[0].mxu0
    %5670 = vdwg.mxu0
    %5671 = vmatprep.subr.bf16.mxu0 0
    %5672 = vmatpush1.bf16.msra.mxu0 %v1967
    %5673 = vmatprep.subr.bf16.mxu0 0
    %5674 = vmatpush1.bf16.msra.mxu0 %v1970
    %5675 = vmatprep.subr.bf16.mxu0 0
    %5676 = vmatpush1.bf16.msra.mxu0 %v1973
    %5677 = vmatprep.subr.bf16.mxu0 0
    %5678 = vmatpush1.bf16.msra.mxu0 %v1976
    %5679 = vmatprep.subr.bf16.mxu0 0
    %5680 = vmatpush1.bf16.msra.mxu0 %v1979
    %5681 = vmatprep.subr.bf16.mxu0 0
    %5682 = vmatpush1.bf16.msra.mxu0 %v1982
    %5683 = vmatprep.subr.bf16.mxu0 0
    %5684 = vmatpush1.bf16.msra.mxu0 %v1985
    %5685 = vmatprep.subr.bf16.mxu0 0
    %5686 = vmatpush1.bf16.msra.mxu0 %v1988
    %5687 = vmatprep.subr.bf16.mxu0 0
    %5688 = vmatpush1.bf16.msra.mxu0 0
    %5689 = vmatprep.subr.bf16.mxu0 0
    %5690 = vmatpush1.bf16.msra.mxu0 0
    %5691 = vmatprep.subr.bf16.mxu0 0
    %5692 = vmatpush1.bf16.msra.mxu0 0
    %5693 = vmatprep.subr.bf16.mxu0 0
    %5694 = vmatpush1.bf16.msra.mxu0 0
    %5695 = vmatprep.subr.bf16.mxu0 0
    %5696 = vmatpush1.bf16.msra.mxu0 0
    %5697 = vmatprep.subr.bf16.mxu0 0
    %5698 = vmatpush1.bf16.msra.mxu0 0
    %5699 = vmatprep.subr.bf16.mxu0 0
    %5700 = vmatpush1.bf16.msra.mxu0 0
    %5701 = vmatprep.subr.bf16.mxu0 0
    %5702 = vmatpush1.bf16.msra.mxu0 0
    %5703 = vmatprep.mubr.bf16.mxu0 0
    %5704 = vmatmul.mubr.bf16.gmra.mrb[0].mxu0 %v5629
    %v5705 = vpop.f32.mrb[0].mxu0
    %v5706 = vadd.f32 %v1881, %v5705
    %v5707 = vpop.f32.mrb[0].mxu0
    %v5708 = vpop.f32.mrb[0].mxu0
    %v5709 = vpop.f32.mrb[0].mxu0
    %5710 = vdwg.mxu0
    %v5711 = vmax.f32 %v5665, 0.0
    %v5712 = vmax.f32 %v5667, 0.0
    %v5713 = vmax.f32 %v5706, 0.0
    %v5714 = vpack.c.bf16 %v3685, %v3685
    %5715 = vmatprep.subr.bf16.mxu0 0
    %5716 = vmatpush1.bf16.msra.mxu0 %v2231
    %5717 = vmatprep.subr.bf16.mxu0 0
    %5718 = vmatpush1.bf16.msra.mxu0 %v2234
    %5719 = vmatprep.subr.bf16.mxu0 0
    %5720 = vmatpush1.bf16.msra.mxu0 %v2237
    %5721 = vmatprep.subr.bf16.mxu0 0
    %5722 = vmatpush1.bf16.msra.mxu0 %v2240
    %5723 = vmatprep.subr.bf16.mxu0 0
    %5724 = vmatpush1.bf16.msra.mxu0 %v2243
    %5725 = vmatprep.subr.bf16.mxu0 0
    %5726 = vmatpush1.bf16.msra.mxu0 %v2246
    %5727 = vmatprep.subr.bf16.mxu0 0
    %5728 = vmatpush1.bf16.msra.mxu0 %v2249
    %5729 = vmatprep.subr.bf16.mxu0 0
    %5730 = vmatpush1.bf16.msra.mxu0 %v2252
    %5731 = vmatprep.subr.bf16.mxu0 0
    %5732 = vmatpush1.bf16.msra.mxu0 0
    %5733 = vmatprep.subr.bf16.mxu0 0
    %5734 = vmatpush1.bf16.msra.mxu0 0
    %5735 = vmatprep.subr.bf16.mxu0 0
    %5736 = vmatpush1.bf16.msra.mxu0 0
    %5737 = vmatprep.subr.bf16.mxu0 0
    %5738 = vmatpush1.bf16.msra.mxu0 0
    %5739 = vmatprep.subr.bf16.mxu0 0
    %5740 = vmatpush1.bf16.msra.mxu0 0
    %5741 = vmatprep.subr.bf16.mxu0 0
    %5742 = vmatpush1.bf16.msra.mxu0 0
    %5743 = vmatprep.subr.bf16.mxu0 0
    %5744 = vmatpush1.bf16.msra.mxu0 0
    %5745 = vmatprep.subr.bf16.mxu0 0
    %5746 = vmatpush1.bf16.msra.mxu0 0
    %5747 = vmatprep.mubr.bf16.mxu0 0
    %5748 = vmatmul.mubr.bf16.gmra.mrb[0].mxu0 %v5714
    %v5749 = vpop.f32.mrb[0].mxu0
    %v5750 = vadd.f32 %v2145, %v5749
    %v5751 = vpop.f32.mrb[0].mxu0
    %v5752 = vpop.f32.mrb[0].mxu0
    %v5753 = vpop.f32.mrb[0].mxu0
    %5754 = vdwg.mxu0
    %v5755 = vmax.f32 %v5750, 0.0
    %v5756 = vpack.c.bf16 %v4462, %v4462
    %5757 = vmatprep.subr.bf16.mxu0 %v2441
    %5758 = vmatpush1.bf16.msra.mxu0 %v2440
    %5759 = vmatprep.subr.bf16.mxu0 %v2443
    %5760 = vmatpush1.bf16.msra.mxu0 %v2442
    %5761 = vmatprep.subr.bf16.mxu0 %v2445
    %5762 = vmatpush1.bf16.msra.mxu0 %v2444
    %5763 = vmatprep.subr.bf16.mxu0 %v2447
    %5764 = vmatpush1.bf16.msra.mxu0 %v2446
    %5765 = vmatprep.subr.bf16.mxu0 %v2449
    %5766 = vmatpush1.bf16.msra.mxu0 %v2448
    %5767 = vmatprep.subr.bf16.mxu0 %v2451
    %5768 = vmatpush1.bf16.msra.mxu0 %v2450
    %5769 = vmatprep.subr.bf16.mxu0 %v2453
    %5770 = vmatpush1.bf16.msra.mxu0 %v2452
    %5771 = vmatprep.subr.bf16.mxu0 %v2455
    %5772 = vmatpush1.bf16.msra.mxu0 %v2454
    %5773 = vmatprep.subr.bf16.mxu0 0
    %5774 = vmatpush1.bf16.msra.mxu0 0
    %5775 = vmatprep.subr.bf16.mxu0 0
    %5776 = vmatpush1.bf16.msra.mxu0 0
    %5777 = vmatprep.subr.bf16.mxu0 0
    %5778 = vmatpush1.bf16.msra.mxu0 0
    %5779 = vmatprep.subr.bf16.mxu0 0
    %5780 = vmatpush1.bf16.msra.mxu0 0
    %5781 = vmatprep.subr.bf16.mxu0 0
    %5782 = vmatpush1.bf16.msra.mxu0 0
    %5783 = vmatprep.subr.bf16.mxu0 0
    %5784 = vmatpush1.bf16.msra.mxu0 0
    %5785 = vmatprep.subr.bf16.mxu0 0
    %5786 = vmatpush1.bf16.msra.mxu0 0
    %5787 = vmatprep.subr.bf16.mxu0 0
    %5788 = vmatpush1.bf16.msra.mxu0 0
    %5789 = vmatprep.mubr.bf16.mxu0 0
    %5790 = vmatmul.mubr.bf16.gmra.mrb[0].mxu0 %v5756
    %v5791 = vpop.f32.mrb[0].mxu0
    %v5792 = vpop.f32.mrb[0].mxu0
    %v5793 = vadd.f32 %v2389, %v5792
    %v5794 = vpop.f32.mrb[0].mxu0
    %v5795 = vpop.f32.mrb[0].mxu0
    %5796 = vdwg.mxu0
    %v5797 = vmax.f32 %v5793, 0.0
    %v5798 = vsel %vm2642, %v5711, -inf
    %v5799 = vsel %vm2643, %v5711, -inf
    %v5800 = vsel %vm2644, %v5711, -inf
    %v5801 = vsel %vm2645, %v5711, -inf
    %v5802 = vsel %vm2646, %v5711, -inf
    %v5803 = vsel %vm2647, %v5711, -inf
    %v5804 = vsel %vm2648, %v5711, -inf
    %v5805 = vsel %vm2649, %v5711, -inf
    %v5806 = vrot.slane %v5798, 4
    %v5807 = vmax.f32 %v5798, %v5806
    %v5808 = vrot.slane %v5807, 2
    %v5809 = vmax.f32 %v5807, %v5808
    %v5810 = vrot.slane %v5809, 1
    %v5811 = vmax.f32 %v5809, %v5810
    %v5812 = vrot.slane %v5799, 4
    %v5813 = vmax.f32 %v5799, %v5812
    %v5814 = vrot.slane %v5813, 2
    %v5815 = vmax.f32 %v5813, %v5814
    %v5816 = vrot.slane %v5815, 1
    %v5817 = vmax.f32 %v5815, %v5816
    %v5818 = vrot.slane %v5800, 4
    %v5819 = vmax.f32 %v5800, %v5818
    %v5820 = vrot.slane %v5819, 2
    %v5821 = vmax.f32 %v5819, %v5820
    %v5822 = vrot.slane %v5821, 1
    %v5823 = vmax.f32 %v5821, %v5822
    %v5824 = vrot.slane %v5801, 4
    %v5825 = vmax.f32 %v5801, %v5824
    %v5826 = vrot.slane %v5825, 2
    %v5827 = vmax.f32 %v5825, %v5826
    %v5828 = vrot.slane %v5827, 1
    %v5829 = vmax.f32 %v5827, %v5828
    %v5830 = vrot.slane %v5802, 4
    %v5831 = vmax.f32 %v5802, %v5830
    %v5832 = vrot.slane %v5831, 2
    %v5833 = vmax.f32 %v5831, %v5832
    %v5834 = vrot.slane %v5833, 1
    %v5835 = vmax.f32 %v5833, %v5834
    %v5836 = vrot.slane %v5803, 4
    %v5837 = vmax.f32 %v5803, %v5836
    %v5838 = vrot.slane %v5837, 2
    %v5839 = vmax.f32 %v5837, %v5838
    %v5840 = vrot.slane %v5839, 1
    %v5841 = vmax.f32 %v5839, %v5840
    %v5842 = vrot.slane %v5804, 4
    %v5843 = vmax.f32 %v5804, %v5842
    %v5844 = vrot.slane %v5843, 2
    %v5845 = vmax.f32 %v5843, %v5844
    %v5846 = vrot.slane %v5845, 1
    %v5847 = vmax.f32 %v5845, %v5846
    %v5848 = vrot.slane %v5805, 4
    %v5849 = vmax.f32 %v5805, %v5848
    %v5850 = vrot.slane %v5849, 2
    %v5851 = vmax.f32 %v5849, %v5850
    %v5852 = vrot.slane %v5851, 1
    %v5853 = vmax.f32 %v5851, %v5852
    %v5854 = vmax.f32 %v5811, 0.0
    %v5855 = vmax.f32 %v5817, 0.0
    %v5856 = vmax.f32 %v5823, 0.0
    %v5857 = vmax.f32 %v5829, 0.0
    %v5858 = vmax.f32 %v5835, 0.0
    %v5859 = vmax.f32 %v5841, 0.0
    %v5860 = vmax.f32 %v5847, 0.0
    %v5861 = vmax.f32 %v5853, 0.0
    %v5870 = vsel %vm2722, %v5855, %v5854
    %v5871 = vsel %vm2724, %v5856, %v5870
    %v5872 = vsel %vm2726, %v5857, %v5871
    %v5873 = vsel %vm2728, %v5858, %v5872
    %v5874 = vsel %vm2730, %v5859, %v5873
    %v5875 = vsel %vm2732, %v5860, %v5874
    %v5876 = vsel %vm2734, %v5861, %v5875
    %v5878 = vpack.c.bf16 %v5876, %v5876
    %5879 = vmatprep.subr.bf16.mxu0 0
    %5880 = vmatpush1.bf16.msra.mxu0 %v2835
    %5881 = vmatprep.subr.bf16.mxu0 0
    %5882 = vmatpush1.bf16.msra.mxu0 %v2836
    %5883 = vmatprep.subr.bf16.mxu0 0
    %5884 = vmatpush1.bf16.msra.mxu0 %v2837
    %5885 = vmatprep.subr.bf16.mxu0 0
    %5886 = vmatpush1.bf16.msra.mxu0 %v2838
    %5887 = vmatprep.subr.bf16.mxu0 0
    %5888 = vmatpush1.bf16.msra.mxu0 %v2839
    %5889 = vmatprep.subr.bf16.mxu0 0
    %5890 = vmatpush1.bf16.msra.mxu0 %v2840
    %5891 = vmatprep.subr.bf16.mxu0 0
    %5892 = vmatpush1.bf16.msra.mxu0 %v2841
    %5893 = vmatprep.subr.bf16.mxu0 0
    %5894 = vmatpush1.bf16.msra.mxu0 %v2842
    %5895 = vmatprep.subr.bf16.mxu0 0
    %5896 = vmatpush1.bf16.msra.mxu0 %v2843
    %5897 = vmatprep.subr.bf16.mxu0 0
    %5898 = vmatpush1.bf16.msra.mxu0 %v2844
    %5899 = vmatprep.subr.bf16.mxu0 0
    %5900 = vmatpush1.bf16.msra.mxu0 %v2845
    %5901 = vmatprep.subr.bf16.mxu0 0
    %5902 = vmatpush1.bf16.msra.mxu0 %v2846
    %5903 = vmatprep.subr.bf16.mxu0 0
    %5904 = vmatpush1.bf16.msra.mxu0 %v2847
    %5905 = vmatprep.subr.bf16.mxu0 0
    %5906 = vmatpush1.bf16.msra.mxu0 %v2848
    %5907 = vmatprep.subr.bf16.mxu0 0
    %5908 = vmatpush1.bf16.msra.mxu0 %v2849
    %5909 = vmatprep.subr.bf16.mxu0 0
    %5910 = vmatpush1.bf16.msra.mxu0 %v2850
    %5911 = vmatprep.mubr.bf16.mxu0 %v5878
    %5912 = vmatmul.mubr.bf16.gmra.mrb[0].mxu0 %v5714
    %v5913 = vpop.f32.mrb[0].mxu0
    %v5914 = vadd.f32 %v2770, %v5913
    %v5915 = vpop.f32.mrb[0].mxu0
    %v5916 = vpop.f32.mrb[0].mxu0
    %v5917 = vpop.f32.mrb[0].mxu0
    %5918 = vdwg.mxu0
    %v5919 = vmax.f32 %v5914, 0.0
    %v5920 = vsel %vm3036, %v5712, -inf
    %v5921 = vsel %vm3037, %v5712, -inf
    %v5922 = vsel %vm3038, %v5712, -inf
    %v5923 = vsel %vm3039, %v5712, -inf
    %v5924 = vsel %vm3040, %v5712, -inf
    %v5925 = vsel %vm3041, %v5712, -inf
    %v5926 = vsel %vm3042, %v5712, -inf
    %v5927 = vsel %vm3043, %v5712, -inf
    %v5928 = vrot.slane %v5920, 4
    %v5929 = vmax.f32 %v5920, %v5928
    %v5930 = vrot.slane %v5929, 2
    %v5931 = vmax.f32 %v5929, %v5930
    %v5932 = vrot.slane %v5931, 1
    %v5933 = vmax.f32 %v5931, %v5932
    %v5934 = vrot.slane %v5921, 4
    %v5935 = vmax.f32 %v5921, %v5934
    %v5936 = vrot.slane %v5935, 2
    %v5937 = vmax.f32 %v5935, %v5936
    %v5938 = vrot.slane %v5937, 1
    %v5939 = vmax.f32 %v5937, %v5938
    %v5940 = vrot.slane %v5922, 4
    %v5941 = vmax.f32 %v5922, %v5940
    %v5942 = vrot.slane %v5941, 2
    %v5943 = vmax.f32 %v5941, %v5942
    %v5944 = vrot.slane %v5943, 1
    %v5945 = vmax.f32 %v5943, %v5944
    %v5946 = vrot.slane %v5923, 4
    %v5947 = vmax.f32 %v5923, %v5946
    %v5948 = vrot.slane %v5947, 2
    %v5949 = vmax.f32 %v5947, %v5948
    %v5950 = vrot.slane %v5949, 1
    %v5951 = vmax.f32 %v5949, %v5950
    %v5952 = vrot.slane %v5924, 4
    %v5953 = vmax.f32 %v5924, %v5952
    %v5954 = vrot.slane %v5953, 2
    %v5955 = vmax.f32 %v5953, %v5954
    %v5956 = vrot.slane %v5955, 1
    %v5957 = vmax.f32 %v5955, %v5956
    %v5958 = vrot.slane %v5925, 4
    %v5959 = vmax.f32 %v5925, %v5958
    %v5960 = vrot.slane %v5959, 2
    %v5961 = vmax.f32 %v5959, %v5960
    %v5962 = vrot.slane %v5961, 1
    %v5963 = vmax.f32 %v5961, %v5962
    %v5964 = vrot.slane %v5926, 4
    %v5965 = vmax.f32 %v5926, %v5964
    %v5966 = vrot.slane %v5965, 2
    %v5967 = vmax.f32 %v5965, %v5966
    %v5968 = vrot.slane %v5967, 1
    %v5969 = vmax.f32 %v5967, %v5968
    %v5970 = vrot.slane %v5927, 4
    %v5971 = vmax.f32 %v5927, %v5970
    %v5972 = vrot.slane %v5971, 2
    %v5973 = vmax.f32 %v5971, %v5972
    %v5974 = vrot.slane %v5973, 1
    %v5975 = vmax.f32 %v5973, %v5974
    %v5976 = vmax.f32 %v5933, 0.0
    %v5977 = vmax.f32 %v5939, 0.0
    %v5978 = vmax.f32 %v5945, 0.0
    %v5979 = vmax.f32 %v5951, 0.0
    %v5980 = vmax.f32 %v5957, 0.0
    %v5981 = vmax.f32 %v5963, 0.0
    %v5982 = vmax.f32 %v5969, 0.0
    %v5983 = vmax.f32 %v5975, 0.0
    %v5992 = vsel %vm2722, %v5977, %v5976
    %v5993 = vsel %vm2724, %v5978, %v5992
    %v5994 = vsel %vm2726, %v5979, %v5993
    %v5995 = vsel %vm2728, %v5980, %v5994
    %v5996 = vsel %vm2730, %v5981, %v5995
    %v5997 = vsel %vm2732, %v5982, %v5996
    %v5998 = vsel %vm2734, %v5983, %v5997
    %v6000 = vpack.c.bf16 %v5998, %v5998
    %6001 = vmatprep.subr.bf16.mxu0 0
    %6002 = vmatpush1.bf16.msra.mxu0 %v3223
    %6003 = vmatprep.subr.bf16.mxu0 0
    %6004 = vmatpush1.bf16.msra.mxu0 %v3224
    %6005 = vmatprep.subr.bf16.mxu0 0
    %6006 = vmatpush1.bf16.msra.mxu0 %v3225
    %6007 = vmatprep.subr.bf16.mxu0 0
    %6008 = vmatpush1.bf16.msra.mxu0 %v3226
    %6009 = vmatprep.subr.bf16.mxu0 0
    %6010 = vmatpush1.bf16.msra.mxu0 %v3227
    %6011 = vmatprep.subr.bf16.mxu0 0
    %6012 = vmatpush1.bf16.msra.mxu0 %v3228
    %6013 = vmatprep.subr.bf16.mxu0 0
    %6014 = vmatpush1.bf16.msra.mxu0 %v3229
    %6015 = vmatprep.subr.bf16.mxu0 0
    %6016 = vmatpush1.bf16.msra.mxu0 %v3230
    %6017 = vmatprep.subr.bf16.mxu0 0
    %6018 = vmatpush1.bf16.msra.mxu0 %v3231
    %6019 = vmatprep.subr.bf16.mxu0 0
    %6020 = vmatpush1.bf16.msra.mxu0 %v3232
    %6021 = vmatprep.subr.bf16.mxu0 0
    %6022 = vmatpush1.bf16.msra.mxu0 %v3233
    %6023 = vmatprep.subr.bf16.mxu0 0
    %6024 = vmatpush1.bf16.msra.mxu0 %v3234
    %6025 = vmatprep.subr.bf16.mxu0 0
    %6026 = vmatpush1.bf16.msra.mxu0 %v3235
    %6027 = vmatprep.subr.bf16.mxu0 0
    %6028 = vmatpush1.bf16.msra.mxu0 %v3236
    %6029 = vmatprep.subr.bf16.mxu0 0
    %6030 = vmatpush1.bf16.msra.mxu0 %v3237
    %6031 = vmatprep.subr.bf16.mxu0 0
    %6032 = vmatpush1.bf16.msra.mxu0 %v3238
    %6033 = vmatprep.mubr.bf16.mxu0 %v6000
    %6034 = vmatmul.mubr.bf16.gmra.mrb[0].mxu0 %v5714
    %v6035 = vpop.f32.mrb[0].mxu0
    %v6036 = vadd.f32 %v3158, %v6035
    %v6037 = vpop.f32.mrb[0].mxu0
    %v6038 = vpop.f32.mrb[0].mxu0
    %v6039 = vpop.f32.mrb[0].mxu0
    %6040 = vdwg.mxu0
    %v6041 = vmax.f32 %v6036, 0.0
    %v6042 = vadd.f32 %v5919, %v6041
    %v6043 = vsel %vm3425, %v5755, -inf
    %v6044 = vsel %vm3426, %v5755, -inf
    %v6045 = vsel %vm3427, %v5755, -inf
    %v6046 = vsel %vm3428, %v5755, -inf
    %v6047 = vsel %vm3429, %v5755, -inf
    %v6048 = vsel %vm3430, %v5755, -inf
    %v6049 = vsel %vm3431, %v5755, -inf
    %v6050 = vsel %vm3432, %v5755, -inf
    %v6051 = vrot.slane %v6043, 4
    %v6052 = vmax.f32 %v6043, %v6051
    %v6053 = vrot.slane %v6052, 2
    %v6054 = vmax.f32 %v6052, %v6053
    %v6055 = vrot.slane %v6054, 1
    %v6056 = vmax.f32 %v6054, %v6055
    %v6057 = vrot.slane %v6044, 4
    %v6058 = vmax.f32 %v6044, %v6057
    %v6059 = vrot.slane %v6058, 2
    %v6060 = vmax.f32 %v6058, %v6059
    %v6061 = vrot.slane %v6060, 1
    %v6062 = vmax.f32 %v6060, %v6061
    %v6063 = vrot.slane %v6045, 4
    %v6064 = vmax.f32 %v6045, %v6063
    %v6065 = vrot.slane %v6064, 2
    %v6066 = vmax.f32 %v6064, %v6065
    %v6067 = vrot.slane %v6066, 1
    %v6068 = vmax.f32 %v6066, %v6067
    %v6069 = vrot.slane %v6046, 4
    %v6070 = vmax.f32 %v6046, %v6069
    %v6071 = vrot.slane %v6070, 2
    %v6072 = vmax.f32 %v6070, %v6071
    %v6073 = vrot.slane %v6072, 1
    %v6074 = vmax.f32 %v6072, %v6073
    %v6075 = vrot.slane %v6047, 4
    %v6076 = vmax.f32 %v6047, %v6075
    %v6077 = vrot.slane %v6076, 2
    %v6078 = vmax.f32 %v6076, %v6077
    %v6079 = vrot.slane %v6078, 1
    %v6080 = vmax.f32 %v6078, %v6079
    %v6081 = vrot.slane %v6048, 4
    %v6082 = vmax.f32 %v6048, %v6081
    %v6083 = vrot.slane %v6082, 2
    %v6084 = vmax.f32 %v6082, %v6083
    %v6085 = vrot.slane %v6084, 1
    %v6086 = vmax.f32 %v6084, %v6085
    %v6087 = vrot.slane %v6049, 4
    %v6088 = vmax.f32 %v6049, %v6087
    %v6089 = vrot.slane %v6088, 2
    %v6090 = vmax.f32 %v6088, %v6089
    %v6091 = vrot.slane %v6090, 1
    %v6092 = vmax.f32 %v6090, %v6091
    %v6093 = vrot.slane %v6050, 4
    %v6094 = vmax.f32 %v6050, %v6093
    %v6095 = vrot.slane %v6094, 2
    %v6096 = vmax.f32 %v6094, %v6095
    %v6097 = vrot.slane %v6096, 1
    %v6098 = vmax.f32 %v6096, %v6097
    %v6099 = vmax.f32 %v6056, 0.0
    %v6100 = vmax.f32 %v6062, 0.0
    %v6101 = vmax.f32 %v6068, 0.0
    %v6102 = vmax.f32 %v6074, 0.0
    %v6103 = vmax.f32 %v6080, 0.0
    %v6104 = vmax.f32 %v6086, 0.0
    %v6105 = vmax.f32 %v6092, 0.0
    %v6106 = vmax.f32 %v6098, 0.0
    %v6115 = vsel %vm2722, %v6100, %v6099
    %v6116 = vsel %vm2724, %v6101, %v6115
    %v6117 = vsel %vm2726, %v6102, %v6116
    %v6118 = vsel %vm2728, %v6103, %v6117
    %v6119 = vsel %vm2730, %v6104, %v6118
    %v6120 = vsel %vm2732, %v6105, %v6119
    %v6121 = vsel %vm2734, %v6106, %v6120
    %v6123 = vpack.c.bf16 %v6121, %v6121
    %6124 = vmatprep.subr.bf16.mxu0 0
    %6125 = vmatpush1.bf16.msra.mxu0 %v3612
    %6126 = vmatprep.subr.bf16.mxu0 0
    %6127 = vmatpush1.bf16.msra.mxu0 %v3613
    %6128 = vmatprep.subr.bf16.mxu0 0
    %6129 = vmatpush1.bf16.msra.mxu0 %v3614
    %6130 = vmatprep.subr.bf16.mxu0 0
    %6131 = vmatpush1.bf16.msra.mxu0 %v3615
    %6132 = vmatprep.subr.bf16.mxu0 0
    %6133 = vmatpush1.bf16.msra.mxu0 %v3616
    %6134 = vmatprep.subr.bf16.mxu0 0
    %6135 = vmatpush1.bf16.msra.mxu0 %v3617
    %6136 = vmatprep.subr.bf16.mxu0 0
    %6137 = vmatpush1.bf16.msra.mxu0 %v3618
    %6138 = vmatprep.subr.bf16.mxu0 0
    %6139 = vmatpush1.bf16.msra.mxu0 %v3619
    %6140 = vmatprep.subr.bf16.mxu0 0
    %6141 = vmatpush1.bf16.msra.mxu0 %v3620
    %6142 = vmatprep.subr.bf16.mxu0 0
    %6143 = vmatpush1.bf16.msra.mxu0 %v3621
    %6144 = vmatprep.subr.bf16.mxu0 0
    %6145 = vmatpush1.bf16.msra.mxu0 %v3622
    %6146 = vmatprep.subr.bf16.mxu0 0
    %6147 = vmatpush1.bf16.msra.mxu0 %v3623
    %6148 = vmatprep.subr.bf16.mxu0 0
    %6149 = vmatpush1.bf16.msra.mxu0 %v3624
    %6150 = vmatprep.subr.bf16.mxu0 0
    %6151 = vmatpush1.bf16.msra.mxu0 %v3625
    %6152 = vmatprep.subr.bf16.mxu0 0
    %6153 = vmatpush1.bf16.msra.mxu0 %v3626
    %6154 = vmatprep.subr.bf16.mxu0 0
    %6155 = vmatpush1.bf16.msra.mxu0 %v3627
    %6156 = vmatprep.mubr.bf16.mxu0 %v6123
    %6157 = vmatmul.mubr.bf16.gmra.mrb[0].mxu0 %v5714
    %v6158 = vpop.f32.mrb[0].mxu0
    %v6159 = vadd.f32 %v3547, %v6158
    %v6160 = vpop.f32.mrb[0].mxu0
    %v6161 = vpop.f32.mrb[0].mxu0
    %v6162 = vpop.f32.mrb[0].mxu0
    %6163 = vdwg.mxu0
    %v6164 = vmax.f32 %v6159, 0.0
    %v6165 = vadd.f32 %v6042, %v6164
    %v6166 = vsel %vm3814, %v5713, -inf
    %v6167 = vsel %vm3815, %v5713, -inf
    %v6168 = vsel %vm3816, %v5713, -inf
    %v6169 = vsel %vm3817, %v5713, -inf
    %v6170 = vsel %vm3818, %v5713, -inf
    %v6171 = vsel %vm3819, %v5713, -inf
    %v6172 = vsel %vm3820, %v5713, -inf
    %v6173 = vsel %vm3821, %v5713, -inf
    %v6174 = vrot.slane %v6166, 4
    %v6175 = vmax.f32 %v6166, %v6174
    %v6176 = vrot.slane %v6175, 2
    %v6177 = vmax.f32 %v6175, %v6176
    %v6178 = vrot.slane %v6177, 1
    %v6179 = vmax.f32 %v6177, %v6178
    %v6180 = vrot.slane %v6167, 4
    %v6181 = vmax.f32 %v6167, %v6180
    %v6182 = vrot.slane %v6181, 2
    %v6183 = vmax.f32 %v6181, %v6182
    %v6184 = vrot.slane %v6183, 1
    %v6185 = vmax.f32 %v6183, %v6184
    %v6186 = vrot.slane %v6168, 4
    %v6187 = vmax.f32 %v6168, %v6186
    %v6188 = vrot.slane %v6187, 2
    %v6189 = vmax.f32 %v6187, %v6188
    %v6190 = vrot.slane %v6189, 1
    %v6191 = vmax.f32 %v6189, %v6190
    %v6192 = vrot.slane %v6169, 4
    %v6193 = vmax.f32 %v6169, %v6192
    %v6194 = vrot.slane %v6193, 2
    %v6195 = vmax.f32 %v6193, %v6194
    %v6196 = vrot.slane %v6195, 1
    %v6197 = vmax.f32 %v6195, %v6196
    %v6198 = vrot.slane %v6170, 4
    %v6199 = vmax.f32 %v6170, %v6198
    %v6200 = vrot.slane %v6199, 2
    %v6201 = vmax.f32 %v6199, %v6200
    %v6202 = vrot.slane %v6201, 1
    %v6203 = vmax.f32 %v6201, %v6202
    %v6204 = vrot.slane %v6171, 4
    %v6205 = vmax.f32 %v6171, %v6204
    %v6206 = vrot.slane %v6205, 2
    %v6207 = vmax.f32 %v6205, %v6206
    %v6208 = vrot.slane %v6207, 1
    %v6209 = vmax.f32 %v6207, %v6208
    %v6210 = vrot.slane %v6172, 4
    %v6211 = vmax.f32 %v6172, %v6210
    %v6212 = vrot.slane %v6211, 2
    %v6213 = vmax.f32 %v6211, %v6212
    %v6214 = vrot.slane %v6213, 1
    %v6215 = vmax.f32 %v6213, %v6214
    %v6216 = vrot.slane %v6173, 4
    %v6217 = vmax.f32 %v6173, %v6216
    %v6218 = vrot.slane %v6217, 2
    %v6219 = vmax.f32 %v6217, %v6218
    %v6220 = vrot.slane %v6219, 1
    %v6221 = vmax.f32 %v6219, %v6220
    %v6222 = vmax.f32 %v6179, 0.0
    %v6223 = vmax.f32 %v6185, 0.0
    %v6224 = vmax.f32 %v6191, 0.0
    %v6225 = vmax.f32 %v6197, 0.0
    %v6226 = vmax.f32 %v6203, 0.0
    %v6227 = vmax.f32 %v6209, 0.0
    %v6228 = vmax.f32 %v6215, 0.0
    %v6229 = vmax.f32 %v6221, 0.0
    %v6238 = vsel %vm2722, %v6223, %v6222
    %v6239 = vsel %vm2724, %v6224, %v6238
    %v6240 = vsel %vm2726, %v6225, %v6239
    %v6241 = vsel %vm2728, %v6226, %v6240
    %v6242 = vsel %vm2730, %v6227, %v6241
    %v6243 = vsel %vm2732, %v6228, %v6242
    %v6244 = vsel %vm2734, %v6229, %v6243
    %v6246 = vpack.c.bf16 %v6244, %v6244
    %6247 = vmatprep.subr.bf16.mxu0 0
    %6248 = vmatpush1.bf16.msra.mxu0 %v4001
    %6249 = vmatprep.subr.bf16.mxu0 0
    %6250 = vmatpush1.bf16.msra.mxu0 %v4002
    %6251 = vmatprep.subr.bf16.mxu0 0
    %6252 = vmatpush1.bf16.msra.mxu0 %v4003
    %6253 = vmatprep.subr.bf16.mxu0 0
    %6254 = vmatpush1.bf16.msra.mxu0 %v4004
    %6255 = vmatprep.subr.bf16.mxu0 0
    %6256 = vmatpush1.bf16.msra.mxu0 %v4005
    %6257 = vmatprep.subr.bf16.mxu0 0
    %6258 = vmatpush1.bf16.msra.mxu0 %v4006
    %6259 = vmatprep.subr.bf16.mxu0 0
    %6260 = vmatpush1.bf16.msra.mxu0 %v4007
    %6261 = vmatprep.subr.bf16.mxu0 0
    %6262 = vmatpush1.bf16.msra.mxu0 %v4008
    %6263 = vmatprep.subr.bf16.mxu0 0
    %6264 = vmatpush1.bf16.msra.mxu0 %v4009
    %6265 = vmatprep.subr.bf16.mxu0 0
    %6266 = vmatpush1.bf16.msra.mxu0 %v4010
    %6267 = vmatprep.subr.bf16.mxu0 0
    %6268 = vmatpush1.bf16.msra.mxu0 %v4011
    %6269 = vmatprep.subr.bf16.mxu0 0
    %6270 = vmatpush1.bf16.msra.mxu0 %v4012
    %6271 = vmatprep.subr.bf16.mxu0 0
    %6272 = vmatpush1.bf16.msra.mxu0 %v4013
    %6273 = vmatprep.subr.bf16.mxu0 0
    %6274 = vmatpush1.bf16.msra.mxu0 %v4014
    %6275 = vmatprep.subr.bf16.mxu0 0
    %6276 = vmatpush1.bf16.msra.mxu0 %v4015
    %6277 = vmatprep.subr.bf16.mxu0 0
    %6278 = vmatpush1.bf16.msra.mxu0 %v4016
    %6279 = vmatprep.mubr.bf16.mxu0 %v6246
    %6280 = vmatmul.mubr.bf16.gmra.mrb[0].mxu0 %v5756
    %v6281 = vpop.f32.mrb[0].mxu0
    %v6282 = vadd.f32 %v3936, %v6281
    %v6283 = vpop.f32.mrb[0].mxu0
    %v6284 = vpop.f32.mrb[0].mxu0
    %v6285 = vpop.f32.mrb[0].mxu0
    %6286 = vdwg.mxu0
    %v6287 = vmax.f32 %v6282, 0.0
    %v6288 = vsel %vm4202, %v5797, -inf
    %v6289 = vsel %vm4203, %v5797, -inf
    %v6290 = vsel %vm4204, %v5797, -inf
    %v6291 = vsel %vm4205, %v5797, -inf
    %v6292 = vsel %vm4206, %v5797, -inf
    %v6293 = vsel %vm4207, %v5797, -inf
    %v6294 = vsel %vm4208, %v5797, -inf
    %v6295 = vsel %vm4209, %v5797, -inf
    %v6296 = vrot.slane %v6288, 4
    %v6297 = vmax.f32 %v6288, %v6296
    %v6298 = vrot.slane %v6297, 2
    %v6299 = vmax.f32 %v6297, %v6298
    %v6300 = vrot.slane %v6299, 1
    %v6301 = vmax.f32 %v6299, %v6300
    %v6302 = vrot.slane %v6289, 4
    %v6303 = vmax.f32 %v6289, %v6302
    %v6304 = vrot.slane %v6303, 2
    %v6305 = vmax.f32 %v6303, %v6304
    %v6306 = vrot.slane %v6305, 1
    %v6307 = vmax.f32 %v6305, %v6306
    %v6308 = vrot.slane %v6290, 4
    %v6309 = vmax.f32 %v6290, %v6308
    %v6310 = vrot.slane %v6309, 2
    %v6311 = vmax.f32 %v6309, %v6310
    %v6312 = vrot.slane %v6311, 1
    %v6313 = vmax.f32 %v6311, %v6312
    %v6314 = vrot.slane %v6291, 4
    %v6315 = vmax.f32 %v6291, %v6314
    %v6316 = vrot.slane %v6315, 2
    %v6317 = vmax.f32 %v6315, %v6316
    %v6318 = vrot.slane %v6317, 1
    %v6319 = vmax.f32 %v6317, %v6318
    %v6320 = vrot.slane %v6292, 4
    %v6321 = vmax.f32 %v6292, %v6320
    %v6322 = vrot.slane %v6321, 2
    %v6323 = vmax.f32 %v6321, %v6322
    %v6324 = vrot.slane %v6323, 1
    %v6325 = vmax.f32 %v6323, %v6324
    %v6326 = vrot.slane %v6293, 4
    %v6327 = vmax.f32 %v6293, %v6326
    %v6328 = vrot.slane %v6327, 2
    %v6329 = vmax.f32 %v6327, %v6328
    %v6330 = vrot.slane %v6329, 1
    %v6331 = vmax.f32 %v6329, %v6330
    %v6332 = vrot.slane %v6294, 4
    %v6333 = vmax.f32 %v6294, %v6332
    %v6334 = vrot.slane %v6333, 2
    %v6335 = vmax.f32 %v6333, %v6334
    %v6336 = vrot.slane %v6335, 1
    %v6337 = vmax.f32 %v6335, %v6336
    %v6338 = vrot.slane %v6295, 4
    %v6339 = vmax.f32 %v6295, %v6338
    %v6340 = vrot.slane %v6339, 2
    %v6341 = vmax.f32 %v6339, %v6340
    %v6342 = vrot.slane %v6341, 1
    %v6343 = vmax.f32 %v6341, %v6342
    %v6344 = vmax.f32 %v6301, 0.0
    %v6345 = vmax.f32 %v6307, 0.0
    %v6346 = vmax.f32 %v6313, 0.0
    %v6347 = vmax.f32 %v6319, 0.0
    %v6348 = vmax.f32 %v6325, 0.0
    %v6349 = vmax.f32 %v6331, 0.0
    %v6350 = vmax.f32 %v6337, 0.0
    %v6351 = vmax.f32 %v6343, 0.0
    %v6360 = vsel %vm2722, %v6345, %v6344
    %v6361 = vsel %vm2724, %v6346, %v6360
    %v6362 = vsel %vm2726, %v6347, %v6361
    %v6363 = vsel %vm2728, %v6348, %v6362
    %v6364 = vsel %vm2730, %v6349, %v6363
    %v6365 = vsel %vm2732, %v6350, %v6364
    %v6366 = vsel %vm2734, %v6351, %v6365
    %v6368 = vpack.c.bf16 %v6366, %v6366
    %6369 = vmatprep.subr.bf16.mxu0 0
    %6370 = vmatpush1.bf16.msra.mxu0 %v4389
    %6371 = vmatprep.subr.bf16.mxu0 0
    %6372 = vmatpush1.bf16.msra.mxu0 %v4390
    %6373 = vmatprep.subr.bf16.mxu0 0
    %6374 = vmatpush1.bf16.msra.mxu0 %v4391
    %6375 = vmatprep.subr.bf16.mxu0 0
    %6376 = vmatpush1.bf16.msra.mxu0 %v4392
    %6377 = vmatprep.subr.bf16.mxu0 0
    %6378 = vmatpush1.bf16.msra.mxu0 %v4393
    %6379 = vmatprep.subr.bf16.mxu0 0
    %6380 = vmatpush1.bf16.msra.mxu0 %v4394
    %6381 = vmatprep.subr.bf16.mxu0 0
    %6382 = vmatpush1.bf16.msra.mxu0 %v4395
    %6383 = vmatprep.subr.bf16.mxu0 0
    %6384 = vmatpush1.bf16.msra.mxu0 %v4396
    %6385 = vmatprep.subr.bf16.mxu0 0
    %6386 = vmatpush1.bf16.msra.mxu0 %v4397
    %6387 = vmatprep.subr.bf16.mxu0 0
    %6388 = vmatpush1.bf16.msra.mxu0 %v4398
    %6389 = vmatprep.subr.bf16.mxu0 0
    %6390 = vmatpush1.bf16.msra.mxu0 %v4399
    %6391 = vmatprep.subr.bf16.mxu0 0
    %6392 = vmatpush1.bf16.msra.mxu0 %v4400
    %6393 = vmatprep.subr.bf16.mxu0 0
    %6394 = vmatpush1.bf16.msra.mxu0 %v4401
    %6395 = vmatprep.subr.bf16.mxu0 0
    %6396 = vmatpush1.bf16.msra.mxu0 %v4402
    %6397 = vmatprep.subr.bf16.mxu0 0
    %6398 = vmatpush1.bf16.msra.mxu0 %v4403
    %6399 = vmatprep.subr.bf16.mxu0 0
    %6400 = vmatpush1.bf16.msra.mxu0 %v4404
    %6401 = vmatprep.mubr.bf16.mxu0 %v6368
    %6402 = vmatmul.mubr.bf16.gmra.mrb[0].mxu0 %v5756
    %v6403 = vpop.f32.mrb[0].mxu0
    %v6404 = vadd.f32 %v4324, %v6403
    %v6405 = vpop.f32.mrb[0].mxu0
    %v6406 = vpop.f32.mrb[0].mxu0
    %v6407 = vpop.f32.mrb[0].mxu0
    %6408 = vdwg.mxu0
    %v6409 = vmax.f32 %v6404, 0.0
    %v6410 = vadd.f32 %v6287, %v6409
    %6411 = vst [vmem:[#allocation2] sm:$0xff] %v722
    %6412 = vst [vmem:[#allocation2 + $0x8] sm:$0xff] %v3685
    %6413 = vst [vmem:[#allocation2 + $0x10] sm:$0xff] %v6165
    %6414 = vst [vmem:[#allocation3] sm:$0xff] %v723
    %6415 = vst [vmem:[#allocation3 + $0x8] sm:$0xff] %v4462
    %6416 = vst [vmem:[#allocation3 + $0x10] sm:$0xff] %v6410
    %6417 = vst [vmem:[#allocation3 + $0x18] sm:$0xff] %v1833
    %s6418 = sld [smem:[#allocation4]]
    %s6419 = sshra.s32 %s6418, 3
    %s6420 = sand.u32 %s6418, 7
    %s6421 = sshra.s32 %s6418, 3
    %s6422 = sand.u32 %s6418, 7
    %s6423 = smul.u32 %s6419, 3
    %s6424 = smul.u32 %s6423, 8
    %s6425 = sadd.s32 %s6424, %s6422
    %s6426 = scalar_lea.vmem [#allocation2], %s6425
    %v6427 = vld [vmem:[%s6426] ss:$8 sm:$0x7]
    %s6428 = sld [smem:[#allocation4 + $0x1]]
    %s6429 = sshra.s32 %s6428, 3
    %s6430 = sand.u32 %s6428, 7
    %s6431 = sshra.s32 %s6428, 3
    %s6432 = sand.u32 %s6428, 7
    %s6433 = smul.u32 %s6429, 3
    %s6434 = smul.u32 %s6433, 8
    %s6435 = sadd.s32 %s6434, %s6432
    %s6436 = scalar_lea.vmem [#allocation2], %s6435
    %v6437 = vld [vmem:[%s6436] ss:$8 sm:$0x7]
    %s6438 = sld [smem:[#allocation4 + $0x2]]
    %s6439 = sshra.s32 %s6438, 3
    %s6440 = sand.u32 %s6438, 7
    %s6441 = sshra.s32 %s6438, 3
    %s6442 = sand.u32 %s6438, 7
    %s6443 = smul.u32 %s6439, 3
    %s6444 = smul.u32 %s6443, 8
    %s6445 = sadd.s32 %s6444, %s6442
    %s6446 = scalar_lea.vmem [#allocation2], %s6445
    %v6447 = vld [vmem:[%s6446] ss:$8 sm:$0x7]
    %s6448 = sld [smem:[#allocation4 + $0x3]]
    %s6449 = sshra.s32 %s6448, 3
    %s6450 = sand.u32 %s6448, 7
    %s6451 = sshra.s32 %s6448, 3
    %s6452 = sand.u32 %s6448, 7
    %s6453 = smul.u32 %s6449, 3
    %s6454 = smul.u32 %s6453, 8
    %s6455 = sadd.s32 %s6454, %s6452
    %s6456 = scalar_lea.vmem [#allocation2], %s6455
    %v6457 = vld [vmem:[%s6456] ss:$8 sm:$0x7]
    %s6458 = sld [smem:[#allocation4 + $0x4]]
    %s6459 = sshra.s32 %s6458, 3
    %s6460 = sand.u32 %s6458, 7
    %s6461 = sshra.s32 %s6458, 3
    %s6462 = sand.u32 %s6458, 7
    %s6463 = smul.u32 %s6459, 3
    %s6464 = smul.u32 %s6463, 8
    %s6465 = sadd.s32 %s6464, %s6462
    %s6466 = scalar_lea.vmem [#allocation2], %s6465
    %v6467 = vld [vmem:[%s6466] ss:$8 sm:$0x7]
    %s6468 = sld [smem:[#allocation4 + $0x5]]
    %s6469 = sshra.s32 %s6468, 3
    %s6470 = sand.u32 %s6468, 7
    %s6471 = sshra.s32 %s6468, 3
    %s6472 = sand.u32 %s6468, 7
    %s6473 = smul.u32 %s6469, 3
    %s6474 = smul.u32 %s6473, 8
    %s6475 = sadd.s32 %s6474, %s6472
    %s6476 = scalar_lea.vmem [#allocation2], %s6475
    %v6477 = vld [vmem:[%s6476] ss:$8 sm:$0x7]
    %s6478 = sld [smem:[#allocation4 + $0x6]]
    %s6479 = sshra.s32 %s6478, 3
    %s6480 = sand.u32 %s6478, 7
    %s6481 = sshra.s32 %s6478, 3
    %s6482 = sand.u32 %s6478, 7
    %s6483 = smul.u32 %s6479, 3
    %s6484 = smul.u32 %s6483, 8
    %s6485 = sadd.s32 %s6484, %s6482
    %s6486 = scalar_lea.vmem [#allocation2], %s6485
    %v6487 = vld [vmem:[%s6486] ss:$8 sm:$0x7]
    %s6488 = sld [smem:[#allocation4 + $0x7]]
    %s6489 = sshra.s32 %s6488, 3
    %s6490 = sand.u32 %s6488, 7
    %s6491 = sshra.s32 %s6488, 3
    %s6492 = sand.u32 %s6488, 7
    %s6493 = smul.u32 %s6489, 3
    %s6494 = smul.u32 %s6493, 8
    %s6495 = sadd.s32 %s6494, %s6492
    %s6496 = scalar_lea.vmem [#allocation2], %s6495
    %v6497 = vld [vmem:[%s6496] ss:$8 sm:$0x7]
    %s6498 = sld [smem:[#allocation7]]
    %s6499 = sshra.s32 %s6498, 3
    %s6500 = sand.u32 %s6498, 7
    %s6501 = sshra.s32 %s6498, 3
    %s6502 = sand.u32 %s6498, 7
    %s6503 = smul.u32 %s6499, 4
    %s6504 = smul.u32 %s6503, 8
    %s6505 = sadd.s32 %s6504, %s6502
    %s6506 = scalar_lea.vmem [#allocation3], %s6505
    %v6507 = vld [vmem:[%s6506] ss:$8 sm:$0xf]
    %s6508 = sld [smem:[#allocation7 + $0x1]]
    %s6509 = sshra.s32 %s6508, 3
    %s6510 = sand.u32 %s6508, 7
    %s6511 = sshra.s32 %s6508, 3
    %s6512 = sand.u32 %s6508, 7
    %s6513 = smul.u32 %s6509, 4
    %s6514 = smul.u32 %s6513, 8
    %s6515 = sadd.s32 %s6514, %s6512
    %s6516 = scalar_lea.vmem [#allocation3], %s6515
    %v6517 = vld [vmem:[%s6516] ss:$8 sm:$0xf]
    %s6518 = sld [smem:[#allocation7 + $0x2]]
    %s6519 = sshra.s32 %s6518, 3
    %s6520 = sand.u32 %s6518, 7
    %s6521 = sshra.s32 %s6518, 3
    %s6522 = sand.u32 %s6518, 7
    %s6523 = smul.u32 %s6519, 4
    %s6524 = smul.u32 %s6523, 8
    %s6525 = sadd.s32 %s6524, %s6522
    %s6526 = scalar_lea.vmem [#allocation3], %s6525
    %v6527 = vld [vmem:[%s6526] ss:$8 sm:$0xf]
    %s6528 = sld [smem:[#allocation7 + $0x3]]
    %s6529 = sshra.s32 %s6528, 3
    %s6530 = sand.u32 %s6528, 7
    %s6531 = sshra.s32 %s6528, 3
    %s6532 = sand.u32 %s6528, 7
    %s6533 = smul.u32 %s6529, 4
    %s6534 = smul.u32 %s6533, 8
    %s6535 = sadd.s32 %s6534, %s6532
    %s6536 = scalar_lea.vmem [#allocation3], %s6535
    %v6537 = vld [vmem:[%s6536] ss:$8 sm:$0xf]
    %s6538 = sld [smem:[#allocation7 + $0x4]]
    %s6539 = sshra.s32 %s6538, 3
    %s6540 = sand.u32 %s6538, 7
    %s6541 = sshra.s32 %s6538, 3
    %s6542 = sand.u32 %s6538, 7
    %s6543 = smul.u32 %s6539, 4
    %s6544 = smul.u32 %s6543, 8
    %s6545 = sadd.s32 %s6544, %s6542
    %s6546 = scalar_lea.vmem [#allocation3], %s6545
    %v6547 = vld [vmem:[%s6546] ss:$8 sm:$0xf]
    %s6548 = sld [smem:[#allocation7 + $0x5]]
    %s6549 = sshra.s32 %s6548, 3
    %s6550 = sand.u32 %s6548, 7
    %s6551 = sshra.s32 %s6548, 3
    %s6552 = sand.u32 %s6548, 7
    %s6553 = smul.u32 %s6549, 4
    %s6554 = smul.u32 %s6553, 8
    %s6555 = sadd.s32 %s6554, %s6552
    %s6556 = scalar_lea.vmem [#allocation3], %s6555
    %v6557 = vld [vmem:[%s6556] ss:$8 sm:$0xf]
    %s6558 = sld [smem:[#allocation7 + $0x6]]
    %s6559 = sshra.s32 %s6558, 3
    %s6560 = sand.u32 %s6558, 7
    %s6561 = sshra.s32 %s6558, 3
    %s6562 = sand.u32 %s6558, 7
    %s6563 = smul.u32 %s6559, 4
    %s6564 = smul.u32 %s6563, 8
    %s6565 = sadd.s32 %s6564, %s6562
    %s6566 = scalar_lea.vmem [#allocation3], %s6565
    %v6567 = vld [vmem:[%s6566] ss:$8 sm:$0xf]
    %s6568 = sld [smem:[#allocation7 + $0x7]]
    %s6569 = sshra.s32 %s6568, 3
    %s6570 = sand.u32 %s6568, 7
    %s6571 = sshra.s32 %s6568, 3
    %s6572 = sand.u32 %s6568, 7
    %s6573 = smul.u32 %s6569, 4
    %s6574 = smul.u32 %s6573, 8
    %s6575 = sadd.s32 %s6574, %s6572
    %s6576 = scalar_lea.vmem [#allocation3], %s6575
    %v6577 = vld [vmem:[%s6576] ss:$8 sm:$0xf]
    %v6579 = vlaneseq
    %v6580 = vshrl.u32 %v6579, 7
    %v6581 = vsub.s32 0, %v6580
    %v6582 = vrot.slane %v6427, %v6581
    %v6583 = vlaneseq
    %v6584 = vshrl.u32 %v6583, 7
    %v6585 = vsub.s32 1, %v6584
    %v6586 = vrot.slane %v6427, %v6585
    %v6587 = vlaneseq
    %v6588 = vshrl.u32 %v6587, 7
    %v6589 = vsub.s32 2, %v6588
    %v6590 = vrot.slane %v6427, %v6589
    %v6595 = vlaneseq
    %v6596 = vshrl.u32 %v6595, 7
    %v6597 = vsub.s32 0, %v6596
    %v6598 = vrot.slane %v6437, %v6597
    %v6599 = vlaneseq
    %v6600 = vshrl.u32 %v6599, 7
    %v6601 = vsub.s32 1, %v6600
    %v6602 = vrot.slane %v6437, %v6601
    %v6603 = vlaneseq
    %v6604 = vshrl.u32 %v6603, 7
    %v6605 = vsub.s32 2, %v6604
    %v6606 = vrot.slane %v6437, %v6605
    %v6611 = vlaneseq
    %v6612 = vshrl.u32 %v6611, 7
    %v6613 = vsub.s32 0, %v6612
    %v6614 = vrot.slane %v6447, %v6613
    %v6615 = vlaneseq
    %v6616 = vshrl.u32 %v6615, 7
    %v6617 = vsub.s32 1, %v6616
    %v6618 = vrot.slane %v6447, %v6617
    %v6619 = vlaneseq
    %v6620 = vshrl.u32 %v6619, 7
    %v6621 = vsub.s32 2, %v6620
    %v6622 = vrot.slane %v6447, %v6621
    %v6627 = vlaneseq
    %v6628 = vshrl.u32 %v6627, 7
    %v6629 = vsub.s32 0, %v6628
    %v6630 = vrot.slane %v6457, %v6629
    %v6631 = vlaneseq
    %v6632 = vshrl.u32 %v6631, 7
    %v6633 = vsub.s32 1, %v6632
    %v6634 = vrot.slane %v6457, %v6633
    %v6635 = vlaneseq
    %v6636 = vshrl.u32 %v6635, 7
    %v6637 = vsub.s32 2, %v6636
    %v6638 = vrot.slane %v6457, %v6637
    %v6643 = vlaneseq
    %v6644 = vshrl.u32 %v6643, 7
    %v6645 = vsub.s32 0, %v6644
    %v6646 = vrot.slane %v6467, %v6645
    %v6647 = vlaneseq
    %v6648 = vshrl.u32 %v6647, 7
    %v6649 = vsub.s32 1, %v6648
    %v6650 = vrot.slane %v6467, %v6649
    %v6651 = vlaneseq
    %v6652 = vshrl.u32 %v6651, 7
    %v6653 = vsub.s32 2, %v6652
    %v6654 = vrot.slane %v6467, %v6653
    %v6659 = vlaneseq
    %v6660 = vshrl.u32 %v6659, 7
    %v6661 = vsub.s32 0, %v6660
    %v6662 = vrot.slane %v6477, %v6661
    %v6663 = vlaneseq
    %v6664 = vshrl.u32 %v6663, 7
    %v6665 = vsub.s32 1, %v6664
    %v6666 = vrot.slane %v6477, %v6665
    %v6667 = vlaneseq
    %v6668 = vshrl.u32 %v6667, 7
    %v6669 = vsub.s32 2, %v6668
    %v6670 = vrot.slane %v6477, %v6669
    %v6675 = vlaneseq
    %v6676 = vshrl.u32 %v6675, 7
    %v6677 = vsub.s32 0, %v6676
    %v6678 = vrot.slane %v6487, %v6677
    %v6679 = vlaneseq
    %v6680 = vshrl.u32 %v6679, 7
    %v6681 = vsub.s32 1, %v6680
    %v6682 = vrot.slane %v6487, %v6681
    %v6683 = vlaneseq
    %v6684 = vshrl.u32 %v6683, 7
    %v6685 = vsub.s32 2, %v6684
    %v6686 = vrot.slane %v6487, %v6685
    %v6691 = vlaneseq
    %v6692 = vshrl.u32 %v6691, 7
    %v6693 = vsub.s32 0, %v6692
    %v6694 = vrot.slane %v6497, %v6693
    %v6695 = vlaneseq
    %v6696 = vshrl.u32 %v6695, 7
    %v6697 = vsub.s32 1, %v6696
    %v6698 = vrot.slane %v6497, %v6697
    %v6699 = vlaneseq
    %v6700 = vshrl.u32 %v6699, 7
    %v6701 = vsub.s32 2, %v6700
    %v6702 = vrot.slane %v6497, %v6701
    %vm6706 = vcmask 1040384
    %v6707 = vsel %vm6706, %v6582, %v6598
    %v6708 = vsel %vm6706, %v6586, %v6602
    %v6709 = vsel %vm6706, %v6590, %v6606
    %vm6710 = vcmask 1041408
    %v6711 = vsel %vm6710, %v6707, %v6614
    %v6712 = vsel %vm6710, %v6708, %v6618
    %v6713 = vsel %vm6710, %v6709, %v6622
    %vm6714 = vcmask 1042432
    %v6715 = vsel %vm6714, %v6711, %v6630
    %v6716 = vsel %vm6714, %v6712, %v6634
    %v6717 = vsel %vm6714, %v6713, %v6638
    %v6718 = vsel %vm841, %v6715, %v6646
    %v6719 = vsel %vm841, %v6716, %v6650
    %v6720 = vsel %vm841, %v6717, %v6654
    %vm6721 = vcmask 1044480
    %v6722 = vsel %vm6721, %v6718, %v6662
    %v6723 = vsel %vm6721, %v6719, %v6666
    %v6724 = vsel %vm6721, %v6720, %v6670
    %vm6725 = vcmask 1045504
    %v6726 = vsel %vm6725, %v6722, %v6678
    %v6727 = vsel %vm6725, %v6723, %v6682
    %v6728 = vsel %vm6725, %v6724, %v6686
    %vm6729 = vcmask 1046528
    %v6730 = vsel %vm6729, %v6726, %v6694
    %v6731 = vsel %vm6729, %v6727, %v6698
    %v6732 = vsel %vm6729, %v6728, %v6702
    %v6734 = vlaneseq
    %v6735 = vshrl.u32 %v6734, 7
    %v6736 = vsub.s32 0, %v6735
    %v6737 = vrot.slane %v6507, %v6736
    %v6738 = vlaneseq
    %v6739 = vshrl.u32 %v6738, 7
    %v6740 = vsub.s32 1, %v6739
    %v6741 = vrot.slane %v6507, %v6740
    %v6742 = vlaneseq
    %v6743 = vshrl.u32 %v6742, 7
    %v6744 = vsub.s32 2, %v6743
    %v6745 = vrot.slane %v6507, %v6744
    %v6746 = vlaneseq
    %v6747 = vshrl.u32 %v6746, 7
    %v6748 = vsub.s32 3, %v6747
    %v6749 = vrot.slane %v6507, %v6748
    %v6755 = vlaneseq
    %v6756 = vshrl.u32 %v6755, 7
    %v6757 = vsub.s32 0, %v6756
    %v6758 = vrot.slane %v6517, %v6757
    %v6759 = vlaneseq
    %v6760 = vshrl.u32 %v6759, 7
    %v6761 = vsub.s32 1, %v6760
    %v6762 = vrot.slane %v6517, %v6761
    %v6763 = vlaneseq
    %v6764 = vshrl.u32 %v6763, 7
    %v6765 = vsub.s32 2, %v6764
    %v6766 = vrot.slane %v6517, %v6765
    %v6767 = vlaneseq
    %v6768 = vshrl.u32 %v6767, 7
    %v6769 = vsub.s32 3, %v6768
    %v6770 = vrot.slane %v6517, %v6769
    %v6776 = vlaneseq
    %v6777 = vshrl.u32 %v6776, 7
    %v6778 = vsub.s32 0, %v6777
    %v6779 = vrot.slane %v6527, %v6778
    %v6780 = vlaneseq
    %v6781 = vshrl.u32 %v6780, 7
    %v6782 = vsub.s32 1, %v6781
    %v6783 = vrot.slane %v6527, %v6782
    %v6784 = vlaneseq
    %v6785 = vshrl.u32 %v6784, 7
    %v6786 = vsub.s32 2, %v6785
    %v6787 = vrot.slane %v6527, %v6786
    %v6788 = vlaneseq
    %v6789 = vshrl.u32 %v6788, 7
    %v6790 = vsub.s32 3, %v6789
    %v6791 = vrot.slane %v6527, %v6790
    %v6797 = vlaneseq
    %v6798 = vshrl.u32 %v6797, 7
    %v6799 = vsub.s32 0, %v6798
    %v6800 = vrot.slane %v6537, %v6799
    %v6801 = vlaneseq
    %v6802 = vshrl.u32 %v6801, 7
    %v6803 = vsub.s32 1, %v6802
    %v6804 = vrot.slane %v6537, %v6803
    %v6805 = vlaneseq
    %v6806 = vshrl.u32 %v6805, 7
    %v6807 = vsub.s32 2, %v6806
    %v6808 = vrot.slane %v6537, %v6807
    %v6809 = vlaneseq
    %v6810 = vshrl.u32 %v6809, 7
    %v6811 = vsub.s32 3, %v6810
    %v6812 = vrot.slane %v6537, %v6811
    %v6818 = vlaneseq
    %v6819 = vshrl.u32 %v6818, 7
    %v6820 = vsub.s32 0, %v6819
    %v6821 = vrot.slane %v6547, %v6820
    %v6822 = vlaneseq
    %v6823 = vshrl.u32 %v6822, 7
    %v6824 = vsub.s32 1, %v6823
    %v6825 = vrot.slane %v6547, %v6824
    %v6826 = vlaneseq
    %v6827 = vshrl.u32 %v6826, 7
    %v6828 = vsub.s32 2, %v6827
    %v6829 = vrot.slane %v6547, %v6828
    %v6830 = vlaneseq
    %v6831 = vshrl.u32 %v6830, 7
    %v6832 = vsub.s32 3, %v6831
    %v6833 = vrot.slane %v6547, %v6832
    %v6839 = vlaneseq
    %v6840 = vshrl.u32 %v6839, 7
    %v6841 = vsub.s32 0, %v6840
    %v6842 = vrot.slane %v6557, %v6841
    %v6843 = vlaneseq
    %v6844 = vshrl.u32 %v6843, 7
    %v6845 = vsub.s32 1, %v6844
    %v6846 = vrot.slane %v6557, %v6845
    %v6847 = vlaneseq
    %v6848 = vshrl.u32 %v6847, 7
    %v6849 = vsub.s32 2, %v6848
    %v6850 = vrot.slane %v6557, %v6849
    %v6851 = vlaneseq
    %v6852 = vshrl.u32 %v6851, 7
    %v6853 = vsub.s32 3, %v6852
    %v6854 = vrot.slane %v6557, %v6853
    %v6860 = vlaneseq
    %v6861 = vshrl.u32 %v6860, 7
    %v6862 = vsub.s32 0, %v6861
    %v6863 = vrot.slane %v6567, %v6862
    %v6864 = vlaneseq
    %v6865 = vshrl.u32 %v6864, 7
    %v6866 = vsub.s32 1, %v6865
    %v6867 = vrot.slane %v6567, %v6866
    %v6868 = vlaneseq
    %v6869 = vshrl.u32 %v6868, 7
    %v6870 = vsub.s32 2, %v6869
    %v6871 = vrot.slane %v6567, %v6870
    %v6872 = vlaneseq
    %v6873 = vshrl.u32 %v6872, 7
    %v6874 = vsub.s32 3, %v6873
    %v6875 = vrot.slane %v6567, %v6874
    %v6881 = vlaneseq
    %v6882 = vshrl.u32 %v6881, 7
    %v6883 = vsub.s32 0, %v6882
    %v6884 = vrot.slane %v6577, %v6883
    %v6885 = vlaneseq
    %v6886 = vshrl.u32 %v6885, 7
    %v6887 = vsub.s32 1, %v6886
    %v6888 = vrot.slane %v6577, %v6887
    %v6889 = vlaneseq
    %v6890 = vshrl.u32 %v6889, 7
    %v6891 = vsub.s32 2, %v6890
    %v6892 = vrot.slane %v6577, %v6891
    %v6893 = vlaneseq
    %v6894 = vshrl.u32 %v6893, 7
    %v6895 = vsub.s32 3, %v6894
    %v6896 = vrot.slane %v6577, %v6895
    %v6901 = vsel %vm6706, %v6737, %v6758
    %v6902 = vsel %vm6706, %v6741, %v6762
    %v6903 = vsel %vm6706, %v6745, %v6766
    %v6904 = vsel %vm6706, %v6749, %v6770
    %v6905 = vsel %vm6710, %v6901, %v6779
    %v6906 = vsel %vm6710, %v6902, %v6783
    %v6907 = vsel %vm6710, %v6903, %v6787
    %v6908 = vsel %vm6710, %v6904, %v6791
    %v6909 = vsel %vm6714, %v6905, %v6800
    %v6910 = vsel %vm6714, %v6906, %v6804
    %v6911 = vsel %vm6714, %v6907, %v6808
    %v6912 = vsel %vm6714, %v6908, %v6812
    %v6913 = vsel %vm841, %v6909, %v6821
    %v6914 = vsel %vm841, %v6910, %v6825
    %v6915 = vsel %vm841, %v6911, %v6829
    %v6916 = vsel %vm841, %v6912, %v6833
    %v6917 = vsel %vm6721, %v6913, %v6842
    %v6918 = vsel %vm6721, %v6914, %v6846
    %v6919 = vsel %vm6721, %v6915, %v6850
    %v6920 = vsel %vm6721, %v6916, %v6854
    %v6921 = vsel %vm6725, %v6917, %v6863
    %v6922 = vsel %vm6725, %v6918, %v6867
    %v6923 = vsel %vm6725, %v6919, %v6871
    %v6924 = vsel %vm6725, %v6920, %v6875
    %v6925 = vsel %vm6729, %v6921, %v6884
    %v6926 = vsel %vm6729, %v6922, %v6888
    %v6927 = vsel %vm6729, %v6923, %v6892
    %v6928 = vsel %vm6729, %v6924, %v6896
    %v6929 = vld [vmem:[#allocation15] sm:$0xff]
    %v6930 = vld [vmem:[#allocation15 + $0x8] sm:$0xff]
    %v6931 = vld [vmem:[#allocation15 + $0x10] sm:$0xff]
    %v6932 = vld [vmem:[#allocation15 + $0x18] sm:$0xff]
    %v6933 = vld [vmem:[#allocation15 + $0x20] sm:$0xff]
    %v6934 = vld [vmem:[#allocation15 + $0x28] sm:$0xff]
    %v6935 = vld [vmem:[#allocation15 + $0x30] sm:$0xff]
    %v6936 = vld [vmem:[#allocation15 + $0x38] sm:$0xff]
    %v6937 = vld [vmem:[#allocation15 + $0x40] sm:$0xff]
    %v6938 = vld [vmem:[#allocation15 + $0x48] sm:$0xff]
    %v6939 = vld [vmem:[#allocation15 + $0x50] sm:$0xff]
    %v6940 = vld [vmem:[#allocation15 + $0x58] sm:$0xff]
    %v6941 = vld [vmem:[#allocation15 + $0x60] sm:$0xff]
    %v6942 = vld [vmem:[#allocation15 + $0x68] sm:$0xff]
    %v6943 = vld [vmem:[#allocation15 + $0x70] sm:$0xff]
    %v6944 = vld [vmem:[#allocation15 + $0x78] sm:$0xff]
    %v6945 = vld [vmem:[#allocation15 + $0x80] sm:$0xff]
    %v6946 = vld [vmem:[#allocation15 + $0x88] sm:$0xff]
    %v6947 = vld [vmem:[#allocation15 + $0x90] sm:$0xff]
    %v6948 = vld [vmem:[#allocation15 + $0x98] sm:$0xff]
    %v6949 = vld [vmem:[#allocation15 + $0xa0] sm:$0xff]
    %v6950 = vld [vmem:[#allocation15 + $0xa8] sm:$0xff]
    %v6951 = vld [vmem:[#allocation15 + $0xb0] sm:$0xff]
    %v6952 = vld [vmem:[#allocation15 + $0xb8] sm:$0xff]
    %v6953 = vld [vmem:[#allocation15 + $0xc0] sm:$0xff]
    %v6954 = vld [vmem:[#allocation15 + $0xc8] sm:$0xff]
    %v6955 = vld [vmem:[#allocation15 + $0xd0] sm:$0xff]
    %v6956 = vld [vmem:[#allocation15 + $0xd8] sm:$0xff]
    %v6957 = vld [vmem:[#allocation15 + $0xe0] sm:$0xff]
    %v6958 = vld [vmem:[#allocation15 + $0xe8] sm:$0xff]
    %v6959 = vld [vmem:[#allocation15 + $0xf0] sm:$0xff]
    %v6960 = vld [vmem:[#allocation15 + $0xf8] sm:$0xff]
    %v6961 = vld [vmem:[#allocation15 + $0x100] sm:$0xff]
    %v6962 = vld [vmem:[#allocation15 + $0x108] sm:$0xff]
    %v6963 = vld [vmem:[#allocation15 + $0x110] sm:$0xff]
    %v6964 = vld [vmem:[#allocation15 + $0x118] sm:$0xff]
    %v6965 = vld [vmem:[#allocation15 + $0x120] sm:$0xff]
    %v6966 = vld [vmem:[#allocation15 + $0x128] sm:$0xff]
    %v6967 = vld [vmem:[#allocation15 + $0x130] sm:$0xff]
    %v6968 = vld [vmem:[#allocation15 + $0x138] sm:$0xff]
    %v6969 = vld [vmem:[#allocation15 + $0x140] sm:$0xff]
    %v6970 = vld [vmem:[#allocation15 + $0x148] sm:$0xff]
    %v6971 = vld [vmem:[#allocation15 + $0x150] sm:$0xff]
    %v6972 = vld [vmem:[#allocation15 + $0x158] sm:$0xff]
    %v6973 = vld [vmem:[#allocation15 + $0x160] sm:$0xff]
    %v6974 = vld [vmem:[#allocation15 + $0x168] sm:$0xff]
    %v6975 = vld [vmem:[#allocation15 + $0x170] sm:$0xff]
    %v6976 = vld [vmem:[#allocation15 + $0x178] sm:$0xff]
    %v6977 = vld [vmem:[#allocation15 + $0x180] sm:$0xff]
    %v6978 = vld [vmem:[#allocation15 + $0x188] sm:$0xff]
    %v6979 = vld [vmem:[#allocation15 + $0x190] sm:$0xff]
    %v6980 = vld [vmem:[#allocation15 + $0x198] sm:$0xff]
    %v6981 = vld [vmem:[#allocation15 + $0x1a0] sm:$0xff]
    %v6982 = vld [vmem:[#allocation15 + $0x1a8] sm:$0xff]
    %v6983 = vld [vmem:[#allocation15 + $0x1b0] sm:$0xff]
    %v6984 = vld [vmem:[#allocation15 + $0x1b8] sm:$0xff]
    %v6985 = vld [vmem:[#allocation15 + $0x1c0] sm:$0xff]
    %v6986 = vld [vmem:[#allocation15 + $0x1c8] sm:$0xff]
    %v6987 = vld [vmem:[#allocation15 + $0x1d0] sm:$0xff]
    %v6988 = vld [vmem:[#allocation15 + $0x1d8] sm:$0xff]
    %v6989 = vld [vmem:[#allocation15 + $0x1e0] sm:$0xff]
    %v6990 = vld [vmem:[#allocation15 + $0x1e8] sm:$0xff]
    %v6991 = vld [vmem:[#allocation15 + $0x1f0] sm:$0xff]
    %v6992 = vld [vmem:[#allocation15 + $0x1f8] sm:$0xff]
    %v6993 = vld [vmem:[#allocation15 + $0x200] sm:$0xff]
    %v6994 = vld [vmem:[#allocation15 + $0x208] sm:$0xff]
    %v6995 = vld [vmem:[#allocation15 + $0x210] sm:$0xff]
    %v6996 = vld [vmem:[#allocation15 + $0x218] sm:$0xff]
    %v6997 = vld [vmem:[#allocation15 + $0x220] sm:$0xff]
    %v6998 = vld [vmem:[#allocation15 + $0x228] sm:$0xff]
    %v6999 = vld [vmem:[#allocation15 + $0x230] sm:$0xff]
    %v7000 = vld [vmem:[#allocation15 + $0x238] sm:$0xff]
    %v7001 = vld [vmem:[#allocation15 + $0x240] sm:$0xff]
    %v7002 = vld [vmem:[#allocation15 + $0x248] sm:$0xff]
    %v7003 = vld [vmem:[#allocation15 + $0x250] sm:$0xff]
    %v7004 = vld [vmem:[#allocation15 + $0x258] sm:$0xff]
    %v7005 = vld [vmem:[#allocation15 + $0x260] sm:$0xff]
    %v7006 = vld [vmem:[#allocation15 + $0x268] sm:$0xff]
    %v7007 = vld [vmem:[#allocation15 + $0x270] sm:$0xff]
    %v7008 = vld [vmem:[#allocation15 + $0x278] sm:$0xff]
    %v7009 = vld [vmem:[#allocation15 + $0x280] sm:$0xff]
    %v7010 = vld [vmem:[#allocation15 + $0x288] sm:$0xff]
    %v7011 = vld [vmem:[#allocation15 + $0x290] sm:$0xff]
    %v7012 = vld [vmem:[#allocation15 + $0x298] sm:$0xff]
    %v7013 = vld [vmem:[#allocation15 + $0x2a0] sm:$0xff]
    %v7014 = vld [vmem:[#allocation15 + $0x2a8] sm:$0xff]
    %v7015 = vld [vmem:[#allocation15 + $0x2b0] sm:$0xff]
    %v7016 = vld [vmem:[#allocation15 + $0x2b8] sm:$0xff]
    %v7017 = vld [vmem:[#allocation15 + $0x2c0] sm:$0xff]
    %v7018 = vld [vmem:[#allocation15 + $0x2c8] sm:$0xff]
    %v7019 = vld [vmem:[#allocation15 + $0x2d0] sm:$0xff]
    %v7020 = vld [vmem:[#allocation15 + $0x2d8] sm:$0xff]
    %v7021 = vld [vmem:[#allocation15 + $0x2e0] sm:$0xff]
    %v7022 = vld [vmem:[#allocation15 + $0x2e8] sm:$0xff]
    %v7023 = vld [vmem:[#allocation15 + $0x2f0] sm:$0xff]
    %v7024 = vld [vmem:[#allocation15 + $0x2f8] sm:$0xff]
    %v7025 = vld [vmem:[#allocation15 + $0x300] sm:$0xff]
    %v7026 = vld [vmem:[#allocation15 + $0x308] sm:$0xff]
    %v7027 = vld [vmem:[#allocation15 + $0x310] sm:$0xff]
    %v7028 = vld [vmem:[#allocation15 + $0x318] sm:$0xff]
    %v7029 = vld [vmem:[#allocation15 + $0x320] sm:$0xff]
    %v7030 = vld [vmem:[#allocation15 + $0x328] sm:$0xff]
    %v7031 = vld [vmem:[#allocation15 + $0x330] sm:$0xff]
    %v7032 = vld [vmem:[#allocation15 + $0x338] sm:$0xff]
    %v7033 = vld [vmem:[#allocation15 + $0x340] sm:$0xff]
    %v7034 = vld [vmem:[#allocation15 + $0x348] sm:$0xff]
    %v7035 = vld [vmem:[#allocation15 + $0x350] sm:$0xff]
    %v7036 = vld [vmem:[#allocation15 + $0x358] sm:$0xff]
    %v7037 = vld [vmem:[#allocation15 + $0x360] sm:$0xff]
    %v7038 = vld [vmem:[#allocation15 + $0x368] sm:$0xff]
    %v7039 = vld [vmem:[#allocation15 + $0x370] sm:$0xff]
    %v7040 = vld [vmem:[#allocation15 + $0x378] sm:$0xff]
    %v7041 = vpack.c.bf16 %v6730, %v6730
    %v7042 = vpack.c.bf16 %v6731, %v6731
    %v7043 = vpack.c.bf16 %v6732, %v6732
    %v7044 = vpack.c.bf16 %v6925, %v6925
    %v7045 = vpack.c.bf16 %v6926, %v6926
    %v7046 = vpack.c.bf16 %v6927, %v6927
    %v7047 = vpack.c.bf16 %v6928, %v6928
    %s7048 = scalar_lea.vmem [#allocation18], 115
    %v7049 = vld [vmem:[%s7048] ss:$8 sm:$0x3]
    %v7051 = vlaneseq
    %v7052 = vshrl.u32 %v7051, 7
    %v7053 = vsub.s32 0, %v7052
    %v7054 = vrot.slane %v7049, %v7053
    %v7055 = vlaneseq
    %v7056 = vshrl.u32 %v7055, 7
    %v7057 = vsub.s32 1, %v7056
    %v7058 = vrot.slane %v7049, %v7057
    %v7173 = vunpack.c.l.b16 %v6929
    %v7174 = vunpack.c.h.b16 %v6929
    %v7175 = vunpack.c.l.b16 %v6930
    %v7176 = vunpack.c.h.b16 %v6930
    %v7177 = vunpack.c.l.b16 %v6931
    %v7178 = vunpack.c.h.b16 %v6931
    %v7179 = vunpack.c.l.b16 %v6932
    %v7180 = vunpack.c.h.b16 %v6932
    %v7181 = vunpack.c.l.b16 %v6933
    %v7182 = vunpack.c.h.b16 %v6933
    %v7183 = vunpack.c.l.b16 %v6934
    %v7184 = vunpack.c.h.b16 %v6934
    %v7185 = vunpack.c.l.b16 %v6935
    %v7186 = vunpack.c.h.b16 %v6935
    %v7187 = vunpack.c.l.b16 %v6936
    %v7188 = vunpack.c.h.b16 %v6936
    %v7189 = vunpack.c.l.b16 %v6937
    %v7190 = vunpack.c.h.b16 %v6937
    %v7191 = vunpack.c.l.b16 %v6938
    %v7192 = vunpack.c.h.b16 %v6938
    %v7193 = vunpack.c.l.b16 %v6939
    %v7194 = vunpack.c.h.b16 %v6939
    %v7195 = vunpack.c.l.b16 %v6940
    %v7196 = vunpack.c.h.b16 %v6940
    %v7197 = vunpack.c.l.b16 %v6941
    %v7198 = vunpack.c.h.b16 %v6941
    %v7199 = vunpack.c.l.b16 %v6942
    %v7200 = vunpack.c.h.b16 %v6942
    %v7201 = vunpack.c.l.b16 %v6943
    %v7202 = vunpack.c.h.b16 %v6943
    %v7203 = vunpack.c.l.b16 %v6944
    %v7204 = vunpack.c.h.b16 %v6944
    %v7205 = vunpack.c.l.b16 %v6945
    %v7206 = vunpack.c.h.b16 %v6945
    %v7207 = vunpack.c.l.b16 %v6946
    %v7208 = vunpack.c.h.b16 %v6946
    %v7209 = vunpack.c.l.b16 %v6947
    %v7210 = vunpack.c.h.b16 %v6947
    %v7211 = vunpack.c.l.b16 %v6948
    %v7212 = vunpack.c.h.b16 %v6948
    %v7213 = vunpack.c.l.b16 %v6949
    %v7214 = vunpack.c.h.b16 %v6949
    %v7215 = vunpack.c.l.b16 %v6950
    %v7216 = vunpack.c.h.b16 %v6950
    %v7217 = vunpack.c.l.b16 %v6951
    %v7218 = vunpack.c.h.b16 %v6951
    %v7219 = vunpack.c.l.b16 %v6952
    %v7220 = vunpack.c.h.b16 %v6952
    %v7221 = vunpack.c.l.b16 %v6953
    %v7222 = vunpack.c.h.b16 %v6953
    %v7223 = vunpack.c.l.b16 %v6954
    %v7224 = vunpack.c.h.b16 %v6954
    %v7225 = vunpack.c.l.b16 %v6955
    %v7226 = vunpack.c.h.b16 %v6955
    %v7227 = vunpack.c.l.b16 %v6956
    %v7228 = vunpack.c.h.b16 %v6956
    %v7229 = vunpack.c.l.b16 %v6957
    %v7230 = vunpack.c.h.b16 %v6957
    %v7231 = vunpack.c.l.b16 %v6958
    %v7232 = vunpack.c.h.b16 %v6958
    %v7233 = vunpack.c.l.b16 %v6959
    %v7234 = vunpack.c.h.b16 %v6959
    %v7235 = vunpack.c.l.b16 %v6960
    %v7236 = vunpack.c.h.b16 %v6960
    %v7237 = vunpack.c.l.b16 %v6961
    %v7238 = vunpack.c.h.b16 %v6961
    %v7239 = vunpack.c.l.b16 %v6962
    %v7240 = vunpack.c.h.b16 %v6962
    %v7241 = vunpack.c.l.b16 %v6963
    %v7242 = vunpack.c.h.b16 %v6963
    %v7243 = vunpack.c.l.b16 %v6964
    %v7244 = vunpack.c.h.b16 %v6964
    %v7245 = vunpack.c.l.b16 %v6965
    %v7246 = vunpack.c.h.b16 %v6965
    %v7247 = vunpack.c.l.b16 %v6966
    %v7248 = vunpack.c.h.b16 %v6966
    %v7249 = vunpack.c.l.b16 %v6967
    %v7250 = vunpack.c.h.b16 %v6967
    %v7251 = vunpack.c.l.b16 %v6968
    %v7252 = vunpack.c.h.b16 %v6968
    %v7253 = vunpack.c.l.b16 %v6969
    %v7254 = vunpack.c.h.b16 %v6969
    %v7255 = vunpack.c.l.b16 %v6970
    %v7256 = vunpack.c.h.b16 %v6970
    %v7257 = vunpack.c.l.b16 %v6971
    %v7258 = vunpack.c.h.b16 %v6971
    %v7259 = vunpack.c.l.b16 %v6972
    %v7260 = vunpack.c.h.b16 %v6972
    %v7261 = vunpack.c.l.b16 %v6973
    %v7262 = vunpack.c.h.b16 %v6973
    %v7263 = vunpack.c.l.b16 %v6974
    %v7264 = vunpack.c.h.b16 %v6974
    %v7265 = vunpack.c.l.b16 %v6975
    %v7266 = vunpack.c.h.b16 %v6975
    %v7267 = vunpack.c.l.b16 %v6976
    %v7268 = vunpack.c.h.b16 %v6976
    %v7269 = vunpack.c.l.b16 %v6977
    %v7270 = vunpack.c.h.b16 %v6977
    %v7271 = vunpack.c.l.b16 %v6978
    %v7272 = vunpack.c.h.b16 %v6978
    %v7273 = vunpack.c.l.b16 %v6979
    %v7274 = vunpack.c.h.b16 %v6979
    %v7275 = vunpack.c.l.b16 %v6980
    %v7276 = vunpack.c.h.b16 %v6980
    %v7277 = vunpack.c.l.b16 %v6981
    %v7278 = vunpack.c.h.b16 %v6981
    %v7279 = vunpack.c.l.b16 %v6982
    %v7280 = vunpack.c.h.b16 %v6982
    %v7281 = vunpack.c.l.b16 %v6983
    %v7282 = vunpack.c.h.b16 %v6983
    %v7283 = vunpack.c.l.b16 %v6984
    %v7284 = vunpack.c.h.b16 %v6984
    %v7285 = vunpack.c.l.b16 %v6985
    %v7286 = vunpack.c.h.b16 %v6985
    %v7287 = vunpack.c.l.b16 %v6986
    %v7288 = vunpack.c.h.b16 %v6986
    %v7289 = vunpack.c.l.b16 %v6987
    %v7290 = vunpack.c.h.b16 %v6987
    %v7291 = vunpack.c.l.b16 %v6988
    %v7292 = vunpack.c.h.b16 %v6988
    %v7293 = vunpack.c.l.b16 %v6989
    %v7294 = vunpack.c.h.b16 %v6989
    %v7295 = vunpack.c.l.b16 %v6990
    %v7296 = vunpack.c.h.b16 %v6990
    %v7297 = vunpack.c.l.b16 %v6991
    %v7298 = vunpack.c.h.b16 %v6991
    %v7299 = vunpack.c.l.b16 %v6992
    %v7300 = vunpack.c.h.b16 %v6992
    %v7301 = vunpack.c.l.b16 %v6993
    %v7302 = vunpack.c.h.b16 %v6993
    %v7303 = vunpack.c.l.b16 %v6994
    %v7304 = vunpack.c.h.b16 %v6994
    %v7305 = vunpack.c.l.b16 %v6995
    %v7306 = vunpack.c.h.b16 %v6995
    %v7307 = vunpack.c.l.b16 %v6996
    %v7308 = vunpack.c.h.b16 %v6996
    %v7309 = vunpack.c.l.b16 %v6997
    %v7310 = vunpack.c.h.b16 %v6997
    %v7311 = vunpack.c.l.b16 %v6998
    %v7312 = vunpack.c.h.b16 %v6998
    %v7313 = vunpack.c.l.b16 %v6999
    %v7314 = vunpack.c.h.b16 %v6999
    %v7315 = vunpack.c.l.b16 %v7000
    %v7316 = vunpack.c.h.b16 %v7000
    %v7317 = vunpack.c.l.b16 %v7001
    %v7318 = vunpack.c.h.b16 %v7001
    %v7319 = vunpack.c.l.b16 %v7002
    %v7320 = vunpack.c.h.b16 %v7002
    %v7321 = vunpack.c.l.b16 %v7003
    %v7322 = vunpack.c.h.b16 %v7003
    %v7323 = vunpack.c.l.b16 %v7004
    %v7324 = vunpack.c.h.b16 %v7004
    %v7325 = vunpack.c.l.b16 %v7005
    %v7326 = vunpack.c.h.b16 %v7005
    %v7327 = vunpack.c.l.b16 %v7006
    %v7328 = vunpack.c.h.b16 %v7006
    %v7329 = vunpack.c.l.b16 %v7007
    %v7330 = vunpack.c.h.b16 %v7007
    %v7331 = vunpack.c.l.b16 %v7008
    %v7332 = vunpack.c.h.b16 %v7008
    %v7333 = vunpack.c.l.b16 %v7009
    %v7334 = vunpack.c.h.b16 %v7009
    %v7335 = vunpack.c.l.b16 %v7010
    %v7336 = vunpack.c.h.b16 %v7010
    %v7337 = vunpack.c.l.b16 %v7011
    %v7338 = vunpack.c.h.b16 %v7011
    %v7339 = vunpack.c.l.b16 %v7012
    %v7340 = vunpack.c.h.b16 %v7012
    %v7341 = vunpack.c.l.b16 %v7013
    %v7342 = vunpack.c.h.b16 %v7013
    %v7343 = vunpack.c.l.b16 %v7014
    %v7344 = vunpack.c.h.b16 %v7014
    %v7345 = vunpack.c.l.b16 %v7015
    %v7346 = vunpack.c.h.b16 %v7015
    %v7347 = vunpack.c.l.b16 %v7016
    %v7348 = vunpack.c.h.b16 %v7016
    %v7349 = vunpack.c.l.b16 %v7017
    %v7350 = vunpack.c.h.b16 %v7017
    %v7351 = vunpack.c.l.b16 %v7018
    %v7352 = vunpack.c.h.b16 %v7018
    %v7353 = vunpack.c.l.b16 %v7019
    %v7354 = vunpack.c.h.b16 %v7019
    %v7355 = vunpack.c.l.b16 %v7020
    %v7356 = vunpack.c.h.b16 %v7020
    %v7357 = vunpack.c.l.b16 %v7021
    %v7358 = vunpack.c.h.b16 %v7021
    %v7359 = vunpack.c.l.b16 %v7022
    %v7360 = vunpack.c.h.b16 %v7022
    %v7361 = vunpack.c.l.b16 %v7023
    %v7362 = vunpack.c.h.b16 %v7023
    %v7363 = vunpack.c.l.b16 %v7024
    %v7364 = vunpack.c.h.b16 %v7024
    %v7365 = vunpack.c.l.b16 %v7025
    %v7366 = vunpack.c.h.b16 %v7025
    %v7367 = vunpack.c.l.b16 %v7026
    %v7368 = vunpack.c.h.b16 %v7026
    %v7369 = vunpack.c.l.b16 %v7027
    %v7370 = vunpack.c.h.b16 %v7027
    %v7371 = vunpack.c.l.b16 %v7028
    %v7372 = vunpack.c.h.b16 %v7028
    %v7373 = vunpack.c.l.b16 %v7029
    %v7374 = vunpack.c.h.b16 %v7029
    %v7375 = vunpack.c.l.b16 %v7030
    %v7376 = vunpack.c.h.b16 %v7030
    %v7377 = vunpack.c.l.b16 %v7031
    %v7378 = vunpack.c.h.b16 %v7031
    %v7379 = vunpack.c.l.b16 %v7032
    %v7380 = vunpack.c.h.b16 %v7032
    %v7381 = vunpack.c.l.b16 %v7033
    %v7382 = vunpack.c.h.b16 %v7033
    %v7383 = vunpack.c.l.b16 %v7034
    %v7384 = vunpack.c.h.b16 %v7034
    %v7385 = vunpack.c.l.b16 %v7035
    %v7386 = vunpack.c.h.b16 %v7035
    %v7387 = vunpack.c.l.b16 %v7036
    %v7388 = vunpack.c.h.b16 %v7036
    %v7389 = vunpack.c.l.b16 %v7037
    %v7390 = vunpack.c.h.b16 %v7037
    %v7391 = vunpack.c.l.b16 %v7038
    %v7392 = vunpack.c.h.b16 %v7038
    %v7393 = vunpack.c.l.b16 %v7039
    %v7394 = vunpack.c.h.b16 %v7039
    %v7395 = vunpack.c.l.b16 %v7040
    %v7396 = vunpack.c.h.b16 %v7040
    %v7397 = vpack.c.b16 %v7175, %v7173
    %v7398 = vpack.c.b16 %v7176, %v7174
    %v7399 = vpack.c.b16 %v7179, %v7177
    %v7400 = vpack.c.b16 %v7180, %v7178
    %v7401 = vpack.c.b16 %v7183, %v7181
    %v7402 = vpack.c.b16 %v7184, %v7182
    %v7403 = vpack.c.b16 %v7187, %v7185
    %v7404 = vpack.c.b16 %v7188, %v7186
    %v7405 = vpack.c.b16 %v7191, %v7189
    %v7406 = vpack.c.b16 %v7192, %v7190
    %v7407 = vpack.c.b16 %v7195, %v7193
    %v7408 = vpack.c.b16 %v7196, %v7194
    %v7409 = vpack.c.b16 %v7199, %v7197
    %v7410 = vpack.c.b16 %v7200, %v7198
    %v7411 = vpack.c.b16 %v7203, %v7201
    %v7412 = vpack.c.b16 %v7204, %v7202
    %v7413 = vpack.c.b16 %v7207, %v7205
    %v7414 = vpack.c.b16 %v7208, %v7206
    %v7415 = vpack.c.b16 %v7211, %v7209
    %v7416 = vpack.c.b16 %v7212, %v7210
    %v7417 = vpack.c.b16 %v7215, %v7213
    %v7418 = vpack.c.b16 %v7216, %v7214
    %v7419 = vpack.c.b16 %v7219, %v7217
    %v7420 = vpack.c.b16 %v7220, %v7218
    %v7421 = vpack.c.b16 %v7223, %v7221
    %v7422 = vpack.c.b16 %v7224, %v7222
    %v7423 = vpack.c.b16 %v7227, %v7225
    %v7424 = vpack.c.b16 %v7228, %v7226
    %v7425 = vpack.c.b16 %v7231, %v7229
    %v7426 = vpack.c.b16 %v7232, %v7230
    %v7427 = vpack.c.b16 %v7235, %v7233
    %v7428 = vpack.c.b16 %v7236, %v7234
    %v7429 = vpack.c.b16 %v7239, %v7237
    %v7430 = vpack.c.b16 %v7240, %v7238
    %v7431 = vpack.c.b16 %v7243, %v7241
    %v7432 = vpack.c.b16 %v7244, %v7242
    %v7433 = vpack.c.b16 %v7247, %v7245
    %v7434 = vpack.c.b16 %v7248, %v7246
    %v7435 = vpack.c.b16 %v7251, %v7249
    %v7436 = vpack.c.b16 %v7252, %v7250
    %v7437 = vpack.c.b16 %v7255, %v7253
    %v7438 = vpack.c.b16 %v7256, %v7254
    %v7439 = vpack.c.b16 %v7259, %v7257
    %v7440 = vpack.c.b16 %v7260, %v7258
    %v7441 = vpack.c.b16 %v7263, %v7261
    %v7442 = vpack.c.b16 %v7264, %v7262
    %v7443 = vpack.c.b16 %v7267, %v7265
    %v7444 = vpack.c.b16 %v7268, %v7266
    %v7445 = vpack.c.b16 %v7271, %v7269
    %v7446 = vpack.c.b16 %v7272, %v7270
    %v7447 = vpack.c.b16 %v7275, %v7273
    %v7448 = vpack.c.b16 %v7276, %v7274
    %v7449 = vpack.c.b16 %v7279, %v7277
    %v7450 = vpack.c.b16 %v7280, %v7278
    %v7451 = vpack.c.b16 %v7283, %v7281
    %v7452 = vpack.c.b16 %v7284, %v7282
    %v7453 = vpack.c.b16 %v7287, %v7285
    %v7454 = vpack.c.b16 %v7288, %v7286
    %v7455 = vpack.c.b16 %v7291, %v7289
    %v7456 = vpack.c.b16 %v7292, %v7290
    %v7457 = vpack.c.b16 %v7295, %v7293
    %v7458 = vpack.c.b16 %v7296, %v7294
    %v7459 = vpack.c.b16 %v7299, %v7297
    %v7460 = vpack.c.b16 %v7300, %v7298
    %v7461 = vpack.c.b16 %v7303, %v7301
    %v7462 = vpack.c.b16 %v7304, %v7302
    %v7463 = vpack.c.b16 %v7307, %v7305
    %v7464 = vpack.c.b16 %v7308, %v7306
    %v7465 = vpack.c.b16 %v7311, %v7309
    %v7466 = vpack.c.b16 %v7312, %v7310
    %v7467 = vpack.c.b16 %v7315, %v7313
    %v7468 = vpack.c.b16 %v7316, %v7314
    %v7469 = vpack.c.b16 %v7319, %v7317
    %v7470 = vpack.c.b16 %v7320, %v7318
    %v7471 = vpack.c.b16 %v7323, %v7321
    %v7472 = vpack.c.b16 %v7324, %v7322
    %v7473 = vpack.c.b16 %v7327, %v7325
    %v7474 = vpack.c.b16 %v7328, %v7326
    %v7475 = vpack.c.b16 %v7331, %v7329
    %v7476 = vpack.c.b16 %v7332, %v7330
    %v7477 = vpack.c.b16 %v7335, %v7333
    %v7478 = vpack.c.b16 %v7336, %v7334
    %v7479 = vpack.c.b16 %v7339, %v7337
    %v7480 = vpack.c.b16 %v7340, %v7338
    %v7481 = vpack.c.b16 %v7343, %v7341
    %v7482 = vpack.c.b16 %v7344, %v7342
    %v7483 = vpack.c.b16 %v7347, %v7345
    %v7484 = vpack.c.b16 %v7348, %v7346
    %v7485 = vpack.c.b16 %v7351, %v7349
    %v7486 = vpack.c.b16 %v7352, %v7350
    %v7487 = vpack.c.b16 %v7355, %v7353
    %v7488 = vpack.c.b16 %v7356, %v7354
    %v7489 = vpack.c.b16 %v7359, %v7357
    %v7490 = vpack.c.b16 %v7360, %v7358
    %v7491 = vpack.c.b16 %v7363, %v7361
    %v7492 = vpack.c.b16 %v7364, %v7362
    %v7493 = vpack.c.b16 %v7367, %v7365
    %v7494 = vpack.c.b16 %v7368, %v7366
    %v7495 = vpack.c.b16 %v7371, %v7369
    %v7496 = vpack.c.b16 %v7372, %v7370
    %v7497 = vpack.c.b16 %v7375, %v7373
    %v7498 = vpack.c.b16 %v7376, %v7374
    %v7499 = vpack.c.b16 %v7379, %v7377
    %v7500 = vpack.c.b16 %v7380, %v7378
    %v7501 = vpack.c.b16 %v7383, %v7381
    %v7502 = vpack.c.b16 %v7384, %v7382
    %v7503 = vpack.c.b16 %v7387, %v7385
    %v7504 = vpack.c.b16 %v7388, %v7386
    %v7505 = vpack.c.b16 %v7391, %v7389
    %v7506 = vpack.c.b16 %v7392, %v7390
    %v7507 = vpack.c.b16 %v7395, %v7393
    %v7508 = vpack.c.b16 %v7396, %v7394
    %7621 = vmatprep.subr.bf16.mxu0 %v7398
    %7622 = vmatpush1.bf16.msra.mxu0 %v7397
    %7623 = vmatprep.subr.bf16.mxu0 %v7400
    %7624 = vmatpush1.bf16.msra.mxu0 %v7399
    %7625 = vmatprep.subr.bf16.mxu0 %v7402
    %7626 = vmatpush1.bf16.msra.mxu0 %v7401
    %7627 = vmatprep.subr.bf16.mxu0 %v7404
    %7628 = vmatpush1.bf16.msra.mxu0 %v7403
    %7629 = vmatprep.subr.bf16.mxu0 %v7406
    %7630 = vmatpush1.bf16.msra.mxu0 %v7405
    %7631 = vmatprep.subr.bf16.mxu0 %v7408
    %7632 = vmatpush1.bf16.msra.mxu0 %v7407
    %7633 = vmatprep.subr.bf16.mxu0 %v7410
    %7634 = vmatpush1.bf16.msra.mxu0 %v7409
    %7635 = vmatprep.subr.bf16.mxu0 %v7412
    %7636 = vmatpush1.bf16.msra.mxu0 %v7411
    %7637 = vmatprep.subr.bf16.mxu0 %v7414
    %7638 = vmatpush1.bf16.msra.mxu0 %v7413
    %7639 = vmatprep.subr.bf16.mxu0 %v7416
    %7640 = vmatpush1.bf16.msra.mxu0 %v7415
    %7641 = vmatprep.subr.bf16.mxu0 %v7418
    %7642 = vmatpush1.bf16.msra.mxu0 %v7417
    %7643 = vmatprep.subr.bf16.mxu0 %v7420
    %7644 = vmatpush1.bf16.msra.mxu0 %v7419
    %7645 = vmatprep.subr.bf16.mxu0 %v7422
    %7646 = vmatpush1.bf16.msra.mxu0 %v7421
    %7647 = vmatprep.subr.bf16.mxu0 %v7424
    %7648 = vmatpush1.bf16.msra.mxu0 %v7423
    %7649 = vmatprep.subr.bf16.mxu0 %v7426
    %7650 = vmatpush1.bf16.msra.mxu0 %v7425
    %7651 = vmatprep.subr.bf16.mxu0 %v7428
    %7652 = vmatpush1.bf16.msra.mxu0 %v7427
    %7653 = vmatprep.mubr.bf16.mxu0 %v7042
    %7654 = vmatmul.mubr.bf16.gmra.mrb[0].mxu0 %v7041
    %v7655 = vpop.f32.mrb[0].mxu0
    %v7656 = vadd.f32 %v7054, %v7655
    %v7657 = vpop.f32.mrb[0].mxu0
    %v7658 = vadd.f32 %v7058, %v7657
    %v7659 = vpop.f32.mrb[0].mxu0
    %v7660 = vpop.f32.mrb[0].mxu0
    %7661 = vdwg.mxu0
    %7662 = vmatprep.subr.bf16.mxu0 %v7430
    %7663 = vmatpush1.bf16.msra.mxu0 %v7429
    %7664 = vmatprep.subr.bf16.mxu0 %v7432
    %7665 = vmatpush1.bf16.msra.mxu0 %v7431
    %7666 = vmatprep.subr.bf16.mxu0 %v7434
    %7667 = vmatpush1.bf16.msra.mxu0 %v7433
    %7668 = vmatprep.subr.bf16.mxu0 %v7436
    %7669 = vmatpush1.bf16.msra.mxu0 %v7435
    %7670 = vmatprep.subr.bf16.mxu0 %v7438
    %7671 = vmatpush1.bf16.msra.mxu0 %v7437
    %7672 = vmatprep.subr.bf16.mxu0 %v7440
    %7673 = vmatpush1.bf16.msra.mxu0 %v7439
    %7674 = vmatprep.subr.bf16.mxu0 %v7442
    %7675 = vmatpush1.bf16.msra.mxu0 %v7441
    %7676 = vmatprep.subr.bf16.mxu0 %v7444
    %7677 = vmatpush1.bf16.msra.mxu0 %v7443
    %7678 = vmatprep.subr.bf16.mxu0 %v7446
    %7679 = vmatpush1.bf16.msra.mxu0 %v7445
    %7680 = vmatprep.subr.bf16.mxu0 %v7448
    %7681 = vmatpush1.bf16.msra.mxu0 %v7447
    %7682 = vmatprep.subr.bf16.mxu0 %v7450
    %7683 = vmatpush1.bf16.msra.mxu0 %v7449
    %7684 = vmatprep.subr.bf16.mxu0 %v7452
    %7685 = vmatpush1.bf16.msra.mxu0 %v7451
    %7686 = vmatprep.subr.bf16.mxu0 %v7454
    %7687 = vmatpush1.bf16.msra.mxu0 %v7453
    %7688 = vmatprep.subr.bf16.mxu0 %v7456
    %7689 = vmatpush1.bf16.msra.mxu0 %v7455
    %7690 = vmatprep.subr.bf16.mxu0 %v7458
    %7691 = vmatpush1.bf16.msra.mxu0 %v7457
    %7692 = vmatprep.subr.bf16.mxu0 %v7460
    %7693 = vmatpush1.bf16.msra.mxu0 %v7459
    %7694 = vmatprep.mubr.bf16.mxu0 %v7044
    %7695 = vmatmul.mubr.bf16.gmra.mrb[0].mxu0 %v7043
    %v7696 = vpop.f32.mrb[0].mxu0
    %v7697 = vadd.f32 %v7656, %v7696
    %v7698 = vpop.f32.mrb[0].mxu0
    %v7699 = vadd.f32 %v7658, %v7698
    %v7700 = vpop.f32.mrb[0].mxu0
    %v7701 = vpop.f32.mrb[0].mxu0
    %7702 = vdwg.mxu0
    %7703 = vmatprep.subr.bf16.mxu0 %v7462
    %7704 = vmatpush1.bf16.msra.mxu0 %v7461
    %7705 = vmatprep.subr.bf16.mxu0 %v7464
    %7706 = vmatpush1.bf16.msra.mxu0 %v7463
    %7707 = vmatprep.subr.bf16.mxu0 %v7466
    %7708 = vmatpush1.bf16.msra.mxu0 %v7465
    %7709 = vmatprep.subr.bf16.mxu0 %v7468
    %7710 = vmatpush1.bf16.msra.mxu0 %v7467
    %7711 = vmatprep.subr.bf16.mxu0 %v7470
    %7712 = vmatpush1.bf16.msra.mxu0 %v7469
    %7713 = vmatprep.subr.bf16.mxu0 %v7472
    %7714 = vmatpush1.bf16.msra.mxu0 %v7471
    %7715 = vmatprep.subr.bf16.mxu0 %v7474
    %7716 = vmatpush1.bf16.msra.mxu0 %v7473
    %7717 = vmatprep.subr.bf16.mxu0 %v7476
    %7718 = vmatpush1.bf16.msra.mxu0 %v7475
    %7719 = vmatprep.subr.bf16.mxu0 %v7478
    %7720 = vmatpush1.bf16.msra.mxu0 %v7477
    %7721 = vmatprep.subr.bf16.mxu0 %v7480
    %7722 = vmatpush1.bf16.msra.mxu0 %v7479
    %7723 = vmatprep.subr.bf16.mxu0 %v7482
    %7724 = vmatpush1.bf16.msra.mxu0 %v7481
    %7725 = vmatprep.subr.bf16.mxu0 %v7484
    %7726 = vmatpush1.bf16.msra.mxu0 %v7483
    %7727 = vmatprep.subr.bf16.mxu0 %v7486
    %7728 = vmatpush1.bf16.msra.mxu0 %v7485
    %7729 = vmatprep.subr.bf16.mxu0 %v7488
    %7730 = vmatpush1.bf16.msra.mxu0 %v7487
    %7731 = vmatprep.subr.bf16.mxu0 %v7490
    %7732 = vmatpush1.bf16.msra.mxu0 %v7489
    %7733 = vmatprep.subr.bf16.mxu0 %v7492
    %7734 = vmatpush1.bf16.msra.mxu0 %v7491
    %7735 = vmatprep.mubr.bf16.mxu0 %v7046
    %7736 = vmatmul.mubr.bf16.gmra.mrb[0].mxu0 %v7045
    %v7737 = vpop.f32.mrb[0].mxu0
    %v7738 = vadd.f32 %v7697, %v7737
    %v7739 = vpop.f32.mrb[0].mxu0
    %v7740 = vadd.f32 %v7699, %v7739
    %v7741 = vpop.f32.mrb[0].mxu0
    %v7742 = vpop.f32.mrb[0].mxu0
    %7743 = vdwg.mxu0
    %7744 = vmatprep.subr.bf16.mxu0 %v7494
    %7745 = vmatpush1.bf16.msra.mxu0 %v7493
    %7746 = vmatprep.subr.bf16.mxu0 %v7496
    %7747 = vmatpush1.bf16.msra.mxu0 %v7495
    %7748 = vmatprep.subr.bf16.mxu0 %v7498
    %7749 = vmatpush1.bf16.msra.mxu0 %v7497
    %7750 = vmatprep.subr.bf16.mxu0 %v7500
    %7751 = vmatpush1.bf16.msra.mxu0 %v7499
    %7752 = vmatprep.subr.bf16.mxu0 %v7502
    %7753 = vmatpush1.bf16.msra.mxu0 %v7501
    %7754 = vmatprep.subr.bf16.mxu0 %v7504
    %7755 = vmatpush1.bf16.msra.mxu0 %v7503
    %7756 = vmatprep.subr.bf16.mxu0 %v7506
    %7757 = vmatpush1.bf16.msra.mxu0 %v7505
    %7758 = vmatprep.subr.bf16.mxu0 %v7508
    %7759 = vmatpush1.bf16.msra.mxu0 %v7507
    %7760 = vmatprep.subr.bf16.mxu0 0
    %7761 = vmatpush1.bf16.msra.mxu0 0
    %7762 = vmatprep.subr.bf16.mxu0 0
    %7763 = vmatpush1.bf16.msra.mxu0 0
    %7764 = vmatprep.subr.bf16.mxu0 0
    %7765 = vmatpush1.bf16.msra.mxu0 0
    %7766 = vmatprep.subr.bf16.mxu0 0
    %7767 = vmatpush1.bf16.msra.mxu0 0
    %7768 = vmatprep.subr.bf16.mxu0 0
    %7769 = vmatpush1.bf16.msra.mxu0 0
    %7770 = vmatprep.subr.bf16.mxu0 0
    %7771 = vmatpush1.bf16.msra.mxu0 0
    %7772 = vmatprep.subr.bf16.mxu0 0
    %7773 = vmatpush1.bf16.msra.mxu0 0
    %7774 = vmatprep.subr.bf16.mxu0 0
    %7775 = vmatpush1.bf16.msra.mxu0 0
    %7776 = vmatprep.mubr.bf16.mxu0 0
    %7777 = vmatmul.mubr.bf16.gmra.mrb[0].mxu0 %v7047
    %v7778 = vpop.f32.mrb[0].mxu0
    %v7779 = vadd.f32 %v7738, %v7778
    %v7780 = vpop.f32.mrb[0].mxu0
    %v7781 = vadd.f32 %v7740, %v7780
    %v7782 = vpop.f32.mrb[0].mxu0
    %v7783 = vpop.f32.mrb[0].mxu0
    %7784 = vdwg.mxu0
    %v7785 = vrot.slane %v7779, 4
    %v7786 = vadd.f32 %v7779, %v7785
    %v7787 = vrot.slane %v7786, 2
    %v7788 = vadd.f32 %v7786, %v7787
    %v7789 = vrot.slane %v7788, 1
    %v7790 = vadd.f32 %v7788, %v7789
    %v7791 = vrot.slane %v7781, 4
    %v7792 = vadd.f32 %v7781, %v7791
    %v7793 = vrot.slane %v7792, 2
    %v7794 = vadd.f32 %v7792, %v7793
    %v7795 = vrot.slane %v7794, 1
    %v7796 = vadd.f32 %v7794, %v7795
    %v7797 = vrcp.pop 8.0
    %v7798 = vmul.f32 %v7790, %v7797
    %v7799 = vmul.f32 %v7796, %v7797
    %v7800 = vmul.f32 %v7779, %v7779
    %v7801 = vmul.f32 %v7781, %v7781
    %v7802 = vrot.slane %v7800, 4
    %v7803 = vadd.f32 %v7800, %v7802
    %v7804 = vrot.slane %v7803, 2
    %v7805 = vadd.f32 %v7803, %v7804
    %v7806 = vrot.slane %v7805, 1
    %v7807 = vadd.f32 %v7805, %v7806
    %v7808 = vrot.slane %v7801, 4
    %v7809 = vadd.f32 %v7801, %v7808
    %v7810 = vrot.slane %v7809, 2
    %v7811 = vadd.f32 %v7809, %v7810
    %v7812 = vrot.slane %v7811, 1
    %v7813 = vadd.f32 %v7811, %v7812
    %v7814 = vmul.f32 %v7807, %v7797
    %v7815 = vmul.f32 %v7813, %v7797
    %v7816 = vmul.f32 %v7798, %v7798
    %v7817 = vmul.f32 %v7799, %v7799
    %v7818 = vsub.f32 %v7814, %v7816
    %v7819 = vsub.f32 %v7815, %v7817
    %v7820 = vsub.f32 %v7779, %v7798
    %v7821 = vsub.f32 %v7781, %v7799
    %v7822 = vadd.f32 %v7818, 1e-05
    %v7823 = vadd.f32 %v7819, 1e-05
    %v7824 = vrsqrt.pop %v7822
    %v7825 = vrsqrt.pop %v7823
    %v7826 = vmul.f32 %v7820, %v7824
    %v7827 = vmul.f32 %v7821, %v7825
    %s7828 = scalar_lea.vmem [#allocation18], 116
    %v7829 = vld [vmem:[%s7828] ss:$8 sm:$0x3]
    %v7831 = vlaneseq
    %v7832 = vshrl.u32 %v7831, 7
    %v7833 = vsub.s32 0, %v7832
    %v7834 = vrot.slane %v7829, %v7833
    %v7835 = vlaneseq
    %v7836 = vshrl.u32 %v7835, 7
    %v7837 = vsub.s32 1, %v7836
    %v7838 = vrot.slane %v7829, %v7837
    %v7841 = vmul.f32 %v7826, %v7834
    %v7842 = vmul.f32 %v7827, %v7838
    %s7843 = scalar_lea.vmem [#allocation18], 117
    %v7844 = vld [vmem:[%s7843] ss:$8 sm:$0x3]
    %v7846 = vlaneseq
    %v7847 = vshrl.u32 %v7846, 7
    %v7848 = vsub.s32 0, %v7847
    %v7849 = vrot.slane %v7844, %v7848
    %v7850 = vlaneseq
    %v7851 = vshrl.u32 %v7850, 7
    %v7852 = vsub.s32 1, %v7851
    %v7853 = vrot.slane %v7844, %v7852
    %v7856 = vadd.f32 %v7841, %v7849
    %v7857 = vadd.f32 %v7842, %v7853
    %v7858 = vmax.f32 %v7856, 0.0
    %v7859 = vmax.f32 %v7857, 0.0
    %v7860 = vld [vmem:[#allocation16] sm:$0xf]
    %v7861 = vld [vmem:[#allocation16 + $0x4] sm:$0xf]
    %v7862 = vld [vmem:[#allocation16 + $0x8] sm:$0xf]
    %v7863 = vld [vmem:[#allocation16 + $0xc] sm:$0xf]
    %v7864 = vld [vmem:[#allocation16 + $0x10] sm:$0xf]
    %v7865 = vld [vmem:[#allocation16 + $0x14] sm:$0xf]
    %v7866 = vld [vmem:[#allocation16 + $0x18] sm:$0xf]
    %v7867 = vld [vmem:[#allocation16 + $0x1c] sm:$0xf]
    %v7868 = vld [vmem:[#allocation16 + $0x20] sm:$0xf]
    %v7869 = vld [vmem:[#allocation16 + $0x24] sm:$0xf]
    %v7870 = vld [vmem:[#allocation16 + $0x28] sm:$0xf]
    %v7871 = vld [vmem:[#allocation16 + $0x2c] sm:$0xf]
    %v7872 = vld [vmem:[#allocation16 + $0x30] sm:$0xf]
    %v7873 = vld [vmem:[#allocation16 + $0x34] sm:$0xf]
    %v7874 = vld [vmem:[#allocation16 + $0x38] sm:$0xf]
    %v7875 = vld [vmem:[#allocation16 + $0x3c] sm:$0xf]
    %v7876 = vld [vmem:[#allocation16 + $0x40] sm:$0xf]
    %v7877 = vld [vmem:[#allocation16 + $0x44] sm:$0xf]
    %v7878 = vld [vmem:[#allocation16 + $0x48] sm:$0xf]
    %v7879 = vld [vmem:[#allocation16 + $0x4c] sm:$0xf]
    %v7880 = vld [vmem:[#allocation16 + $0x50] sm:$0xf]
    %v7881 = vld [vmem:[#allocation16 + $0x54] sm:$0xf]
    %v7882 = vld [vmem:[#allocation16 + $0x58] sm:$0xf]
    %v7883 = vld [vmem:[#allocation16 + $0x5c] sm:$0xf]
    %v7884 = vld [vmem:[#allocation16 + $0x60] sm:$0xf]
    %v7885 = vld [vmem:[#allocation16 + $0x64] sm:$0xf]
    %v7886 = vld [vmem:[#allocation16 + $0x68] sm:$0xf]
    %v7887 = vld [vmem:[#allocation16 + $0x6c] sm:$0xf]
    %v7888 = vld [vmem:[#allocation16 + $0x70] sm:$0xf]
    %v7889 = vld [vmem:[#allocation16 + $0x74] sm:$0xf]
    %v7890 = vld [vmem:[#allocation16 + $0x78] sm:$0xf]
    %v7891 = vld [vmem:[#allocation16 + $0x7c] sm:$0xf]
    %v7892 = vpack.c.bf16 %v7858, %v7858
    %v7893 = vpack.c.bf16 %v7859, %v7859
    %v7894 = vld [vmem:[#allocation18 + $0x76] ss:$0 sm:$0xff]
    %v7927 = vunpack.c.l.b16 %v7860
    %v7928 = vunpack.c.l.b16 %v7861
    %v7929 = vunpack.c.l.b16 %v7862
    %v7930 = vunpack.c.l.b16 %v7863
    %v7931 = vunpack.c.l.b16 %v7864
    %v7932 = vunpack.c.l.b16 %v7865
    %v7933 = vunpack.c.l.b16 %v7866
    %v7934 = vunpack.c.l.b16 %v7867
    %v7935 = vunpack.c.l.b16 %v7868
    %v7936 = vunpack.c.l.b16 %v7869
    %v7937 = vunpack.c.l.b16 %v7870
    %v7938 = vunpack.c.l.b16 %v7871
    %v7939 = vunpack.c.l.b16 %v7872
    %v7940 = vunpack.c.l.b16 %v7873
    %v7941 = vunpack.c.l.b16 %v7874
    %v7942 = vunpack.c.l.b16 %v7875
    %v7943 = vunpack.c.l.b16 %v7876
    %v7944 = vunpack.c.l.b16 %v7877
    %v7945 = vunpack.c.l.b16 %v7878
    %v7946 = vunpack.c.l.b16 %v7879
    %v7947 = vunpack.c.l.b16 %v7880
    %v7948 = vunpack.c.l.b16 %v7881
    %v7949 = vunpack.c.l.b16 %v7882
    %v7950 = vunpack.c.l.b16 %v7883
    %v7951 = vunpack.c.l.b16 %v7884
    %v7952 = vunpack.c.l.b16 %v7885
    %v7953 = vunpack.c.l.b16 %v7886
    %v7954 = vunpack.c.l.b16 %v7887
    %v7955 = vunpack.c.l.b16 %v7888
    %v7956 = vunpack.c.l.b16 %v7889
    %v7957 = vunpack.c.l.b16 %v7890
    %v7958 = vunpack.c.l.b16 %v7891
    %v7959 = vpack.c.b16 %v7928, %v7927
    %v7960 = vpack.c.b16 %v7930, %v7929
    %v7961 = vpack.c.b16 %v7932, %v7931
    %v7962 = vpack.c.b16 %v7934, %v7933
    %v7963 = vpack.c.b16 %v7936, %v7935
    %v7964 = vpack.c.b16 %v7938, %v7937
    %v7965 = vpack.c.b16 %v7940, %v7939
    %v7966 = vpack.c.b16 %v7942, %v7941
    %v7967 = vpack.c.b16 %v7944, %v7943
    %v7968 = vpack.c.b16 %v7946, %v7945
    %v7969 = vpack.c.b16 %v7948, %v7947
    %v7970 = vpack.c.b16 %v7950, %v7949
    %v7971 = vpack.c.b16 %v7952, %v7951
    %v7972 = vpack.c.b16 %v7954, %v7953
    %v7973 = vpack.c.b16 %v7956, %v7955
    %v7974 = vpack.c.b16 %v7958, %v7957
    %7991 = vmatprep.subr.bf16.mxu0 0
    %7992 = vmatpush1.bf16.msra.mxu0 %v7959
    %7993 = vmatprep.subr.bf16.mxu0 0
    %7994 = vmatpush1.bf16.msra.mxu0 %v7960
    %7995 = vmatprep.subr.bf16.mxu0 0
    %7996 = vmatpush1.bf16.msra.mxu0 %v7961
    %7997 = vmatprep.subr.bf16.mxu0 0
    %7998 = vmatpush1.bf16.msra.mxu0 %v7962
    %7999 = vmatprep.subr.bf16.mxu0 0
    %8000 = vmatpush1.bf16.msra.mxu0 %v7963
    %8001 = vmatprep.subr.bf16.mxu0 0
    %8002 = vmatpush1.bf16.msra.mxu0 %v7964
    %8003 = vmatprep.subr.bf16.mxu0 0
    %8004 = vmatpush1.bf16.msra.mxu0 %v7965
    %8005 = vmatprep.subr.bf16.mxu0 0
    %8006 = vmatpush1.bf16.msra.mxu0 %v7966
    %8007 = vmatprep.subr.bf16.mxu0 0
    %8008 = vmatpush1.bf16.msra.mxu0 %v7967
    %8009 = vmatprep.subr.bf16.mxu0 0
    %8010 = vmatpush1.bf16.msra.mxu0 %v7968
    %8011 = vmatprep.subr.bf16.mxu0 0
    %8012 = vmatpush1.bf16.msra.mxu0 %v7969
    %8013 = vmatprep.subr.bf16.mxu0 0
    %8014 = vmatpush1.bf16.msra.mxu0 %v7970
    %8015 = vmatprep.subr.bf16.mxu0 0
    %8016 = vmatpush1.bf16.msra.mxu0 %v7971
    %8017 = vmatprep.subr.bf16.mxu0 0
    %8018 = vmatpush1.bf16.msra.mxu0 %v7972
    %8019 = vmatprep.subr.bf16.mxu0 0
    %8020 = vmatpush1.bf16.msra.mxu0 %v7973
    %8021 = vmatprep.subr.bf16.mxu0 0
    %8022 = vmatpush1.bf16.msra.mxu0 %v7974
    %8023 = vmatprep.mubr.bf16.mxu0 %v7893
    %8024 = vmatmul.mubr.bf16.gmra.mrb[0].mxu0 %v7892
    %v8025 = vpop.f32.mrb[0].mxu0
    %v8026 = vadd.f32 %v7894, %v8025
    %v8027 = vpop.f32.mrb[0].mxu0
    %v8028 = vpop.f32.mrb[0].mxu0
    %v8029 = vpop.f32.mrb[0].mxu0
    %8030 = vdwg.mxu0
    %v8031 = vrot.slane %v8026, 4
    %v8032 = vadd.f32 %v8026, %v8031
    %v8033 = vrot.slane %v8032, 2
    %v8034 = vadd.f32 %v8032, %v8033
    %v8035 = vrot.slane %v8034, 1
    %v8036 = vadd.f32 %v8034, %v8035
    %v8037 = vmul.f32 %v8036, %v7797
    %v8038 = vmul.f32 %v8026, %v8026
    %v8039 = vrot.slane %v8038, 4
    %v8040 = vadd.f32 %v8038, %v8039
    %v8041 = vrot.slane %v8040, 2
    %v8042 = vadd.f32 %v8040, %v8041
    %v8043 = vrot.slane %v8042, 1
    %v8044 = vadd.f32 %v8042, %v8043
    %v8045 = vmul.f32 %v8044, %v7797
    %v8046 = vmul.f32 %v8037, %v8037
    %v8047 = vsub.f32 %v8045, %v8046
    %v8048 = vsub.f32 %v8026, %v8037
    %v8049 = vadd.f32 %v8047, 1e-05
    %v8050 = vrsqrt.pop %v8049
    %v8051 = vmul.f32 %v8048, %v8050
    %v8052 = vld [vmem:[#allocation18 + $0x77] ss:$0 sm:$0xff]
    %v8053 = vmul.f32 %v8051, %v8052
    %v8054 = vld [vmem:[#allocation18 + $0xa8] ss:$0 sm:$0xff]
    %v8055 = vadd.f32 %v8053, %v8054
    %v8056 = vmax.f32 %v8055, 0.0
    %v8057 = vld [vmem:[%s11] sm:$0xf]
    %v8058 = vld [vmem:[%s11 + $0x4] sm:$0xf]
    %v8059 = vld [vmem:[%s11 + $0x8] sm:$0xf]
    %v8060 = vld [vmem:[%s11 + $0xc] sm:$0xf]
    %v8061 = vld [vmem:[%s11 + $0x10] sm:$0xf]
    %v8062 = vld [vmem:[%s11 + $0x14] sm:$0xf]
    %v8063 = vld [vmem:[%s11 + $0x18] sm:$0xf]
    %v8064 = vld [vmem:[%s11 + $0x1c] sm:$0xf]
    %v8065 = vld [vmem:[%s11 + $0x20] sm:$0xf]
    %v8066 = vld [vmem:[%s11 + $0x24] sm:$0xf]
    %v8067 = vld [vmem:[%s11 + $0x28] sm:$0xf]
    %v8068 = vld [vmem:[%s11 + $0x2c] sm:$0xf]
    %v8069 = vld [vmem:[%s11 + $0x30] sm:$0xf]
    %v8070 = vld [vmem:[%s11 + $0x34] sm:$0xf]
    %v8071 = vld [vmem:[%s11 + $0x38] sm:$0xf]
    %v8072 = vld [vmem:[%s11 + $0x3c] sm:$0xf]
    %v8073 = vpack.c.bf16 %v8056, %v8056
    %v8074 = vld [vmem:[#allocation18 + $0xa9] ss:$0 sm:$0xff]
    %v8091 = vunpack.c.l.b16 %v8057
    %v8092 = vunpack.c.l.b16 %v8058
    %v8093 = vunpack.c.l.b16 %v8059
    %v8094 = vunpack.c.l.b16 %v8060
    %v8095 = vunpack.c.l.b16 %v8061
    %v8096 = vunpack.c.l.b16 %v8062
    %v8097 = vunpack.c.l.b16 %v8063
    %v8098 = vunpack.c.l.b16 %v8064
    %v8099 = vunpack.c.l.b16 %v8065
    %v8100 = vunpack.c.l.b16 %v8066
    %v8101 = vunpack.c.l.b16 %v8067
    %v8102 = vunpack.c.l.b16 %v8068
    %v8103 = vunpack.c.l.b16 %v8069
    %v8104 = vunpack.c.l.b16 %v8070
    %v8105 = vunpack.c.l.b16 %v8071
    %v8106 = vunpack.c.l.b16 %v8072
    %v8107 = vpack.c.b16 %v8092, %v8091
    %v8108 = vpack.c.b16 %v8094, %v8093
    %v8109 = vpack.c.b16 %v8096, %v8095
    %v8110 = vpack.c.b16 %v8098, %v8097
    %v8111 = vpack.c.b16 %v8100, %v8099
    %v8112 = vpack.c.b16 %v8102, %v8101
    %v8113 = vpack.c.b16 %v8104, %v8103
    %v8114 = vpack.c.b16 %v8106, %v8105
    %8123 = vmatprep.subr.bf16.mxu0 0
    %8124 = vmatpush1.bf16.msra.mxu0 %v8107
    %8125 = vmatprep.subr.bf16.mxu0 0
    %8126 = vmatpush1.bf16.msra.mxu0 %v8108
    %8127 = vmatprep.subr.bf16.mxu0 0
    %8128 = vmatpush1.bf16.msra.mxu0 %v8109
    %8129 = vmatprep.subr.bf16.mxu0 0
    %8130 = vmatpush1.bf16.msra.mxu0 %v8110
    %8131 = vmatprep.subr.bf16.mxu0 0
    %8132 = vmatpush1.bf16.msra.mxu0 %v8111
    %8133 = vmatprep.subr.bf16.mxu0 0
    %8134 = vmatpush1.bf16.msra.mxu0 %v8112
    %8135 = vmatprep.subr.bf16.mxu0 0
    %8136 = vmatpush1.bf16.msra.mxu0 %v8113
    %8137 = vmatprep.subr.bf16.mxu0 0
    %8138 = vmatpush1.bf16.msra.mxu0 %v8114
    %8139 = vmatprep.subr.bf16.mxu0 0
    %8140 = vmatpush1.bf16.msra.mxu0 0
    %8141 = vmatprep.subr.bf16.mxu0 0
    %8142 = vmatpush1.bf16.msra.mxu0 0
    %8143 = vmatprep.subr.bf16.mxu0 0
    %8144 = vmatpush1.bf16.msra.mxu0 0
    %8145 = vmatprep.subr.bf16.mxu0 0
    %8146 = vmatpush1.bf16.msra.mxu0 0
    %8147 = vmatprep.subr.bf16.mxu0 0
    %8148 = vmatpush1.bf16.msra.mxu0 0
    %8149 = vmatprep.subr.bf16.mxu0 0
    %8150 = vmatpush1.bf16.msra.mxu0 0
    %8151 = vmatprep.subr.bf16.mxu0 0
    %8152 = vmatpush1.bf16.msra.mxu0 0
    %8153 = vmatprep.subr.bf16.mxu0 0
    %8154 = vmatpush1.bf16.msra.mxu0 0
    %8155 = vmatprep.mubr.bf16.mxu0 0
    %8156 = vmatmul.mubr.bf16.gmra.mrb[0].mxu0 %v8073
    %v8157 = vpop.f32.mrb[0].mxu0
    %v8158 = vadd.f32 %v8074, %v8157
    %v8159 = vpop.f32.mrb[0].mxu0
    %v8160 = vpop.f32.mrb[0].mxu0
    %v8161 = vpop.f32.mrb[0].mxu0
    %8162 = vdwg.mxu0
    %vm8163 = vcmask 523264
    %v8164 = vsel %vm8163, %v8158, 0.0
    %v8165 = vrot.slane %v8164, 4
    %v8166 = vadd.f32 %v8164, %v8165
    %v8167 = vrot.slane %v8166, 2
    %v8168 = vadd.f32 %v8166, %v8167
    %v8169 = vrot.slane %v8168, 1
    %v8170 = vadd.f32 %v8168, %v8169
    %v8171 = vmul.f32 %v8170, %v7797
    %v8172 = vmul.f32 %v8158, %v8158
    %v8173 = vsel %vm8163, %v8172, 0.0
    %v8174 = vrot.slane %v8173, 4
    %v8175 = vadd.f32 %v8173, %v8174
    %v8176 = vrot.slane %v8175, 2
    %v8177 = vadd.f32 %v8175, %v8176
    %v8178 = vrot.slane %v8177, 1
    %v8179 = vadd.f32 %v8177, %v8178
    %v8180 = vmul.f32 %v8179, %v7797
    %v8181 = vmul.f32 %v8171, %v8171
    %v8182 = vsub.f32 %v8180, %v8181
    %v8183 = vsub.f32 %v8158, %v8171
    %v8184 = vadd.f32 %v8182, 1e-05
    %v8185 = vrsqrt.pop %v8184
    %v8186 = vmul.f32 %v8183, %v8185
    %v8187 = vld [vmem:[#allocation18 + $0xaa] ss:$0 sm:$0xff]
    %v8188 = vmul.f32 %v8186, %v8187
    %v8189 = vld [vmem:[#allocation18 + $0xab] ss:$0 sm:$0xff]
    %v8190 = vadd.f32 %v8188, %v8189
    %v8191 = vmax.f32 %v8190, 0.0
    %v8192 = vld [vmem:[#allocation18 + $0xac] ss:$0 sm:$0xff]
    %v8193 = vmul.f32 %v8191, %v8192
    %v8194 = vsel %vm8163, %v8193, 0.0
    %8195 = vadd.xlane.f32.xlu0 %v8194
    %v8196 = vpop.xlane.xlu0 %8195
    %v8197 = vld [vmem:[#allocation18 + $0xad] ss:$0 sm:$0xff]
    %v8198 = vadd.f32 %v8196, %v8197
    %v8199 = vxor.u32 %v8198, 2147483648
    %v8200 = vmul.f32 %v8199, 1.442695
    %v8201 = vpow.pop %v8200
    %v8202 = vadd.f32 %v8201, 1.0
    %v8203 = vrcp.pop %v8202
    %v8204 = vmul.f32 1.0, %v8203
    %vm8205 = vcmask 7168
    %8206 = vst.msk [vmem:[%s13] sm:$0xff] %vm8205, %v8204
    // Predicated region
    $region90: #{my_net_forward.1} parent=1 // pred_check
      _
    $region91: #{my_net_forward.1} parent=1 // pred_check_branch
      %8208 = sbr.rel (0) target = $region93
    $region92: #{my_net_forward.1} parent=1 // pred_region
      _
    $region93: #{my_net_forward.1} parent=1 // pred_fallthru
      _
    // Predicated region
    $region94: #{my_net_forward.1} parent=1 // pred_check
      _
    $region95: #{my_net_forward.1} parent=1 // pred_check_branch
      %8210 = sbr.rel (0) target = $region97
    $region96: #{my_net_forward.1} parent=1 // pred_region
      _
    $region97: #{my_net_forward.1} parent=1 // pred_fallthru
      _
    %8211 = vsyncpa [#allocation5], 1
    %8212 = vsyncpa [#allocation11], 1
    %8213 = vsyncpa [#allocation14], 1
    %8214 = vsyncpa [#allocation17], 1
    %8215 = vsyncpa [#allocation6], 1
    %8216 = vsyncpa [#allocation8], 1

</llo_original>
